<compile_context>
chip_gen: v7x
topology: tpu7x:2x2x1
jax: 0.10.0
libtpu: 0.0.40
codegen_flags: <defaults>
</compile_context>

<pallas_src>
import jax
import jax.numpy as jnp
from jax.experimental import pallas as pl
from jax.experimental.pallas import tpu as pltpu


def _round_up(x, m):
    return (x + m - 1) // m * m


def _tensorcores_per_device():
    """2 on v7x (batch axis can shard across both TensorCores), else 1."""
    try:
        kind = jax.devices()[0].device_kind.lower()
    except Exception:
        return 1
    return 2 if ("v7" in kind or "tpu7" in kind) else 1


def _vmem_estimate(T, TB, Ep, Hp, with_seq, w_bytes, weight_bufs=2):
    """Rough per-core VMEM working-set estimate (bytes) for a given chunk size."""
    est = 2 * T * TB * Ep * 4                                   # x chunk (double-buffered, f32)
    est += 2 * T * TB * 128 * 4                                 # ts chunk (lane-padded)
    est += weight_bufs * ((2 * Hp) * (5 * Hp) + Ep * (4 * Hp)) * w_bytes
    est += weight_bufs * (5 * Hp) * 4                           # biases
    est += T * TB * 4 * Hp * 4                                  # xp scratch (f32)
    est += 4 * TB * Hp * 4                                      # h/c carries + mean out buffers
    if with_seq:
        est += 2 * T * TB * Hp * 4                              # per-step h output chunk
    return est


# ---------------------------------------------------------------------------
# TimeLSTM kernel
# ---------------------------------------------------------------------------
def _make_timelstm_kernel(T, S_real, Sp, inv_s, with_seq):
    need_mask = Sp != S_real

    def _recurrence(x_ref, ts_ref, wblk_ref, ua_ref, bc_ref, bd_ref,
                    mean_ref, seq_ref, xp_sc, h_sc, c_sc):
        s = pl.program_id(1)                      # sequence-chunk index (serial axis)

        @pl.when(s == 0)
        def _init():                              # new batch tile: reset carries
            h_sc[...] = jnp.zeros_like(h_sc)
            c_sc[...] = jnp.zeros_like(c_sc)
            mean_ref[...] = jnp.zeros_like(mean_ref)

        TB, Hp = h_sc.shape
        Ep = x_ref.shape[-1]
        mxu_dt = ua_ref.dtype

        # Hoisted input projection (+ fused gate bias) for the whole chunk: ONE big
        # MXU matmul, staged into a time-major VMEM scratch so the serial loop only
        # reads one contiguous (TB, 4Hp) slab per step (keeps vreg pressure low).
        x2 = x_ref[...].reshape(T * TB, Ep).astype(mxu_dt)
        xp_sc[...] = (jnp.dot(x2, ua_ref[...], preferred_element_type=jnp.float32)
                      + bc_ref[...]).reshape(T, TB, 4 * Hp)
        tsm1 = ts_ref[...] - 1.0                  # (T, TB, 1), hoisted out of the loop
        bd = bd_ref[...]

        h = h_sc[...]
        c = c_sc[...]
        hsum = jnp.zeros((TB, Hp), jnp.float32)
        for t in range(T):                        # fully unrolled chunk recurrence
            # One fused MXU push per step: [h | c] @ [[W_all, 0], [0, W_d]].
            hc = jnp.concatenate([h, c], axis=1).astype(mxu_dt)      # (TB, 2Hp)
            g5 = jnp.dot(hc, wblk_ref[...], preferred_element_type=jnp.float32)
            # time-aware cell decay:  c_adj = c + tanh(W_d c + b_d) * (ts - 1)
            c_s1 = jnp.tanh(g5[:, 4 * Hp:] + bd)
            c_adj = c + c_s1 * tsm1[t]
            # single sigmoid over all four gates, then lane-aligned slices
            gates = jax.nn.sigmoid(g5[:, :4 * Hp] + xp_sc[t])
            f = gates[:, 0 * Hp:1 * Hp]
            i = gates[:, 1 * Hp:2 * Hp]
            o = gates[:, 2 * Hp:3 * Hp]
            g = gates[:, 3 * Hp:4 * Hp]           # sigmoid candidate (matches reference)
            c = f * c_adj + i * g
            h = o * jnp.tanh(c)
            if with_seq:
                seq_ref[t] = h.astype(seq_ref.dtype)   # whole (TB, Hp) aligned slab
            if need_mask:
                hsum = hsum + jnp.where(s * T + t < S_real, h, jnp.zeros_like(h))
            else:
                hsum = hsum + h

        h_sc[...] = h
        c_sc[...] = c
        mean_ref[...] = mean_ref[...] + hsum * inv_s

    if with_seq:
        def kernel(x_ref, ts_ref, wblk_ref, ua_ref, bc_ref, bd_ref,
                   seq_ref, mean_ref, xp_sc, h_sc, c_sc):
            _recurrence(x_ref, ts_ref, wblk_ref, ua_ref, bc_ref, bd_ref,
                        mean_ref, seq_ref, xp_sc, h_sc, c_sc)
    else:
        def kernel(x_ref, ts_ref, wblk_ref, ua_ref, bc_ref, bd_ref,
                   mean_ref, xp_sc, h_sc, c_sc):
            _recurrence(x_ref, ts_ref, wblk_ref, ua_ref, bc_ref, bd_ref,
                        mean_ref, None, xp_sc, h_sc, c_sc)

    return kernel


def timelstm_forward(inputs, timestamps, params, *, reverse=False, chunk_t=None,
                     return_sequence=False, mxu_dtype=jnp.float32,
                     seq_dtype=jnp.float32, batch_tiles=None,
                     single_buffer_weights=True):
    """TimeLSTM forward.

    inputs     : [B, S, E] float32
    timestamps : [B, S]    float32
    Returns (per-step outputs [B, S, H] or None, mean over the sequence [B, H]).
    """
    inputs = jnp.asarray(inputs, jnp.float32)
    timestamps = jnp.asarray(timestamps, jnp.float32)
    B, S, E = inputs.shape
    H = params["W_d_w"].shape[0]

    Bp = _round_up(B, 8)
    Ep = _round_up(E, 128)
    Hp = _round_up(H, 128)

    # Batch tiling: split over the 2 TensorCores on v7x, single tile elsewhere.
    if batch_tiles is None:
        batch_tiles = 2 if (_tensorcores_per_device() >= 2
                            and Bp >= 16 and Bp % 16 == 0) else 1
    TB = Bp // batch_tiles

    # Timesteps per grid step: large chunks amortize the ~0.35us per-step pipeline
    # overhead; shrink until the working set fits a v7x-safe VMEM budget.
    w_bytes = jnp.dtype(mxu_dtype).itemsize
    if chunk_t is None:
        chunk_t = min(_round_up(S, 8), 128)
    T = _round_up(chunk_t, 8)
    budget = 40 * 1024 * 1024
    while T > 8 and _vmem_estimate(T, TB, Ep, Hp, return_sequence, w_bytes) > budget:
        T = _round_up(T // 2, 8)
    Sp = _round_up(S, T)
    vmem_limit = int(min(64 * 1024 * 1024,
                         max(32 * 1024 * 1024,
                             int(1.5 * _vmem_estimate(T, TB, Ep, Hp,
                                                      return_sequence, w_bytes)))))

    # Activations time-major: per-step kernel loads/stores are whole aligned
    # (TB, *) slabs and the hoisted x-projection lands directly in a time-major
    # scratch (no in-kernel transposes).  Pad only if needed.
    x_tm = jnp.transpose(inputs, (1, 0, 2))                       # (S, B, E)
    if (Sp, Bp, Ep) != (S, B, E):
        x_tm = jnp.pad(x_tm, ((0, Sp - S), (0, Bp - B), (0, Ep - E)))
    ts_tm = jnp.transpose(timestamps, (1, 0))[:, :, None]         # (S, B, 1)
    if (Sp, Bp) != (S, B):
        ts_tm = jnp.pad(ts_tm, ((0, Sp - S), (0, Bp - B), (0, 0)))

    # Weights in x @ W layout; per-gate padding keeps [f|i|o|g] at k*Hp.
    def gate_pack(w_t, din, din_p):               # w_t: (din, 4H)
        w4 = w_t.reshape(din, 4, H)
        w4 = jnp.pad(w4, ((0, din_p - din), (0, 0), (0, Hp - H)))
        return w4.reshape(din_p, 4 * Hp)

    # Fused recurrence weight (2Hp, 5Hp): rows 0:Hp -> W_all (cols 0:4Hp),
    # rows Hp:2Hp -> W_d (cols 4Hp:5Hp).  One MXU push per timestep instead of two.
    wblk = jnp.zeros((2 * Hp, 5 * Hp), jnp.float32)
    wblk = wblk.at[:Hp, :4 * Hp].set(gate_pack(params["W_all_w"].T, H, Hp))
    wblk = wblk.at[Hp:, 4 * Hp:].set(
        jnp.pad(params["W_d_w"].T, ((0, Hp - H), (0, Hp - H))))
    wblk = wblk.astype(mxu_dtype)
    ua = gate_pack(params["U_all_w"].T, E, Ep).astype(mxu_dtype)              # (Ep, 4Hp)
    bc = jnp.pad((params["W_all_b"] + params["U_all_b"]).reshape(4, H),
                 ((0, 0), (0, Hp - H))).reshape(1, 4 * Hp)                    # fused gate bias
    bd = jnp.pad(params["W_d_b"], (0, Hp - H)).reshape(1, Hp)

    kernel = _make_timelstm_kernel(T, S, Sp, 1.0 / S, return_sequence)

    def build(weight_mode):
        def wspec(shape):
            return pl.BlockSpec(shape, lambda b, s: (0,) * len(shape),
                                pipeline_mode=weight_mode)
        in_specs = [
            pl.BlockSpec((T, TB, Ep), lambda b, s: (s, b, 0)),     # x chunk (time-major)
            pl.BlockSpec((T, TB, 1), lambda b, s: (s, b, 0)),      # timestamps chunk
            wspec((2 * Hp, 5 * Hp)),                               # fused [W_all | W_d] block
            wspec((Ep, 4 * Hp)),                                   # U_all
            wspec((1, 4 * Hp)),                                    # fused gate bias
            wspec((1, Hp)),                                        # b_d
        ]
        mean_spec = pl.BlockSpec((TB, Hp), lambda b, s: (b, 0))
        mean_shape = jax.ShapeDtypeStruct((Bp, Hp), jnp.float32)
        if return_sequence:
            out_shape = (jax.ShapeDtypeStruct((Sp, Bp, Hp), seq_dtype), mean_shape)
            out_specs = (pl.BlockSpec((T, TB, Hp), lambda b, s: (s, b, 0)), mean_spec)
        else:
            out_shape = mean_shape
            out_specs = mean_spec
        return pl.pallas_call(
            kernel,
            out_shape=out_shape,
            grid=(Bp // TB, Sp // T),
            in_specs=in_specs,
            out_specs=out_specs,
            scratch_shapes=[pltpu.VMEM((T, TB, 4 * Hp), jnp.float32),   # staged x-projection
                            pltpu.VMEM((TB, Hp), jnp.float32),          # h carry
                            pltpu.VMEM((TB, Hp), jnp.float32)],         # c carry
            compiler_params=pltpu.CompilerParams(
                dimension_semantics=("parallel", "arbitrary"),
                vmem_limit_bytes=vmem_limit),
        )

    args = (x_tm, ts_tm, wblk, ua, bc, bd)
    if single_buffer_weights:
        try:
            # Constant-index weight blocks only need a single VMEM buffer.
            res = build(pl.Buffered(1))(*args)
        except Exception:
            # Fall back to default double-buffering if this Pallas build rejects it.
            res = build(None)(*args)
    else:
        res = build(None)(*args)

    if return_sequence:
        seq_p, mean_p = res
        out = jnp.transpose(seq_p, (1, 0, 2))[:B, :S, :H].astype(jnp.float32)
        if reverse:
            out = jnp.flip(out, axis=1)
    else:
        mean_p = res
        out = None
    mean = mean_p[:B, :H]
    return out, mean


# ---------------------------------------------------------------------------
# Head kernel (fc_ct -> concat/fc_concat -> final), dropout = identity
# ---------------------------------------------------------------------------
def _head_kernel(tweet_ref, hist_ref, wct_ref, bct_ref,
                 wcc_tw_ref, wcc_hi_ref, bcc_ref, wf_ref, bf_ref, out_ref):
    tw = jax.nn.relu(jnp.dot(tweet_ref[...], wct_ref[...],
                             preferred_element_type=jnp.float32) + bct_ref[...])
    # cat((tweet, hist), 1) @ W_cc.T  ==  tweet @ W_cc1 + hist @ W_cc2  (no concat needed)
    pre = (jnp.dot(tw, wcc_tw_ref[...], preferred_element_type=jnp.float32)
           + jnp.dot(hist_ref[...], wcc_hi_ref[...], preferred_element_type=jnp.float32)
           + bcc_ref[...])
    x = jax.nn.relu(pre)
    out_ref[...] = (jnp.dot(x, wf_ref[...], preferred_element_type=jnp.float32)
                    + bf_ref[...]).astype(out_ref.dtype)


def head_forward(tweet_features, hist_mean, params):
    tweet_features = jnp.asarray(tweet_features, jnp.float32)
    hist_mean = jnp.asarray(hist_mean, jnp.float32)
    B, D_t = tweet_features.shape
    H = hist_mean.shape[1]
    Bp = _round_up(B, 8)
    Dp = _round_up(D_t, 128)
    Hp = _round_up(H, 128)
    n_out = params["final_w"].shape[0]            # = 2
    Np = _round_up(n_out, 128)                    # pad final dim -> lane-dense store

    tweet_p = jnp.zeros((Bp, Dp), jnp.float32).at[:B, :D_t].set(tweet_features)
    hist_p = jnp.zeros((Bp, Hp), jnp.float32).at[:B, :H].set(hist_mean)

    wct = jnp.pad(params["fc_ct_w"].T, ((0, Dp - D_t), (0, Hp - H)))      # (Dp, Hp)
    bct = jnp.pad(params["fc_ct_b"], (0, Hp - H)).reshape(1, Hp)
    wcc_t = params["fc_concat_w"].T                                       # (2H, H)
    wcc_tw = jnp.pad(wcc_t[:H], ((0, Hp - H), (0, Hp - H)))               # tweet half
    wcc_hi = jnp.pad(wcc_t[H:], ((0, Hp - H), (0, Hp - H)))               # historic half
    bcc = jnp.pad(params["fc_concat_b"], (0, Hp - H)).reshape(1, Hp)
    wf = jnp.pad(params["final_w"].T, ((0, Hp - H), (0, Np - n_out)))     # (Hp, Np)
    bf = jnp.pad(params["final_b"], (0, Np - n_out)).reshape(1, Np)

    full = lambda shape: pl.BlockSpec(shape, lambda i: (0,) * len(shape))
    logits_p = pl.pallas_call(
        _head_kernel,
        out_shape=jax.ShapeDtypeStruct((Bp, Np), jnp.float32),
        grid=(1,),
        in_specs=[full((Bp, Dp)), full((Bp, Hp)),
                  full((Dp, Hp)), full((1, Hp)),
                  full((Hp, Hp)), full((Hp, Hp)), full((1, Hp)),
                  full((Hp, Np)), full((1, Np))],
        out_specs=full((Bp, Np)),
        compiler_params=pltpu.CompilerParams(dimension_semantics=("arbitrary",)),
    )(tweet_p, hist_p, wct, bct, wcc_tw, wcc_hi, bcc, wf, bf)
    return logits_p[:B, :n_out]


def historic_current_forward(tweet_features, historic_features, timestamps, params, *,
                             chunk_t=None, mxu_dtype=jnp.float32,
                             return_sequence=False):
    """HistoricCurrent (model='tlstm') forward.

    Returns logits [B, 2]; if return_sequence=True also returns the TimeLSTM
    per-step outputs [B, S, H] (the module itself only returns logits).
    """
    seq_out, hist_mean = timelstm_forward(historic_features, timestamps, params,
                                          chunk_t=chunk_t, mxu_dtype=mxu_dtype,
                                          return_sequence=return_sequence)
    logits = head_forward(tweet_features, hist_mean, params)
    if return_sequence:
        return logits, seq_out
    return logits


# ---------------------------------------------------------------------------
# Pure-JAX references (mirror the PyTorch module, dropout = identity)
# ---------------------------------------------------------------------------
def timelstm_reference(inputs, timestamps, params, reverse=False):
    B, S, E = inputs.shape
    H = params["W_d_w"].shape[0]
    h = jnp.zeros((B, H), jnp.float32)
    c = jnp.zeros((B, H), jnp.float32)
    outs_list = []
    for s in range(S):
        c_s1 = jnp.tanh(c @ params["W_d_w"].T + params["W_d_b"])
        c_s2 = c_s1 * timestamps[:, s:s + 1]
        c_adj = (c - c_s1) + c_s2
        outs = (h @ params["W_all_w"].T + params["W_all_b"]
                + inputs[:, s] @ params["U_all_w"].T + params["U_all_b"])
        f, i, o, g = jnp.split(outs, 4, axis=1)
        f, i, o, g = map(jax.nn.sigmoid, (f, i, o, g))
        c = f * c_adj + i * g
        h = o * jnp.tanh(c)
        outs_list.append(h)
    out = jnp.stack(outs_list, axis=1)
    if reverse:
        out = jnp.flip(out, axis=1)
    return out


def historic_current_reference(tweet_features, historic_features, timestamps, params):
    outputs = timelstm_reference(historic_features, timestamps, params)
    tw = jax.nn.relu(tweet_features @ params["fc_ct_w"].T + params["fc_ct_b"])
    hist = jnp.mean(outputs, axis=1)
    comb = jnp.concatenate([tw, hist], axis=1)
    x = jax.nn.relu(comb @ params["fc_concat_w"].T + params["fc_concat_b"])
    return x @ params["final_w"].T + params["final_b"]


def init_params(key, input_size, hidden_size, tweet_dim=768):
    H, E = hidden_size, input_size
    ks = jax.random.split(key, 12)

    def lin(kw, kb, out_d, in_d):
        bound = 1.0 / (in_d ** 0.5)
        w = jax.random.uniform(kw, (out_d, in_d), jnp.float32, -bound, bound)
        b = jax.random.uniform(kb, (out_d,), jnp.float32, -bound, bound)
        return w, b

    p = {}
    p["W_all_w"], p["W_all_b"] = lin(ks[0], ks[1], 4 * H, H)
    p["U_all_w"], p["U_all_b"] = lin(ks[2], ks[3], 4 * H, E)
    p["W_d_w"], p["W_d_b"] = lin(ks[4], ks[5], H, H)
    p["fc_ct_w"], p["fc_ct_b"] = lin(ks[6], ks[7], H, tweet_dim)
    p["fc_concat_w"], p["fc_concat_b"] = lin(ks[8], ks[9], H, 2 * H)
    p["final_w"], p["final_b"] = lin(ks[10], ks[11], 2, H)
    return p


if __name__ == "__main__":
    B, S, E, H = 2, 8, 4, 32
    TWEET_DIM = 768

    key = jax.random.PRNGKey(0)
    k_hist, k_ts, k_tweet, k_par = jax.random.split(key, 4)

    historic = jax.random.normal(k_hist, (B, S, E), jnp.float32)
    timestamps = jax.random.uniform(k_ts, (B, S), jnp.float32, 0.0, 2.0)
    tweet = jax.random.normal(k_tweet, (B, TWEET_DIM), jnp.float32)
    params = init_params(k_par, E, H, TWEET_DIM)

    # f32 path, with the optional full-sequence output (for validation only).
    logits, seq_out = historic_current_forward(tweet, historic, timestamps, params,
                                               return_sequence=True)
    jax.block_until_ready(logits)
    jax.block_until_ready(seq_out)

    # Default fast path: fused in-kernel mean only, no [B,S,H] HBM round trip.
    logits_fast = historic_current_forward(tweet, historic, timestamps, params)
    jax.block_until_ready(logits_fast)

    # bf16 MXU-operand path (weights/dot-LHS in bf16, f32 accumulation & VPU math).
    logits_bf16 = historic_current_forward(tweet, historic, timestamps, params,
                                           mxu_dtype=jnp.bfloat16)
    jax.block_until_ready(logits_bf16)

    seq_ref = timelstm_reference(historic, timestamps, params)
    logits_ref = historic_current_reference(tweet, historic, timestamps, params)

    assert seq_out.shape == (B, S, H)
    assert logits.shape == (B, 2)
    assert jnp.allclose(seq_out, seq_ref, atol=1e-4, rtol=1e-4), "TimeLSTM mismatch vs reference"
    assert jnp.allclose(logits, logits_ref, atol=1e-4, rtol=1e-4), "HistoricCurrent mismatch vs reference"
    assert jnp.allclose(logits_fast, logits_ref, atol=1e-4, rtol=1e-4), "Mean-only path mismatch vs reference"
    assert jnp.allclose(logits_bf16, logits_ref, atol=6e-2, rtol=6e-2), "bf16 MXU path mismatch vs reference"
    print("KERNEL_OK")
</pallas_src>

<mosaic_0001>
module attributes {stable_mosaic.version = 11 : i64} {
  func.func @kernel(%arg0: i32, %arg1: i32, %arg2: memref<8x8x128xf32, #tpu.memory_space<vmem>>, %arg3: memref<8x8x1xf32, #tpu.memory_space<vmem>>, %arg4: memref<256x640xf32, #tpu.memory_space<vmem>>, %arg5: memref<128x512xf32, #tpu.memory_space<vmem>>, %arg6: memref<1x512xf32, #tpu.memory_space<vmem>>, %arg7: memref<1x128xf32, #tpu.memory_space<vmem>>, %arg8: memref<8x8x128xf32, #tpu.memory_space<vmem>>, %arg9: memref<8x128xf32, #tpu.memory_space<vmem>>, %arg10: memref<8x8x512xf32, #tpu.memory_space<vmem>>, %arg11: memref<8x128xf32, #tpu.memory_space<vmem>>, %arg12: memref<8x128xf32, #tpu.memory_space<vmem>>) attributes {dimension_semantics = [#tpu.dimension_semantics<parallel>, #tpu.dimension_semantics<arbitrary>], iteration_bounds = array<i64: 1, 1>, scalar_prefetch = 0 : i64, scratch_operands = 3 : i64, tpu.core_type = #tpu.core_type<tc>, window_params = [{transform_indices = @transform_0, window_bounds = array<i64: 8, 8, 128>}, {transform_indices = @transform_1, window_bounds = array<i64: 8, 8, 1>}, {pipeline_mode = #tpu.pipeline_mode<synchronous>, transform_indices = @transform_2, window_bounds = array<i64: 256, 640>}, {pipeline_mode = #tpu.pipeline_mode<synchronous>, transform_indices = @transform_3, window_bounds = array<i64: 128, 512>}, {pipeline_mode = #tpu.pipeline_mode<synchronous>, transform_indices = @transform_4, window_bounds = array<i64: 1, 512>}, {pipeline_mode = #tpu.pipeline_mode<synchronous>, transform_indices = @transform_5, window_bounds = array<i64: 1, 128>}, {transform_indices = @transform_6, window_bounds = array<i64: 8, 8, 128>}, {transform_indices = @transform_7, window_bounds = array<i64: 8, 128>}]} {
    %c0_i32 = arith.constant 0 : i32
    %0 = arith.cmpi eq, %arg1, %c0_i32 : i32
    %1 = arith.extui %0 : i1 to i32
    %c0_i32_0 = arith.constant 0 : i32
    %2 = arith.cmpi ne, %1, %c0_i32_0 : i32
    scf.if %2 {
      %cst_103 = arith.constant 0.000000e+00 : f32
      %298 = vector.broadcast %cst_103 : f32 to vector<8x128xf32>
      %c0_104 = arith.constant 0 : index
      %c0_105 = arith.constant 0 : index
      %299 = vector.load %arg11[%c0_104, %c0_105] : memref<8x128xf32, #tpu.memory_space<vmem>>, vector<8x128xf32>
      tpu.vector_store %arg11[%c0_104, %c0_105], %298 {strides = array<i32>} : memref<8x128xf32, #tpu.memory_space<vmem>>, vector<8x128xf32>,
      %cst_106 = arith.constant 0.000000e+00 : f32
      %300 = vector.broadcast %cst_106 : f32 to vector<8x128xf32>
      %c0_107 = arith.constant 0 : index
      %c0_108 = arith.constant 0 : index
      %301 = vector.load %arg12[%c0_107, %c0_108] : memref<8x128xf32, #tpu.memory_space<vmem>>, vector<8x128xf32>
      tpu.vector_store %arg12[%c0_107, %c0_108], %300 {strides = array<i32>} : memref<8x128xf32, #tpu.memory_space<vmem>>, vector<8x128xf32>,
      %cst_109 = arith.constant 0.000000e+00 : f32
      %302 = vector.broadcast %cst_109 : f32 to vector<8x128xf32>
      %c0_110 = arith.constant 0 : index
      %c0_111 = arith.constant 0 : index
      %303 = vector.load %arg9[%c0_110, %c0_111] : memref<8x128xf32, #tpu.memory_space<vmem>>, vector<8x128xf32>
      tpu.vector_store %arg9[%c0_110, %c0_111], %302 {strides = array<i32>} : memref<8x128xf32, #tpu.memory_space<vmem>>, vector<8x128xf32>,
    } else {
    }
    %c0 = arith.constant 0 : index
    %c0_1 = arith.constant 0 : index
    %c0_2 = arith.constant 0 : index
    %3 = vector.load %arg2[%c0, %c0_1, %c0_2] : memref<8x8x128xf32, #tpu.memory_space<vmem>>, vector<8x8x128xf32>
    %4 = vector.shape_cast %3 : vector<8x8x128xf32> to vector<64x128xf32>
    %c0_3 = arith.constant 0 : index
    %c0_4 = arith.constant 0 : index
    %5 = vector.load %arg5[%c0_3, %c0_4] : memref<128x512xf32, #tpu.memory_space<vmem>>, vector<128x512xf32>
    %cst = arith.constant dense<0.000000e+00> : vector<64x512xf32>
    %6 = tpu.matmul %4, %5, %cst {dimension_numbers = #tpu.dot_dimension_numbers<[1], [0], [0], [1], [0, 0, 1, 1], [], []>} : vector<64x128xf32>, vector<128x512xf32>, vector<64x512xf32> -> vector<64x512xf32>
    %c0_5 = arith.constant 0 : index
    %c0_6 = arith.constant 0 : index
    %7 = vector.load %arg6[%c0_5, %c0_6] : memref<1x512xf32, #tpu.memory_space<vmem>>, vector<1x512xf32>
    %8 = vector.broadcast %7 : vector<1x512xf32> to vector<64x512xf32>
    %9 = arith.addf %6, %8 : vector<64x512xf32>
    %10 = vector.shape_cast %9 : vector<64x512xf32> to vector<8x8x512xf32>
    %c0_7 = arith.constant 0 : index
    %c0_8 = arith.constant 0 : index
    %c0_9 = arith.constant 0 : index
    %11 = vector.load %arg10[%c0_7, %c0_8, %c0_9] : memref<8x8x512xf32, #tpu.memory_space<vmem>>, vector<8x8x512xf32>
    tpu.vector_store %arg10[%c0_7, %c0_8, %c0_9], %10 {strides = array<i32>} : memref<8x8x512xf32, #tpu.memory_space<vmem>>, vector<8x8x512xf32>,
    %c0_10 = arith.constant 0 : index
    %c0_11 = arith.constant 0 : index
    %c0_12 = arith.constant 0 : index
    %12 = vector.load %arg3[%c0_10, %c0_11, %c0_12] : memref<8x8x1xf32, #tpu.memory_space<vmem>>, vector<8x8x1xf32>
    %cst_13 = arith.constant 1.000000e+00 : f32
    %13 = vector.broadcast %cst_13 : f32 to vector<8x8x1xf32>
    %14 = arith.subf %12, %13 : vector<8x8x1xf32>
    %c0_14 = arith.constant 0 : index
    %c0_15 = arith.constant 0 : index
    %15 = vector.load %arg7[%c0_14, %c0_15] : memref<1x128xf32, #tpu.memory_space<vmem>>, vector<1x128xf32>
    %c0_16 = arith.constant 0 : index
    %c0_17 = arith.constant 0 : index
    %16 = vector.load %arg11[%c0_16, %c0_17] : memref<8x128xf32, #tpu.memory_space<vmem>>, vector<8x128xf32>
    %c0_18 = arith.constant 0 : index
    %c0_19 = arith.constant 0 : index
    %17 = vector.load %arg12[%c0_18, %c0_19] : memref<8x128xf32, #tpu.memory_space<vmem>>, vector<8x128xf32>
    %cst_20 = arith.constant 0.000000e+00 : f32
    %18 = vector.broadcast %cst_20 : f32 to vector<8x128xf32>
    %19 = tpu.concatenate %16, %17 in 1 : vector<8x128xf32>, vector<8x128xf32> -> vector<8x256xf32>
    %c0_21 = arith.constant 0 : index
    %c0_22 = arith.constant 0 : index
    %20 = vector.load %arg4[%c0_21, %c0_22] : memref<256x640xf32, #tpu.memory_space<vmem>>, vector<256x640xf32>
    %cst_23 = arith.constant dense<0.000000e+00> : vector<8x640xf32>
    %21 = tpu.matmul %19, %20, %cst_23 {dimension_numbers = #tpu.dot_dimension_numbers<[1], [0], [0], [1], [0, 0, 1, 1], [], []>} : vector<8x256xf32>, vector<256x640xf32>, vector<8x640xf32> -> vector<8x640xf32>
    %22 = vector.extract_strided_slice %21 {offsets = [0, 512], sizes = [8, 128], strides = [1, 1]} : vector<8x640xf32> to vector<8x128xf32>
    %23 = vector.broadcast %15 : vector<1x128xf32> to vector<8x128xf32>
    %24 = arith.addf %22, %23 : vector<8x128xf32>
    %25 = math.tanh %24 : vector<8x128xf32>
    %26 = vector.extract_strided_slice %14 {offsets = [0, 0, 0], sizes = [1, 8, 1], strides = [1, 1, 1]} : vector<8x8x1xf32> to vector<1x8x1xf32>
    %27 = vector.shape_cast %26 : vector<1x8x1xf32> to vector<8x1xf32>
    %28 = vector.broadcast %27 : vector<8x1xf32> to vector<8x128xf32>
    %29 = arith.mulf %25, %28 : vector<8x128xf32>
    %30 = arith.addf %17, %29 : vector<8x128xf32>
    %31 = vector.extract_strided_slice %21 {offsets = [0, 0], sizes = [8, 512], strides = [1, 1]} : vector<8x640xf32> to vector<8x512xf32>
    %c0_24 = arith.constant 0 : index
    %c0_25 = arith.constant 0 : index
    %c0_26 = arith.constant 0 : index
    %32 = vector.load %arg10[%c0_24, %c0_25, %c0_26] : memref<8x8x512xf32, #tpu.memory_space<vmem>>, vector<1x8x512xf32>
    %33 = vector.shape_cast %32 : vector<1x8x512xf32> to vector<8x512xf32>
    %34 = arith.addf %31, %33 : vector<8x512xf32>
    %35 = arith.negf %34 : vector<8x512xf32>
    %36 = math.exp %35 : vector<8x512xf32>
    %cst_27 = arith.constant 1.000000e+00 : f32
    %37 = vector.broadcast %cst_27 : f32 to vector<8x512xf32>
    %38 = arith.addf %37, %36 : vector<8x512xf32>
    %39 = arith.divf %37, %38 : vector<8x512xf32>
    %40 = vector.extract_strided_slice %39 {offsets = [0, 0], sizes = [8, 128], strides = [1, 1]} : vector<8x512xf32> to vector<8x128xf32>
    %41 = vector.extract_strided_slice %39 {offsets = [0, 128], sizes = [8, 128], strides = [1, 1]} : vector<8x512xf32> to vector<8x128xf32>
    %42 = vector.extract_strided_slice %39 {offsets = [0, 256], sizes = [8, 128], strides = [1, 1]} : vector<8x512xf32> to vector<8x128xf32>
    %43 = vector.extract_strided_slice %39 {offsets = [0, 384], sizes = [8, 128], strides = [1, 1]} : vector<8x512xf32> to vector<8x128xf32>
    %44 = arith.mulf %40, %30 : vector<8x128xf32>
    %45 = arith.mulf %41, %43 : vector<8x128xf32>
    %46 = arith.addf %44, %45 : vector<8x128xf32>
    %47 = math.tanh %46 : vector<8x128xf32>
    %48 = arith.mulf %42, %47 : vector<8x128xf32>
    %c0_28 = arith.constant 0 : index
    %c0_29 = arith.constant 0 : index
    %c0_30 = arith.constant 0 : index
    %49 = vector.load %arg8[%c0_28, %c0_29, %c0_30] : memref<8x8x128xf32, #tpu.memory_space<vmem>>, vector<1x8x128xf32>
    %50 = vector.shape_cast %49 : vector<1x8x128xf32> to vector<8x128xf32>
    %51 = vector.shape_cast %48 : vector<8x128xf32> to vector<1x8x128xf32>
    tpu.vector_store %arg8[%c0_28, %c0_29, %c0_30], %51 {strides = array<i32>} : memref<8x8x128xf32, #tpu.memory_space<vmem>>, vector<1x8x128xf32>,
    %52 = arith.addf %18, %48 : vector<8x128xf32>
    %53 = tpu.concatenate %48, %46 in 1 : vector<8x128xf32>, vector<8x128xf32> -> vector<8x256xf32>
    %c0_31 = arith.constant 0 : index
    %c0_32 = arith.constant 0 : index
    %54 = vector.load %arg4[%c0_31, %c0_32] : memref<256x640xf32, #tpu.memory_space<vmem>>, vector<256x640xf32>
    %cst_33 = arith.constant dense<0.000000e+00> : vector<8x640xf32>
    %55 = tpu.matmul %53, %54, %cst_33 {dimension_numbers = #tpu.dot_dimension_numbers<[1], [0], [0], [1], [0, 0, 1, 1], [], []>} : vector<8x256xf32>, vector<256x640xf32>, vector<8x640xf32> -> vector<8x640xf32>
    %56 = vector.extract_strided_slice %55 {offsets = [0, 512], sizes = [8, 128], strides = [1, 1]} : vector<8x640xf32> to vector<8x128xf32>
    %57 = vector.broadcast %15 : vector<1x128xf32> to vector<8x128xf32>
    %58 = arith.addf %56, %57 : vector<8x128xf32>
    %59 = math.tanh %58 : vector<8x128xf32>
    %60 = vector.extract_strided_slice %14 {offsets = [1, 0, 0], sizes = [1, 8, 1], strides = [1, 1, 1]} : vector<8x8x1xf32> to vector<1x8x1xf32>
    %61 = vector.shape_cast %60 : vector<1x8x1xf32> to vector<8x1xf32>
    %62 = vector.broadcast %61 : vector<8x1xf32> to vector<8x128xf32>
    %63 = arith.mulf %59, %62 : vector<8x128xf32>
    %64 = arith.addf %46, %63 : vector<8x128xf32>
    %65 = vector.extract_strided_slice %55 {offsets = [0, 0], sizes = [8, 512], strides = [1, 1]} : vector<8x640xf32> to vector<8x512xf32>
    %c1 = arith.constant 1 : index
    %c0_34 = arith.constant 0 : index
    %c0_35 = arith.constant 0 : index
    %66 = vector.load %arg10[%c1, %c0_34, %c0_35] : memref<8x8x512xf32, #tpu.memory_space<vmem>>, vector<1x8x512xf32>
    %67 = vector.shape_cast %66 : vector<1x8x512xf32> to vector<8x512xf32>
    %68 = arith.addf %65, %67 : vector<8x512xf32>
    %69 = arith.negf %68 : vector<8x512xf32>
    %70 = math.exp %69 : vector<8x512xf32>
    %cst_36 = arith.constant 1.000000e+00 : f32
    %71 = vector.broadcast %cst_36 : f32 to vector<8x512xf32>
    %72 = arith.addf %71, %70 : vector<8x512xf32>
    %73 = arith.divf %71, %72 : vector<8x512xf32>
    %74 = vector.extract_strided_slice %73 {offsets = [0, 0], sizes = [8, 128], strides = [1, 1]} : vector<8x512xf32> to vector<8x128xf32>
    %75 = vector.extract_strided_slice %73 {offsets = [0, 128], sizes = [8, 128], strides = [1, 1]} : vector<8x512xf32> to vector<8x128xf32>
    %76 = vector.extract_strided_slice %73 {offsets = [0, 256], sizes = [8, 128], strides = [1, 1]} : vector<8x512xf32> to vector<8x128xf32>
    %77 = vector.extract_strided_slice %73 {offsets = [0, 384], sizes = [8, 128], strides = [1, 1]} : vector<8x512xf32> to vector<8x128xf32>
    %78 = arith.mulf %74, %64 : vector<8x128xf32>
    %79 = arith.mulf %75, %77 : vector<8x128xf32>
    %80 = arith.addf %78, %79 : vector<8x128xf32>
    %81 = math.tanh %80 : vector<8x128xf32>
    %82 = arith.mulf %76, %81 : vector<8x128xf32>
    %c1_37 = arith.constant 1 : index
    %c0_38 = arith.constant 0 : index
    %c0_39 = arith.constant 0 : index
    %83 = vector.load %arg8[%c1_37, %c0_38, %c0_39] : memref<8x8x128xf32, #tpu.memory_space<vmem>>, vector<1x8x128xf32>
    %84 = vector.shape_cast %83 : vector<1x8x128xf32> to vector<8x128xf32>
    %85 = vector.shape_cast %82 : vector<8x128xf32> to vector<1x8x128xf32>
    tpu.vector_store %arg8[%c1_37, %c0_38, %c0_39], %85 {strides = array<i32>} : memref<8x8x128xf32, #tpu.memory_space<vmem>>, vector<1x8x128xf32>,
    %86 = arith.addf %52, %82 : vector<8x128xf32>
    %87 = tpu.concatenate %82, %80 in 1 : vector<8x128xf32>, vector<8x128xf32> -> vector<8x256xf32>
    %c0_40 = arith.constant 0 : index
    %c0_41 = arith.constant 0 : index
    %88 = vector.load %arg4[%c0_40, %c0_41] : memref<256x640xf32, #tpu.memory_space<vmem>>, vector<256x640xf32>
    %cst_42 = arith.constant dense<0.000000e+00> : vector<8x640xf32>
    %89 = tpu.matmul %87, %88, %cst_42 {dimension_numbers = #tpu.dot_dimension_numbers<[1], [0], [0], [1], [0, 0, 1, 1], [], []>} : vector<8x256xf32>, vector<256x640xf32>, vector<8x640xf32> -> vector<8x640xf32>
    %90 = vector.extract_strided_slice %89 {offsets = [0, 512], sizes = [8, 128], strides = [1, 1]} : vector<8x640xf32> to vector<8x128xf32>
    %91 = vector.broadcast %15 : vector<1x128xf32> to vector<8x128xf32>
    %92 = arith.addf %90, %91 : vector<8x128xf32>
    %93 = math.tanh %92 : vector<8x128xf32>
    %94 = vector.extract_strided_slice %14 {offsets = [2, 0, 0], sizes = [1, 8, 1], strides = [1, 1, 1]} : vector<8x8x1xf32> to vector<1x8x1xf32>
    %95 = vector.shape_cast %94 : vector<1x8x1xf32> to vector<8x1xf32>
    %96 = vector.broadcast %95 : vector<8x1xf32> to vector<8x128xf32>
    %97 = arith.mulf %93, %96 : vector<8x128xf32>
    %98 = arith.addf %80, %97 : vector<8x128xf32>
    %99 = vector.extract_strided_slice %89 {offsets = [0, 0], sizes = [8, 512], strides = [1, 1]} : vector<8x640xf32> to vector<8x512xf32>
    %c2 = arith.constant 2 : index
    %c0_43 = arith.constant 0 : index
    %c0_44 = arith.constant 0 : index
    %100 = vector.load %arg10[%c2, %c0_43, %c0_44] : memref<8x8x512xf32, #tpu.memory_space<vmem>>, vector<1x8x512xf32>
    %101 = vector.shape_cast %100 : vector<1x8x512xf32> to vector<8x512xf32>
    %102 = arith.addf %99, %101 : vector<8x512xf32>
    %103 = arith.negf %102 : vector<8x512xf32>
    %104 = math.exp %103 : vector<8x512xf32>
    %cst_45 = arith.constant 1.000000e+00 : f32
    %105 = vector.broadcast %cst_45 : f32 to vector<8x512xf32>
    %106 = arith.addf %105, %104 : vector<8x512xf32>
    %107 = arith.divf %105, %106 : vector<8x512xf32>
    %108 = vector.extract_strided_slice %107 {offsets = [0, 0], sizes = [8, 128], strides = [1, 1]} : vector<8x512xf32> to vector<8x128xf32>
    %109 = vector.extract_strided_slice %107 {offsets = [0, 128], sizes = [8, 128], strides = [1, 1]} : vector<8x512xf32> to vector<8x128xf32>
    %110 = vector.extract_strided_slice %107 {offsets = [0, 256], sizes = [8, 128], strides = [1, 1]} : vector<8x512xf32> to vector<8x128xf32>
    %111 = vector.extract_strided_slice %107 {offsets = [0, 384], sizes = [8, 128], strides = [1, 1]} : vector<8x512xf32> to vector<8x128xf32>
    %112 = arith.mulf %108, %98 : vector<8x128xf32>
    %113 = arith.mulf %109, %111 : vector<8x128xf32>
    %114 = arith.addf %112, %113 : vector<8x128xf32>
    %115 = math.tanh %114 : vector<8x128xf32>
    %116 = arith.mulf %110, %115 : vector<8x128xf32>
    %c2_46 = arith.constant 2 : index
    %c0_47 = arith.constant 0 : index
    %c0_48 = arith.constant 0 : index
    %117 = vector.load %arg8[%c2_46, %c0_47, %c0_48] : memref<8x8x128xf32, #tpu.memory_space<vmem>>, vector<1x8x128xf32>
    %118 = vector.shape_cast %117 : vector<1x8x128xf32> to vector<8x128xf32>
    %119 = vector.shape_cast %116 : vector<8x128xf32> to vector<1x8x128xf32>
    tpu.vector_store %arg8[%c2_46, %c0_47, %c0_48], %119 {strides = array<i32>} : memref<8x8x128xf32, #tpu.memory_space<vmem>>, vector<1x8x128xf32>,
    %120 = arith.addf %86, %116 : vector<8x128xf32>
    %121 = tpu.concatenate %116, %114 in 1 : vector<8x128xf32>, vector<8x128xf32> -> vector<8x256xf32>
    %c0_49 = arith.constant 0 : index
    %c0_50 = arith.constant 0 : index
    %122 = vector.load %arg4[%c0_49, %c0_50] : memref<256x640xf32, #tpu.memory_space<vmem>>, vector<256x640xf32>
    %cst_51 = arith.constant dense<0.000000e+00> : vector<8x640xf32>
    %123 = tpu.matmul %121, %122, %cst_51 {dimension_numbers = #tpu.dot_dimension_numbers<[1], [0], [0], [1], [0, 0, 1, 1], [], []>} : vector<8x256xf32>, vector<256x640xf32>, vector<8x640xf32> -> vector<8x640xf32>
    %124 = vector.extract_strided_slice %123 {offsets = [0, 512], sizes = [8, 128], strides = [1, 1]} : vector<8x640xf32> to vector<8x128xf32>
    %125 = vector.broadcast %15 : vector<1x128xf32> to vector<8x128xf32>
    %126 = arith.addf %124, %125 : vector<8x128xf32>
    %127 = math.tanh %126 : vector<8x128xf32>
    %128 = vector.extract_strided_slice %14 {offsets = [3, 0, 0], sizes = [1, 8, 1], strides = [1, 1, 1]} : vector<8x8x1xf32> to vector<1x8x1xf32>
    %129 = vector.shape_cast %128 : vector<1x8x1xf32> to vector<8x1xf32>
    %130 = vector.broadcast %129 : vector<8x1xf32> to vector<8x128xf32>
    %131 = arith.mulf %127, %130 : vector<8x128xf32>
    %132 = arith.addf %114, %131 : vector<8x128xf32>
    %133 = vector.extract_strided_slice %123 {offsets = [0, 0], sizes = [8, 512], strides = [1, 1]} : vector<8x640xf32> to vector<8x512xf32>
    %c3 = arith.constant 3 : index
    %c0_52 = arith.constant 0 : index
    %c0_53 = arith.constant 0 : index
    %134 = vector.load %arg10[%c3, %c0_52, %c0_53] : memref<8x8x512xf32, #tpu.memory_space<vmem>>, vector<1x8x512xf32>
    %135 = vector.shape_cast %134 : vector<1x8x512xf32> to vector<8x512xf32>
    %136 = arith.addf %133, %135 : vector<8x512xf32>
    %137 = arith.negf %136 : vector<8x512xf32>
    %138 = math.exp %137 : vector<8x512xf32>
    %cst_54 = arith.constant 1.000000e+00 : f32
    %139 = vector.broadcast %cst_54 : f32 to vector<8x512xf32>
    %140 = arith.addf %139, %138 : vector<8x512xf32>
    %141 = arith.divf %139, %140 : vector<8x512xf32>
    %142 = vector.extract_strided_slice %141 {offsets = [0, 0], sizes = [8, 128], strides = [1, 1]} : vector<8x512xf32> to vector<8x128xf32>
    %143 = vector.extract_strided_slice %141 {offsets = [0, 128], sizes = [8, 128], strides = [1, 1]} : vector<8x512xf32> to vector<8x128xf32>
    %144 = vector.extract_strided_slice %141 {offsets = [0, 256], sizes = [8, 128], strides = [1, 1]} : vector<8x512xf32> to vector<8x128xf32>
    %145 = vector.extract_strided_slice %141 {offsets = [0, 384], sizes = [8, 128], strides = [1, 1]} : vector<8x512xf32> to vector<8x128xf32>
    %146 = arith.mulf %142, %132 : vector<8x128xf32>
    %147 = arith.mulf %143, %145 : vector<8x128xf32>
    %148 = arith.addf %146, %147 : vector<8x128xf32>
    %149 = math.tanh %148 : vector<8x128xf32>
    %150 = arith.mulf %144, %149 : vector<8x128xf32>
    %c3_55 = arith.constant 3 : index
    %c0_56 = arith.constant 0 : index
    %c0_57 = arith.constant 0 : index
    %151 = vector.load %arg8[%c3_55, %c0_56, %c0_57] : memref<8x8x128xf32, #tpu.memory_space<vmem>>, vector<1x8x128xf32>
    %152 = vector.shape_cast %151 : vector<1x8x128xf32> to vector<8x128xf32>
    %153 = vector.shape_cast %150 : vector<8x128xf32> to vector<1x8x128xf32>
    tpu.vector_store %arg8[%c3_55, %c0_56, %c0_57], %153 {strides = array<i32>} : memref<8x8x128xf32, #tpu.memory_space<vmem>>, vector<1x8x128xf32>,
    %154 = arith.addf %120, %150 : vector<8x128xf32>
    %155 = tpu.concatenate %150, %148 in 1 : vector<8x128xf32>, vector<8x128xf32> -> vector<8x256xf32>
    %c0_58 = arith.constant 0 : index
    %c0_59 = arith.constant 0 : index
    %156 = vector.load %arg4[%c0_58, %c0_59] : memref<256x640xf32, #tpu.memory_space<vmem>>, vector<256x640xf32>
    %cst_60 = arith.constant dense<0.000000e+00> : vector<8x640xf32>
    %157 = tpu.matmul %155, %156, %cst_60 {dimension_numbers = #tpu.dot_dimension_numbers<[1], [0], [0], [1], [0, 0, 1, 1], [], []>} : vector<8x256xf32>, vector<256x640xf32>, vector<8x640xf32> -> vector<8x640xf32>
    %158 = vector.extract_strided_slice %157 {offsets = [0, 512], sizes = [8, 128], strides = [1, 1]} : vector<8x640xf32> to vector<8x128xf32>
    %159 = vector.broadcast %15 : vector<1x128xf32> to vector<8x128xf32>
    %160 = arith.addf %158, %159 : vector<8x128xf32>
    %161 = math.tanh %160 : vector<8x128xf32>
    %162 = vector.extract_strided_slice %14 {offsets = [4, 0, 0], sizes = [1, 8, 1], strides = [1, 1, 1]} : vector<8x8x1xf32> to vector<1x8x1xf32>
    %163 = vector.shape_cast %162 : vector<1x8x1xf32> to vector<8x1xf32>
    %164 = vector.broadcast %163 : vector<8x1xf32> to vector<8x128xf32>
    %165 = arith.mulf %161, %164 : vector<8x128xf32>
    %166 = arith.addf %148, %165 : vector<8x128xf32>
    %167 = vector.extract_strided_slice %157 {offsets = [0, 0], sizes = [8, 512], strides = [1, 1]} : vector<8x640xf32> to vector<8x512xf32>
    %c4 = arith.constant 4 : index
    %c0_61 = arith.constant 0 : index
    %c0_62 = arith.constant 0 : index
    %168 = vector.load %arg10[%c4, %c0_61, %c0_62] : memref<8x8x512xf32, #tpu.memory_space<vmem>>, vector<1x8x512xf32>
    %169 = vector.shape_cast %168 : vector<1x8x512xf32> to vector<8x512xf32>
    %170 = arith.addf %167, %169 : vector<8x512xf32>
    %171 = arith.negf %170 : vector<8x512xf32>
    %172 = math.exp %171 : vector<8x512xf32>
    %cst_63 = arith.constant 1.000000e+00 : f32
    %173 = vector.broadcast %cst_63 : f32 to vector<8x512xf32>
    %174 = arith.addf %173, %172 : vector<8x512xf32>
    %175 = arith.divf %173, %174 : vector<8x512xf32>
    %176 = vector.extract_strided_slice %175 {offsets = [0, 0], sizes = [8, 128], strides = [1, 1]} : vector<8x512xf32> to vector<8x128xf32>
    %177 = vector.extract_strided_slice %175 {offsets = [0, 128], sizes = [8, 128], strides = [1, 1]} : vector<8x512xf32> to vector<8x128xf32>
    %178 = vector.extract_strided_slice %175 {offsets = [0, 256], sizes = [8, 128], strides = [1, 1]} : vector<8x512xf32> to vector<8x128xf32>
    %179 = vector.extract_strided_slice %175 {offsets = [0, 384], sizes = [8, 128], strides = [1, 1]} : vector<8x512xf32> to vector<8x128xf32>
    %180 = arith.mulf %176, %166 : vector<8x128xf32>
    %181 = arith.mulf %177, %179 : vector<8x128xf32>
    %182 = arith.addf %180, %181 : vector<8x128xf32>
    %183 = math.tanh %182 : vector<8x128xf32>
    %184 = arith.mulf %178, %183 : vector<8x128xf32>
    %c4_64 = arith.constant 4 : index
    %c0_65 = arith.constant 0 : index
    %c0_66 = arith.constant 0 : index
    %185 = vector.load %arg8[%c4_64, %c0_65, %c0_66] : memref<8x8x128xf32, #tpu.memory_space<vmem>>, vector<1x8x128xf32>
    %186 = vector.shape_cast %185 : vector<1x8x128xf32> to vector<8x128xf32>
    %187 = vector.shape_cast %184 : vector<8x128xf32> to vector<1x8x128xf32>
    tpu.vector_store %arg8[%c4_64, %c0_65, %c0_66], %187 {strides = array<i32>} : memref<8x8x128xf32, #tpu.memory_space<vmem>>, vector<1x8x128xf32>,
    %188 = arith.addf %154, %184 : vector<8x128xf32>
    %189 = tpu.concatenate %184, %182 in 1 : vector<8x128xf32>, vector<8x128xf32> -> vector<8x256xf32>
    %c0_67 = arith.constant 0 : index
    %c0_68 = arith.constant 0 : index
    %190 = vector.load %arg4[%c0_67, %c0_68] : memref<256x640xf32, #tpu.memory_space<vmem>>, vector<256x640xf32>
    %cst_69 = arith.constant dense<0.000000e+00> : vector<8x640xf32>
    %191 = tpu.matmul %189, %190, %cst_69 {dimension_numbers = #tpu.dot_dimension_numbers<[1], [0], [0], [1], [0, 0, 1, 1], [], []>} : vector<8x256xf32>, vector<256x640xf32>, vector<8x640xf32> -> vector<8x640xf32>
    %192 = vector.extract_strided_slice %191 {offsets = [0, 512], sizes = [8, 128], strides = [1, 1]} : vector<8x640xf32> to vector<8x128xf32>
    %193 = vector.broadcast %15 : vector<1x128xf32> to vector<8x128xf32>
    %194 = arith.addf %192, %193 : vector<8x128xf32>
    %195 = math.tanh %194 : vector<8x128xf32>
    %196 = vector.extract_strided_slice %14 {offsets = [5, 0, 0], sizes = [1, 8, 1], strides = [1, 1, 1]} : vector<8x8x1xf32> to vector<1x8x1xf32>
    %197 = vector.shape_cast %196 : vector<1x8x1xf32> to vector<8x1xf32>
    %198 = vector.broadcast %197 : vector<8x1xf32> to vector<8x128xf32>
    %199 = arith.mulf %195, %198 : vector<8x128xf32>
    %200 = arith.addf %182, %199 : vector<8x128xf32>
    %201 = vector.extract_strided_slice %191 {offsets = [0, 0], sizes = [8, 512], strides = [1, 1]} : vector<8x640xf32> to vector<8x512xf32>
    %c5 = arith.constant 5 : index
    %c0_70 = arith.constant 0 : index
    %c0_71 = arith.constant 0 : index
    %202 = vector.load %arg10[%c5, %c0_70, %c0_71] : memref<8x8x512xf32, #tpu.memory_space<vmem>>, vector<1x8x512xf32>
    %203 = vector.shape_cast %202 : vector<1x8x512xf32> to vector<8x512xf32>
    %204 = arith.addf %201, %203 : vector<8x512xf32>
    %205 = arith.negf %204 : vector<8x512xf32>
    %206 = math.exp %205 : vector<8x512xf32>
    %cst_72 = arith.constant 1.000000e+00 : f32
    %207 = vector.broadcast %cst_72 : f32 to vector<8x512xf32>
    %208 = arith.addf %207, %206 : vector<8x512xf32>
    %209 = arith.divf %207, %208 : vector<8x512xf32>
    %210 = vector.extract_strided_slice %209 {offsets = [0, 0], sizes = [8, 128], strides = [1, 1]} : vector<8x512xf32> to vector<8x128xf32>
    %211 = vector.extract_strided_slice %209 {offsets = [0, 128], sizes = [8, 128], strides = [1, 1]} : vector<8x512xf32> to vector<8x128xf32>
    %212 = vector.extract_strided_slice %209 {offsets = [0, 256], sizes = [8, 128], strides = [1, 1]} : vector<8x512xf32> to vector<8x128xf32>
    %213 = vector.extract_strided_slice %209 {offsets = [0, 384], sizes = [8, 128], strides = [1, 1]} : vector<8x512xf32> to vector<8x128xf32>
    %214 = arith.mulf %210, %200 : vector<8x128xf32>
    %215 = arith.mulf %211, %213 : vector<8x128xf32>
    %216 = arith.addf %214, %215 : vector<8x128xf32>
    %217 = math.tanh %216 : vector<8x128xf32>
    %218 = arith.mulf %212, %217 : vector<8x128xf32>
    %c5_73 = arith.constant 5 : index
    %c0_74 = arith.constant 0 : index
    %c0_75 = arith.constant 0 : index
    %219 = vector.load %arg8[%c5_73, %c0_74, %c0_75] : memref<8x8x128xf32, #tpu.memory_space<vmem>>, vector<1x8x128xf32>
    %220 = vector.shape_cast %219 : vector<1x8x128xf32> to vector<8x128xf32>
    %221 = vector.shape_cast %218 : vector<8x128xf32> to vector<1x8x128xf32>
    tpu.vector_store %arg8[%c5_73, %c0_74, %c0_75], %221 {strides = array<i32>} : memref<8x8x128xf32, #tpu.memory_space<vmem>>, vector<1x8x128xf32>,
    %222 = arith.addf %188, %218 : vector<8x128xf32>
    %223 = tpu.concatenate %218, %216 in 1 : vector<8x128xf32>, vector<8x128xf32> -> vector<8x256xf32>
    %c0_76 = arith.constant 0 : index
    %c0_77 = arith.constant 0 : index
    %224 = vector.load %arg4[%c0_76, %c0_77] : memref<256x640xf32, #tpu.memory_space<vmem>>, vector<256x640xf32>
    %cst_78 = arith.constant dense<0.000000e+00> : vector<8x640xf32>
    %225 = tpu.matmul %223, %224, %cst_78 {dimension_numbers = #tpu.dot_dimension_numbers<[1], [0], [0], [1], [0, 0, 1, 1], [], []>} : vector<8x256xf32>, vector<256x640xf32>, vector<8x640xf32> -> vector<8x640xf32>
    %226 = vector.extract_strided_slice %225 {offsets = [0, 512], sizes = [8, 128], strides = [1, 1]} : vector<8x640xf32> to vector<8x128xf32>
    %227 = vector.broadcast %15 : vector<1x128xf32> to vector<8x128xf32>
    %228 = arith.addf %226, %227 : vector<8x128xf32>
    %229 = math.tanh %228 : vector<8x128xf32>
    %230 = vector.extract_strided_slice %14 {offsets = [6, 0, 0], sizes = [1, 8, 1], strides = [1, 1, 1]} : vector<8x8x1xf32> to vector<1x8x1xf32>
    %231 = vector.shape_cast %230 : vector<1x8x1xf32> to vector<8x1xf32>
    %232 = vector.broadcast %231 : vector<8x1xf32> to vector<8x128xf32>
    %233 = arith.mulf %229, %232 : vector<8x128xf32>
    %234 = arith.addf %216, %233 : vector<8x128xf32>
    %235 = vector.extract_strided_slice %225 {offsets = [0, 0], sizes = [8, 512], strides = [1, 1]} : vector<8x640xf32> to vector<8x512xf32>
    %c6 = arith.constant 6 : index
    %c0_79 = arith.constant 0 : index
    %c0_80 = arith.constant 0 : index
    %236 = vector.load %arg10[%c6, %c0_79, %c0_80] : memref<8x8x512xf32, #tpu.memory_space<vmem>>, vector<1x8x512xf32>
    %237 = vector.shape_cast %236 : vector<1x8x512xf32> to vector<8x512xf32>
    %238 = arith.addf %235, %237 : vector<8x512xf32>
    %239 = arith.negf %238 : vector<8x512xf32>
    %240 = math.exp %239 : vector<8x512xf32>
    %cst_81 = arith.constant 1.000000e+00 : f32
    %241 = vector.broadcast %cst_81 : f32 to vector<8x512xf32>
    %242 = arith.addf %241, %240 : vector<8x512xf32>
    %243 = arith.divf %241, %242 : vector<8x512xf32>
    %244 = vector.extract_strided_slice %243 {offsets = [0, 0], sizes = [8, 128], strides = [1, 1]} : vector<8x512xf32> to vector<8x128xf32>
    %245 = vector.extract_strided_slice %243 {offsets = [0, 128], sizes = [8, 128], strides = [1, 1]} : vector<8x512xf32> to vector<8x128xf32>
    %246 = vector.extract_strided_slice %243 {offsets = [0, 256], sizes = [8, 128], strides = [1, 1]} : vector<8x512xf32> to vector<8x128xf32>
    %247 = vector.extract_strided_slice %243 {offsets = [0, 384], sizes = [8, 128], strides = [1, 1]} : vector<8x512xf32> to vector<8x128xf32>
    %248 = arith.mulf %244, %234 : vector<8x128xf32>
    %249 = arith.mulf %245, %247 : vector<8x128xf32>
    %250 = arith.addf %248, %249 : vector<8x128xf32>
    %251 = math.tanh %250 : vector<8x128xf32>
    %252 = arith.mulf %246, %251 : vector<8x128xf32>
    %c6_82 = arith.constant 6 : index
    %c0_83 = arith.constant 0 : index
    %c0_84 = arith.constant 0 : index
    %253 = vector.load %arg8[%c6_82, %c0_83, %c0_84] : memref<8x8x128xf32, #tpu.memory_space<vmem>>, vector<1x8x128xf32>
    %254 = vector.shape_cast %253 : vector<1x8x128xf32> to vector<8x128xf32>
    %255 = vector.shape_cast %252 : vector<8x128xf32> to vector<1x8x128xf32>
    tpu.vector_store %arg8[%c6_82, %c0_83, %c0_84], %255 {strides = array<i32>} : memref<8x8x128xf32, #tpu.memory_space<vmem>>, vector<1x8x128xf32>,
    %256 = arith.addf %222, %252 : vector<8x128xf32>
    %257 = tpu.concatenate %252, %250 in 1 : vector<8x128xf32>, vector<8x128xf32> -> vector<8x256xf32>
    %c0_85 = arith.constant 0 : index
    %c0_86 = arith.constant 0 : index
    %258 = vector.load %arg4[%c0_85, %c0_86] : memref<256x640xf32, #tpu.memory_space<vmem>>, vector<256x640xf32>
    %cst_87 = arith.constant dense<0.000000e+00> : vector<8x640xf32>
    %259 = tpu.matmul %257, %258, %cst_87 {dimension_numbers = #tpu.dot_dimension_numbers<[1], [0], [0], [1], [0, 0, 1, 1], [], []>} : vector<8x256xf32>, vector<256x640xf32>, vector<8x640xf32> -> vector<8x640xf32>
    %260 = vector.extract_strided_slice %259 {offsets = [0, 512], sizes = [8, 128], strides = [1, 1]} : vector<8x640xf32> to vector<8x128xf32>
    %261 = vector.broadcast %15 : vector<1x128xf32> to vector<8x128xf32>
    %262 = arith.addf %260, %261 : vector<8x128xf32>
    %263 = math.tanh %262 : vector<8x128xf32>
    %264 = vector.extract_strided_slice %14 {offsets = [7, 0, 0], sizes = [1, 8, 1], strides = [1, 1, 1]} : vector<8x8x1xf32> to vector<1x8x1xf32>
    %265 = vector.shape_cast %264 : vector<1x8x1xf32> to vector<8x1xf32>
    %266 = vector.broadcast %265 : vector<8x1xf32> to vector<8x128xf32>
    %267 = arith.mulf %263, %266 : vector<8x128xf32>
    %268 = arith.addf %250, %267 : vector<8x128xf32>
    %269 = vector.extract_strided_slice %259 {offsets = [0, 0], sizes = [8, 512], strides = [1, 1]} : vector<8x640xf32> to vector<8x512xf32>
    %c7 = arith.constant 7 : index
    %c0_88 = arith.constant 0 : index
    %c0_89 = arith.constant 0 : index
    %270 = vector.load %arg10[%c7, %c0_88, %c0_89] : memref<8x8x512xf32, #tpu.memory_space<vmem>>, vector<1x8x512xf32>
    %271 = vector.shape_cast %270 : vector<1x8x512xf32> to vector<8x512xf32>
    %272 = arith.addf %269, %271 : vector<8x512xf32>
    %273 = arith.negf %272 : vector<8x512xf32>
    %274 = math.exp %273 : vector<8x512xf32>
    %cst_90 = arith.constant 1.000000e+00 : f32
    %275 = vector.broadcast %cst_90 : f32 to vector<8x512xf32>
    %276 = arith.addf %275, %274 : vector<8x512xf32>
    %277 = arith.divf %275, %276 : vector<8x512xf32>
    %278 = vector.extract_strided_slice %277 {offsets = [0, 0], sizes = [8, 128], strides = [1, 1]} : vector<8x512xf32> to vector<8x128xf32>
    %279 = vector.extract_strided_slice %277 {offsets = [0, 128], sizes = [8, 128], strides = [1, 1]} : vector<8x512xf32> to vector<8x128xf32>
    %280 = vector.extract_strided_slice %277 {offsets = [0, 256], sizes = [8, 128], strides = [1, 1]} : vector<8x512xf32> to vector<8x128xf32>
    %281 = vector.extract_strided_slice %277 {offsets = [0, 384], sizes = [8, 128], strides = [1, 1]} : vector<8x512xf32> to vector<8x128xf32>
    %282 = arith.mulf %278, %268 : vector<8x128xf32>
    %283 = arith.mulf %279, %281 : vector<8x128xf32>
    %284 = arith.addf %282, %283 : vector<8x128xf32>
    %285 = math.tanh %284 : vector<8x128xf32>
    %286 = arith.mulf %280, %285 : vector<8x128xf32>
    %c7_91 = arith.constant 7 : index
    %c0_92 = arith.constant 0 : index
    %c0_93 = arith.constant 0 : index
    %287 = vector.load %arg8[%c7_91, %c0_92, %c0_93] : memref<8x8x128xf32, #tpu.memory_space<vmem>>, vector<1x8x128xf32>
    %288 = vector.shape_cast %287 : vector<1x8x128xf32> to vector<8x128xf32>
    %289 = vector.shape_cast %286 : vector<8x128xf32> to vector<1x8x128xf32>
    tpu.vector_store %arg8[%c7_91, %c0_92, %c0_93], %289 {strides = array<i32>} : memref<8x8x128xf32, #tpu.memory_space<vmem>>, vector<1x8x128xf32>,
    %290 = arith.addf %256, %286 : vector<8x128xf32>
    %c0_94 = arith.constant 0 : index
    %c0_95 = arith.constant 0 : index
    %291 = vector.load %arg11[%c0_94, %c0_95] : memref<8x128xf32, #tpu.memory_space<vmem>>, vector<8x128xf32>
    tpu.vector_store %arg11[%c0_94, %c0_95], %286 {strides = array<i32>} : memref<8x128xf32, #tpu.memory_space<vmem>>, vector<8x128xf32>,
    %c0_96 = arith.constant 0 : index
    %c0_97 = arith.constant 0 : index
    %292 = vector.load %arg12[%c0_96, %c0_97] : memref<8x128xf32, #tpu.memory_space<vmem>>, vector<8x128xf32>
    tpu.vector_store %arg12[%c0_96, %c0_97], %284 {strides = array<i32>} : memref<8x128xf32, #tpu.memory_space<vmem>>, vector<8x128xf32>,
    %c0_98 = arith.constant 0 : index
    %c0_99 = arith.constant 0 : index
    %293 = vector.load %arg9[%c0_98, %c0_99] : memref<8x128xf32, #tpu.memory_space<vmem>>, vector<8x128xf32>
    %cst_100 = arith.constant 1.250000e-01 : f32
    %294 = vector.broadcast %cst_100 : f32 to vector<8x128xf32>
    %295 = arith.mulf %290, %294 : vector<8x128xf32>
    %296 = arith.addf %293, %295 : vector<8x128xf32>
    %c0_101 = arith.constant 0 : index
    %c0_102 = arith.constant 0 : index
    %297 = vector.load %arg9[%c0_101, %c0_102] : memref<8x128xf32, #tpu.memory_space<vmem>>, vector<8x128xf32>
    tpu.vector_store %arg9[%c0_101, %c0_102], %296 {strides = array<i32>} : memref<8x128xf32, #tpu.memory_space<vmem>>, vector<8x128xf32>,
    return
  }
  func.func @transform_0(%arg0: i32, %arg1: i32) -> (i32, i32, i32) {
    %c0_i32 = arith.constant 0 : i32
    %c0_i32_0 = arith.constant 0 : i32
    return %arg1, %arg0, %c0_i32 : i32, i32, i32
  }
  func.func @transform_1(%arg0: i32, %arg1: i32) -> (i32, i32, i32) {
    %c0_i32 = arith.constant 0 : i32
    %c0_i32_0 = arith.constant 0 : i32
    return %arg1, %arg0, %c0_i32 : i32, i32, i32
  }
  func.func @transform_2(%arg0: i32, %arg1: i32) -> (i32, i32) {
    %c0_i32 = arith.constant 0 : i32
    %c0_i32_0 = arith.constant 0 : i32
    %c0_i32_1 = arith.constant 0 : i32
    return %c0_i32, %c0_i32_0 : i32, i32
  }
  func.func @transform_3(%arg0: i32, %arg1: i32) -> (i32, i32) {
    %c0_i32 = arith.constant 0 : i32
    %c0_i32_0 = arith.constant 0 : i32
    %c0_i32_1 = arith.constant 0 : i32
    return %c0_i32, %c0_i32_0 : i32, i32
  }
  func.func @transform_4(%arg0: i32, %arg1: i32) -> (i32, i32) {
    %c0_i32 = arith.constant 0 : i32
    %c0_i32_0 = arith.constant 0 : i32
    %c0_i32_1 = arith.constant 0 : i32
    return %c0_i32, %c0_i32_0 : i32, i32
  }
  func.func @transform_5(%arg0: i32, %arg1: i32) -> (i32, i32) {
    %c0_i32 = arith.constant 0 : i32
    %c0_i32_0 = arith.constant 0 : i32
    %c0_i32_1 = arith.constant 0 : i32
    return %c0_i32, %c0_i32_0 : i32, i32
  }
  func.func @transform_6(%arg0: i32, %arg1: i32) -> (i32, i32, i32) {
    %c0_i32 = arith.constant 0 : i32
    %c0_i32_0 = arith.constant 0 : i32
    return %arg1, %arg0, %c0_i32 : i32, i32, i32
  }
  func.func @transform_7(%arg0: i32, %arg1: i32) -> (i32, i32) {
    %c0_i32 = arith.constant 0 : i32
    %c0_i32_0 = arith.constant 0 : i32
    return %arg0, %c0_i32 : i32, i32
  }
}

module attributes {stable_mosaic.version = 11 : i64} {
  func.func @kernel(%arg0: i32, %arg1: i32, %arg2: memref<8x8x128xf32, #tpu.memory_space<vmem>>, %arg3: memref<8x8x1xf32, #tpu.memory_space<vmem>>, %arg4: memref<256x640xf32, #tpu.memory_space<vmem>>, %arg5: memref<128x512xf32, #tpu.memory_space<vmem>>, %arg6: memref<1x512xf32, #tpu.memory_space<vmem>>, %arg7: memref<1x128xf32, #tpu.memory_space<vmem>>, %arg8: memref<8x8x128xf32, #tpu.memory_space<vmem>>, %arg9: memref<8x128xf32, #tpu.memory_space<vmem>>, %arg10: memref<8x8x512xf32, #tpu.memory_space<vmem>>, %arg11: memref<8x128xf32, #tpu.memory_space<vmem>>, %arg12: memref<8x128xf32, #tpu.memory_space<vmem>>) attributes {dimension_semantics = [#tpu.dimension_semantics<parallel>, #tpu.dimension_semantics<arbitrary>], iteration_bounds = array<i64: 1, 1>, scalar_prefetch = 0 : i64, scratch_operands = 3 : i64, tpu.core_type = #tpu.core_type<tc>, window_params = [{transform_indices = @transform_0, window_bounds = array<i64: 8, 8, 128>}, {transform_indices = @transform_1, window_bounds = array<i64: 8, 8, 1>}, {pipeline_mode = #tpu.pipeline_mode<synchronous>, transform_indices = @transform_2, window_bounds = array<i64: 256, 640>}, {pipeline_mode = #tpu.pipeline_mode<synchronous>, transform_indices = @transform_3, window_bounds = array<i64: 128, 512>}, {pipeline_mode = #tpu.pipeline_mode<synchronous>, transform_indices = @transform_4, window_bounds = array<i64: 1, 512>}, {pipeline_mode = #tpu.pipeline_mode<synchronous>, transform_indices = @transform_5, window_bounds = array<i64: 1, 128>}, {transform_indices = @transform_6, window_bounds = array<i64: 8, 8, 128>}, {transform_indices = @transform_7, window_bounds = array<i64: 8, 128>}]} {
    %c0_i32 = arith.constant 0 : i32
    %0 = arith.cmpi eq, %arg1, %c0_i32 : i32
    %1 = arith.extui %0 : i1 to i32
    %c0_i32_0 = arith.constant 0 : i32
    %2 = arith.cmpi ne, %1, %c0_i32_0 : i32
    scf.if %2 {
      %cst_103 = arith.constant 0.000000e+00 : f32
      %298 = vector.broadcast %cst_103 : f32 to vector<8x128xf32>
      %c0_104 = arith.constant 0 : index
      %c0_105 = arith.constant 0 : index
      %299 = vector.load %arg11[%c0_104, %c0_105] : memref<8x128xf32, #tpu.memory_space<vmem>>, vector<8x128xf32>
      tpu.vector_store %arg11[%c0_104, %c0_105], %298 {strides = array<i32>} : memref<8x128xf32, #tpu.memory_space<vmem>>, vector<8x128xf32>,
      %cst_106 = arith.constant 0.000000e+00 : f32
      %300 = vector.broadcast %cst_106 : f32 to vector<8x128xf32>
      %c0_107 = arith.constant 0 : index
      %c0_108 = arith.constant 0 : index
      %301 = vector.load %arg12[%c0_107, %c0_108] : memref<8x128xf32, #tpu.memory_space<vmem>>, vector<8x128xf32>
      tpu.vector_store %arg12[%c0_107, %c0_108], %300 {strides = array<i32>} : memref<8x128xf32, #tpu.memory_space<vmem>>, vector<8x128xf32>,
      %cst_109 = arith.constant 0.000000e+00 : f32
      %302 = vector.broadcast %cst_109 : f32 to vector<8x128xf32>
      %c0_110 = arith.constant 0 : index
      %c0_111 = arith.constant 0 : index
      %303 = vector.load %arg9[%c0_110, %c0_111] : memref<8x128xf32, #tpu.memory_space<vmem>>, vector<8x128xf32>
      tpu.vector_store %arg9[%c0_110, %c0_111], %302 {strides = array<i32>} : memref<8x128xf32, #tpu.memory_space<vmem>>, vector<8x128xf32>,
    } else {
    }
    %c0 = arith.constant 0 : index
    %c0_1 = arith.constant 0 : index
    %c0_2 = arith.constant 0 : index
    %3 = vector.load %arg2[%c0, %c0_1, %c0_2] : memref<8x8x128xf32, #tpu.memory_space<vmem>>, vector<8x8x128xf32>
    %4 = vector.shape_cast %3 : vector<8x8x128xf32> to vector<64x128xf32>
    %c0_3 = arith.constant 0 : index
    %c0_4 = arith.constant 0 : index
    %5 = vector.load %arg5[%c0_3, %c0_4] : memref<128x512xf32, #tpu.memory_space<vmem>>, vector<128x512xf32>
    %cst = arith.constant dense<0.000000e+00> : vector<64x512xf32>
    %6 = tpu.matmul %4, %5, %cst {dimension_numbers = #tpu.dot_dimension_numbers<[1], [0], [0], [1], [0, 0, 1, 1], [], []>} : vector<64x128xf32>, vector<128x512xf32>, vector<64x512xf32> -> vector<64x512xf32>
    %c0_5 = arith.constant 0 : index
    %c0_6 = arith.constant 0 : index
    %7 = vector.load %arg6[%c0_5, %c0_6] : memref<1x512xf32, #tpu.memory_space<vmem>>, vector<1x512xf32>
    %8 = vector.broadcast %7 : vector<1x512xf32> to vector<64x512xf32>
    %9 = arith.addf %6, %8 : vector<64x512xf32>
    %10 = vector.shape_cast %9 : vector<64x512xf32> to vector<8x8x512xf32>
    %c0_7 = arith.constant 0 : index
    %c0_8 = arith.constant 0 : index
    %c0_9 = arith.constant 0 : index
    %11 = vector.load %arg10[%c0_7, %c0_8, %c0_9] : memref<8x8x512xf32, #tpu.memory_space<vmem>>, vector<8x8x512xf32>
    tpu.vector_store %arg10[%c0_7, %c0_8, %c0_9], %10 {strides = array<i32>} : memref<8x8x512xf32, #tpu.memory_space<vmem>>, vector<8x8x512xf32>,
    %c0_10 = arith.constant 0 : index
    %c0_11 = arith.constant 0 : index
    %c0_12 = arith.constant 0 : index
    %12 = vector.load %arg3[%c0_10, %c0_11, %c0_12] : memref<8x8x1xf32, #tpu.memory_space<vmem>>, vector<8x8x1xf32>
    %cst_13 = arith.constant 1.000000e+00 : f32
    %13 = vector.broadcast %cst_13 : f32 to vector<8x8x1xf32>
    %14 = arith.subf %12, %13 : vector<8x8x1xf32>
    %c0_14 = arith.constant 0 : index
    %c0_15 = arith.constant 0 : index
    %15 = vector.load %arg7[%c0_14, %c0_15] : memref<1x128xf32, #tpu.memory_space<vmem>>, vector<1x128xf32>
    %c0_16 = arith.constant 0 : index
    %c0_17 = arith.constant 0 : index
    %16 = vector.load %arg11[%c0_16, %c0_17] : memref<8x128xf32, #tpu.memory_space<vmem>>, vector<8x128xf32>
    %c0_18 = arith.constant 0 : index
    %c0_19 = arith.constant 0 : index
    %17 = vector.load %arg12[%c0_18, %c0_19] : memref<8x128xf32, #tpu.memory_space<vmem>>, vector<8x128xf32>
    %cst_20 = arith.constant 0.000000e+00 : f32
    %18 = vector.broadcast %cst_20 : f32 to vector<8x128xf32>
    %19 = tpu.concatenate %16, %17 in 1 : vector<8x128xf32>, vector<8x128xf32> -> vector<8x256xf32>
    %c0_21 = arith.constant 0 : index
    %c0_22 = arith.constant 0 : index
    %20 = vector.load %arg4[%c0_21, %c0_22] : memref<256x640xf32, #tpu.memory_space<vmem>>, vector<256x640xf32>
    %cst_23 = arith.constant dense<0.000000e+00> : vector<8x640xf32>
    %21 = tpu.matmul %19, %20, %cst_23 {dimension_numbers = #tpu.dot_dimension_numbers<[1], [0], [0], [1], [0, 0, 1, 1], [], []>} : vector<8x256xf32>, vector<256x640xf32>, vector<8x640xf32> -> vector<8x640xf32>
    %22 = vector.extract_strided_slice %21 {offsets = [0, 512], sizes = [8, 128], strides = [1, 1]} : vector<8x640xf32> to vector<8x128xf32>
    %23 = vector.broadcast %15 : vector<1x128xf32> to vector<8x128xf32>
    %24 = arith.addf %22, %23 : vector<8x128xf32>
    %25 = math.tanh %24 : vector<8x128xf32>
    %26 = vector.extract_strided_slice %14 {offsets = [0, 0, 0], sizes = [1, 8, 1], strides = [1, 1, 1]} : vector<8x8x1xf32> to vector<1x8x1xf32>
    %27 = vector.shape_cast %26 : vector<1x8x1xf32> to vector<8x1xf32>
    %28 = vector.broadcast %27 : vector<8x1xf32> to vector<8x128xf32>
    %29 = arith.mulf %25, %28 : vector<8x128xf32>
    %30 = arith.addf %17, %29 : vector<8x128xf32>
    %31 = vector.extract_strided_slice %21 {offsets = [0, 0], sizes = [8, 512], strides = [1, 1]} : vector<8x640xf32> to vector<8x512xf32>
    %c0_24 = arith.constant 0 : index
    %c0_25 = arith.constant 0 : index
    %c0_26 = arith.constant 0 : index
    %32 = vector.load %arg10[%c0_24, %c0_25, %c0_26] : memref<8x8x512xf32, #tpu.memory_space<vmem>>, vector<1x8x512xf32>
    %33 = vector.shape_cast %32 : vector<1x8x512xf32> to vector<8x512xf32>
    %34 = arith.addf %31, %33 : vector<8x512xf32>
    %35 = arith.negf %34 : vector<8x512xf32>
    %36 = math.exp %35 : vector<8x512xf32>
    %cst_27 = arith.constant 1.000000e+00 : f32
    %37 = vector.broadcast %cst_27 : f32 to vector<8x512xf32>
    %38 = arith.addf %37, %36 : vector<8x512xf32>
    %39 = arith.divf %37, %38 : vector<8x512xf32>
    %40 = vector.extract_strided_slice %39 {offsets = [0, 0], sizes = [8, 128], strides = [1, 1]} : vector<8x512xf32> to vector<8x128xf32>
    %41 = vector.extract_strided_slice %39 {offsets = [0, 128], sizes = [8, 128], strides = [1, 1]} : vector<8x512xf32> to vector<8x128xf32>
    %42 = vector.extract_strided_slice %39 {offsets = [0, 256], sizes = [8, 128], strides = [1, 1]} : vector<8x512xf32> to vector<8x128xf32>
    %43 = vector.extract_strided_slice %39 {offsets = [0, 384], sizes = [8, 128], strides = [1, 1]} : vector<8x512xf32> to vector<8x128xf32>
    %44 = arith.mulf %40, %30 : vector<8x128xf32>
    %45 = arith.mulf %41, %43 : vector<8x128xf32>
    %46 = arith.addf %44, %45 : vector<8x128xf32>
    %47 = math.tanh %46 : vector<8x128xf32>
    %48 = arith.mulf %42, %47 : vector<8x128xf32>
    %c0_28 = arith.constant 0 : index
    %c0_29 = arith.constant 0 : index
    %c0_30 = arith.constant 0 : index
    %49 = vector.load %arg8[%c0_28, %c0_29, %c0_30] : memref<8x8x128xf32, #tpu.memory_space<vmem>>, vector<1x8x128xf32>
    %50 = vector.shape_cast %49 : vector<1x8x128xf32> to vector<8x128xf32>
    %51 = vector.shape_cast %48 : vector<8x128xf32> to vector<1x8x128xf32>
    tpu.vector_store %arg8[%c0_28, %c0_29, %c0_30], %51 {strides = array<i32>} : memref<8x8x128xf32, #tpu.memory_space<vmem>>, vector<1x8x128xf32>,
    %52 = arith.addf %18, %48 : vector<8x128xf32>
    %53 = tpu.concatenate %48, %46 in 1 : vector<8x128xf32>, vector<8x128xf32> -> vector<8x256xf32>
    %c0_31 = arith.constant 0 : index
    %c0_32 = arith.constant 0 : index
    %54 = vector.load %arg4[%c0_31, %c0_32] : memref<256x640xf32, #tpu.memory_space<vmem>>, vector<256x640xf32>
    %cst_33 = arith.constant dense<0.000000e+00> : vector<8x640xf32>
    %55 = tpu.matmul %53, %54, %cst_33 {dimension_numbers = #tpu.dot_dimension_numbers<[1], [0], [0], [1], [0, 0, 1, 1], [], []>} : vector<8x256xf32>, vector<256x640xf32>, vector<8x640xf32> -> vector<8x640xf32>
    %56 = vector.extract_strided_slice %55 {offsets = [0, 512], sizes = [8, 128], strides = [1, 1]} : vector<8x640xf32> to vector<8x128xf32>
    %57 = vector.broadcast %15 : vector<1x128xf32> to vector<8x128xf32>
    %58 = arith.addf %56, %57 : vector<8x128xf32>
    %59 = math.tanh %58 : vector<8x128xf32>
    %60 = vector.extract_strided_slice %14 {offsets = [1, 0, 0], sizes = [1, 8, 1], strides = [1, 1, 1]} : vector<8x8x1xf32> to vector<1x8x1xf32>
    %61 = vector.shape_cast %60 : vector<1x8x1xf32> to vector<8x1xf32>
    %62 = vector.broadcast %61 : vector<8x1xf32> to vector<8x128xf32>
    %63 = arith.mulf %59, %62 : vector<8x128xf32>
    %64 = arith.addf %46, %63 : vector<8x128xf32>
    %65 = vector.extract_strided_slice %55 {offsets = [0, 0], sizes = [8, 512], strides = [1, 1]} : vector<8x640xf32> to vector<8x512xf32>
    %c1 = arith.constant 1 : index
    %c0_34 = arith.constant 0 : index
    %c0_35 = arith.constant 0 : index
    %66 = vector.load %arg10[%c1, %c0_34, %c0_35] : memref<8x8x512xf32, #tpu.memory_space<vmem>>, vector<1x8x512xf32>
    %67 = vector.shape_cast %66 : vector<1x8x512xf32> to vector<8x512xf32>
    %68 = arith.addf %65, %67 : vector<8x512xf32>
    %69 = arith.negf %68 : vector<8x512xf32>
    %70 = math.exp %69 : vector<8x512xf32>
    %cst_36 = arith.constant 1.000000e+00 : f32
    %71 = vector.broadcast %cst_36 : f32 to vector<8x512xf32>
    %72 = arith.addf %71, %70 : vector<8x512xf32>
    %73 = arith.divf %71, %72 : vector<8x512xf32>
    %74 = vector.extract_strided_slice %73 {offsets = [0, 0], sizes = [8, 128], strides = [1, 1]} : vector<8x512xf32> to vector<8x128xf32>
    %75 = vector.extract_strided_slice %73 {offsets = [0, 128], sizes = [8, 128], strides = [1, 1]} : vector<8x512xf32> to vector<8x128xf32>
    %76 = vector.extract_strided_slice %73 {offsets = [0, 256], sizes = [8, 128], strides = [1, 1]} : vector<8x512xf32> to vector<8x128xf32>
    %77 = vector.extract_strided_slice %73 {offsets = [0, 384], sizes = [8, 128], strides = [1, 1]} : vector<8x512xf32> to vector<8x128xf32>
    %78 = arith.mulf %74, %64 : vector<8x128xf32>
    %79 = arith.mulf %75, %77 : vector<8x128xf32>
    %80 = arith.addf %78, %79 : vector<8x128xf32>
    %81 = math.tanh %80 : vector<8x128xf32>
    %82 = arith.mulf %76, %81 : vector<8x128xf32>
    %c1_37 = arith.constant 1 : index
    %c0_38 = arith.constant 0 : index
    %c0_39 = arith.constant 0 : index
    %83 = vector.load %arg8[%c1_37, %c0_38, %c0_39] : memref<8x8x128xf32, #tpu.memory_space<vmem>>, vector<1x8x128xf32>
    %84 = vector.shape_cast %83 : vector<1x8x128xf32> to vector<8x128xf32>
    %85 = vector.shape_cast %82 : vector<8x128xf32> to vector<1x8x128xf32>
    tpu.vector_store %arg8[%c1_37, %c0_38, %c0_39], %85 {strides = array<i32>} : memref<8x8x128xf32, #tpu.memory_space<vmem>>, vector<1x8x128xf32>,
    %86 = arith.addf %52, %82 : vector<8x128xf32>
    %87 = tpu.concatenate %82, %80 in 1 : vector<8x128xf32>, vector<8x128xf32> -> vector<8x256xf32>
    %c0_40 = arith.constant 0 : index
    %c0_41 = arith.constant 0 : index
    %88 = vector.load %arg4[%c0_40, %c0_41] : memref<256x640xf32, #tpu.memory_space<vmem>>, vector<256x640xf32>
    %cst_42 = arith.constant dense<0.000000e+00> : vector<8x640xf32>
    %89 = tpu.matmul %87, %88, %cst_42 {dimension_numbers = #tpu.dot_dimension_numbers<[1], [0], [0], [1], [0, 0, 1, 1], [], []>} : vector<8x256xf32>, vector<256x640xf32>, vector<8x640xf32> -> vector<8x640xf32>
    %90 = vector.extract_strided_slice %89 {offsets = [0, 512], sizes = [8, 128], strides = [1, 1]} : vector<8x640xf32> to vector<8x128xf32>
    %91 = vector.broadcast %15 : vector<1x128xf32> to vector<8x128xf32>
    %92 = arith.addf %90, %91 : vector<8x128xf32>
    %93 = math.tanh %92 : vector<8x128xf32>
    %94 = vector.extract_strided_slice %14 {offsets = [2, 0, 0], sizes = [1, 8, 1], strides = [1, 1, 1]} : vector<8x8x1xf32> to vector<1x8x1xf32>
    %95 = vector.shape_cast %94 : vector<1x8x1xf32> to vector<8x1xf32>
    %96 = vector.broadcast %95 : vector<8x1xf32> to vector<8x128xf32>
    %97 = arith.mulf %93, %96 : vector<8x128xf32>
    %98 = arith.addf %80, %97 : vector<8x128xf32>
    %99 = vector.extract_strided_slice %89 {offsets = [0, 0], sizes = [8, 512], strides = [1, 1]} : vector<8x640xf32> to vector<8x512xf32>
    %c2 = arith.constant 2 : index
    %c0_43 = arith.constant 0 : index
    %c0_44 = arith.constant 0 : index
    %100 = vector.load %arg10[%c2, %c0_43, %c0_44] : memref<8x8x512xf32, #tpu.memory_space<vmem>>, vector<1x8x512xf32>
    %101 = vector.shape_cast %100 : vector<1x8x512xf32> to vector<8x512xf32>
    %102 = arith.addf %99, %101 : vector<8x512xf32>
    %103 = arith.negf %102 : vector<8x512xf32>
    %104 = math.exp %103 : vector<8x512xf32>
    %cst_45 = arith.constant 1.000000e+00 : f32
    %105 = vector.broadcast %cst_45 : f32 to vector<8x512xf32>
    %106 = arith.addf %105, %104 : vector<8x512xf32>
    %107 = arith.divf %105, %106 : vector<8x512xf32>
    %108 = vector.extract_strided_slice %107 {offsets = [0, 0], sizes = [8, 128], strides = [1, 1]} : vector<8x512xf32> to vector<8x128xf32>
    %109 = vector.extract_strided_slice %107 {offsets = [0, 128], sizes = [8, 128], strides = [1, 1]} : vector<8x512xf32> to vector<8x128xf32>
    %110 = vector.extract_strided_slice %107 {offsets = [0, 256], sizes = [8, 128], strides = [1, 1]} : vector<8x512xf32> to vector<8x128xf32>
    %111 = vector.extract_strided_slice %107 {offsets = [0, 384], sizes = [8, 128], strides = [1, 1]} : vector<8x512xf32> to vector<8x128xf32>
    %112 = arith.mulf %108, %98 : vector<8x128xf32>
    %113 = arith.mulf %109, %111 : vector<8x128xf32>
    %114 = arith.addf %112, %113 : vector<8x128xf32>
    %115 = math.tanh %114 : vector<8x128xf32>
    %116 = arith.mulf %110, %115 : vector<8x128xf32>
    %c2_46 = arith.constant 2 : index
    %c0_47 = arith.constant 0 : index
    %c0_48 = arith.constant 0 : index
    %117 = vector.load %arg8[%c2_46, %c0_47, %c0_48] : memref<8x8x128xf32, #tpu.memory_space<vmem>>, vector<1x8x128xf32>
    %118 = vector.shape_cast %117 : vector<1x8x128xf32> to vector<8x128xf32>
    %119 = vector.shape_cast %116 : vector<8x128xf32> to vector<1x8x128xf32>
    tpu.vector_store %arg8[%c2_46, %c0_47, %c0_48], %119 {strides = array<i32>} : memref<8x8x128xf32, #tpu.memory_space<vmem>>, vector<1x8x128xf32>,
    %120 = arith.addf %86, %116 : vector<8x128xf32>
    %121 = tpu.concatenate %116, %114 in 1 : vector<8x128xf32>, vector<8x128xf32> -> vector<8x256xf32>
    %c0_49 = arith.constant 0 : index
    %c0_50 = arith.constant 0 : index
    %122 = vector.load %arg4[%c0_49, %c0_50] : memref<256x640xf32, #tpu.memory_space<vmem>>, vector<256x640xf32>
    %cst_51 = arith.constant dense<0.000000e+00> : vector<8x640xf32>
    %123 = tpu.matmul %121, %122, %cst_51 {dimension_numbers = #tpu.dot_dimension_numbers<[1], [0], [0], [1], [0, 0, 1, 1], [], []>} : vector<8x256xf32>, vector<256x640xf32>, vector<8x640xf32> -> vector<8x640xf32>
    %124 = vector.extract_strided_slice %123 {offsets = [0, 512], sizes = [8, 128], strides = [1, 1]} : vector<8x640xf32> to vector<8x128xf32>
    %125 = vector.broadcast %15 : vector<1x128xf32> to vector<8x128xf32>
    %126 = arith.addf %124, %125 : vector<8x128xf32>
    %127 = math.tanh %126 : vector<8x128xf32>
    %128 = vector.extract_strided_slice %14 {offsets = [3, 0, 0], sizes = [1, 8, 1], strides = [1, 1, 1]} : vector<8x8x1xf32> to vector<1x8x1xf32>
    %129 = vector.shape_cast %128 : vector<1x8x1xf32> to vector<8x1xf32>
    %130 = vector.broadcast %129 : vector<8x1xf32> to vector<8x128xf32>
    %131 = arith.mulf %127, %130 : vector<8x128xf32>
    %132 = arith.addf %114, %131 : vector<8x128xf32>
    %133 = vector.extract_strided_slice %123 {offsets = [0, 0], sizes = [8, 512], strides = [1, 1]} : vector<8x640xf32> to vector<8x512xf32>
    %c3 = arith.constant 3 : index
    %c0_52 = arith.constant 0 : index
    %c0_53 = arith.constant 0 : index
    %134 = vector.load %arg10[%c3, %c0_52, %c0_53] : memref<8x8x512xf32, #tpu.memory_space<vmem>>, vector<1x8x512xf32>
    %135 = vector.shape_cast %134 : vector<1x8x512xf32> to vector<8x512xf32>
    %136 = arith.addf %133, %135 : vector<8x512xf32>
    %137 = arith.negf %136 : vector<8x512xf32>
    %138 = math.exp %137 : vector<8x512xf32>
    %cst_54 = arith.constant 1.000000e+00 : f32
    %139 = vector.broadcast %cst_54 : f32 to vector<8x512xf32>
    %140 = arith.addf %139, %138 : vector<8x512xf32>
    %141 = arith.divf %139, %140 : vector<8x512xf32>
    %142 = vector.extract_strided_slice %141 {offsets = [0, 0], sizes = [8, 128], strides = [1, 1]} : vector<8x512xf32> to vector<8x128xf32>
    %143 = vector.extract_strided_slice %141 {offsets = [0, 128], sizes = [8, 128], strides = [1, 1]} : vector<8x512xf32> to vector<8x128xf32>
    %144 = vector.extract_strided_slice %141 {offsets = [0, 256], sizes = [8, 128], strides = [1, 1]} : vector<8x512xf32> to vector<8x128xf32>
    %145 = vector.extract_strided_slice %141 {offsets = [0, 384], sizes = [8, 128], strides = [1, 1]} : vector<8x512xf32> to vector<8x128xf32>
    %146 = arith.mulf %142, %132 : vector<8x128xf32>
    %147 = arith.mulf %143, %145 : vector<8x128xf32>
    %148 = arith.addf %146, %147 : vector<8x128xf32>
    %149 = math.tanh %148 : vector<8x128xf32>
    %150 = arith.mulf %144, %149 : vector<8x128xf32>
    %c3_55 = arith.constant 3 : index
    %c0_56 = arith.constant 0 : index
    %c0_57 = arith.constant 0 : index
    %151 = vector.load %arg8[%c3_55, %c0_56, %c0_57] : memref<8x8x128xf32, #tpu.memory_space<vmem>>, vector<1x8x128xf32>
    %152 = vector.shape_cast %151 : vector<1x8x128xf32> to vector<8x128xf32>
    %153 = vector.shape_cast %150 : vector<8x128xf32> to vector<1x8x128xf32>
    tpu.vector_store %arg8[%c3_55, %c0_56, %c0_57], %153 {strides = array<i32>} : memref<8x8x128xf32, #tpu.memory_space<vmem>>, vector<1x8x128xf32>,
    %154 = arith.addf %120, %150 : vector<8x128xf32>
    %155 = tpu.concatenate %150, %148 in 1 : vector<8x128xf32>, vector<8x128xf32> -> vector<8x256xf32>
    %c0_58 = arith.constant 0 : index
    %c0_59 = arith.constant 0 : index
    %156 = vector.load %arg4[%c0_58, %c0_59] : memref<256x640xf32, #tpu.memory_space<vmem>>, vector<256x640xf32>
    %cst_60 = arith.constant dense<0.000000e+00> : vector<8x640xf32>
    %157 = tpu.matmul %155, %156, %cst_60 {dimension_numbers = #tpu.dot_dimension_numbers<[1], [0], [0], [1], [0, 0, 1, 1], [], []>} : vector<8x256xf32>, vector<256x640xf32>, vector<8x640xf32> -> vector<8x640xf32>
    %158 = vector.extract_strided_slice %157 {offsets = [0, 512], sizes = [8, 128], strides = [1, 1]} : vector<8x640xf32> to vector<8x128xf32>
    %159 = vector.broadcast %15 : vector<1x128xf32> to vector<8x128xf32>
    %160 = arith.addf %158, %159 : vector<8x128xf32>
    %161 = math.tanh %160 : vector<8x128xf32>
    %162 = vector.extract_strided_slice %14 {offsets = [4, 0, 0], sizes = [1, 8, 1], strides = [1, 1, 1]} : vector<8x8x1xf32> to vector<1x8x1xf32>
    %163 = vector.shape_cast %162 : vector<1x8x1xf32> to vector<8x1xf32>
    %164 = vector.broadcast %163 : vector<8x1xf32> to vector<8x128xf32>
    %165 = arith.mulf %161, %164 : vector<8x128xf32>
    %166 = arith.addf %148, %165 : vector<8x128xf32>
    %167 = vector.extract_strided_slice %157 {offsets = [0, 0], sizes = [8, 512], strides = [1, 1]} : vector<8x640xf32> to vector<8x512xf32>
    %c4 = arith.constant 4 : index
    %c0_61 = arith.constant 0 : index
    %c0_62 = arith.constant 0 : index
    %168 = vector.load %arg10[%c4, %c0_61, %c0_62] : memref<8x8x512xf32, #tpu.memory_space<vmem>>, vector<1x8x512xf32>
    %169 = vector.shape_cast %168 : vector<1x8x512xf32> to vector<8x512xf32>
    %170 = arith.addf %167, %169 : vector<8x512xf32>
    %171 = arith.negf %170 : vector<8x512xf32>
    %172 = math.exp %171 : vector<8x512xf32>
    %cst_63 = arith.constant 1.000000e+00 : f32
    %173 = vector.broadcast %cst_63 : f32 to vector<8x512xf32>
    %174 = arith.addf %173, %172 : vector<8x512xf32>
    %175 = arith.divf %173, %174 : vector<8x512xf32>
    %176 = vector.extract_strided_slice %175 {offsets = [0, 0], sizes = [8, 128], strides = [1, 1]} : vector<8x512xf32> to vector<8x128xf32>
    %177 = vector.extract_strided_slice %175 {offsets = [0, 128], sizes = [8, 128], strides = [1, 1]} : vector<8x512xf32> to vector<8x128xf32>
    %178 = vector.extract_strided_slice %175 {offsets = [0, 256], sizes = [8, 128], strides = [1, 1]} : vector<8x512xf32> to vector<8x128xf32>
    %179 = vector.extract_strided_slice %175 {offsets = [0, 384], sizes = [8, 128], strides = [1, 1]} : vector<8x512xf32> to vector<8x128xf32>
    %180 = arith.mulf %176, %166 : vector<8x128xf32>
    %181 = arith.mulf %177, %179 : vector<8x128xf32>
    %182 = arith.addf %180, %181 : vector<8x128xf32>
    %183 = math.tanh %182 : vector<8x128xf32>
    %184 = arith.mulf %178, %183 : vector<8x128xf32>
    %c4_64 = arith.constant 4 : index
    %c0_65 = arith.constant 0 : index
    %c0_66 = arith.constant 0 : index
    %185 = vector.load %arg8[%c4_64, %c0_65, %c0_66] : memref<8x8x128xf32, #tpu.memory_space<vmem>>, vector<1x8x128xf32>
    %186 = vector.shape_cast %185 : vector<1x8x128xf32> to vector<8x128xf32>
    %187 = vector.shape_cast %184 : vector<8x128xf32> to vector<1x8x128xf32>
    tpu.vector_store %arg8[%c4_64, %c0_65, %c0_66], %187 {strides = array<i32>} : memref<8x8x128xf32, #tpu.memory_space<vmem>>, vector<1x8x128xf32>,
    %188 = arith.addf %154, %184 : vector<8x128xf32>
    %189 = tpu.concatenate %184, %182 in 1 : vector<8x128xf32>, vector<8x128xf32> -> vector<8x256xf32>
    %c0_67 = arith.constant 0 : index
    %c0_68 = arith.constant 0 : index
    %190 = vector.load %arg4[%c0_67, %c0_68] : memref<256x640xf32, #tpu.memory_space<vmem>>, vector<256x640xf32>
    %cst_69 = arith.constant dense<0.000000e+00> : vector<8x640xf32>
    %191 = tpu.matmul %189, %190, %cst_69 {dimension_numbers = #tpu.dot_dimension_numbers<[1], [0], [0], [1], [0, 0, 1, 1], [], []>} : vector<8x256xf32>, vector<256x640xf32>, vector<8x640xf32> -> vector<8x640xf32>
    %192 = vector.extract_strided_slice %191 {offsets = [0, 512], sizes = [8, 128], strides = [1, 1]} : vector<8x640xf32> to vector<8x128xf32>
    %193 = vector.broadcast %15 : vector<1x128xf32> to vector<8x128xf32>
    %194 = arith.addf %192, %193 : vector<8x128xf32>
    %195 = math.tanh %194 : vector<8x128xf32>
    %196 = vector.extract_strided_slice %14 {offsets = [5, 0, 0], sizes = [1, 8, 1], strides = [1, 1, 1]} : vector<8x8x1xf32> to vector<1x8x1xf32>
    %197 = vector.shape_cast %196 : vector<1x8x1xf32> to vector<8x1xf32>
    %198 = vector.broadcast %197 : vector<8x1xf32> to vector<8x128xf32>
    %199 = arith.mulf %195, %198 : vector<8x128xf32>
    %200 = arith.addf %182, %199 : vector<8x128xf32>
    %201 = vector.extract_strided_slice %191 {offsets = [0, 0], sizes = [8, 512], strides = [1, 1]} : vector<8x640xf32> to vector<8x512xf32>
    %c5 = arith.constant 5 : index
    %c0_70 = arith.constant 0 : index
    %c0_71 = arith.constant 0 : index
    %202 = vector.load %arg10[%c5, %c0_70, %c0_71] : memref<8x8x512xf32, #tpu.memory_space<vmem>>, vector<1x8x512xf32>
    %203 = vector.shape_cast %202 : vector<1x8x512xf32> to vector<8x512xf32>
    %204 = arith.addf %201, %203 : vector<8x512xf32>
    %205 = arith.negf %204 : vector<8x512xf32>
    %206 = math.exp %205 : vector<8x512xf32>
    %cst_72 = arith.constant 1.000000e+00 : f32
    %207 = vector.broadcast %cst_72 : f32 to vector<8x512xf32>
    %208 = arith.addf %207, %206 : vector<8x512xf32>
    %209 = arith.divf %207, %208 : vector<8x512xf32>
    %210 = vector.extract_strided_slice %209 {offsets = [0, 0], sizes = [8, 128], strides = [1, 1]} : vector<8x512xf32> to vector<8x128xf32>
    %211 = vector.extract_strided_slice %209 {offsets = [0, 128], sizes = [8, 128], strides = [1, 1]} : vector<8x512xf32> to vector<8x128xf32>
    %212 = vector.extract_strided_slice %209 {offsets = [0, 256], sizes = [8, 128], strides = [1, 1]} : vector<8x512xf32> to vector<8x128xf32>
    %213 = vector.extract_strided_slice %209 {offsets = [0, 384], sizes = [8, 128], strides = [1, 1]} : vector<8x512xf32> to vector<8x128xf32>
    %214 = arith.mulf %210, %200 : vector<8x128xf32>
    %215 = arith.mulf %211, %213 : vector<8x128xf32>
    %216 = arith.addf %214, %215 : vector<8x128xf32>
    %217 = math.tanh %216 : vector<8x128xf32>
    %218 = arith.mulf %212, %217 : vector<8x128xf32>
    %c5_73 = arith.constant 5 : index
    %c0_74 = arith.constant 0 : index
    %c0_75 = arith.constant 0 : index
    %219 = vector.load %arg8[%c5_73, %c0_74, %c0_75] : memref<8x8x128xf32, #tpu.memory_space<vmem>>, vector<1x8x128xf32>
    %220 = vector.shape_cast %219 : vector<1x8x128xf32> to vector<8x128xf32>
    %221 = vector.shape_cast %218 : vector<8x128xf32> to vector<1x8x128xf32>
    tpu.vector_store %arg8[%c5_73, %c0_74, %c0_75], %221 {strides = array<i32>} : memref<8x8x128xf32, #tpu.memory_space<vmem>>, vector<1x8x128xf32>,
    %222 = arith.addf %188, %218 : vector<8x128xf32>
    %223 = tpu.concatenate %218, %216 in 1 : vector<8x128xf32>, vector<8x128xf32> -> vector<8x256xf32>
    %c0_76 = arith.constant 0 : index
    %c0_77 = arith.constant 0 : index
    %224 = vector.load %arg4[%c0_76, %c0_77] : memref<256x640xf32, #tpu.memory_space<vmem>>, vector<256x640xf32>
    %cst_78 = arith.constant dense<0.000000e+00> : vector<8x640xf32>
    %225 = tpu.matmul %223, %224, %cst_78 {dimension_numbers = #tpu.dot_dimension_numbers<[1], [0], [0], [1], [0, 0, 1, 1], [], []>} : vector<8x256xf32>, vector<256x640xf32>, vector<8x640xf32> -> vector<8x640xf32>
    %226 = vector.extract_strided_slice %225 {offsets = [0, 512], sizes = [8, 128], strides = [1, 1]} : vector<8x640xf32> to vector<8x128xf32>
    %227 = vector.broadcast %15 : vector<1x128xf32> to vector<8x128xf32>
    %228 = arith.addf %226, %227 : vector<8x128xf32>
    %229 = math.tanh %228 : vector<8x128xf32>
    %230 = vector.extract_strided_slice %14 {offsets = [6, 0, 0], sizes = [1, 8, 1], strides = [1, 1, 1]} : vector<8x8x1xf32> to vector<1x8x1xf32>
    %231 = vector.shape_cast %230 : vector<1x8x1xf32> to vector<8x1xf32>
    %232 = vector.broadcast %231 : vector<8x1xf32> to vector<8x128xf32>
    %233 = arith.mulf %229, %232 : vector<8x128xf32>
    %234 = arith.addf %216, %233 : vector<8x128xf32>
    %235 = vector.extract_strided_slice %225 {offsets = [0, 0], sizes = [8, 512], strides = [1, 1]} : vector<8x640xf32> to vector<8x512xf32>
    %c6 = arith.constant 6 : index
    %c0_79 = arith.constant 0 : index
    %c0_80 = arith.constant 0 : index
    %236 = vector.load %arg10[%c6, %c0_79, %c0_80] : memref<8x8x512xf32, #tpu.memory_space<vmem>>, vector<1x8x512xf32>
    %237 = vector.shape_cast %236 : vector<1x8x512xf32> to vector<8x512xf32>
    %238 = arith.addf %235, %237 : vector<8x512xf32>
    %239 = arith.negf %238 : vector<8x512xf32>
    %240 = math.exp %239 : vector<8x512xf32>
    %cst_81 = arith.constant 1.000000e+00 : f32
    %241 = vector.broadcast %cst_81 : f32 to vector<8x512xf32>
    %242 = arith.addf %241, %240 : vector<8x512xf32>
    %243 = arith.divf %241, %242 : vector<8x512xf32>
    %244 = vector.extract_strided_slice %243 {offsets = [0, 0], sizes = [8, 128], strides = [1, 1]} : vector<8x512xf32> to vector<8x128xf32>
    %245 = vector.extract_strided_slice %243 {offsets = [0, 128], sizes = [8, 128], strides = [1, 1]} : vector<8x512xf32> to vector<8x128xf32>
    %246 = vector.extract_strided_slice %243 {offsets = [0, 256], sizes = [8, 128], strides = [1, 1]} : vector<8x512xf32> to vector<8x128xf32>
    %247 = vector.extract_strided_slice %243 {offsets = [0, 384], sizes = [8, 128], strides = [1, 1]} : vector<8x512xf32> to vector<8x128xf32>
    %248 = arith.mulf %244, %234 : vector<8x128xf32>
    %249 = arith.mulf %245, %247 : vector<8x128xf32>
    %250 = arith.addf %248, %249 : vector<8x128xf32>
    %251 = math.tanh %250 : vector<8x128xf32>
    %252 = arith.mulf %246, %251 : vector<8x128xf32>
    %c6_82 = arith.constant 6 : index
    %c0_83 = arith.constant 0 : index
    %c0_84 = arith.constant 0 : index
    %253 = vector.load %arg8[%c6_82, %c0_83, %c0_84] : memref<8x8x128xf32, #tpu.memory_space<vmem>>, vector<1x8x128xf32>
    %254 = vector.shape_cast %253 : vector<1x8x128xf32> to vector<8x128xf32>
    %255 = vector.shape_cast %252 : vector<8x128xf32> to vector<1x8x128xf32>
    tpu.vector_store %arg8[%c6_82, %c0_83, %c0_84], %255 {strides = array<i32>} : memref<8x8x128xf32, #tpu.memory_space<vmem>>, vector<1x8x128xf32>,
    %256 = arith.addf %222, %252 : vector<8x128xf32>
    %257 = tpu.concatenate %252, %250 in 1 : vector<8x128xf32>, vector<8x128xf32> -> vector<8x256xf32>
    %c0_85 = arith.constant 0 : index
    %c0_86 = arith.constant 0 : index
    %258 = vector.load %arg4[%c0_85, %c0_86] : memref<256x640xf32, #tpu.memory_space<vmem>>, vector<256x640xf32>
    %cst_87 = arith.constant dense<0.000000e+00> : vector<8x640xf32>
    %259 = tpu.matmul %257, %258, %cst_87 {dimension_numbers = #tpu.dot_dimension_numbers<[1], [0], [0], [1], [0, 0, 1, 1], [], []>} : vector<8x256xf32>, vector<256x640xf32>, vector<8x640xf32> -> vector<8x640xf32>
    %260 = vector.extract_strided_slice %259 {offsets = [0, 512], sizes = [8, 128], strides = [1, 1]} : vector<8x640xf32> to vector<8x128xf32>
    %261 = vector.broadcast %15 : vector<1x128xf32> to vector<8x128xf32>
    %262 = arith.addf %260, %261 : vector<8x128xf32>
    %263 = math.tanh %262 : vector<8x128xf32>
    %264 = vector.extract_strided_slice %14 {offsets = [7, 0, 0], sizes = [1, 8, 1], strides = [1, 1, 1]} : vector<8x8x1xf32> to vector<1x8x1xf32>
    %265 = vector.shape_cast %264 : vector<1x8x1xf32> to vector<8x1xf32>
    %266 = vector.broadcast %265 : vector<8x1xf32> to vector<8x128xf32>
    %267 = arith.mulf %263, %266 : vector<8x128xf32>
    %268 = arith.addf %250, %267 : vector<8x128xf32>
    %269 = vector.extract_strided_slice %259 {offsets = [0, 0], sizes = [8, 512], strides = [1, 1]} : vector<8x640xf32> to vector<8x512xf32>
    %c7 = arith.constant 7 : index
    %c0_88 = arith.constant 0 : index
    %c0_89 = arith.constant 0 : index
    %270 = vector.load %arg10[%c7, %c0_88, %c0_89] : memref<8x8x512xf32, #tpu.memory_space<vmem>>, vector<1x8x512xf32>
    %271 = vector.shape_cast %270 : vector<1x8x512xf32> to vector<8x512xf32>
    %272 = arith.addf %269, %271 : vector<8x512xf32>
    %273 = arith.negf %272 : vector<8x512xf32>
    %274 = math.exp %273 : vector<8x512xf32>
    %cst_90 = arith.constant 1.000000e+00 : f32
    %275 = vector.broadcast %cst_90 : f32 to vector<8x512xf32>
    %276 = arith.addf %275, %274 : vector<8x512xf32>
    %277 = arith.divf %275, %276 : vector<8x512xf32>
    %278 = vector.extract_strided_slice %277 {offsets = [0, 0], sizes = [8, 128], strides = [1, 1]} : vector<8x512xf32> to vector<8x128xf32>
    %279 = vector.extract_strided_slice %277 {offsets = [0, 128], sizes = [8, 128], strides = [1, 1]} : vector<8x512xf32> to vector<8x128xf32>
    %280 = vector.extract_strided_slice %277 {offsets = [0, 256], sizes = [8, 128], strides = [1, 1]} : vector<8x512xf32> to vector<8x128xf32>
    %281 = vector.extract_strided_slice %277 {offsets = [0, 384], sizes = [8, 128], strides = [1, 1]} : vector<8x512xf32> to vector<8x128xf32>
    %282 = arith.mulf %278, %268 : vector<8x128xf32>
    %283 = arith.mulf %279, %281 : vector<8x128xf32>
    %284 = arith.addf %282, %283 : vector<8x128xf32>
    %285 = math.tanh %284 : vector<8x128xf32>
    %286 = arith.mulf %280, %285 : vector<8x128xf32>
    %c7_91 = arith.constant 7 : index
    %c0_92 = arith.constant 0 : index
    %c0_93 = arith.constant 0 : index
    %287 = vector.load %arg8[%c7_91, %c0_92, %c0_93] : memref<8x8x128xf32, #tpu.memory_space<vmem>>, vector<1x8x128xf32>
    %288 = vector.shape_cast %287 : vector<1x8x128xf32> to vector<8x128xf32>
    %289 = vector.shape_cast %286 : vector<8x128xf32> to vector<1x8x128xf32>
    tpu.vector_store %arg8[%c7_91, %c0_92, %c0_93], %289 {strides = array<i32>} : memref<8x8x128xf32, #tpu.memory_space<vmem>>, vector<1x8x128xf32>,
    %290 = arith.addf %256, %286 : vector<8x128xf32>
    %c0_94 = arith.constant 0 : index
    %c0_95 = arith.constant 0 : index
    %291 = vector.load %arg11[%c0_94, %c0_95] : memref<8x128xf32, #tpu.memory_space<vmem>>, vector<8x128xf32>
    tpu.vector_store %arg11[%c0_94, %c0_95], %286 {strides = array<i32>} : memref<8x128xf32, #tpu.memory_space<vmem>>, vector<8x128xf32>,
    %c0_96 = arith.constant 0 : index
    %c0_97 = arith.constant 0 : index
    %292 = vector.load %arg12[%c0_96, %c0_97] : memref<8x128xf32, #tpu.memory_space<vmem>>, vector<8x128xf32>
    tpu.vector_store %arg12[%c0_96, %c0_97], %284 {strides = array<i32>} : memref<8x128xf32, #tpu.memory_space<vmem>>, vector<8x128xf32>,
    %c0_98 = arith.constant 0 : index
    %c0_99 = arith.constant 0 : index
    %293 = vector.load %arg9[%c0_98, %c0_99] : memref<8x128xf32, #tpu.memory_space<vmem>>, vector<8x128xf32>
    %cst_100 = arith.constant 1.250000e-01 : f32
    %294 = vector.broadcast %cst_100 : f32 to vector<8x128xf32>
    %295 = arith.mulf %290, %294 : vector<8x128xf32>
    %296 = arith.addf %293, %295 : vector<8x128xf32>
    %c0_101 = arith.constant 0 : index
    %c0_102 = arith.constant 0 : index
    %297 = vector.load %arg9[%c0_101, %c0_102] : memref<8x128xf32, #tpu.memory_space<vmem>>, vector<8x128xf32>
    tpu.vector_store %arg9[%c0_101, %c0_102], %296 {strides = array<i32>} : memref<8x128xf32, #tpu.memory_space<vmem>>, vector<8x128xf32>,
    return
  }
  func.func @transform_0(%arg0: i32, %arg1: i32) -> (i32, i32, i32) {
    %c0_i32 = arith.constant 0 : i32
    %c0_i32_0 = arith.constant 0 : i32
    return %arg1, %arg0, %c0_i32 : i32, i32, i32
  }
  func.func @transform_1(%arg0: i32, %arg1: i32) -> (i32, i32, i32) {
    %c0_i32 = arith.constant 0 : i32
    %c0_i32_0 = arith.constant 0 : i32
    return %arg1, %arg0, %c0_i32 : i32, i32, i32
  }
  func.func @transform_2(%arg0: i32, %arg1: i32) -> (i32, i32) {
    %c0_i32 = arith.constant 0 : i32
    %c0_i32_0 = arith.constant 0 : i32
    %c0_i32_1 = arith.constant 0 : i32
    return %c0_i32, %c0_i32_0 : i32, i32
  }
  func.func @transform_3(%arg0: i32, %arg1: i32) -> (i32, i32) {
    %c0_i32 = arith.constant 0 : i32
    %c0_i32_0 = arith.constant 0 : i32
    %c0_i32_1 = arith.constant 0 : i32
    return %c0_i32, %c0_i32_0 : i32, i32
  }
  func.func @transform_4(%arg0: i32, %arg1: i32) -> (i32, i32) {
    %c0_i32 = arith.constant 0 : i32
    %c0_i32_0 = arith.constant 0 : i32
    %c0_i32_1 = arith.constant 0 : i32
    return %c0_i32, %c0_i32_0 : i32, i32
  }
  func.func @transform_5(%arg0: i32, %arg1: i32) -> (i32, i32) {
    %c0_i32 = arith.constant 0 : i32
    %c0_i32_0 = arith.constant 0 : i32
    %c0_i32_1 = arith.constant 0 : i32
    return %c0_i32, %c0_i32_0 : i32, i32
  }
  func.func @transform_6(%arg0: i32, %arg1: i32) -> (i32, i32, i32) {
    %c0_i32 = arith.constant 0 : i32
    %c0_i32_0 = arith.constant 0 : i32
    return %arg1, %arg0, %c0_i32 : i32, i32, i32
  }
  func.func @transform_7(%arg0: i32, %arg1: i32) -> (i32, i32) {
    %c0_i32 = arith.constant 0 : i32
    %c0_i32_0 = arith.constant 0 : i32
    return %arg0, %c0_i32 : i32, i32
  }
}

</mosaic_0001>

<llo_original>
// kernel: tpu_custom_call.1
$region0: #{tpu_custom_call.1}
  #allocation0 [shape = 'u32[]', space=smem, size = 0x4, offset = 0x4, fixed_abs, tag = 'smem constant byte address 0x4 - core index']
  #allocation1 [shape = 'u32[144,128]{1,0:T(1,128)}', space=vmem, size = 0x12000, scoped, tag = 'internal scratch']
  #allocation2 [shape = 'f32[8,8,512]{2,1,0:T(8,128)}', space=vmem, size = 0x20000, scoped, tag = 'scratch operand']
  #allocation3 [shape = 'f32[8,128]{1,0:T(8,128)}', space=vmem, size = 0x1000, scoped, tag = 'scratch operand']
  #allocation4 [shape = 'f32[8,128]{1,0:T(8,128)}', space=vmem, size = 0x1000, scoped, tag = 'scratch operand']
  %s0 = inlined_call_operand.vmem [shape: f32[8,8,128], index: 0, kind: input, shape index: {}]
  %s1 = inlined_call_operand.vmem [shape: f32[8,8,1], index: 1, kind: input, shape index: {}]
  %s2 = inlined_call_operand.hbm [shape: f32[256,640], index: 2, kind: input, shape index: {}]
  %s3 = inlined_call_operand.hbm [shape: f32[128,512], index: 3, kind: input, shape index: {}]
  %s4 = inlined_call_operand.vmem [shape: f32[1,512], index: 4, kind: input, shape index: {}]
  %s5 = inlined_call_operand.vmem [shape: f32[1,128], index: 5, kind: input, shape index: {}]
  %s6 = inlined_call_operand.hbm [shape: f32[8,8,128], index: 6, kind: output, shape index: {0}]
  %s7 = inlined_call_operand.hbm [shape: f32[8,128], index: 7, kind: output, shape index: {1}]
  %8 = xla_tuple %s6, %s7
  %s9 = sld [smem:[#allocation0]]
  $region54: #{tpu_custom_call.1} parent=0
    _
  %s11 = ssub.s32 1, %s9
  %s12 = scalar_select 0, %s11, %s9
  $region1: #{tpu_custom_call.1} parent=0
    #allocation5 [shape = 'u8[655360]{0}', space=vmem, size = 0xa0000, scoped, tag = 'input window, operand 2, single buffered']
    #allocation6 [shape = 's32[1]{0}', space=sflag, size = 0x4, scoped, tag = 'scoped memory for tpu_custom_call.1']
    #allocation7 [shape = 's32[1]{0}', space=sflag, size = 0x4, scoped, tag = 'scoped memory for tpu_custom_call.1']
    #allocation8 [shape = 'u8[262144]{0}', space=vmem, size = 0x40000, scoped, tag = 'input window, operand 3, single buffered']
    #allocation9 [shape = 's32[1]{0}', space=sflag, size = 0x4, scoped, tag = 'scoped memory for tpu_custom_call.1']
    #allocation10 [shape = 'u8[32768]{0}', space=vmem, size = 0x8000, scoped, tag = 'output window, operand 0, single buffered']
    #allocation11 [shape = 'u8[4096]{0}', space=vmem, size = 0x1000, scoped, tag = 'output window, operand 1, single buffered']
    #allocation12 [shape = 's32[1]{0}', space=sflag, size = 0x4, scoped, tag = 'scoped memory for tpu_custom_call.1']
    %13 = vsyncpa [#allocation6], 0
    %14 = vsyncpa [#allocation9], 0
    %15 = vsyncpa [#allocation7], 0
    %16 = vsyncpa [#allocation12], 0
    // Predicated region
    $region2: #{tpu_custom_call.1} parent=1 // pred_check
      _
    $region3: #{tpu_custom_call.1} parent=1 // pred_check_branch
      %18 = sbr.rel (0) target = $region5
    $region4: #{tpu_custom_call.1} parent=1 // pred_region
      _
    $region5: #{tpu_custom_call.1} parent=1 // pred_fallthru
      _
    // Predicated region
    $region6: #{tpu_custom_call.1} parent=1 // pred_check
      _
    $region7: #{tpu_custom_call.1} parent=1 // pred_check_branch
      %20 = sbr.rel (0) target = $region9
    $region8: #{tpu_custom_call.1} parent=1 // pred_region
      _
    $region9: #{tpu_custom_call.1} parent=1 // pred_fallthru
      _
    // Predicated region
    $region10: #{tpu_custom_call.1} parent=1 // pred_check
      _
    $region11: #{tpu_custom_call.1} parent=1 // pred_check_branch
      %22 = sbr.rel (0) target = $region13
    $region12: #{tpu_custom_call.1} parent=1 // pred_region
      %s24 = ssub.s32 20480, 20480
      %25 = vsyncadd [#allocation6], %s24
      %s26 = sshll.u32 [#allocation5], 4
      %s27 = int_to_ptr.vmem [resolvable:$true] %s26
      %32 = dma.hbm_to_vmem [thread:$0]  %s2, 20480, %s27, [#allocation6], 640, 640, 40
    $region13: #{tpu_custom_call.1} parent=1 // pred_fallthru
      _
    // Predicated region
    $region14: #{tpu_custom_call.1} parent=1 // pred_check
      _
    $region15: #{tpu_custom_call.1} parent=1 // pred_check_branch
      %34 = sbr.rel (0) target = $region17
    $region16: #{tpu_custom_call.1} parent=1 // pred_region
      %s36 = ssub.s32 8192, 8192
      %37 = vsyncadd [#allocation9], %s36
      %s38 = sshll.u32 [#allocation8], 4
      %s39 = int_to_ptr.vmem [resolvable:$true] %s38
      %44 = dma.hbm_to_vmem [thread:$0]  %s3, 8192, %s39, [#allocation9], 512, 512, 32
    $region17: #{tpu_custom_call.1} parent=1 // pred_fallthru
      _
    // Predicated region
    $region18: #{tpu_custom_call.1} parent=1 // pred_check
      _
    $region19: #{tpu_custom_call.1} parent=1 // pred_check_branch
      %46 = sbr.rel (0) target = $region21
    $region20: #{tpu_custom_call.1} parent=1 // pred_region
      _
    $region21: #{tpu_custom_call.1} parent=1 // pred_fallthru
      _
    // Predicated region
    $region22: #{tpu_custom_call.1} parent=1 // pred_check
      _
    $region23: #{tpu_custom_call.1} parent=1 // pred_check_branch
      %48 = sbr.rel (0) target = $region25
    $region24: #{tpu_custom_call.1} parent=1 // pred_region
      _
    $region25: #{tpu_custom_call.1} parent=1 // pred_fallthru
      _
    // Predicated region
    $region26: #{tpu_custom_call.1} parent=1 // pred_check
      _
    $region27: #{tpu_custom_call.1} parent=1 // pred_check_branch
      %50 = sbr.rel (0) target = $region29
    $region28: #{tpu_custom_call.1} parent=1 // pred_region
      %51 = dma.done [#allocation6], 20480
    $region29: #{tpu_custom_call.1} parent=1 // pred_fallthru
      _
    // Predicated region
    $region30: #{tpu_custom_call.1} parent=1 // pred_check
      _
    $region31: #{tpu_custom_call.1} parent=1 // pred_check_branch
      %53 = sbr.rel (0) target = $region33
    $region32: #{tpu_custom_call.1} parent=1 // pred_region
      %54 = dma.done [#allocation9], 8192
    $region33: #{tpu_custom_call.1} parent=1 // pred_fallthru
      _
    %p55 = scmp.eq.s32.totalorder 0, 0
    // Predicated region
    $region34: #{tpu_custom_call.1} parent=1 // pred_check
      %p56 = pneg %p55
    $region35: #{tpu_custom_call.1} parent=1 // pred_check_branch
      %58 = sbr.rel (%p56) target = $region37
    $region36: #{tpu_custom_call.1} parent=1 // pred_region
      %59 = vst [vmem:[#allocation3] sm:$0xff] 0.0
      %60 = vst [vmem:[#allocation4] sm:$0xff] 0.0
      %61 = vst [vmem:[#allocation11] sm:$0xff] 0.0
    $region37: #{tpu_custom_call.1} parent=1 // pred_fallthru
      _
    %v62 = vld [vmem:[%s0] sm:$0xff]
    %v63 = vld [vmem:[%s0 + $0x8] sm:$0xff]
    %v64 = vld [vmem:[%s0 + $0x10] sm:$0xff]
    %v65 = vld [vmem:[%s0 + $0x18] sm:$0xff]
    %v66 = vld [vmem:[%s0 + $0x20] sm:$0xff]
    %v67 = vld [vmem:[%s0 + $0x28] sm:$0xff]
    %v68 = vld [vmem:[%s0 + $0x30] sm:$0xff]
    %v69 = vld [vmem:[%s0 + $0x38] sm:$0xff]
    %v70 = vld [vmem:[#allocation8] sm:$0xff]
    %v71 = vld [vmem:[#allocation8 + $0x8] sm:$0xff]
    %v72 = vld [vmem:[#allocation8 + $0x10] sm:$0xff]
    %v73 = vld [vmem:[#allocation8 + $0x18] sm:$0xff]
    %v74 = vld [vmem:[#allocation8 + $0x20] sm:$0xff]
    %v75 = vld [vmem:[#allocation8 + $0x28] sm:$0xff]
    %v76 = vld [vmem:[#allocation8 + $0x30] sm:$0xff]
    %v77 = vld [vmem:[#allocation8 + $0x38] sm:$0xff]
    %v78 = vld [vmem:[#allocation8 + $0x40] sm:$0xff]
    %v79 = vld [vmem:[#allocation8 + $0x48] sm:$0xff]
    %v80 = vld [vmem:[#allocation8 + $0x50] sm:$0xff]
    %v81 = vld [vmem:[#allocation8 + $0x58] sm:$0xff]
    %v82 = vld [vmem:[#allocation8 + $0x60] sm:$0xff]
    %v83 = vld [vmem:[#allocation8 + $0x68] sm:$0xff]
    %v84 = vld [vmem:[#allocation8 + $0x70] sm:$0xff]
    %v85 = vld [vmem:[#allocation8 + $0x78] sm:$0xff]
    %v86 = vld [vmem:[#allocation8 + $0x80] sm:$0xff]
    %v87 = vld [vmem:[#allocation8 + $0x88] sm:$0xff]
    %v88 = vld [vmem:[#allocation8 + $0x90] sm:$0xff]
    %v89 = vld [vmem:[#allocation8 + $0x98] sm:$0xff]
    %v90 = vld [vmem:[#allocation8 + $0xa0] sm:$0xff]
    %v91 = vld [vmem:[#allocation8 + $0xa8] sm:$0xff]
    %v92 = vld [vmem:[#allocation8 + $0xb0] sm:$0xff]
    %v93 = vld [vmem:[#allocation8 + $0xb8] sm:$0xff]
    %v94 = vld [vmem:[#allocation8 + $0xc0] sm:$0xff]
    %v95 = vld [vmem:[#allocation8 + $0xc8] sm:$0xff]
    %v96 = vld [vmem:[#allocation8 + $0xd0] sm:$0xff]
    %v97 = vld [vmem:[#allocation8 + $0xd8] sm:$0xff]
    %v98 = vld [vmem:[#allocation8 + $0xe0] sm:$0xff]
    %v99 = vld [vmem:[#allocation8 + $0xe8] sm:$0xff]
    %v100 = vld [vmem:[#allocation8 + $0xf0] sm:$0xff]
    %v101 = vld [vmem:[#allocation8 + $0xf8] sm:$0xff]
    %v102 = vld [vmem:[#allocation8 + $0x100] sm:$0xff]
    %v103 = vld [vmem:[#allocation8 + $0x108] sm:$0xff]
    %v104 = vld [vmem:[#allocation8 + $0x110] sm:$0xff]
    %v105 = vld [vmem:[#allocation8 + $0x118] sm:$0xff]
    %v106 = vld [vmem:[#allocation8 + $0x120] sm:$0xff]
    %v107 = vld [vmem:[#allocation8 + $0x128] sm:$0xff]
    %v108 = vld [vmem:[#allocation8 + $0x130] sm:$0xff]
    %v109 = vld [vmem:[#allocation8 + $0x138] sm:$0xff]
    %v110 = vld [vmem:[#allocation8 + $0x140] sm:$0xff]
    %v111 = vld [vmem:[#allocation8 + $0x148] sm:$0xff]
    %v112 = vld [vmem:[#allocation8 + $0x150] sm:$0xff]
    %v113 = vld [vmem:[#allocation8 + $0x158] sm:$0xff]
    %v114 = vld [vmem:[#allocation8 + $0x160] sm:$0xff]
    %v115 = vld [vmem:[#allocation8 + $0x168] sm:$0xff]
    %v116 = vld [vmem:[#allocation8 + $0x170] sm:$0xff]
    %v117 = vld [vmem:[#allocation8 + $0x178] sm:$0xff]
    %v118 = vld [vmem:[#allocation8 + $0x180] sm:$0xff]
    %v119 = vld [vmem:[#allocation8 + $0x188] sm:$0xff]
    %v120 = vld [vmem:[#allocation8 + $0x190] sm:$0xff]
    %v121 = vld [vmem:[#allocation8 + $0x198] sm:$0xff]
    %v122 = vld [vmem:[#allocation8 + $0x1a0] sm:$0xff]
    %v123 = vld [vmem:[#allocation8 + $0x1a8] sm:$0xff]
    %v124 = vld [vmem:[#allocation8 + $0x1b0] sm:$0xff]
    %v125 = vld [vmem:[#allocation8 + $0x1b8] sm:$0xff]
    %v126 = vld [vmem:[#allocation8 + $0x1c0] sm:$0xff]
    %v127 = vld [vmem:[#allocation8 + $0x1c8] sm:$0xff]
    %v128 = vld [vmem:[#allocation8 + $0x1d0] sm:$0xff]
    %v129 = vld [vmem:[#allocation8 + $0x1d8] sm:$0xff]
    %v130 = vld [vmem:[#allocation8 + $0x1e0] sm:$0xff]
    %v131 = vld [vmem:[#allocation8 + $0x1e8] sm:$0xff]
    %v132 = vld [vmem:[#allocation8 + $0x1f0] sm:$0xff]
    %v133 = vld [vmem:[#allocation8 + $0x1f8] sm:$0xff]
    %v134 = vld [vmem:[%s4] sm:$0xf]
    %v136 = vlaneseq
    %v137 = vshrl.u32 %v136, 7
    %v138 = vsub.s32 0, %v137
    %v139 = vrot.slane %v134, %v138
    %v140 = vlaneseq
    %v141 = vshrl.u32 %v140, 7
    %v142 = vsub.s32 1, %v141
    %v143 = vrot.slane %v134, %v142
    %v144 = vlaneseq
    %v145 = vshrl.u32 %v144, 7
    %v146 = vsub.s32 2, %v145
    %v147 = vrot.slane %v134, %v146
    %v148 = vlaneseq
    %v149 = vshrl.u32 %v148, 7
    %v150 = vsub.s32 3, %v149
    %v151 = vrot.slane %v134, %v150
    %156 = vmatprep.subr.mxu0 %v71
    %157 = vmatpush1.msra.mxu0 %v70
    %158 = vmatprep.subr.mxu0 %v75
    %159 = vmatpush1.msra.mxu0 %v74
    %160 = vmatprep.subr.mxu0 %v79
    %161 = vmatpush1.msra.mxu0 %v78
    %162 = vmatprep.subr.mxu0 %v83
    %163 = vmatpush1.msra.mxu0 %v82
    %164 = vmatprep.subr.mxu0 %v87
    %165 = vmatpush1.msra.mxu0 %v86
    %166 = vmatprep.subr.mxu0 %v91
    %167 = vmatpush1.msra.mxu0 %v90
    %168 = vmatprep.subr.mxu0 %v95
    %169 = vmatpush1.msra.mxu0 %v94
    %170 = vmatprep.subr.mxu0 %v99
    %171 = vmatpush1.msra.mxu0 %v98
    %172 = vmatprep.subr.mxu0 %v103
    %173 = vmatpush1.msra.mxu0 %v102
    %174 = vmatprep.subr.mxu0 %v107
    %175 = vmatpush1.msra.mxu0 %v106
    %176 = vmatprep.subr.mxu0 %v111
    %177 = vmatpush1.msra.mxu0 %v110
    %178 = vmatprep.subr.mxu0 %v115
    %179 = vmatpush1.msra.mxu0 %v114
    %180 = vmatprep.subr.mxu0 %v119
    %181 = vmatpush1.msra.mxu0 %v118
    %182 = vmatprep.subr.mxu0 %v123
    %183 = vmatpush1.msra.mxu0 %v122
    %184 = vmatprep.subr.mxu0 %v127
    %185 = vmatpush1.msra.mxu0 %v126
    %186 = vmatprep.subr.mxu0 %v131
    %187 = vmatpush1.msra.mxu0 %v130
    %188 = vmatprep.subr.mxu0 0.0
    %189 = vmatpush1.msra.mxu0 0.0
    %190 = vmatprep.subr.mxu0 0.0
    %191 = vmatpush1.msra.mxu0 0.0
    %192 = vmatprep.subr.mxu0 0.0
    %193 = vmatpush1.msra.mxu0 0.0
    %194 = vmatprep.subr.mxu0 0.0
    %195 = vmatpush1.msra.mxu0 0.0
    %196 = vmatprep.subr.mxu0 0.0
    %197 = vmatpush1.msra.mxu0 0.0
    %198 = vmatprep.subr.mxu0 0.0
    %199 = vmatpush1.msra.mxu0 0.0
    %200 = vmatprep.subr.mxu0 0.0
    %201 = vmatpush1.msra.mxu0 0.0
    %202 = vmatprep.subr.mxu0 0.0
    %203 = vmatpush1.msra.mxu0 0.0
    %204 = vmatprep.subr.mxu0 0.0
    %205 = vmatpush1.msra.mxu0 0.0
    %206 = vmatprep.subr.mxu0 0.0
    %207 = vmatpush1.msra.mxu0 0.0
    %208 = vmatprep.subr.mxu0 0.0
    %209 = vmatpush1.msra.mxu0 0.0
    %210 = vmatprep.subr.mxu0 0.0
    %211 = vmatpush1.msra.mxu0 0.0
    %212 = vmatprep.subr.mxu0 0.0
    %213 = vmatpush1.msra.mxu0 0.0
    %214 = vmatprep.subr.mxu0 0.0
    %215 = vmatpush1.msra.mxu0 0.0
    %216 = vmatprep.subr.mxu0 0.0
    %217 = vmatpush1.msra.mxu0 0.0
    %218 = vmatprep.subr.mxu0 0.0
    %219 = vmatpush1.msra.mxu0 0.0
    %220 = vmatprep.mubr.f32.mxu0 0.0
    %221 = vmatmul.mubr.f32.gmra.mrb[0].mxu0 %v62
    %v222 = vpop.f32.mrb[0].mxu0
    %v223 = vadd.f32 %v139, %v222
    %v224 = vpop.f32.mrb[0].mxu0
    %v225 = vadd.f32 %v143, %v224
    %226 = vmatprep.mubr.f32.mxu0 0.0
    %227 = vmatmul.mubr.f32.gmra.mrb[0].mxu0 %v63
    %v228 = vpop.f32.mrb[0].mxu0
    %v229 = vadd.f32 %v139, %v228
    %v230 = vpop.f32.mrb[0].mxu0
    %v231 = vadd.f32 %v143, %v230
    %232 = vmatprep.mubr.f32.mxu0 0.0
    %233 = vmatmul.mubr.f32.gmra.mrb[0].mxu0 %v64
    %v234 = vpop.f32.mrb[0].mxu0
    %v235 = vadd.f32 %v139, %v234
    %v236 = vpop.f32.mrb[0].mxu0
    %v237 = vadd.f32 %v143, %v236
    %238 = vmatprep.mubr.f32.mxu0 0.0
    %239 = vmatmul.mubr.f32.gmra.mrb[0].mxu0 %v65
    %v240 = vpop.f32.mrb[0].mxu0
    %v241 = vadd.f32 %v139, %v240
    %v242 = vpop.f32.mrb[0].mxu0
    %v243 = vadd.f32 %v143, %v242
    %244 = vmatprep.mubr.f32.mxu0 0.0
    %245 = vmatmul.mubr.f32.gmra.mrb[0].mxu0 %v66
    %v246 = vpop.f32.mrb[0].mxu0
    %v247 = vadd.f32 %v139, %v246
    %v248 = vpop.f32.mrb[0].mxu0
    %v249 = vadd.f32 %v143, %v248
    %250 = vmatprep.mubr.f32.mxu0 0.0
    %251 = vmatmul.mubr.f32.gmra.mrb[0].mxu0 %v67
    %v252 = vpop.f32.mrb[0].mxu0
    %v253 = vadd.f32 %v139, %v252
    %v254 = vpop.f32.mrb[0].mxu0
    %v255 = vadd.f32 %v143, %v254
    %256 = vmatprep.mubr.f32.mxu0 0.0
    %257 = vmatmul.mubr.f32.gmra.mrb[0].mxu0 %v68
    %v258 = vpop.f32.mrb[0].mxu0
    %v259 = vadd.f32 %v139, %v258
    %v260 = vpop.f32.mrb[0].mxu0
    %v261 = vadd.f32 %v143, %v260
    %262 = vmatprep.mubr.f32.mxu0 0.0
    %263 = vmatmul.mubr.f32.gmra.mrb[0].mxu0 %v69
    %v264 = vpop.f32.mrb[0].mxu0
    %v265 = vadd.f32 %v139, %v264
    %v266 = vpop.f32.mrb[0].mxu0
    %v267 = vadd.f32 %v143, %v266
    %268 = vdwg.mxu0
    %269 = vmatprep.subr.mxu0 %v73
    %270 = vmatpush1.msra.mxu0 %v72
    %271 = vmatprep.subr.mxu0 %v77
    %272 = vmatpush1.msra.mxu0 %v76
    %273 = vmatprep.subr.mxu0 %v81
    %274 = vmatpush1.msra.mxu0 %v80
    %275 = vmatprep.subr.mxu0 %v85
    %276 = vmatpush1.msra.mxu0 %v84
    %277 = vmatprep.subr.mxu0 %v89
    %278 = vmatpush1.msra.mxu0 %v88
    %279 = vmatprep.subr.mxu0 %v93
    %280 = vmatpush1.msra.mxu0 %v92
    %281 = vmatprep.subr.mxu0 %v97
    %282 = vmatpush1.msra.mxu0 %v96
    %283 = vmatprep.subr.mxu0 %v101
    %284 = vmatpush1.msra.mxu0 %v100
    %285 = vmatprep.subr.mxu0 %v105
    %286 = vmatpush1.msra.mxu0 %v104
    %287 = vmatprep.subr.mxu0 %v109
    %288 = vmatpush1.msra.mxu0 %v108
    %289 = vmatprep.subr.mxu0 %v113
    %290 = vmatpush1.msra.mxu0 %v112
    %291 = vmatprep.subr.mxu0 %v117
    %292 = vmatpush1.msra.mxu0 %v116
    %293 = vmatprep.subr.mxu0 %v121
    %294 = vmatpush1.msra.mxu0 %v120
    %295 = vmatprep.subr.mxu0 %v125
    %296 = vmatpush1.msra.mxu0 %v124
    %297 = vmatprep.subr.mxu0 %v129
    %298 = vmatpush1.msra.mxu0 %v128
    %299 = vmatprep.subr.mxu0 %v133
    %300 = vmatpush1.msra.mxu0 %v132
    %301 = vmatprep.subr.mxu0 0.0
    %302 = vmatpush1.msra.mxu0 0.0
    %303 = vmatprep.subr.mxu0 0.0
    %304 = vmatpush1.msra.mxu0 0.0
    %305 = vmatprep.subr.mxu0 0.0
    %306 = vmatpush1.msra.mxu0 0.0
    %307 = vmatprep.subr.mxu0 0.0
    %308 = vmatpush1.msra.mxu0 0.0
    %309 = vmatprep.subr.mxu0 0.0
    %310 = vmatpush1.msra.mxu0 0.0
    %311 = vmatprep.subr.mxu0 0.0
    %312 = vmatpush1.msra.mxu0 0.0
    %313 = vmatprep.subr.mxu0 0.0
    %314 = vmatpush1.msra.mxu0 0.0
    %315 = vmatprep.subr.mxu0 0.0
    %316 = vmatpush1.msra.mxu0 0.0
    %317 = vmatprep.subr.mxu0 0.0
    %318 = vmatpush1.msra.mxu0 0.0
    %319 = vmatprep.subr.mxu0 0.0
    %320 = vmatpush1.msra.mxu0 0.0
    %321 = vmatprep.subr.mxu0 0.0
    %322 = vmatpush1.msra.mxu0 0.0
    %323 = vmatprep.subr.mxu0 0.0
    %324 = vmatpush1.msra.mxu0 0.0
    %325 = vmatprep.subr.mxu0 0.0
    %326 = vmatpush1.msra.mxu0 0.0
    %327 = vmatprep.subr.mxu0 0.0
    %328 = vmatpush1.msra.mxu0 0.0
    %329 = vmatprep.subr.mxu0 0.0
    %330 = vmatpush1.msra.mxu0 0.0
    %331 = vmatprep.subr.mxu0 0.0
    %332 = vmatpush1.msra.mxu0 0.0
    %333 = vmatprep.mubr.f32.mxu0 0.0
    %334 = vmatmul.mubr.f32.gmra.mrb[0].mxu0 %v62
    %v335 = vpop.f32.mrb[0].mxu0
    %v336 = vadd.f32 %v147, %v335
    %v337 = vpop.f32.mrb[0].mxu0
    %v338 = vadd.f32 %v151, %v337
    %339 = vmatprep.mubr.f32.mxu0 0.0
    %340 = vmatmul.mubr.f32.gmra.mrb[0].mxu0 %v63
    %v341 = vpop.f32.mrb[0].mxu0
    %v342 = vadd.f32 %v147, %v341
    %v343 = vpop.f32.mrb[0].mxu0
    %v344 = vadd.f32 %v151, %v343
    %345 = vmatprep.mubr.f32.mxu0 0.0
    %346 = vmatmul.mubr.f32.gmra.mrb[0].mxu0 %v64
    %v347 = vpop.f32.mrb[0].mxu0
    %v348 = vadd.f32 %v147, %v347
    %v349 = vpop.f32.mrb[0].mxu0
    %v350 = vadd.f32 %v151, %v349
    %351 = vmatprep.mubr.f32.mxu0 0.0
    %352 = vmatmul.mubr.f32.gmra.mrb[0].mxu0 %v65
    %v353 = vpop.f32.mrb[0].mxu0
    %v354 = vadd.f32 %v147, %v353
    %v355 = vpop.f32.mrb[0].mxu0
    %v356 = vadd.f32 %v151, %v355
    %357 = vmatprep.mubr.f32.mxu0 0.0
    %358 = vmatmul.mubr.f32.gmra.mrb[0].mxu0 %v66
    %v359 = vpop.f32.mrb[0].mxu0
    %v360 = vadd.f32 %v147, %v359
    %v361 = vpop.f32.mrb[0].mxu0
    %v362 = vadd.f32 %v151, %v361
    %363 = vmatprep.mubr.f32.mxu0 0.0
    %364 = vmatmul.mubr.f32.gmra.mrb[0].mxu0 %v67
    %v365 = vpop.f32.mrb[0].mxu0
    %v366 = vadd.f32 %v147, %v365
    %v367 = vpop.f32.mrb[0].mxu0
    %v368 = vadd.f32 %v151, %v367
    %369 = vmatprep.mubr.f32.mxu0 0.0
    %370 = vmatmul.mubr.f32.gmra.mrb[0].mxu0 %v68
    %v371 = vpop.f32.mrb[0].mxu0
    %v372 = vadd.f32 %v147, %v371
    %v373 = vpop.f32.mrb[0].mxu0
    %v374 = vadd.f32 %v151, %v373
    %375 = vmatprep.mubr.f32.mxu0 0.0
    %376 = vmatmul.mubr.f32.gmra.mrb[0].mxu0 %v69
    %v377 = vpop.f32.mrb[0].mxu0
    %v378 = vadd.f32 %v147, %v377
    %v379 = vpop.f32.mrb[0].mxu0
    %v380 = vadd.f32 %v151, %v379
    %381 = vdwg.mxu0
    %382 = vst [vmem:[#allocation2] sm:$0xff] %v223
    %383 = vst [vmem:[#allocation2 + $0x8] sm:$0xff] %v225
    %384 = vst [vmem:[#allocation2 + $0x10] sm:$0xff] %v336
    %385 = vst [vmem:[#allocation2 + $0x18] sm:$0xff] %v338
    %386 = vst [vmem:[#allocation2 + $0x20] sm:$0xff] %v229
    %387 = vst [vmem:[#allocation2 + $0x28] sm:$0xff] %v231
    %388 = vst [vmem:[#allocation2 + $0x30] sm:$0xff] %v342
    %389 = vst [vmem:[#allocation2 + $0x38] sm:$0xff] %v344
    %390 = vst [vmem:[#allocation2 + $0x40] sm:$0xff] %v235
    %391 = vst [vmem:[#allocation2 + $0x48] sm:$0xff] %v237
    %392 = vst [vmem:[#allocation2 + $0x50] sm:$0xff] %v348
    %393 = vst [vmem:[#allocation2 + $0x58] sm:$0xff] %v350
    %394 = vst [vmem:[#allocation2 + $0x60] sm:$0xff] %v241
    %395 = vst [vmem:[#allocation2 + $0x68] sm:$0xff] %v243
    %396 = vst [vmem:[#allocation2 + $0x70] sm:$0xff] %v354
    %397 = vst [vmem:[#allocation2 + $0x78] sm:$0xff] %v356
    %398 = vst [vmem:[#allocation2 + $0x80] sm:$0xff] %v247
    %399 = vst [vmem:[#allocation2 + $0x88] sm:$0xff] %v249
    %400 = vst [vmem:[#allocation2 + $0x90] sm:$0xff] %v360
    %401 = vst [vmem:[#allocation2 + $0x98] sm:$0xff] %v362
    %402 = vst [vmem:[#allocation2 + $0xa0] sm:$0xff] %v253
    %403 = vst [vmem:[#allocation2 + $0xa8] sm:$0xff] %v255
    %404 = vst [vmem:[#allocation2 + $0xb0] sm:$0xff] %v366
    %405 = vst [vmem:[#allocation2 + $0xb8] sm:$0xff] %v368
    %406 = vst [vmem:[#allocation2 + $0xc0] sm:$0xff] %v259
    %407 = vst [vmem:[#allocation2 + $0xc8] sm:$0xff] %v261
    %408 = vst [vmem:[#allocation2 + $0xd0] sm:$0xff] %v372
    %409 = vst [vmem:[#allocation2 + $0xd8] sm:$0xff] %v374
    %410 = vst [vmem:[#allocation2 + $0xe0] sm:$0xff] %v265
    %411 = vst [vmem:[#allocation2 + $0xe8] sm:$0xff] %v267
    %412 = vst [vmem:[#allocation2 + $0xf0] sm:$0xff] %v378
    %413 = vst [vmem:[#allocation2 + $0xf8] sm:$0xff] %v380
    %v414 = vld [vmem:[%s1] sm:$0xff]
    %v415 = vld [vmem:[%s1 + $0x8] sm:$0xff]
    %v416 = vld [vmem:[%s1 + $0x10] sm:$0xff]
    %v417 = vld [vmem:[%s1 + $0x18] sm:$0xff]
    %v418 = vld [vmem:[%s1 + $0x20] sm:$0xff]
    %v419 = vld [vmem:[%s1 + $0x28] sm:$0xff]
    %v420 = vld [vmem:[%s1 + $0x30] sm:$0xff]
    %v421 = vld [vmem:[%s1 + $0x38] sm:$0xff]
    %v422 = vsub.f32 %v414, 1.0
    %v423 = vsub.f32 %v415, 1.0
    %v424 = vsub.f32 %v416, 1.0
    %v425 = vsub.f32 %v417, 1.0
    %v426 = vsub.f32 %v418, 1.0
    %v427 = vsub.f32 %v419, 1.0
    %v428 = vsub.f32 %v420, 1.0
    %v429 = vsub.f32 %v421, 1.0
    %v430 = vld [vmem:[%s5] sm:$0x1]
    %v431 = vld [vmem:[#allocation3] sm:$0xff]
    %v432 = vld [vmem:[#allocation4] sm:$0xff]
    %v433 = vld [vmem:[#allocation5] sm:$0xff]
    %v434 = vld [vmem:[#allocation5 + $0x8] sm:$0xff]
    %v435 = vld [vmem:[#allocation5 + $0x10] sm:$0xff]
    %v436 = vld [vmem:[#allocation5 + $0x18] sm:$0xff]
    %v437 = vld [vmem:[#allocation5 + $0x20] sm:$0xff]
    %v438 = vld [vmem:[#allocation5 + $0x28] sm:$0xff]
    %v439 = vld [vmem:[#allocation5 + $0x30] sm:$0xff]
    %v440 = vld [vmem:[#allocation5 + $0x38] sm:$0xff]
    %v441 = vld [vmem:[#allocation5 + $0x40] sm:$0xff]
    %v442 = vld [vmem:[#allocation5 + $0x48] sm:$0xff]
    %v443 = vld [vmem:[#allocation5 + $0x50] sm:$0xff]
    %v444 = vld [vmem:[#allocation5 + $0x58] sm:$0xff]
    %v445 = vld [vmem:[#allocation5 + $0x60] sm:$0xff]
    %v446 = vld [vmem:[#allocation5 + $0x68] sm:$0xff]
    %v447 = vld [vmem:[#allocation5 + $0x70] sm:$0xff]
    %v448 = vld [vmem:[#allocation5 + $0x78] sm:$0xff]
    %v449 = vld [vmem:[#allocation5 + $0x80] sm:$0xff]
    %v450 = vld [vmem:[#allocation5 + $0x88] sm:$0xff]
    %v451 = vld [vmem:[#allocation5 + $0x90] sm:$0xff]
    %v452 = vld [vmem:[#allocation5 + $0x98] sm:$0xff]
    %v453 = vld [vmem:[#allocation5 + $0xa0] sm:$0xff]
    %v454 = vld [vmem:[#allocation5 + $0xa8] sm:$0xff]
    %v455 = vld [vmem:[#allocation5 + $0xb0] sm:$0xff]
    %v456 = vld [vmem:[#allocation5 + $0xb8] sm:$0xff]
    %v457 = vld [vmem:[#allocation5 + $0xc0] sm:$0xff]
    %v458 = vld [vmem:[#allocation5 + $0xc8] sm:$0xff]
    %v459 = vld [vmem:[#allocation5 + $0xd0] sm:$0xff]
    %v460 = vld [vmem:[#allocation5 + $0xd8] sm:$0xff]
    %v461 = vld [vmem:[#allocation5 + $0xe0] sm:$0xff]
    %v462 = vld [vmem:[#allocation5 + $0xe8] sm:$0xff]
    %v463 = vld [vmem:[#allocation5 + $0xf0] sm:$0xff]
    %v464 = vld [vmem:[#allocation5 + $0xf8] sm:$0xff]
    %v465 = vld [vmem:[#allocation5 + $0x100] sm:$0xff]
    %v466 = vld [vmem:[#allocation5 + $0x108] sm:$0xff]
    %v467 = vld [vmem:[#allocation5 + $0x110] sm:$0xff]
    %v468 = vld [vmem:[#allocation5 + $0x118] sm:$0xff]
    %v469 = vld [vmem:[#allocation5 + $0x120] sm:$0xff]
    %v470 = vld [vmem:[#allocation5 + $0x128] sm:$0xff]
    %v471 = vld [vmem:[#allocation5 + $0x130] sm:$0xff]
    %v472 = vld [vmem:[#allocation5 + $0x138] sm:$0xff]
    %v473 = vld [vmem:[#allocation5 + $0x140] sm:$0xff]
    %v474 = vld [vmem:[#allocation5 + $0x148] sm:$0xff]
    %v475 = vld [vmem:[#allocation5 + $0x150] sm:$0xff]
    %v476 = vld [vmem:[#allocation5 + $0x158] sm:$0xff]
    %v477 = vld [vmem:[#allocation5 + $0x160] sm:$0xff]
    %v478 = vld [vmem:[#allocation5 + $0x168] sm:$0xff]
    %v479 = vld [vmem:[#allocation5 + $0x170] sm:$0xff]
    %v480 = vld [vmem:[#allocation5 + $0x178] sm:$0xff]
    %v481 = vld [vmem:[#allocation5 + $0x180] sm:$0xff]
    %v482 = vld [vmem:[#allocation5 + $0x188] sm:$0xff]
    %v483 = vld [vmem:[#allocation5 + $0x190] sm:$0xff]
    %v484 = vld [vmem:[#allocation5 + $0x198] sm:$0xff]
    %v485 = vld [vmem:[#allocation5 + $0x1a0] sm:$0xff]
    %v486 = vld [vmem:[#allocation5 + $0x1a8] sm:$0xff]
    %v487 = vld [vmem:[#allocation5 + $0x1b0] sm:$0xff]
    %v488 = vld [vmem:[#allocation5 + $0x1b8] sm:$0xff]
    %v489 = vld [vmem:[#allocation5 + $0x1c0] sm:$0xff]
    %v490 = vld [vmem:[#allocation5 + $0x1c8] sm:$0xff]
    %v491 = vld [vmem:[#allocation5 + $0x1d0] sm:$0xff]
    %v492 = vld [vmem:[#allocation5 + $0x1d8] sm:$0xff]
    %v493 = vld [vmem:[#allocation5 + $0x1e0] sm:$0xff]
    %v494 = vld [vmem:[#allocation5 + $0x1e8] sm:$0xff]
    %v495 = vld [vmem:[#allocation5 + $0x1f0] sm:$0xff]
    %v496 = vld [vmem:[#allocation5 + $0x1f8] sm:$0xff]
    %v497 = vld [vmem:[#allocation5 + $0x200] sm:$0xff]
    %v498 = vld [vmem:[#allocation5 + $0x208] sm:$0xff]
    %v499 = vld [vmem:[#allocation5 + $0x210] sm:$0xff]
    %v500 = vld [vmem:[#allocation5 + $0x218] sm:$0xff]
    %v501 = vld [vmem:[#allocation5 + $0x220] sm:$0xff]
    %v502 = vld [vmem:[#allocation5 + $0x228] sm:$0xff]
    %v503 = vld [vmem:[#allocation5 + $0x230] sm:$0xff]
    %v504 = vld [vmem:[#allocation5 + $0x238] sm:$0xff]
    %v505 = vld [vmem:[#allocation5 + $0x240] sm:$0xff]
    %v506 = vld [vmem:[#allocation5 + $0x248] sm:$0xff]
    %v507 = vld [vmem:[#allocation5 + $0x250] sm:$0xff]
    %v508 = vld [vmem:[#allocation5 + $0x258] sm:$0xff]
    %v509 = vld [vmem:[#allocation5 + $0x260] sm:$0xff]
    %v510 = vld [vmem:[#allocation5 + $0x268] sm:$0xff]
    %v511 = vld [vmem:[#allocation5 + $0x270] sm:$0xff]
    %v512 = vld [vmem:[#allocation5 + $0x278] sm:$0xff]
    %v513 = vld [vmem:[#allocation5 + $0x280] sm:$0xff]
    %v514 = vld [vmem:[#allocation5 + $0x288] sm:$0xff]
    %v515 = vld [vmem:[#allocation5 + $0x290] sm:$0xff]
    %v516 = vld [vmem:[#allocation5 + $0x298] sm:$0xff]
    %v517 = vld [vmem:[#allocation5 + $0x2a0] sm:$0xff]
    %v518 = vld [vmem:[#allocation5 + $0x2a8] sm:$0xff]
    %v519 = vld [vmem:[#allocation5 + $0x2b0] sm:$0xff]
    %v520 = vld [vmem:[#allocation5 + $0x2b8] sm:$0xff]
    %v521 = vld [vmem:[#allocation5 + $0x2c0] sm:$0xff]
    %v522 = vld [vmem:[#allocation5 + $0x2c8] sm:$0xff]
    %v523 = vld [vmem:[#allocation5 + $0x2d0] sm:$0xff]
    %v524 = vld [vmem:[#allocation5 + $0x2d8] sm:$0xff]
    %v525 = vld [vmem:[#allocation5 + $0x2e0] sm:$0xff]
    %v526 = vld [vmem:[#allocation5 + $0x2e8] sm:$0xff]
    %v527 = vld [vmem:[#allocation5 + $0x2f0] sm:$0xff]
    %v528 = vld [vmem:[#allocation5 + $0x2f8] sm:$0xff]
    %v529 = vld [vmem:[#allocation5 + $0x300] sm:$0xff]
    %v530 = vld [vmem:[#allocation5 + $0x308] sm:$0xff]
    %v531 = vld [vmem:[#allocation5 + $0x310] sm:$0xff]
    %v532 = vld [vmem:[#allocation5 + $0x318] sm:$0xff]
    %v533 = vld [vmem:[#allocation5 + $0x320] sm:$0xff]
    %v534 = vld [vmem:[#allocation5 + $0x328] sm:$0xff]
    %v535 = vld [vmem:[#allocation5 + $0x330] sm:$0xff]
    %v536 = vld [vmem:[#allocation5 + $0x338] sm:$0xff]
    %v537 = vld [vmem:[#allocation5 + $0x340] sm:$0xff]
    %v538 = vld [vmem:[#allocation5 + $0x348] sm:$0xff]
    %v539 = vld [vmem:[#allocation5 + $0x350] sm:$0xff]
    %v540 = vld [vmem:[#allocation5 + $0x358] sm:$0xff]
    %v541 = vld [vmem:[#allocation5 + $0x360] sm:$0xff]
    %v542 = vld [vmem:[#allocation5 + $0x368] sm:$0xff]
    %v543 = vld [vmem:[#allocation5 + $0x370] sm:$0xff]
    %v544 = vld [vmem:[#allocation5 + $0x378] sm:$0xff]
    %v545 = vld [vmem:[#allocation5 + $0x380] sm:$0xff]
    %v546 = vld [vmem:[#allocation5 + $0x388] sm:$0xff]
    %v547 = vld [vmem:[#allocation5 + $0x390] sm:$0xff]
    %v548 = vld [vmem:[#allocation5 + $0x398] sm:$0xff]
    %v549 = vld [vmem:[#allocation5 + $0x3a0] sm:$0xff]
    %v550 = vld [vmem:[#allocation5 + $0x3a8] sm:$0xff]
    %v551 = vld [vmem:[#allocation5 + $0x3b0] sm:$0xff]
    %v552 = vld [vmem:[#allocation5 + $0x3b8] sm:$0xff]
    %v553 = vld [vmem:[#allocation5 + $0x3c0] sm:$0xff]
    %v554 = vld [vmem:[#allocation5 + $0x3c8] sm:$0xff]
    %v555 = vld [vmem:[#allocation5 + $0x3d0] sm:$0xff]
    %v556 = vld [vmem:[#allocation5 + $0x3d8] sm:$0xff]
    %v557 = vld [vmem:[#allocation5 + $0x3e0] sm:$0xff]
    %v558 = vld [vmem:[#allocation5 + $0x3e8] sm:$0xff]
    %v559 = vld [vmem:[#allocation5 + $0x3f0] sm:$0xff]
    %v560 = vld [vmem:[#allocation5 + $0x3f8] sm:$0xff]
    %v561 = vld [vmem:[#allocation5 + $0x400] sm:$0xff]
    %v562 = vld [vmem:[#allocation5 + $0x408] sm:$0xff]
    %v563 = vld [vmem:[#allocation5 + $0x410] sm:$0xff]
    %v564 = vld [vmem:[#allocation5 + $0x418] sm:$0xff]
    %v565 = vld [vmem:[#allocation5 + $0x420] sm:$0xff]
    %v566 = vld [vmem:[#allocation5 + $0x428] sm:$0xff]
    %v567 = vld [vmem:[#allocation5 + $0x430] sm:$0xff]
    %v568 = vld [vmem:[#allocation5 + $0x438] sm:$0xff]
    %v569 = vld [vmem:[#allocation5 + $0x440] sm:$0xff]
    %v570 = vld [vmem:[#allocation5 + $0x448] sm:$0xff]
    %v571 = vld [vmem:[#allocation5 + $0x450] sm:$0xff]
    %v572 = vld [vmem:[#allocation5 + $0x458] sm:$0xff]
    %v573 = vld [vmem:[#allocation5 + $0x460] sm:$0xff]
    %v574 = vld [vmem:[#allocation5 + $0x468] sm:$0xff]
    %v575 = vld [vmem:[#allocation5 + $0x470] sm:$0xff]
    %v576 = vld [vmem:[#allocation5 + $0x478] sm:$0xff]
    %v577 = vld [vmem:[#allocation5 + $0x480] sm:$0xff]
    %v578 = vld [vmem:[#allocation5 + $0x488] sm:$0xff]
    %v579 = vld [vmem:[#allocation5 + $0x490] sm:$0xff]
    %v580 = vld [vmem:[#allocation5 + $0x498] sm:$0xff]
    %v581 = vld [vmem:[#allocation5 + $0x4a0] sm:$0xff]
    %v582 = vld [vmem:[#allocation5 + $0x4a8] sm:$0xff]
    %v583 = vld [vmem:[#allocation5 + $0x4b0] sm:$0xff]
    %v584 = vld [vmem:[#allocation5 + $0x4b8] sm:$0xff]
    %v585 = vld [vmem:[#allocation5 + $0x4c0] sm:$0xff]
    %v586 = vld [vmem:[#allocation5 + $0x4c8] sm:$0xff]
    %v587 = vld [vmem:[#allocation5 + $0x4d0] sm:$0xff]
    %v588 = vld [vmem:[#allocation5 + $0x4d8] sm:$0xff]
    %v589 = vld [vmem:[#allocation5 + $0x4e0] sm:$0xff]
    %v590 = vld [vmem:[#allocation5 + $0x4e8] sm:$0xff]
    %v591 = vld [vmem:[#allocation5 + $0x4f0] sm:$0xff]
    %v592 = vld [vmem:[#allocation5 + $0x4f8] sm:$0xff]
    %593 = vmatprep.subr.mxu0 %v434
    %594 = vmatpush1.msra.mxu0 %v433
    %595 = vmatprep.subr.mxu0 %v439
    %596 = vmatpush1.msra.mxu0 %v438
    %597 = vmatprep.subr.mxu0 %v444
    %598 = vmatpush1.msra.mxu0 %v443
    %599 = vmatprep.subr.mxu0 %v449
    %600 = vmatpush1.msra.mxu0 %v448
    %601 = vmatprep.subr.mxu0 %v454
    %602 = vmatpush1.msra.mxu0 %v453
    %603 = vmatprep.subr.mxu0 %v459
    %604 = vmatpush1.msra.mxu0 %v458
    %605 = vmatprep.subr.mxu0 %v464
    %606 = vmatpush1.msra.mxu0 %v463
    %607 = vmatprep.subr.mxu0 %v469
    %608 = vmatpush1.msra.mxu0 %v468
    %609 = vmatprep.subr.mxu0 %v474
    %610 = vmatpush1.msra.mxu0 %v473
    %611 = vmatprep.subr.mxu0 %v479
    %612 = vmatpush1.msra.mxu0 %v478
    %613 = vmatprep.subr.mxu0 %v484
    %614 = vmatpush1.msra.mxu0 %v483
    %615 = vmatprep.subr.mxu0 %v489
    %616 = vmatpush1.msra.mxu0 %v488
    %617 = vmatprep.subr.mxu0 %v494
    %618 = vmatpush1.msra.mxu0 %v493
    %619 = vmatprep.subr.mxu0 %v499
    %620 = vmatpush1.msra.mxu0 %v498
    %621 = vmatprep.subr.mxu0 %v504
    %622 = vmatpush1.msra.mxu0 %v503
    %623 = vmatprep.subr.mxu0 %v509
    %624 = vmatpush1.msra.mxu0 %v508
    %625 = vmatprep.subr.mxu0 %v514
    %626 = vmatpush1.msra.mxu0 %v513
    %627 = vmatprep.subr.mxu0 %v519
    %628 = vmatpush1.msra.mxu0 %v518
    %629 = vmatprep.subr.mxu0 %v524
    %630 = vmatpush1.msra.mxu0 %v523
    %631 = vmatprep.subr.mxu0 %v529
    %632 = vmatpush1.msra.mxu0 %v528
    %633 = vmatprep.subr.mxu0 %v534
    %634 = vmatpush1.msra.mxu0 %v533
    %635 = vmatprep.subr.mxu0 %v539
    %636 = vmatpush1.msra.mxu0 %v538
    %637 = vmatprep.subr.mxu0 %v544
    %638 = vmatpush1.msra.mxu0 %v543
    %639 = vmatprep.subr.mxu0 %v549
    %640 = vmatpush1.msra.mxu0 %v548
    %641 = vmatprep.subr.mxu0 %v554
    %642 = vmatpush1.msra.mxu0 %v553
    %643 = vmatprep.subr.mxu0 %v559
    %644 = vmatpush1.msra.mxu0 %v558
    %645 = vmatprep.subr.mxu0 %v564
    %646 = vmatpush1.msra.mxu0 %v563
    %647 = vmatprep.subr.mxu0 %v569
    %648 = vmatpush1.msra.mxu0 %v568
    %649 = vmatprep.subr.mxu0 %v574
    %650 = vmatpush1.msra.mxu0 %v573
    %651 = vmatprep.subr.mxu0 %v579
    %652 = vmatpush1.msra.mxu0 %v578
    %653 = vmatprep.subr.mxu0 %v584
    %654 = vmatpush1.msra.mxu0 %v583
    %655 = vmatprep.subr.mxu0 %v589
    %656 = vmatpush1.msra.mxu0 %v588
    %657 = vmatprep.mubr.f32.mxu0 %v432
    %658 = vmatmul.mubr.f32.gmra.mrb[0].mxu0 %v431
    %v659 = vpop.f32.mrb[0].mxu0
    %v660 = vadd.f32 0.0, %v659
    %v661 = vpop.f32.mrb[0].mxu0
    %v662 = vadd.f32 0.0, %v661
    %663 = vdwg.mxu0
    %664 = vmatprep.subr.mxu0 %v436
    %665 = vmatpush1.msra.mxu0 %v435
    %666 = vmatprep.subr.mxu0 %v441
    %667 = vmatpush1.msra.mxu0 %v440
    %668 = vmatprep.subr.mxu0 %v446
    %669 = vmatpush1.msra.mxu0 %v445
    %670 = vmatprep.subr.mxu0 %v451
    %671 = vmatpush1.msra.mxu0 %v450
    %672 = vmatprep.subr.mxu0 %v456
    %673 = vmatpush1.msra.mxu0 %v455
    %674 = vmatprep.subr.mxu0 %v461
    %675 = vmatpush1.msra.mxu0 %v460
    %676 = vmatprep.subr.mxu0 %v466
    %677 = vmatpush1.msra.mxu0 %v465
    %678 = vmatprep.subr.mxu0 %v471
    %679 = vmatpush1.msra.mxu0 %v470
    %680 = vmatprep.subr.mxu0 %v476
    %681 = vmatpush1.msra.mxu0 %v475
    %682 = vmatprep.subr.mxu0 %v481
    %683 = vmatpush1.msra.mxu0 %v480
    %684 = vmatprep.subr.mxu0 %v486
    %685 = vmatpush1.msra.mxu0 %v485
    %686 = vmatprep.subr.mxu0 %v491
    %687 = vmatpush1.msra.mxu0 %v490
    %688 = vmatprep.subr.mxu0 %v496
    %689 = vmatpush1.msra.mxu0 %v495
    %690 = vmatprep.subr.mxu0 %v501
    %691 = vmatpush1.msra.mxu0 %v500
    %692 = vmatprep.subr.mxu0 %v506
    %693 = vmatpush1.msra.mxu0 %v505
    %694 = vmatprep.subr.mxu0 %v511
    %695 = vmatpush1.msra.mxu0 %v510
    %696 = vmatprep.subr.mxu0 %v516
    %697 = vmatpush1.msra.mxu0 %v515
    %698 = vmatprep.subr.mxu0 %v521
    %699 = vmatpush1.msra.mxu0 %v520
    %700 = vmatprep.subr.mxu0 %v526
    %701 = vmatpush1.msra.mxu0 %v525
    %702 = vmatprep.subr.mxu0 %v531
    %703 = vmatpush1.msra.mxu0 %v530
    %704 = vmatprep.subr.mxu0 %v536
    %705 = vmatpush1.msra.mxu0 %v535
    %706 = vmatprep.subr.mxu0 %v541
    %707 = vmatpush1.msra.mxu0 %v540
    %708 = vmatprep.subr.mxu0 %v546
    %709 = vmatpush1.msra.mxu0 %v545
    %710 = vmatprep.subr.mxu0 %v551
    %711 = vmatpush1.msra.mxu0 %v550
    %712 = vmatprep.subr.mxu0 %v556
    %713 = vmatpush1.msra.mxu0 %v555
    %714 = vmatprep.subr.mxu0 %v561
    %715 = vmatpush1.msra.mxu0 %v560
    %716 = vmatprep.subr.mxu0 %v566
    %717 = vmatpush1.msra.mxu0 %v565
    %718 = vmatprep.subr.mxu0 %v571
    %719 = vmatpush1.msra.mxu0 %v570
    %720 = vmatprep.subr.mxu0 %v576
    %721 = vmatpush1.msra.mxu0 %v575
    %722 = vmatprep.subr.mxu0 %v581
    %723 = vmatpush1.msra.mxu0 %v580
    %724 = vmatprep.subr.mxu0 %v586
    %725 = vmatpush1.msra.mxu0 %v585
    %726 = vmatprep.subr.mxu0 %v591
    %727 = vmatpush1.msra.mxu0 %v590
    %728 = vmatprep.mubr.f32.mxu0 %v432
    %729 = vmatmul.mubr.f32.gmra.mrb[0].mxu0 %v431
    %v730 = vpop.f32.mrb[0].mxu0
    %v731 = vadd.f32 0.0, %v730
    %v732 = vpop.f32.mrb[0].mxu0
    %v733 = vadd.f32 0.0, %v732
    %734 = vdwg.mxu0
    %735 = vmatprep.subr.mxu0 0.0
    %736 = vmatpush1.msra.mxu0 %v437
    %737 = vmatprep.subr.mxu0 0.0
    %738 = vmatpush1.msra.mxu0 %v442
    %739 = vmatprep.subr.mxu0 0.0
    %740 = vmatpush1.msra.mxu0 %v447
    %741 = vmatprep.subr.mxu0 0.0
    %742 = vmatpush1.msra.mxu0 %v452
    %743 = vmatprep.subr.mxu0 0.0
    %744 = vmatpush1.msra.mxu0 %v457
    %745 = vmatprep.subr.mxu0 0.0
    %746 = vmatpush1.msra.mxu0 %v462
    %747 = vmatprep.subr.mxu0 0.0
    %748 = vmatpush1.msra.mxu0 %v467
    %749 = vmatprep.subr.mxu0 0.0
    %750 = vmatpush1.msra.mxu0 %v472
    %751 = vmatprep.subr.mxu0 0.0
    %752 = vmatpush1.msra.mxu0 %v477
    %753 = vmatprep.subr.mxu0 0.0
    %754 = vmatpush1.msra.mxu0 %v482
    %755 = vmatprep.subr.mxu0 0.0
    %756 = vmatpush1.msra.mxu0 %v487
    %757 = vmatprep.subr.mxu0 0.0
    %758 = vmatpush1.msra.mxu0 %v492
    %759 = vmatprep.subr.mxu0 0.0
    %760 = vmatpush1.msra.mxu0 %v497
    %761 = vmatprep.subr.mxu0 0.0
    %762 = vmatpush1.msra.mxu0 %v502
    %763 = vmatprep.subr.mxu0 0.0
    %764 = vmatpush1.msra.mxu0 %v507
    %765 = vmatprep.subr.mxu0 0.0
    %766 = vmatpush1.msra.mxu0 %v512
    %767 = vmatprep.subr.mxu0 0.0
    %768 = vmatpush1.msra.mxu0 %v517
    %769 = vmatprep.subr.mxu0 0.0
    %770 = vmatpush1.msra.mxu0 %v522
    %771 = vmatprep.subr.mxu0 0.0
    %772 = vmatpush1.msra.mxu0 %v527
    %773 = vmatprep.subr.mxu0 0.0
    %774 = vmatpush1.msra.mxu0 %v532
    %775 = vmatprep.subr.mxu0 0.0
    %776 = vmatpush1.msra.mxu0 %v537
    %777 = vmatprep.subr.mxu0 0.0
    %778 = vmatpush1.msra.mxu0 %v542
    %779 = vmatprep.subr.mxu0 0.0
    %780 = vmatpush1.msra.mxu0 %v547
    %781 = vmatprep.subr.mxu0 0.0
    %782 = vmatpush1.msra.mxu0 %v552
    %783 = vmatprep.subr.mxu0 0.0
    %784 = vmatpush1.msra.mxu0 %v557
    %785 = vmatprep.subr.mxu0 0.0
    %786 = vmatpush1.msra.mxu0 %v562
    %787 = vmatprep.subr.mxu0 0.0
    %788 = vmatpush1.msra.mxu0 %v567
    %789 = vmatprep.subr.mxu0 0.0
    %790 = vmatpush1.msra.mxu0 %v572
    %791 = vmatprep.subr.mxu0 0.0
    %792 = vmatpush1.msra.mxu0 %v577
    %793 = vmatprep.subr.mxu0 0.0
    %794 = vmatpush1.msra.mxu0 %v582
    %795 = vmatprep.subr.mxu0 0.0
    %796 = vmatpush1.msra.mxu0 %v587
    %797 = vmatprep.subr.mxu0 0.0
    %798 = vmatpush1.msra.mxu0 %v592
    %799 = vmatprep.mubr.f32.mxu0 %v432
    %800 = vmatmul.mubr.f32.gmra.mrb[0].mxu0 %v431
    %v801 = vpop.f32.mrb[0].mxu0
    %v802 = vadd.f32 0.0, %v801
    %v803 = vpop.f32.mrb[0].mxu0
    %804 = vdwg.mxu0
    %v806 = vlaneseq
    %v807 = vshrl.u32 %v806, 7
    %v808 = vsub.s32 0, %v807
    %v809 = vrot.slane %v430, %v808
    %v811 = vadd.f32 %v802, %v809
    %v812 = vtanh.pop %v811
    %814 = vset.pattern.permute.xlu0 0
    %815 = vperm.xlu0 %814, %v422
    %v816 = vpop.permute.xlu0 %815
    %v818 = vmul.f32 %v812, %v816
    %v819 = vadd.f32 %v432, %v818
    %v820 = vld [vmem:[#allocation2] sm:$0xff]
    %v821 = vld [vmem:[#allocation2 + $0x8] sm:$0xff]
    %v822 = vld [vmem:[#allocation2 + $0x10] sm:$0xff]
    %v823 = vld [vmem:[#allocation2 + $0x18] sm:$0xff]
    %v824 = vadd.f32 %v660, %v820
    %v825 = vadd.f32 %v662, %v821
    %v826 = vadd.f32 %v731, %v822
    %v827 = vadd.f32 %v733, %v823
    %v828 = vxor.u32 %v824, 2147483648
    %v829 = vxor.u32 %v825, 2147483648
    %v830 = vxor.u32 %v826, 2147483648
    %v831 = vxor.u32 %v827, 2147483648
    %v832 = vmul.f32 %v828, 1.442695
    %v833 = vpow.pop %v832
    %v834 = vmul.f32 %v829, 1.442695
    %v835 = vpow.pop %v834
    %v836 = vmul.f32 %v830, 1.442695
    %v837 = vpow.pop %v836
    %v838 = vmul.f32 %v831, 1.442695
    %v839 = vpow.pop %v838
    %v840 = vadd.f32 %v833, 1.0
    %v841 = vadd.f32 %v835, 1.0
    %v842 = vadd.f32 %v837, 1.0
    %v843 = vadd.f32 %v839, 1.0
    %v844 = vrcp.pop %v840
    %v845 = vmul.f32 1.0, %v844
    %v846 = vrcp.pop %v841
    %v847 = vmul.f32 1.0, %v846
    %v848 = vrcp.pop %v842
    %v849 = vmul.f32 1.0, %v848
    %v850 = vrcp.pop %v843
    %v851 = vmul.f32 1.0, %v850
    %v852 = vmul.f32 %v845, %v819
    %v853 = vmul.f32 %v847, %v851
    %v854 = vadd.f32 %v852, %v853
    %v855 = vtanh.pop %v854
    %v856 = vmul.f32 %v849, %v855
    %857 = vst [vmem:[#allocation10] sm:$0xff] %v856
    %v858 = vadd.f32 %v856, 0.0
    %v859 = vld [vmem:[#allocation5] sm:$0xff]
    %v860 = vld [vmem:[#allocation5 + $0x8] sm:$0xff]
    %v861 = vld [vmem:[#allocation5 + $0x10] sm:$0xff]
    %v862 = vld [vmem:[#allocation5 + $0x18] sm:$0xff]
    %v863 = vld [vmem:[#allocation5 + $0x20] sm:$0xff]
    %v864 = vld [vmem:[#allocation5 + $0x28] sm:$0xff]
    %v865 = vld [vmem:[#allocation5 + $0x30] sm:$0xff]
    %v866 = vld [vmem:[#allocation5 + $0x38] sm:$0xff]
    %v867 = vld [vmem:[#allocation5 + $0x40] sm:$0xff]
    %v868 = vld [vmem:[#allocation5 + $0x48] sm:$0xff]
    %v869 = vld [vmem:[#allocation5 + $0x50] sm:$0xff]
    %v870 = vld [vmem:[#allocation5 + $0x58] sm:$0xff]
    %v871 = vld [vmem:[#allocation5 + $0x60] sm:$0xff]
    %v872 = vld [vmem:[#allocation5 + $0x68] sm:$0xff]
    %v873 = vld [vmem:[#allocation5 + $0x70] sm:$0xff]
    %v874 = vld [vmem:[#allocation5 + $0x78] sm:$0xff]
    %v875 = vld [vmem:[#allocation5 + $0x80] sm:$0xff]
    %v876 = vld [vmem:[#allocation5 + $0x88] sm:$0xff]
    %v877 = vld [vmem:[#allocation5 + $0x90] sm:$0xff]
    %v878 = vld [vmem:[#allocation5 + $0x98] sm:$0xff]
    %v879 = vld [vmem:[#allocation5 + $0xa0] sm:$0xff]
    %v880 = vld [vmem:[#allocation5 + $0xa8] sm:$0xff]
    %v881 = vld [vmem:[#allocation5 + $0xb0] sm:$0xff]
    %v882 = vld [vmem:[#allocation5 + $0xb8] sm:$0xff]
    %v883 = vld [vmem:[#allocation5 + $0xc0] sm:$0xff]
    %v884 = vld [vmem:[#allocation5 + $0xc8] sm:$0xff]
    %v885 = vld [vmem:[#allocation5 + $0xd0] sm:$0xff]
    %v886 = vld [vmem:[#allocation5 + $0xd8] sm:$0xff]
    %v887 = vld [vmem:[#allocation5 + $0xe0] sm:$0xff]
    %v888 = vld [vmem:[#allocation5 + $0xe8] sm:$0xff]
    %v889 = vld [vmem:[#allocation5 + $0xf0] sm:$0xff]
    %v890 = vld [vmem:[#allocation5 + $0xf8] sm:$0xff]
    %v891 = vld [vmem:[#allocation5 + $0x100] sm:$0xff]
    %v892 = vld [vmem:[#allocation5 + $0x108] sm:$0xff]
    %v893 = vld [vmem:[#allocation5 + $0x110] sm:$0xff]
    %v894 = vld [vmem:[#allocation5 + $0x118] sm:$0xff]
    %v895 = vld [vmem:[#allocation5 + $0x120] sm:$0xff]
    %v896 = vld [vmem:[#allocation5 + $0x128] sm:$0xff]
    %v897 = vld [vmem:[#allocation5 + $0x130] sm:$0xff]
    %v898 = vld [vmem:[#allocation5 + $0x138] sm:$0xff]
    %v899 = vld [vmem:[#allocation5 + $0x140] sm:$0xff]
    %v900 = vld [vmem:[#allocation5 + $0x148] sm:$0xff]
    %v901 = vld [vmem:[#allocation5 + $0x150] sm:$0xff]
    %v902 = vld [vmem:[#allocation5 + $0x158] sm:$0xff]
    %v903 = vld [vmem:[#allocation5 + $0x160] sm:$0xff]
    %v904 = vld [vmem:[#allocation5 + $0x168] sm:$0xff]
    %v905 = vld [vmem:[#allocation5 + $0x170] sm:$0xff]
    %v906 = vld [vmem:[#allocation5 + $0x178] sm:$0xff]
    %v907 = vld [vmem:[#allocation5 + $0x180] sm:$0xff]
    %v908 = vld [vmem:[#allocation5 + $0x188] sm:$0xff]
    %v909 = vld [vmem:[#allocation5 + $0x190] sm:$0xff]
    %v910 = vld [vmem:[#allocation5 + $0x198] sm:$0xff]
    %v911 = vld [vmem:[#allocation5 + $0x1a0] sm:$0xff]
    %v912 = vld [vmem:[#allocation5 + $0x1a8] sm:$0xff]
    %v913 = vld [vmem:[#allocation5 + $0x1b0] sm:$0xff]
    %v914 = vld [vmem:[#allocation5 + $0x1b8] sm:$0xff]
    %v915 = vld [vmem:[#allocation5 + $0x1c0] sm:$0xff]
    %v916 = vld [vmem:[#allocation5 + $0x1c8] sm:$0xff]
    %v917 = vld [vmem:[#allocation5 + $0x1d0] sm:$0xff]
    %v918 = vld [vmem:[#allocation5 + $0x1d8] sm:$0xff]
    %v919 = vld [vmem:[#allocation5 + $0x1e0] sm:$0xff]
    %v920 = vld [vmem:[#allocation5 + $0x1e8] sm:$0xff]
    %v921 = vld [vmem:[#allocation5 + $0x1f0] sm:$0xff]
    %v922 = vld [vmem:[#allocation5 + $0x1f8] sm:$0xff]
    %v923 = vld [vmem:[#allocation5 + $0x200] sm:$0xff]
    %v924 = vld [vmem:[#allocation5 + $0x208] sm:$0xff]
    %v925 = vld [vmem:[#allocation5 + $0x210] sm:$0xff]
    %v926 = vld [vmem:[#allocation5 + $0x218] sm:$0xff]
    %v927 = vld [vmem:[#allocation5 + $0x220] sm:$0xff]
    %v928 = vld [vmem:[#allocation5 + $0x228] sm:$0xff]
    %v929 = vld [vmem:[#allocation5 + $0x230] sm:$0xff]
    %v930 = vld [vmem:[#allocation5 + $0x238] sm:$0xff]
    %v931 = vld [vmem:[#allocation5 + $0x240] sm:$0xff]
    %v932 = vld [vmem:[#allocation5 + $0x248] sm:$0xff]
    %v933 = vld [vmem:[#allocation5 + $0x250] sm:$0xff]
    %v934 = vld [vmem:[#allocation5 + $0x258] sm:$0xff]
    %v935 = vld [vmem:[#allocation5 + $0x260] sm:$0xff]
    %v936 = vld [vmem:[#allocation5 + $0x268] sm:$0xff]
    %v937 = vld [vmem:[#allocation5 + $0x270] sm:$0xff]
    %v938 = vld [vmem:[#allocation5 + $0x278] sm:$0xff]
    %v939 = vld [vmem:[#allocation5 + $0x280] sm:$0xff]
    %v940 = vld [vmem:[#allocation5 + $0x288] sm:$0xff]
    %v941 = vld [vmem:[#allocation5 + $0x290] sm:$0xff]
    %v942 = vld [vmem:[#allocation5 + $0x298] sm:$0xff]
    %v943 = vld [vmem:[#allocation5 + $0x2a0] sm:$0xff]
    %v944 = vld [vmem:[#allocation5 + $0x2a8] sm:$0xff]
    %v945 = vld [vmem:[#allocation5 + $0x2b0] sm:$0xff]
    %v946 = vld [vmem:[#allocation5 + $0x2b8] sm:$0xff]
    %v947 = vld [vmem:[#allocation5 + $0x2c0] sm:$0xff]
    %v948 = vld [vmem:[#allocation5 + $0x2c8] sm:$0xff]
    %v949 = vld [vmem:[#allocation5 + $0x2d0] sm:$0xff]
    %v950 = vld [vmem:[#allocation5 + $0x2d8] sm:$0xff]
    %v951 = vld [vmem:[#allocation5 + $0x2e0] sm:$0xff]
    %v952 = vld [vmem:[#allocation5 + $0x2e8] sm:$0xff]
    %v953 = vld [vmem:[#allocation5 + $0x2f0] sm:$0xff]
    %v954 = vld [vmem:[#allocation5 + $0x2f8] sm:$0xff]
    %v955 = vld [vmem:[#allocation5 + $0x300] sm:$0xff]
    %v956 = vld [vmem:[#allocation5 + $0x308] sm:$0xff]
    %v957 = vld [vmem:[#allocation5 + $0x310] sm:$0xff]
    %v958 = vld [vmem:[#allocation5 + $0x318] sm:$0xff]
    %v959 = vld [vmem:[#allocation5 + $0x320] sm:$0xff]
    %v960 = vld [vmem:[#allocation5 + $0x328] sm:$0xff]
    %v961 = vld [vmem:[#allocation5 + $0x330] sm:$0xff]
    %v962 = vld [vmem:[#allocation5 + $0x338] sm:$0xff]
    %v963 = vld [vmem:[#allocation5 + $0x340] sm:$0xff]
    %v964 = vld [vmem:[#allocation5 + $0x348] sm:$0xff]
    %v965 = vld [vmem:[#allocation5 + $0x350] sm:$0xff]
    %v966 = vld [vmem:[#allocation5 + $0x358] sm:$0xff]
    %v967 = vld [vmem:[#allocation5 + $0x360] sm:$0xff]
    %v968 = vld [vmem:[#allocation5 + $0x368] sm:$0xff]
    %v969 = vld [vmem:[#allocation5 + $0x370] sm:$0xff]
    %v970 = vld [vmem:[#allocation5 + $0x378] sm:$0xff]
    %v971 = vld [vmem:[#allocation5 + $0x380] sm:$0xff]
    %v972 = vld [vmem:[#allocation5 + $0x388] sm:$0xff]
    %v973 = vld [vmem:[#allocation5 + $0x390] sm:$0xff]
    %v974 = vld [vmem:[#allocation5 + $0x398] sm:$0xff]
    %v975 = vld [vmem:[#allocation5 + $0x3a0] sm:$0xff]
    %v976 = vld [vmem:[#allocation5 + $0x3a8] sm:$0xff]
    %v977 = vld [vmem:[#allocation5 + $0x3b0] sm:$0xff]
    %v978 = vld [vmem:[#allocation5 + $0x3b8] sm:$0xff]
    %v979 = vld [vmem:[#allocation5 + $0x3c0] sm:$0xff]
    %v980 = vld [vmem:[#allocation5 + $0x3c8] sm:$0xff]
    %v981 = vld [vmem:[#allocation5 + $0x3d0] sm:$0xff]
    %v982 = vld [vmem:[#allocation5 + $0x3d8] sm:$0xff]
    %v983 = vld [vmem:[#allocation5 + $0x3e0] sm:$0xff]
    %v984 = vld [vmem:[#allocation5 + $0x3e8] sm:$0xff]
    %v985 = vld [vmem:[#allocation5 + $0x3f0] sm:$0xff]
    %v986 = vld [vmem:[#allocation5 + $0x3f8] sm:$0xff]
    %v987 = vld [vmem:[#allocation5 + $0x400] sm:$0xff]
    %v988 = vld [vmem:[#allocation5 + $0x408] sm:$0xff]
    %v989 = vld [vmem:[#allocation5 + $0x410] sm:$0xff]
    %v990 = vld [vmem:[#allocation5 + $0x418] sm:$0xff]
    %v991 = vld [vmem:[#allocation5 + $0x420] sm:$0xff]
    %v992 = vld [vmem:[#allocation5 + $0x428] sm:$0xff]
    %v993 = vld [vmem:[#allocation5 + $0x430] sm:$0xff]
    %v994 = vld [vmem:[#allocation5 + $0x438] sm:$0xff]
    %v995 = vld [vmem:[#allocation5 + $0x440] sm:$0xff]
    %v996 = vld [vmem:[#allocation5 + $0x448] sm:$0xff]
    %v997 = vld [vmem:[#allocation5 + $0x450] sm:$0xff]
    %v998 = vld [vmem:[#allocation5 + $0x458] sm:$0xff]
    %v999 = vld [vmem:[#allocation5 + $0x460] sm:$0xff]
    %v1000 = vld [vmem:[#allocation5 + $0x468] sm:$0xff]
    %v1001 = vld [vmem:[#allocation5 + $0x470] sm:$0xff]
    %v1002 = vld [vmem:[#allocation5 + $0x478] sm:$0xff]
    %v1003 = vld [vmem:[#allocation5 + $0x480] sm:$0xff]
    %v1004 = vld [vmem:[#allocation5 + $0x488] sm:$0xff]
    %v1005 = vld [vmem:[#allocation5 + $0x490] sm:$0xff]
    %v1006 = vld [vmem:[#allocation5 + $0x498] sm:$0xff]
    %v1007 = vld [vmem:[#allocation5 + $0x4a0] sm:$0xff]
    %v1008 = vld [vmem:[#allocation5 + $0x4a8] sm:$0xff]
    %v1009 = vld [vmem:[#allocation5 + $0x4b0] sm:$0xff]
    %v1010 = vld [vmem:[#allocation5 + $0x4b8] sm:$0xff]
    %v1011 = vld [vmem:[#allocation5 + $0x4c0] sm:$0xff]
    %v1012 = vld [vmem:[#allocation5 + $0x4c8] sm:$0xff]
    %v1013 = vld [vmem:[#allocation5 + $0x4d0] sm:$0xff]
    %v1014 = vld [vmem:[#allocation5 + $0x4d8] sm:$0xff]
    %v1015 = vld [vmem:[#allocation5 + $0x4e0] sm:$0xff]
    %v1016 = vld [vmem:[#allocation5 + $0x4e8] sm:$0xff]
    %v1017 = vld [vmem:[#allocation5 + $0x4f0] sm:$0xff]
    %v1018 = vld [vmem:[#allocation5 + $0x4f8] sm:$0xff]
    %1019 = vmatprep.subr.mxu0 %v860
    %1020 = vmatpush1.msra.mxu0 %v859
    %1021 = vmatprep.subr.mxu0 %v865
    %1022 = vmatpush1.msra.mxu0 %v864
    %1023 = vmatprep.subr.mxu0 %v870
    %1024 = vmatpush1.msra.mxu0 %v869
    %1025 = vmatprep.subr.mxu0 %v875
    %1026 = vmatpush1.msra.mxu0 %v874
    %1027 = vmatprep.subr.mxu0 %v880
    %1028 = vmatpush1.msra.mxu0 %v879
    %1029 = vmatprep.subr.mxu0 %v885
    %1030 = vmatpush1.msra.mxu0 %v884
    %1031 = vmatprep.subr.mxu0 %v890
    %1032 = vmatpush1.msra.mxu0 %v889
    %1033 = vmatprep.subr.mxu0 %v895
    %1034 = vmatpush1.msra.mxu0 %v894
    %1035 = vmatprep.subr.mxu0 %v900
    %1036 = vmatpush1.msra.mxu0 %v899
    %1037 = vmatprep.subr.mxu0 %v905
    %1038 = vmatpush1.msra.mxu0 %v904
    %1039 = vmatprep.subr.mxu0 %v910
    %1040 = vmatpush1.msra.mxu0 %v909
    %1041 = vmatprep.subr.mxu0 %v915
    %1042 = vmatpush1.msra.mxu0 %v914
    %1043 = vmatprep.subr.mxu0 %v920
    %1044 = vmatpush1.msra.mxu0 %v919
    %1045 = vmatprep.subr.mxu0 %v925
    %1046 = vmatpush1.msra.mxu0 %v924
    %1047 = vmatprep.subr.mxu0 %v930
    %1048 = vmatpush1.msra.mxu0 %v929
    %1049 = vmatprep.subr.mxu0 %v935
    %1050 = vmatpush1.msra.mxu0 %v934
    %1051 = vmatprep.subr.mxu0 %v940
    %1052 = vmatpush1.msra.mxu0 %v939
    %1053 = vmatprep.subr.mxu0 %v945
    %1054 = vmatpush1.msra.mxu0 %v944
    %1055 = vmatprep.subr.mxu0 %v950
    %1056 = vmatpush1.msra.mxu0 %v949
    %1057 = vmatprep.subr.mxu0 %v955
    %1058 = vmatpush1.msra.mxu0 %v954
    %1059 = vmatprep.subr.mxu0 %v960
    %1060 = vmatpush1.msra.mxu0 %v959
    %1061 = vmatprep.subr.mxu0 %v965
    %1062 = vmatpush1.msra.mxu0 %v964
    %1063 = vmatprep.subr.mxu0 %v970
    %1064 = vmatpush1.msra.mxu0 %v969
    %1065 = vmatprep.subr.mxu0 %v975
    %1066 = vmatpush1.msra.mxu0 %v974
    %1067 = vmatprep.subr.mxu0 %v980
    %1068 = vmatpush1.msra.mxu0 %v979
    %1069 = vmatprep.subr.mxu0 %v985
    %1070 = vmatpush1.msra.mxu0 %v984
    %1071 = vmatprep.subr.mxu0 %v990
    %1072 = vmatpush1.msra.mxu0 %v989
    %1073 = vmatprep.subr.mxu0 %v995
    %1074 = vmatpush1.msra.mxu0 %v994
    %1075 = vmatprep.subr.mxu0 %v1000
    %1076 = vmatpush1.msra.mxu0 %v999
    %1077 = vmatprep.subr.mxu0 %v1005
    %1078 = vmatpush1.msra.mxu0 %v1004
    %1079 = vmatprep.subr.mxu0 %v1010
    %1080 = vmatpush1.msra.mxu0 %v1009
    %1081 = vmatprep.subr.mxu0 %v1015
    %1082 = vmatpush1.msra.mxu0 %v1014
    %1083 = vmatprep.mubr.f32.mxu0 %v854
    %1084 = vmatmul.mubr.f32.gmra.mrb[0].mxu0 %v856
    %v1085 = vpop.f32.mrb[0].mxu0
    %v1086 = vadd.f32 0.0, %v1085
    %v1087 = vpop.f32.mrb[0].mxu0
    %v1088 = vadd.f32 0.0, %v1087
    %1089 = vdwg.mxu0
    %1090 = vmatprep.subr.mxu0 %v862
    %1091 = vmatpush1.msra.mxu0 %v861
    %1092 = vmatprep.subr.mxu0 %v867
    %1093 = vmatpush1.msra.mxu0 %v866
    %1094 = vmatprep.subr.mxu0 %v872
    %1095 = vmatpush1.msra.mxu0 %v871
    %1096 = vmatprep.subr.mxu0 %v877
    %1097 = vmatpush1.msra.mxu0 %v876
    %1098 = vmatprep.subr.mxu0 %v882
    %1099 = vmatpush1.msra.mxu0 %v881
    %1100 = vmatprep.subr.mxu0 %v887
    %1101 = vmatpush1.msra.mxu0 %v886
    %1102 = vmatprep.subr.mxu0 %v892
    %1103 = vmatpush1.msra.mxu0 %v891
    %1104 = vmatprep.subr.mxu0 %v897
    %1105 = vmatpush1.msra.mxu0 %v896
    %1106 = vmatprep.subr.mxu0 %v902
    %1107 = vmatpush1.msra.mxu0 %v901
    %1108 = vmatprep.subr.mxu0 %v907
    %1109 = vmatpush1.msra.mxu0 %v906
    %1110 = vmatprep.subr.mxu0 %v912
    %1111 = vmatpush1.msra.mxu0 %v911
    %1112 = vmatprep.subr.mxu0 %v917
    %1113 = vmatpush1.msra.mxu0 %v916
    %1114 = vmatprep.subr.mxu0 %v922
    %1115 = vmatpush1.msra.mxu0 %v921
    %1116 = vmatprep.subr.mxu0 %v927
    %1117 = vmatpush1.msra.mxu0 %v926
    %1118 = vmatprep.subr.mxu0 %v932
    %1119 = vmatpush1.msra.mxu0 %v931
    %1120 = vmatprep.subr.mxu0 %v937
    %1121 = vmatpush1.msra.mxu0 %v936
    %1122 = vmatprep.subr.mxu0 %v942
    %1123 = vmatpush1.msra.mxu0 %v941
    %1124 = vmatprep.subr.mxu0 %v947
    %1125 = vmatpush1.msra.mxu0 %v946
    %1126 = vmatprep.subr.mxu0 %v952
    %1127 = vmatpush1.msra.mxu0 %v951
    %1128 = vmatprep.subr.mxu0 %v957
    %1129 = vmatpush1.msra.mxu0 %v956
    %1130 = vmatprep.subr.mxu0 %v962
    %1131 = vmatpush1.msra.mxu0 %v961
    %1132 = vmatprep.subr.mxu0 %v967
    %1133 = vmatpush1.msra.mxu0 %v966
    %1134 = vmatprep.subr.mxu0 %v972
    %1135 = vmatpush1.msra.mxu0 %v971
    %1136 = vmatprep.subr.mxu0 %v977
    %1137 = vmatpush1.msra.mxu0 %v976
    %1138 = vmatprep.subr.mxu0 %v982
    %1139 = vmatpush1.msra.mxu0 %v981
    %1140 = vmatprep.subr.mxu0 %v987
    %1141 = vmatpush1.msra.mxu0 %v986
    %1142 = vmatprep.subr.mxu0 %v992
    %1143 = vmatpush1.msra.mxu0 %v991
    %1144 = vmatprep.subr.mxu0 %v997
    %1145 = vmatpush1.msra.mxu0 %v996
    %1146 = vmatprep.subr.mxu0 %v1002
    %1147 = vmatpush1.msra.mxu0 %v1001
    %1148 = vmatprep.subr.mxu0 %v1007
    %1149 = vmatpush1.msra.mxu0 %v1006
    %1150 = vmatprep.subr.mxu0 %v1012
    %1151 = vmatpush1.msra.mxu0 %v1011
    %1152 = vmatprep.subr.mxu0 %v1017
    %1153 = vmatpush1.msra.mxu0 %v1016
    %1154 = vmatprep.mubr.f32.mxu0 %v854
    %1155 = vmatmul.mubr.f32.gmra.mrb[0].mxu0 %v856
    %v1156 = vpop.f32.mrb[0].mxu0
    %v1157 = vadd.f32 0.0, %v1156
    %v1158 = vpop.f32.mrb[0].mxu0
    %v1159 = vadd.f32 0.0, %v1158
    %1160 = vdwg.mxu0
    %1161 = vmatprep.subr.mxu0 0.0
    %1162 = vmatpush1.msra.mxu0 %v863
    %1163 = vmatprep.subr.mxu0 0.0
    %1164 = vmatpush1.msra.mxu0 %v868
    %1165 = vmatprep.subr.mxu0 0.0
    %1166 = vmatpush1.msra.mxu0 %v873
    %1167 = vmatprep.subr.mxu0 0.0
    %1168 = vmatpush1.msra.mxu0 %v878
    %1169 = vmatprep.subr.mxu0 0.0
    %1170 = vmatpush1.msra.mxu0 %v883
    %1171 = vmatprep.subr.mxu0 0.0
    %1172 = vmatpush1.msra.mxu0 %v888
    %1173 = vmatprep.subr.mxu0 0.0
    %1174 = vmatpush1.msra.mxu0 %v893
    %1175 = vmatprep.subr.mxu0 0.0
    %1176 = vmatpush1.msra.mxu0 %v898
    %1177 = vmatprep.subr.mxu0 0.0
    %1178 = vmatpush1.msra.mxu0 %v903
    %1179 = vmatprep.subr.mxu0 0.0
    %1180 = vmatpush1.msra.mxu0 %v908
    %1181 = vmatprep.subr.mxu0 0.0
    %1182 = vmatpush1.msra.mxu0 %v913
    %1183 = vmatprep.subr.mxu0 0.0
    %1184 = vmatpush1.msra.mxu0 %v918
    %1185 = vmatprep.subr.mxu0 0.0
    %1186 = vmatpush1.msra.mxu0 %v923
    %1187 = vmatprep.subr.mxu0 0.0
    %1188 = vmatpush1.msra.mxu0 %v928
    %1189 = vmatprep.subr.mxu0 0.0
    %1190 = vmatpush1.msra.mxu0 %v933
    %1191 = vmatprep.subr.mxu0 0.0
    %1192 = vmatpush1.msra.mxu0 %v938
    %1193 = vmatprep.subr.mxu0 0.0
    %1194 = vmatpush1.msra.mxu0 %v943
    %1195 = vmatprep.subr.mxu0 0.0
    %1196 = vmatpush1.msra.mxu0 %v948
    %1197 = vmatprep.subr.mxu0 0.0
    %1198 = vmatpush1.msra.mxu0 %v953
    %1199 = vmatprep.subr.mxu0 0.0
    %1200 = vmatpush1.msra.mxu0 %v958
    %1201 = vmatprep.subr.mxu0 0.0
    %1202 = vmatpush1.msra.mxu0 %v963
    %1203 = vmatprep.subr.mxu0 0.0
    %1204 = vmatpush1.msra.mxu0 %v968
    %1205 = vmatprep.subr.mxu0 0.0
    %1206 = vmatpush1.msra.mxu0 %v973
    %1207 = vmatprep.subr.mxu0 0.0
    %1208 = vmatpush1.msra.mxu0 %v978
    %1209 = vmatprep.subr.mxu0 0.0
    %1210 = vmatpush1.msra.mxu0 %v983
    %1211 = vmatprep.subr.mxu0 0.0
    %1212 = vmatpush1.msra.mxu0 %v988
    %1213 = vmatprep.subr.mxu0 0.0
    %1214 = vmatpush1.msra.mxu0 %v993
    %1215 = vmatprep.subr.mxu0 0.0
    %1216 = vmatpush1.msra.mxu0 %v998
    %1217 = vmatprep.subr.mxu0 0.0
    %1218 = vmatpush1.msra.mxu0 %v1003
    %1219 = vmatprep.subr.mxu0 0.0
    %1220 = vmatpush1.msra.mxu0 %v1008
    %1221 = vmatprep.subr.mxu0 0.0
    %1222 = vmatpush1.msra.mxu0 %v1013
    %1223 = vmatprep.subr.mxu0 0.0
    %1224 = vmatpush1.msra.mxu0 %v1018
    %1225 = vmatprep.mubr.f32.mxu0 %v854
    %1226 = vmatmul.mubr.f32.gmra.mrb[0].mxu0 %v856
    %v1227 = vpop.f32.mrb[0].mxu0
    %v1228 = vadd.f32 0.0, %v1227
    %v1229 = vpop.f32.mrb[0].mxu0
    %1230 = vdwg.mxu0
    %v1231 = vadd.f32 %v1228, %v809
    %v1232 = vtanh.pop %v1231
    %1234 = vset.pattern.permute.xlu0 0
    %1235 = vperm.xlu0 %1234, %v423
    %v1236 = vpop.permute.xlu0 %1235
    %v1238 = vmul.f32 %v1232, %v1236
    %v1239 = vadd.f32 %v854, %v1238
    %s1240 = scalar_lea.vmem [#allocation2], 32
    %v1241 = vld [vmem:[%s1240] sm:$0xff]
    %v1242 = vld [vmem:[%s1240 + $0x8] sm:$0xff]
    %v1243 = vld [vmem:[%s1240 + $0x10] sm:$0xff]
    %v1244 = vld [vmem:[%s1240 + $0x18] sm:$0xff]
    %v1245 = vadd.f32 %v1086, %v1241
    %v1246 = vadd.f32 %v1088, %v1242
    %v1247 = vadd.f32 %v1157, %v1243
    %v1248 = vadd.f32 %v1159, %v1244
    %v1249 = vxor.u32 %v1245, 2147483648
    %v1250 = vxor.u32 %v1246, 2147483648
    %v1251 = vxor.u32 %v1247, 2147483648
    %v1252 = vxor.u32 %v1248, 2147483648
    %v1253 = vmul.f32 %v1249, 1.442695
    %v1254 = vpow.pop %v1253
    %v1255 = vmul.f32 %v1250, 1.442695
    %v1256 = vpow.pop %v1255
    %v1257 = vmul.f32 %v1251, 1.442695
    %v1258 = vpow.pop %v1257
    %v1259 = vmul.f32 %v1252, 1.442695
    %v1260 = vpow.pop %v1259
    %v1261 = vadd.f32 %v1254, 1.0
    %v1262 = vadd.f32 %v1256, 1.0
    %v1263 = vadd.f32 %v1258, 1.0
    %v1264 = vadd.f32 %v1260, 1.0
    %v1265 = vrcp.pop %v1261
    %v1266 = vmul.f32 1.0, %v1265
    %v1267 = vrcp.pop %v1262
    %v1268 = vmul.f32 1.0, %v1267
    %v1269 = vrcp.pop %v1263
    %v1270 = vmul.f32 1.0, %v1269
    %v1271 = vrcp.pop %v1264
    %v1272 = vmul.f32 1.0, %v1271
    %v1273 = vmul.f32 %v1266, %v1239
    %v1274 = vmul.f32 %v1268, %v1272
    %v1275 = vadd.f32 %v1273, %v1274
    %v1276 = vtanh.pop %v1275
    %v1277 = vmul.f32 %v1270, %v1276
    %s1278 = scalar_lea.vmem [#allocation10], 8
    %1279 = vst [vmem:[%s1278] sm:$0xff] %v1277
    %v1280 = vadd.f32 %v858, %v1277
    %v1281 = vld [vmem:[#allocation5] sm:$0xff]
    %v1282 = vld [vmem:[#allocation5 + $0x8] sm:$0xff]
    %v1283 = vld [vmem:[#allocation5 + $0x10] sm:$0xff]
    %v1284 = vld [vmem:[#allocation5 + $0x18] sm:$0xff]
    %v1285 = vld [vmem:[#allocation5 + $0x20] sm:$0xff]
    %v1286 = vld [vmem:[#allocation5 + $0x28] sm:$0xff]
    %v1287 = vld [vmem:[#allocation5 + $0x30] sm:$0xff]
    %v1288 = vld [vmem:[#allocation5 + $0x38] sm:$0xff]
    %v1289 = vld [vmem:[#allocation5 + $0x40] sm:$0xff]
    %v1290 = vld [vmem:[#allocation5 + $0x48] sm:$0xff]
    %v1291 = vld [vmem:[#allocation5 + $0x50] sm:$0xff]
    %v1292 = vld [vmem:[#allocation5 + $0x58] sm:$0xff]
    %v1293 = vld [vmem:[#allocation5 + $0x60] sm:$0xff]
    %v1294 = vld [vmem:[#allocation5 + $0x68] sm:$0xff]
    %v1295 = vld [vmem:[#allocation5 + $0x70] sm:$0xff]
    %v1296 = vld [vmem:[#allocation5 + $0x78] sm:$0xff]
    %v1297 = vld [vmem:[#allocation5 + $0x80] sm:$0xff]
    %v1298 = vld [vmem:[#allocation5 + $0x88] sm:$0xff]
    %v1299 = vld [vmem:[#allocation5 + $0x90] sm:$0xff]
    %v1300 = vld [vmem:[#allocation5 + $0x98] sm:$0xff]
    %v1301 = vld [vmem:[#allocation5 + $0xa0] sm:$0xff]
    %v1302 = vld [vmem:[#allocation5 + $0xa8] sm:$0xff]
    %v1303 = vld [vmem:[#allocation5 + $0xb0] sm:$0xff]
    %v1304 = vld [vmem:[#allocation5 + $0xb8] sm:$0xff]
    %v1305 = vld [vmem:[#allocation5 + $0xc0] sm:$0xff]
    %v1306 = vld [vmem:[#allocation5 + $0xc8] sm:$0xff]
    %v1307 = vld [vmem:[#allocation5 + $0xd0] sm:$0xff]
    %v1308 = vld [vmem:[#allocation5 + $0xd8] sm:$0xff]
    %v1309 = vld [vmem:[#allocation5 + $0xe0] sm:$0xff]
    %v1310 = vld [vmem:[#allocation5 + $0xe8] sm:$0xff]
    %v1311 = vld [vmem:[#allocation5 + $0xf0] sm:$0xff]
    %v1312 = vld [vmem:[#allocation5 + $0xf8] sm:$0xff]
    %v1313 = vld [vmem:[#allocation5 + $0x100] sm:$0xff]
    %v1314 = vld [vmem:[#allocation5 + $0x108] sm:$0xff]
    %v1315 = vld [vmem:[#allocation5 + $0x110] sm:$0xff]
    %v1316 = vld [vmem:[#allocation5 + $0x118] sm:$0xff]
    %v1317 = vld [vmem:[#allocation5 + $0x120] sm:$0xff]
    %v1318 = vld [vmem:[#allocation5 + $0x128] sm:$0xff]
    %v1319 = vld [vmem:[#allocation5 + $0x130] sm:$0xff]
    %v1320 = vld [vmem:[#allocation5 + $0x138] sm:$0xff]
    %v1321 = vld [vmem:[#allocation5 + $0x140] sm:$0xff]
    %v1322 = vld [vmem:[#allocation5 + $0x148] sm:$0xff]
    %v1323 = vld [vmem:[#allocation5 + $0x150] sm:$0xff]
    %v1324 = vld [vmem:[#allocation5 + $0x158] sm:$0xff]
    %v1325 = vld [vmem:[#allocation5 + $0x160] sm:$0xff]
    %v1326 = vld [vmem:[#allocation5 + $0x168] sm:$0xff]
    %v1327 = vld [vmem:[#allocation5 + $0x170] sm:$0xff]
    %v1328 = vld [vmem:[#allocation5 + $0x178] sm:$0xff]
    %v1329 = vld [vmem:[#allocation5 + $0x180] sm:$0xff]
    %v1330 = vld [vmem:[#allocation5 + $0x188] sm:$0xff]
    %v1331 = vld [vmem:[#allocation5 + $0x190] sm:$0xff]
    %v1332 = vld [vmem:[#allocation5 + $0x198] sm:$0xff]
    %v1333 = vld [vmem:[#allocation5 + $0x1a0] sm:$0xff]
    %v1334 = vld [vmem:[#allocation5 + $0x1a8] sm:$0xff]
    %v1335 = vld [vmem:[#allocation5 + $0x1b0] sm:$0xff]
    %v1336 = vld [vmem:[#allocation5 + $0x1b8] sm:$0xff]
    %v1337 = vld [vmem:[#allocation5 + $0x1c0] sm:$0xff]
    %v1338 = vld [vmem:[#allocation5 + $0x1c8] sm:$0xff]
    %v1339 = vld [vmem:[#allocation5 + $0x1d0] sm:$0xff]
    %v1340 = vld [vmem:[#allocation5 + $0x1d8] sm:$0xff]
    %v1341 = vld [vmem:[#allocation5 + $0x1e0] sm:$0xff]
    %v1342 = vld [vmem:[#allocation5 + $0x1e8] sm:$0xff]
    %v1343 = vld [vmem:[#allocation5 + $0x1f0] sm:$0xff]
    %v1344 = vld [vmem:[#allocation5 + $0x1f8] sm:$0xff]
    %v1345 = vld [vmem:[#allocation5 + $0x200] sm:$0xff]
    %v1346 = vld [vmem:[#allocation5 + $0x208] sm:$0xff]
    %v1347 = vld [vmem:[#allocation5 + $0x210] sm:$0xff]
    %v1348 = vld [vmem:[#allocation5 + $0x218] sm:$0xff]
    %v1349 = vld [vmem:[#allocation5 + $0x220] sm:$0xff]
    %v1350 = vld [vmem:[#allocation5 + $0x228] sm:$0xff]
    %v1351 = vld [vmem:[#allocation5 + $0x230] sm:$0xff]
    %v1352 = vld [vmem:[#allocation5 + $0x238] sm:$0xff]
    %v1353 = vld [vmem:[#allocation5 + $0x240] sm:$0xff]
    %v1354 = vld [vmem:[#allocation5 + $0x248] sm:$0xff]
    %v1355 = vld [vmem:[#allocation5 + $0x250] sm:$0xff]
    %v1356 = vld [vmem:[#allocation5 + $0x258] sm:$0xff]
    %v1357 = vld [vmem:[#allocation5 + $0x260] sm:$0xff]
    %v1358 = vld [vmem:[#allocation5 + $0x268] sm:$0xff]
    %v1359 = vld [vmem:[#allocation5 + $0x270] sm:$0xff]
    %v1360 = vld [vmem:[#allocation5 + $0x278] sm:$0xff]
    %v1361 = vld [vmem:[#allocation5 + $0x280] sm:$0xff]
    %v1362 = vld [vmem:[#allocation5 + $0x288] sm:$0xff]
    %v1363 = vld [vmem:[#allocation5 + $0x290] sm:$0xff]
    %v1364 = vld [vmem:[#allocation5 + $0x298] sm:$0xff]
    %v1365 = vld [vmem:[#allocation5 + $0x2a0] sm:$0xff]
    %v1366 = vld [vmem:[#allocation5 + $0x2a8] sm:$0xff]
    %v1367 = vld [vmem:[#allocation5 + $0x2b0] sm:$0xff]
    %v1368 = vld [vmem:[#allocation5 + $0x2b8] sm:$0xff]
    %v1369 = vld [vmem:[#allocation5 + $0x2c0] sm:$0xff]
    %v1370 = vld [vmem:[#allocation5 + $0x2c8] sm:$0xff]
    %v1371 = vld [vmem:[#allocation5 + $0x2d0] sm:$0xff]
    %v1372 = vld [vmem:[#allocation5 + $0x2d8] sm:$0xff]
    %v1373 = vld [vmem:[#allocation5 + $0x2e0] sm:$0xff]
    %v1374 = vld [vmem:[#allocation5 + $0x2e8] sm:$0xff]
    %v1375 = vld [vmem:[#allocation5 + $0x2f0] sm:$0xff]
    %v1376 = vld [vmem:[#allocation5 + $0x2f8] sm:$0xff]
    %v1377 = vld [vmem:[#allocation5 + $0x300] sm:$0xff]
    %v1378 = vld [vmem:[#allocation5 + $0x308] sm:$0xff]
    %v1379 = vld [vmem:[#allocation5 + $0x310] sm:$0xff]
    %v1380 = vld [vmem:[#allocation5 + $0x318] sm:$0xff]
    %v1381 = vld [vmem:[#allocation5 + $0x320] sm:$0xff]
    %v1382 = vld [vmem:[#allocation5 + $0x328] sm:$0xff]
    %v1383 = vld [vmem:[#allocation5 + $0x330] sm:$0xff]
    %v1384 = vld [vmem:[#allocation5 + $0x338] sm:$0xff]
    %v1385 = vld [vmem:[#allocation5 + $0x340] sm:$0xff]
    %v1386 = vld [vmem:[#allocation5 + $0x348] sm:$0xff]
    %v1387 = vld [vmem:[#allocation5 + $0x350] sm:$0xff]
    %v1388 = vld [vmem:[#allocation5 + $0x358] sm:$0xff]
    %v1389 = vld [vmem:[#allocation5 + $0x360] sm:$0xff]
    %v1390 = vld [vmem:[#allocation5 + $0x368] sm:$0xff]
    %v1391 = vld [vmem:[#allocation5 + $0x370] sm:$0xff]
    %v1392 = vld [vmem:[#allocation5 + $0x378] sm:$0xff]
    %v1393 = vld [vmem:[#allocation5 + $0x380] sm:$0xff]
    %v1394 = vld [vmem:[#allocation5 + $0x388] sm:$0xff]
    %v1395 = vld [vmem:[#allocation5 + $0x390] sm:$0xff]
    %v1396 = vld [vmem:[#allocation5 + $0x398] sm:$0xff]
    %v1397 = vld [vmem:[#allocation5 + $0x3a0] sm:$0xff]
    %v1398 = vld [vmem:[#allocation5 + $0x3a8] sm:$0xff]
    %v1399 = vld [vmem:[#allocation5 + $0x3b0] sm:$0xff]
    %v1400 = vld [vmem:[#allocation5 + $0x3b8] sm:$0xff]
    %v1401 = vld [vmem:[#allocation5 + $0x3c0] sm:$0xff]
    %v1402 = vld [vmem:[#allocation5 + $0x3c8] sm:$0xff]
    %v1403 = vld [vmem:[#allocation5 + $0x3d0] sm:$0xff]
    %v1404 = vld [vmem:[#allocation5 + $0x3d8] sm:$0xff]
    %v1405 = vld [vmem:[#allocation5 + $0x3e0] sm:$0xff]
    %v1406 = vld [vmem:[#allocation5 + $0x3e8] sm:$0xff]
    %v1407 = vld [vmem:[#allocation5 + $0x3f0] sm:$0xff]
    %v1408 = vld [vmem:[#allocation5 + $0x3f8] sm:$0xff]
    %v1409 = vld [vmem:[#allocation5 + $0x400] sm:$0xff]
    %v1410 = vld [vmem:[#allocation5 + $0x408] sm:$0xff]
    %v1411 = vld [vmem:[#allocation5 + $0x410] sm:$0xff]
    %v1412 = vld [vmem:[#allocation5 + $0x418] sm:$0xff]
    %v1413 = vld [vmem:[#allocation5 + $0x420] sm:$0xff]
    %v1414 = vld [vmem:[#allocation5 + $0x428] sm:$0xff]
    %v1415 = vld [vmem:[#allocation5 + $0x430] sm:$0xff]
    %v1416 = vld [vmem:[#allocation5 + $0x438] sm:$0xff]
    %v1417 = vld [vmem:[#allocation5 + $0x440] sm:$0xff]
    %v1418 = vld [vmem:[#allocation5 + $0x448] sm:$0xff]
    %v1419 = vld [vmem:[#allocation5 + $0x450] sm:$0xff]
    %v1420 = vld [vmem:[#allocation5 + $0x458] sm:$0xff]
    %v1421 = vld [vmem:[#allocation5 + $0x460] sm:$0xff]
    %v1422 = vld [vmem:[#allocation5 + $0x468] sm:$0xff]
    %v1423 = vld [vmem:[#allocation5 + $0x470] sm:$0xff]
    %v1424 = vld [vmem:[#allocation5 + $0x478] sm:$0xff]
    %v1425 = vld [vmem:[#allocation5 + $0x480] sm:$0xff]
    %v1426 = vld [vmem:[#allocation5 + $0x488] sm:$0xff]
    %v1427 = vld [vmem:[#allocation5 + $0x490] sm:$0xff]
    %v1428 = vld [vmem:[#allocation5 + $0x498] sm:$0xff]
    %v1429 = vld [vmem:[#allocation5 + $0x4a0] sm:$0xff]
    %v1430 = vld [vmem:[#allocation5 + $0x4a8] sm:$0xff]
    %v1431 = vld [vmem:[#allocation5 + $0x4b0] sm:$0xff]
    %v1432 = vld [vmem:[#allocation5 + $0x4b8] sm:$0xff]
    %v1433 = vld [vmem:[#allocation5 + $0x4c0] sm:$0xff]
    %v1434 = vld [vmem:[#allocation5 + $0x4c8] sm:$0xff]
    %v1435 = vld [vmem:[#allocation5 + $0x4d0] sm:$0xff]
    %v1436 = vld [vmem:[#allocation5 + $0x4d8] sm:$0xff]
    %v1437 = vld [vmem:[#allocation5 + $0x4e0] sm:$0xff]
    %v1438 = vld [vmem:[#allocation5 + $0x4e8] sm:$0xff]
    %v1439 = vld [vmem:[#allocation5 + $0x4f0] sm:$0xff]
    %v1440 = vld [vmem:[#allocation5 + $0x4f8] sm:$0xff]
    %1441 = vmatprep.subr.mxu0 %v1282
    %1442 = vmatpush1.msra.mxu0 %v1281
    %1443 = vmatprep.subr.mxu0 %v1287
    %1444 = vmatpush1.msra.mxu0 %v1286
    %1445 = vmatprep.subr.mxu0 %v1292
    %1446 = vmatpush1.msra.mxu0 %v1291
    %1447 = vmatprep.subr.mxu0 %v1297
    %1448 = vmatpush1.msra.mxu0 %v1296
    %1449 = vmatprep.subr.mxu0 %v1302
    %1450 = vmatpush1.msra.mxu0 %v1301
    %1451 = vmatprep.subr.mxu0 %v1307
    %1452 = vmatpush1.msra.mxu0 %v1306
    %1453 = vmatprep.subr.mxu0 %v1312
    %1454 = vmatpush1.msra.mxu0 %v1311
    %1455 = vmatprep.subr.mxu0 %v1317
    %1456 = vmatpush1.msra.mxu0 %v1316
    %1457 = vmatprep.subr.mxu0 %v1322
    %1458 = vmatpush1.msra.mxu0 %v1321
    %1459 = vmatprep.subr.mxu0 %v1327
    %1460 = vmatpush1.msra.mxu0 %v1326
    %1461 = vmatprep.subr.mxu0 %v1332
    %1462 = vmatpush1.msra.mxu0 %v1331
    %1463 = vmatprep.subr.mxu0 %v1337
    %1464 = vmatpush1.msra.mxu0 %v1336
    %1465 = vmatprep.subr.mxu0 %v1342
    %1466 = vmatpush1.msra.mxu0 %v1341
    %1467 = vmatprep.subr.mxu0 %v1347
    %1468 = vmatpush1.msra.mxu0 %v1346
    %1469 = vmatprep.subr.mxu0 %v1352
    %1470 = vmatpush1.msra.mxu0 %v1351
    %1471 = vmatprep.subr.mxu0 %v1357
    %1472 = vmatpush1.msra.mxu0 %v1356
    %1473 = vmatprep.subr.mxu0 %v1362
    %1474 = vmatpush1.msra.mxu0 %v1361
    %1475 = vmatprep.subr.mxu0 %v1367
    %1476 = vmatpush1.msra.mxu0 %v1366
    %1477 = vmatprep.subr.mxu0 %v1372
    %1478 = vmatpush1.msra.mxu0 %v1371
    %1479 = vmatprep.subr.mxu0 %v1377
    %1480 = vmatpush1.msra.mxu0 %v1376
    %1481 = vmatprep.subr.mxu0 %v1382
    %1482 = vmatpush1.msra.mxu0 %v1381
    %1483 = vmatprep.subr.mxu0 %v1387
    %1484 = vmatpush1.msra.mxu0 %v1386
    %1485 = vmatprep.subr.mxu0 %v1392
    %1486 = vmatpush1.msra.mxu0 %v1391
    %1487 = vmatprep.subr.mxu0 %v1397
    %1488 = vmatpush1.msra.mxu0 %v1396
    %1489 = vmatprep.subr.mxu0 %v1402
    %1490 = vmatpush1.msra.mxu0 %v1401
    %1491 = vmatprep.subr.mxu0 %v1407
    %1492 = vmatpush1.msra.mxu0 %v1406
    %1493 = vmatprep.subr.mxu0 %v1412
    %1494 = vmatpush1.msra.mxu0 %v1411
    %1495 = vmatprep.subr.mxu0 %v1417
    %1496 = vmatpush1.msra.mxu0 %v1416
    %1497 = vmatprep.subr.mxu0 %v1422
    %1498 = vmatpush1.msra.mxu0 %v1421
    %1499 = vmatprep.subr.mxu0 %v1427
    %1500 = vmatpush1.msra.mxu0 %v1426
    %1501 = vmatprep.subr.mxu0 %v1432
    %1502 = vmatpush1.msra.mxu0 %v1431
    %1503 = vmatprep.subr.mxu0 %v1437
    %1504 = vmatpush1.msra.mxu0 %v1436
    %1505 = vmatprep.mubr.f32.mxu0 %v1275
    %1506 = vmatmul.mubr.f32.gmra.mrb[0].mxu0 %v1277
    %v1507 = vpop.f32.mrb[0].mxu0
    %v1508 = vadd.f32 0.0, %v1507
    %v1509 = vpop.f32.mrb[0].mxu0
    %v1510 = vadd.f32 0.0, %v1509
    %1511 = vdwg.mxu0
    %1512 = vmatprep.subr.mxu0 %v1284
    %1513 = vmatpush1.msra.mxu0 %v1283
    %1514 = vmatprep.subr.mxu0 %v1289
    %1515 = vmatpush1.msra.mxu0 %v1288
    %1516 = vmatprep.subr.mxu0 %v1294
    %1517 = vmatpush1.msra.mxu0 %v1293
    %1518 = vmatprep.subr.mxu0 %v1299
    %1519 = vmatpush1.msra.mxu0 %v1298
    %1520 = vmatprep.subr.mxu0 %v1304
    %1521 = vmatpush1.msra.mxu0 %v1303
    %1522 = vmatprep.subr.mxu0 %v1309
    %1523 = vmatpush1.msra.mxu0 %v1308
    %1524 = vmatprep.subr.mxu0 %v1314
    %1525 = vmatpush1.msra.mxu0 %v1313
    %1526 = vmatprep.subr.mxu0 %v1319
    %1527 = vmatpush1.msra.mxu0 %v1318
    %1528 = vmatprep.subr.mxu0 %v1324
    %1529 = vmatpush1.msra.mxu0 %v1323
    %1530 = vmatprep.subr.mxu0 %v1329
    %1531 = vmatpush1.msra.mxu0 %v1328
    %1532 = vmatprep.subr.mxu0 %v1334
    %1533 = vmatpush1.msra.mxu0 %v1333
    %1534 = vmatprep.subr.mxu0 %v1339
    %1535 = vmatpush1.msra.mxu0 %v1338
    %1536 = vmatprep.subr.mxu0 %v1344
    %1537 = vmatpush1.msra.mxu0 %v1343
    %1538 = vmatprep.subr.mxu0 %v1349
    %1539 = vmatpush1.msra.mxu0 %v1348
    %1540 = vmatprep.subr.mxu0 %v1354
    %1541 = vmatpush1.msra.mxu0 %v1353
    %1542 = vmatprep.subr.mxu0 %v1359
    %1543 = vmatpush1.msra.mxu0 %v1358
    %1544 = vmatprep.subr.mxu0 %v1364
    %1545 = vmatpush1.msra.mxu0 %v1363
    %1546 = vmatprep.subr.mxu0 %v1369
    %1547 = vmatpush1.msra.mxu0 %v1368
    %1548 = vmatprep.subr.mxu0 %v1374
    %1549 = vmatpush1.msra.mxu0 %v1373
    %1550 = vmatprep.subr.mxu0 %v1379
    %1551 = vmatpush1.msra.mxu0 %v1378
    %1552 = vmatprep.subr.mxu0 %v1384
    %1553 = vmatpush1.msra.mxu0 %v1383
    %1554 = vmatprep.subr.mxu0 %v1389
    %1555 = vmatpush1.msra.mxu0 %v1388
    %1556 = vmatprep.subr.mxu0 %v1394
    %1557 = vmatpush1.msra.mxu0 %v1393
    %1558 = vmatprep.subr.mxu0 %v1399
    %1559 = vmatpush1.msra.mxu0 %v1398
    %1560 = vmatprep.subr.mxu0 %v1404
    %1561 = vmatpush1.msra.mxu0 %v1403
    %1562 = vmatprep.subr.mxu0 %v1409
    %1563 = vmatpush1.msra.mxu0 %v1408
    %1564 = vmatprep.subr.mxu0 %v1414
    %1565 = vmatpush1.msra.mxu0 %v1413
    %1566 = vmatprep.subr.mxu0 %v1419
    %1567 = vmatpush1.msra.mxu0 %v1418
    %1568 = vmatprep.subr.mxu0 %v1424
    %1569 = vmatpush1.msra.mxu0 %v1423
    %1570 = vmatprep.subr.mxu0 %v1429
    %1571 = vmatpush1.msra.mxu0 %v1428
    %1572 = vmatprep.subr.mxu0 %v1434
    %1573 = vmatpush1.msra.mxu0 %v1433
    %1574 = vmatprep.subr.mxu0 %v1439
    %1575 = vmatpush1.msra.mxu0 %v1438
    %1576 = vmatprep.mubr.f32.mxu0 %v1275
    %1577 = vmatmul.mubr.f32.gmra.mrb[0].mxu0 %v1277
    %v1578 = vpop.f32.mrb[0].mxu0
    %v1579 = vadd.f32 0.0, %v1578
    %v1580 = vpop.f32.mrb[0].mxu0
    %v1581 = vadd.f32 0.0, %v1580
    %1582 = vdwg.mxu0
    %1583 = vmatprep.subr.mxu0 0.0
    %1584 = vmatpush1.msra.mxu0 %v1285
    %1585 = vmatprep.subr.mxu0 0.0
    %1586 = vmatpush1.msra.mxu0 %v1290
    %1587 = vmatprep.subr.mxu0 0.0
    %1588 = vmatpush1.msra.mxu0 %v1295
    %1589 = vmatprep.subr.mxu0 0.0
    %1590 = vmatpush1.msra.mxu0 %v1300
    %1591 = vmatprep.subr.mxu0 0.0
    %1592 = vmatpush1.msra.mxu0 %v1305
    %1593 = vmatprep.subr.mxu0 0.0
    %1594 = vmatpush1.msra.mxu0 %v1310
    %1595 = vmatprep.subr.mxu0 0.0
    %1596 = vmatpush1.msra.mxu0 %v1315
    %1597 = vmatprep.subr.mxu0 0.0
    %1598 = vmatpush1.msra.mxu0 %v1320
    %1599 = vmatprep.subr.mxu0 0.0
    %1600 = vmatpush1.msra.mxu0 %v1325
    %1601 = vmatprep.subr.mxu0 0.0
    %1602 = vmatpush1.msra.mxu0 %v1330
    %1603 = vmatprep.subr.mxu0 0.0
    %1604 = vmatpush1.msra.mxu0 %v1335
    %1605 = vmatprep.subr.mxu0 0.0
    %1606 = vmatpush1.msra.mxu0 %v1340
    %1607 = vmatprep.subr.mxu0 0.0
    %1608 = vmatpush1.msra.mxu0 %v1345
    %1609 = vmatprep.subr.mxu0 0.0
    %1610 = vmatpush1.msra.mxu0 %v1350
    %1611 = vmatprep.subr.mxu0 0.0
    %1612 = vmatpush1.msra.mxu0 %v1355
    %1613 = vmatprep.subr.mxu0 0.0
    %1614 = vmatpush1.msra.mxu0 %v1360
    %1615 = vmatprep.subr.mxu0 0.0
    %1616 = vmatpush1.msra.mxu0 %v1365
    %1617 = vmatprep.subr.mxu0 0.0
    %1618 = vmatpush1.msra.mxu0 %v1370
    %1619 = vmatprep.subr.mxu0 0.0
    %1620 = vmatpush1.msra.mxu0 %v1375
    %1621 = vmatprep.subr.mxu0 0.0
    %1622 = vmatpush1.msra.mxu0 %v1380
    %1623 = vmatprep.subr.mxu0 0.0
    %1624 = vmatpush1.msra.mxu0 %v1385
    %1625 = vmatprep.subr.mxu0 0.0
    %1626 = vmatpush1.msra.mxu0 %v1390
    %1627 = vmatprep.subr.mxu0 0.0
    %1628 = vmatpush1.msra.mxu0 %v1395
    %1629 = vmatprep.subr.mxu0 0.0
    %1630 = vmatpush1.msra.mxu0 %v1400
    %1631 = vmatprep.subr.mxu0 0.0
    %1632 = vmatpush1.msra.mxu0 %v1405
    %1633 = vmatprep.subr.mxu0 0.0
    %1634 = vmatpush1.msra.mxu0 %v1410
    %1635 = vmatprep.subr.mxu0 0.0
    %1636 = vmatpush1.msra.mxu0 %v1415
    %1637 = vmatprep.subr.mxu0 0.0
    %1638 = vmatpush1.msra.mxu0 %v1420
    %1639 = vmatprep.subr.mxu0 0.0
    %1640 = vmatpush1.msra.mxu0 %v1425
    %1641 = vmatprep.subr.mxu0 0.0
    %1642 = vmatpush1.msra.mxu0 %v1430
    %1643 = vmatprep.subr.mxu0 0.0
    %1644 = vmatpush1.msra.mxu0 %v1435
    %1645 = vmatprep.subr.mxu0 0.0
    %1646 = vmatpush1.msra.mxu0 %v1440
    %1647 = vmatprep.mubr.f32.mxu0 %v1275
    %1648 = vmatmul.mubr.f32.gmra.mrb[0].mxu0 %v1277
    %v1649 = vpop.f32.mrb[0].mxu0
    %v1650 = vadd.f32 0.0, %v1649
    %v1651 = vpop.f32.mrb[0].mxu0
    %1652 = vdwg.mxu0
    %v1653 = vadd.f32 %v1650, %v809
    %v1654 = vtanh.pop %v1653
    %1656 = vset.pattern.permute.xlu0 0
    %1657 = vperm.xlu0 %1656, %v424
    %v1658 = vpop.permute.xlu0 %1657
    %v1660 = vmul.f32 %v1654, %v1658
    %v1661 = vadd.f32 %v1275, %v1660
    %s1662 = scalar_lea.vmem [#allocation2], 64
    %v1663 = vld [vmem:[%s1662] sm:$0xff]
    %v1664 = vld [vmem:[%s1662 + $0x8] sm:$0xff]
    %v1665 = vld [vmem:[%s1662 + $0x10] sm:$0xff]
    %v1666 = vld [vmem:[%s1662 + $0x18] sm:$0xff]
    %v1667 = vadd.f32 %v1508, %v1663
    %v1668 = vadd.f32 %v1510, %v1664
    %v1669 = vadd.f32 %v1579, %v1665
    %v1670 = vadd.f32 %v1581, %v1666
    %v1671 = vxor.u32 %v1667, 2147483648
    %v1672 = vxor.u32 %v1668, 2147483648
    %v1673 = vxor.u32 %v1669, 2147483648
    %v1674 = vxor.u32 %v1670, 2147483648
    %v1675 = vmul.f32 %v1671, 1.442695
    %v1676 = vpow.pop %v1675
    %v1677 = vmul.f32 %v1672, 1.442695
    %v1678 = vpow.pop %v1677
    %v1679 = vmul.f32 %v1673, 1.442695
    %v1680 = vpow.pop %v1679
    %v1681 = vmul.f32 %v1674, 1.442695
    %v1682 = vpow.pop %v1681
    %v1683 = vadd.f32 %v1676, 1.0
    %v1684 = vadd.f32 %v1678, 1.0
    %v1685 = vadd.f32 %v1680, 1.0
    %v1686 = vadd.f32 %v1682, 1.0
    %v1687 = vrcp.pop %v1683
    %v1688 = vmul.f32 1.0, %v1687
    %v1689 = vrcp.pop %v1684
    %v1690 = vmul.f32 1.0, %v1689
    %v1691 = vrcp.pop %v1685
    %v1692 = vmul.f32 1.0, %v1691
    %v1693 = vrcp.pop %v1686
    %v1694 = vmul.f32 1.0, %v1693
    %v1695 = vmul.f32 %v1688, %v1661
    %v1696 = vmul.f32 %v1690, %v1694
    %v1697 = vadd.f32 %v1695, %v1696
    %v1698 = vtanh.pop %v1697
    %v1699 = vmul.f32 %v1692, %v1698
    %s1700 = scalar_lea.vmem [#allocation10], 16
    %1701 = vst [vmem:[%s1700] sm:$0xff] %v1699
    %v1702 = vadd.f32 %v1280, %v1699
    %v1703 = vld [vmem:[#allocation5] sm:$0xff]
    %v1704 = vld [vmem:[#allocation5 + $0x8] sm:$0xff]
    %v1705 = vld [vmem:[#allocation5 + $0x10] sm:$0xff]
    %v1706 = vld [vmem:[#allocation5 + $0x18] sm:$0xff]
    %v1707 = vld [vmem:[#allocation5 + $0x20] sm:$0xff]
    %v1708 = vld [vmem:[#allocation5 + $0x28] sm:$0xff]
    %v1709 = vld [vmem:[#allocation5 + $0x30] sm:$0xff]
    %v1710 = vld [vmem:[#allocation5 + $0x38] sm:$0xff]
    %v1711 = vld [vmem:[#allocation5 + $0x40] sm:$0xff]
    %v1712 = vld [vmem:[#allocation5 + $0x48] sm:$0xff]
    %v1713 = vld [vmem:[#allocation5 + $0x50] sm:$0xff]
    %v1714 = vld [vmem:[#allocation5 + $0x58] sm:$0xff]
    %v1715 = vld [vmem:[#allocation5 + $0x60] sm:$0xff]
    %v1716 = vld [vmem:[#allocation5 + $0x68] sm:$0xff]
    %v1717 = vld [vmem:[#allocation5 + $0x70] sm:$0xff]
    %v1718 = vld [vmem:[#allocation5 + $0x78] sm:$0xff]
    %v1719 = vld [vmem:[#allocation5 + $0x80] sm:$0xff]
    %v1720 = vld [vmem:[#allocation5 + $0x88] sm:$0xff]
    %v1721 = vld [vmem:[#allocation5 + $0x90] sm:$0xff]
    %v1722 = vld [vmem:[#allocation5 + $0x98] sm:$0xff]
    %v1723 = vld [vmem:[#allocation5 + $0xa0] sm:$0xff]
    %v1724 = vld [vmem:[#allocation5 + $0xa8] sm:$0xff]
    %v1725 = vld [vmem:[#allocation5 + $0xb0] sm:$0xff]
    %v1726 = vld [vmem:[#allocation5 + $0xb8] sm:$0xff]
    %v1727 = vld [vmem:[#allocation5 + $0xc0] sm:$0xff]
    %v1728 = vld [vmem:[#allocation5 + $0xc8] sm:$0xff]
    %v1729 = vld [vmem:[#allocation5 + $0xd0] sm:$0xff]
    %v1730 = vld [vmem:[#allocation5 + $0xd8] sm:$0xff]
    %v1731 = vld [vmem:[#allocation5 + $0xe0] sm:$0xff]
    %v1732 = vld [vmem:[#allocation5 + $0xe8] sm:$0xff]
    %v1733 = vld [vmem:[#allocation5 + $0xf0] sm:$0xff]
    %v1734 = vld [vmem:[#allocation5 + $0xf8] sm:$0xff]
    %v1735 = vld [vmem:[#allocation5 + $0x100] sm:$0xff]
    %v1736 = vld [vmem:[#allocation5 + $0x108] sm:$0xff]
    %v1737 = vld [vmem:[#allocation5 + $0x110] sm:$0xff]
    %v1738 = vld [vmem:[#allocation5 + $0x118] sm:$0xff]
    %v1739 = vld [vmem:[#allocation5 + $0x120] sm:$0xff]
    %v1740 = vld [vmem:[#allocation5 + $0x128] sm:$0xff]
    %v1741 = vld [vmem:[#allocation5 + $0x130] sm:$0xff]
    %v1742 = vld [vmem:[#allocation5 + $0x138] sm:$0xff]
    %v1743 = vld [vmem:[#allocation5 + $0x140] sm:$0xff]
    %v1744 = vld [vmem:[#allocation5 + $0x148] sm:$0xff]
    %v1745 = vld [vmem:[#allocation5 + $0x150] sm:$0xff]
    %v1746 = vld [vmem:[#allocation5 + $0x158] sm:$0xff]
    %v1747 = vld [vmem:[#allocation5 + $0x160] sm:$0xff]
    %v1748 = vld [vmem:[#allocation5 + $0x168] sm:$0xff]
    %v1749 = vld [vmem:[#allocation5 + $0x170] sm:$0xff]
    %v1750 = vld [vmem:[#allocation5 + $0x178] sm:$0xff]
    %v1751 = vld [vmem:[#allocation5 + $0x180] sm:$0xff]
    %v1752 = vld [vmem:[#allocation5 + $0x188] sm:$0xff]
    %v1753 = vld [vmem:[#allocation5 + $0x190] sm:$0xff]
    %v1754 = vld [vmem:[#allocation5 + $0x198] sm:$0xff]
    %v1755 = vld [vmem:[#allocation5 + $0x1a0] sm:$0xff]
    %v1756 = vld [vmem:[#allocation5 + $0x1a8] sm:$0xff]
    %v1757 = vld [vmem:[#allocation5 + $0x1b0] sm:$0xff]
    %v1758 = vld [vmem:[#allocation5 + $0x1b8] sm:$0xff]
    %v1759 = vld [vmem:[#allocation5 + $0x1c0] sm:$0xff]
    %v1760 = vld [vmem:[#allocation5 + $0x1c8] sm:$0xff]
    %v1761 = vld [vmem:[#allocation5 + $0x1d0] sm:$0xff]
    %v1762 = vld [vmem:[#allocation5 + $0x1d8] sm:$0xff]
    %v1763 = vld [vmem:[#allocation5 + $0x1e0] sm:$0xff]
    %v1764 = vld [vmem:[#allocation5 + $0x1e8] sm:$0xff]
    %v1765 = vld [vmem:[#allocation5 + $0x1f0] sm:$0xff]
    %v1766 = vld [vmem:[#allocation5 + $0x1f8] sm:$0xff]
    %v1767 = vld [vmem:[#allocation5 + $0x200] sm:$0xff]
    %v1768 = vld [vmem:[#allocation5 + $0x208] sm:$0xff]
    %v1769 = vld [vmem:[#allocation5 + $0x210] sm:$0xff]
    %v1770 = vld [vmem:[#allocation5 + $0x218] sm:$0xff]
    %v1771 = vld [vmem:[#allocation5 + $0x220] sm:$0xff]
    %v1772 = vld [vmem:[#allocation5 + $0x228] sm:$0xff]
    %v1773 = vld [vmem:[#allocation5 + $0x230] sm:$0xff]
    %v1774 = vld [vmem:[#allocation5 + $0x238] sm:$0xff]
    %v1775 = vld [vmem:[#allocation5 + $0x240] sm:$0xff]
    %v1776 = vld [vmem:[#allocation5 + $0x248] sm:$0xff]
    %v1777 = vld [vmem:[#allocation5 + $0x250] sm:$0xff]
    %v1778 = vld [vmem:[#allocation5 + $0x258] sm:$0xff]
    %v1779 = vld [vmem:[#allocation5 + $0x260] sm:$0xff]
    %v1780 = vld [vmem:[#allocation5 + $0x268] sm:$0xff]
    %v1781 = vld [vmem:[#allocation5 + $0x270] sm:$0xff]
    %v1782 = vld [vmem:[#allocation5 + $0x278] sm:$0xff]
    %v1783 = vld [vmem:[#allocation5 + $0x280] sm:$0xff]
    %v1784 = vld [vmem:[#allocation5 + $0x288] sm:$0xff]
    %v1785 = vld [vmem:[#allocation5 + $0x290] sm:$0xff]
    %v1786 = vld [vmem:[#allocation5 + $0x298] sm:$0xff]
    %v1787 = vld [vmem:[#allocation5 + $0x2a0] sm:$0xff]
    %v1788 = vld [vmem:[#allocation5 + $0x2a8] sm:$0xff]
    %v1789 = vld [vmem:[#allocation5 + $0x2b0] sm:$0xff]
    %v1790 = vld [vmem:[#allocation5 + $0x2b8] sm:$0xff]
    %v1791 = vld [vmem:[#allocation5 + $0x2c0] sm:$0xff]
    %v1792 = vld [vmem:[#allocation5 + $0x2c8] sm:$0xff]
    %v1793 = vld [vmem:[#allocation5 + $0x2d0] sm:$0xff]
    %v1794 = vld [vmem:[#allocation5 + $0x2d8] sm:$0xff]
    %v1795 = vld [vmem:[#allocation5 + $0x2e0] sm:$0xff]
    %v1796 = vld [vmem:[#allocation5 + $0x2e8] sm:$0xff]
    %v1797 = vld [vmem:[#allocation5 + $0x2f0] sm:$0xff]
    %v1798 = vld [vmem:[#allocation5 + $0x2f8] sm:$0xff]
    %v1799 = vld [vmem:[#allocation5 + $0x300] sm:$0xff]
    %v1800 = vld [vmem:[#allocation5 + $0x308] sm:$0xff]
    %v1801 = vld [vmem:[#allocation5 + $0x310] sm:$0xff]
    %v1802 = vld [vmem:[#allocation5 + $0x318] sm:$0xff]
    %v1803 = vld [vmem:[#allocation5 + $0x320] sm:$0xff]
    %v1804 = vld [vmem:[#allocation5 + $0x328] sm:$0xff]
    %v1805 = vld [vmem:[#allocation5 + $0x330] sm:$0xff]
    %v1806 = vld [vmem:[#allocation5 + $0x338] sm:$0xff]
    %v1807 = vld [vmem:[#allocation5 + $0x340] sm:$0xff]
    %v1808 = vld [vmem:[#allocation5 + $0x348] sm:$0xff]
    %v1809 = vld [vmem:[#allocation5 + $0x350] sm:$0xff]
    %v1810 = vld [vmem:[#allocation5 + $0x358] sm:$0xff]
    %v1811 = vld [vmem:[#allocation5 + $0x360] sm:$0xff]
    %v1812 = vld [vmem:[#allocation5 + $0x368] sm:$0xff]
    %v1813 = vld [vmem:[#allocation5 + $0x370] sm:$0xff]
    %v1814 = vld [vmem:[#allocation5 + $0x378] sm:$0xff]
    %v1815 = vld [vmem:[#allocation5 + $0x380] sm:$0xff]
    %v1816 = vld [vmem:[#allocation5 + $0x388] sm:$0xff]
    %v1817 = vld [vmem:[#allocation5 + $0x390] sm:$0xff]
    %v1818 = vld [vmem:[#allocation5 + $0x398] sm:$0xff]
    %v1819 = vld [vmem:[#allocation5 + $0x3a0] sm:$0xff]
    %v1820 = vld [vmem:[#allocation5 + $0x3a8] sm:$0xff]
    %v1821 = vld [vmem:[#allocation5 + $0x3b0] sm:$0xff]
    %v1822 = vld [vmem:[#allocation5 + $0x3b8] sm:$0xff]
    %v1823 = vld [vmem:[#allocation5 + $0x3c0] sm:$0xff]
    %v1824 = vld [vmem:[#allocation5 + $0x3c8] sm:$0xff]
    %v1825 = vld [vmem:[#allocation5 + $0x3d0] sm:$0xff]
    %v1826 = vld [vmem:[#allocation5 + $0x3d8] sm:$0xff]
    %v1827 = vld [vmem:[#allocation5 + $0x3e0] sm:$0xff]
    %v1828 = vld [vmem:[#allocation5 + $0x3e8] sm:$0xff]
    %v1829 = vld [vmem:[#allocation5 + $0x3f0] sm:$0xff]
    %v1830 = vld [vmem:[#allocation5 + $0x3f8] sm:$0xff]
    %v1831 = vld [vmem:[#allocation5 + $0x400] sm:$0xff]
    %v1832 = vld [vmem:[#allocation5 + $0x408] sm:$0xff]
    %v1833 = vld [vmem:[#allocation5 + $0x410] sm:$0xff]
    %v1834 = vld [vmem:[#allocation5 + $0x418] sm:$0xff]
    %v1835 = vld [vmem:[#allocation5 + $0x420] sm:$0xff]
    %v1836 = vld [vmem:[#allocation5 + $0x428] sm:$0xff]
    %v1837 = vld [vmem:[#allocation5 + $0x430] sm:$0xff]
    %v1838 = vld [vmem:[#allocation5 + $0x438] sm:$0xff]
    %v1839 = vld [vmem:[#allocation5 + $0x440] sm:$0xff]
    %v1840 = vld [vmem:[#allocation5 + $0x448] sm:$0xff]
    %v1841 = vld [vmem:[#allocation5 + $0x450] sm:$0xff]
    %v1842 = vld [vmem:[#allocation5 + $0x458] sm:$0xff]
    %v1843 = vld [vmem:[#allocation5 + $0x460] sm:$0xff]
    %v1844 = vld [vmem:[#allocation5 + $0x468] sm:$0xff]
    %v1845 = vld [vmem:[#allocation5 + $0x470] sm:$0xff]
    %v1846 = vld [vmem:[#allocation5 + $0x478] sm:$0xff]
    %v1847 = vld [vmem:[#allocation5 + $0x480] sm:$0xff]
    %v1848 = vld [vmem:[#allocation5 + $0x488] sm:$0xff]
    %v1849 = vld [vmem:[#allocation5 + $0x490] sm:$0xff]
    %v1850 = vld [vmem:[#allocation5 + $0x498] sm:$0xff]
    %v1851 = vld [vmem:[#allocation5 + $0x4a0] sm:$0xff]
    %v1852 = vld [vmem:[#allocation5 + $0x4a8] sm:$0xff]
    %v1853 = vld [vmem:[#allocation5 + $0x4b0] sm:$0xff]
    %v1854 = vld [vmem:[#allocation5 + $0x4b8] sm:$0xff]
    %v1855 = vld [vmem:[#allocation5 + $0x4c0] sm:$0xff]
    %v1856 = vld [vmem:[#allocation5 + $0x4c8] sm:$0xff]
    %v1857 = vld [vmem:[#allocation5 + $0x4d0] sm:$0xff]
    %v1858 = vld [vmem:[#allocation5 + $0x4d8] sm:$0xff]
    %v1859 = vld [vmem:[#allocation5 + $0x4e0] sm:$0xff]
    %v1860 = vld [vmem:[#allocation5 + $0x4e8] sm:$0xff]
    %v1861 = vld [vmem:[#allocation5 + $0x4f0] sm:$0xff]
    %v1862 = vld [vmem:[#allocation5 + $0x4f8] sm:$0xff]
    %1863 = vmatprep.subr.mxu0 %v1704
    %1864 = vmatpush1.msra.mxu0 %v1703
    %1865 = vmatprep.subr.mxu0 %v1709
    %1866 = vmatpush1.msra.mxu0 %v1708
    %1867 = vmatprep.subr.mxu0 %v1714
    %1868 = vmatpush1.msra.mxu0 %v1713
    %1869 = vmatprep.subr.mxu0 %v1719
    %1870 = vmatpush1.msra.mxu0 %v1718
    %1871 = vmatprep.subr.mxu0 %v1724
    %1872 = vmatpush1.msra.mxu0 %v1723
    %1873 = vmatprep.subr.mxu0 %v1729
    %1874 = vmatpush1.msra.mxu0 %v1728
    %1875 = vmatprep.subr.mxu0 %v1734
    %1876 = vmatpush1.msra.mxu0 %v1733
    %1877 = vmatprep.subr.mxu0 %v1739
    %1878 = vmatpush1.msra.mxu0 %v1738
    %1879 = vmatprep.subr.mxu0 %v1744
    %1880 = vmatpush1.msra.mxu0 %v1743
    %1881 = vmatprep.subr.mxu0 %v1749
    %1882 = vmatpush1.msra.mxu0 %v1748
    %1883 = vmatprep.subr.mxu0 %v1754
    %1884 = vmatpush1.msra.mxu0 %v1753
    %1885 = vmatprep.subr.mxu0 %v1759
    %1886 = vmatpush1.msra.mxu0 %v1758
    %1887 = vmatprep.subr.mxu0 %v1764
    %1888 = vmatpush1.msra.mxu0 %v1763
    %1889 = vmatprep.subr.mxu0 %v1769
    %1890 = vmatpush1.msra.mxu0 %v1768
    %1891 = vmatprep.subr.mxu0 %v1774
    %1892 = vmatpush1.msra.mxu0 %v1773
    %1893 = vmatprep.subr.mxu0 %v1779
    %1894 = vmatpush1.msra.mxu0 %v1778
    %1895 = vmatprep.subr.mxu0 %v1784
    %1896 = vmatpush1.msra.mxu0 %v1783
    %1897 = vmatprep.subr.mxu0 %v1789
    %1898 = vmatpush1.msra.mxu0 %v1788
    %1899 = vmatprep.subr.mxu0 %v1794
    %1900 = vmatpush1.msra.mxu0 %v1793
    %1901 = vmatprep.subr.mxu0 %v1799
    %1902 = vmatpush1.msra.mxu0 %v1798
    %1903 = vmatprep.subr.mxu0 %v1804
    %1904 = vmatpush1.msra.mxu0 %v1803
    %1905 = vmatprep.subr.mxu0 %v1809
    %1906 = vmatpush1.msra.mxu0 %v1808
    %1907 = vmatprep.subr.mxu0 %v1814
    %1908 = vmatpush1.msra.mxu0 %v1813
    %1909 = vmatprep.subr.mxu0 %v1819
    %1910 = vmatpush1.msra.mxu0 %v1818
    %1911 = vmatprep.subr.mxu0 %v1824
    %1912 = vmatpush1.msra.mxu0 %v1823
    %1913 = vmatprep.subr.mxu0 %v1829
    %1914 = vmatpush1.msra.mxu0 %v1828
    %1915 = vmatprep.subr.mxu0 %v1834
    %1916 = vmatpush1.msra.mxu0 %v1833
    %1917 = vmatprep.subr.mxu0 %v1839
    %1918 = vmatpush1.msra.mxu0 %v1838
    %1919 = vmatprep.subr.mxu0 %v1844
    %1920 = vmatpush1.msra.mxu0 %v1843
    %1921 = vmatprep.subr.mxu0 %v1849
    %1922 = vmatpush1.msra.mxu0 %v1848
    %1923 = vmatprep.subr.mxu0 %v1854
    %1924 = vmatpush1.msra.mxu0 %v1853
    %1925 = vmatprep.subr.mxu0 %v1859
    %1926 = vmatpush1.msra.mxu0 %v1858
    %1927 = vmatprep.mubr.f32.mxu0 %v1697
    %1928 = vmatmul.mubr.f32.gmra.mrb[0].mxu0 %v1699
    %v1929 = vpop.f32.mrb[0].mxu0
    %v1930 = vadd.f32 0.0, %v1929
    %v1931 = vpop.f32.mrb[0].mxu0
    %v1932 = vadd.f32 0.0, %v1931
    %1933 = vdwg.mxu0
    %1934 = vmatprep.subr.mxu0 %v1706
    %1935 = vmatpush1.msra.mxu0 %v1705
    %1936 = vmatprep.subr.mxu0 %v1711
    %1937 = vmatpush1.msra.mxu0 %v1710
    %1938 = vmatprep.subr.mxu0 %v1716
    %1939 = vmatpush1.msra.mxu0 %v1715
    %1940 = vmatprep.subr.mxu0 %v1721
    %1941 = vmatpush1.msra.mxu0 %v1720
    %1942 = vmatprep.subr.mxu0 %v1726
    %1943 = vmatpush1.msra.mxu0 %v1725
    %1944 = vmatprep.subr.mxu0 %v1731
    %1945 = vmatpush1.msra.mxu0 %v1730
    %1946 = vmatprep.subr.mxu0 %v1736
    %1947 = vmatpush1.msra.mxu0 %v1735
    %1948 = vmatprep.subr.mxu0 %v1741
    %1949 = vmatpush1.msra.mxu0 %v1740
    %1950 = vmatprep.subr.mxu0 %v1746
    %1951 = vmatpush1.msra.mxu0 %v1745
    %1952 = vmatprep.subr.mxu0 %v1751
    %1953 = vmatpush1.msra.mxu0 %v1750
    %1954 = vmatprep.subr.mxu0 %v1756
    %1955 = vmatpush1.msra.mxu0 %v1755
    %1956 = vmatprep.subr.mxu0 %v1761
    %1957 = vmatpush1.msra.mxu0 %v1760
    %1958 = vmatprep.subr.mxu0 %v1766
    %1959 = vmatpush1.msra.mxu0 %v1765
    %1960 = vmatprep.subr.mxu0 %v1771
    %1961 = vmatpush1.msra.mxu0 %v1770
    %1962 = vmatprep.subr.mxu0 %v1776
    %1963 = vmatpush1.msra.mxu0 %v1775
    %1964 = vmatprep.subr.mxu0 %v1781
    %1965 = vmatpush1.msra.mxu0 %v1780
    %1966 = vmatprep.subr.mxu0 %v1786
    %1967 = vmatpush1.msra.mxu0 %v1785
    %1968 = vmatprep.subr.mxu0 %v1791
    %1969 = vmatpush1.msra.mxu0 %v1790
    %1970 = vmatprep.subr.mxu0 %v1796
    %1971 = vmatpush1.msra.mxu0 %v1795
    %1972 = vmatprep.subr.mxu0 %v1801
    %1973 = vmatpush1.msra.mxu0 %v1800
    %1974 = vmatprep.subr.mxu0 %v1806
    %1975 = vmatpush1.msra.mxu0 %v1805
    %1976 = vmatprep.subr.mxu0 %v1811
    %1977 = vmatpush1.msra.mxu0 %v1810
    %1978 = vmatprep.subr.mxu0 %v1816
    %1979 = vmatpush1.msra.mxu0 %v1815
    %1980 = vmatprep.subr.mxu0 %v1821
    %1981 = vmatpush1.msra.mxu0 %v1820
    %1982 = vmatprep.subr.mxu0 %v1826
    %1983 = vmatpush1.msra.mxu0 %v1825
    %1984 = vmatprep.subr.mxu0 %v1831
    %1985 = vmatpush1.msra.mxu0 %v1830
    %1986 = vmatprep.subr.mxu0 %v1836
    %1987 = vmatpush1.msra.mxu0 %v1835
    %1988 = vmatprep.subr.mxu0 %v1841
    %1989 = vmatpush1.msra.mxu0 %v1840
    %1990 = vmatprep.subr.mxu0 %v1846
    %1991 = vmatpush1.msra.mxu0 %v1845
    %1992 = vmatprep.subr.mxu0 %v1851
    %1993 = vmatpush1.msra.mxu0 %v1850
    %1994 = vmatprep.subr.mxu0 %v1856
    %1995 = vmatpush1.msra.mxu0 %v1855
    %1996 = vmatprep.subr.mxu0 %v1861
    %1997 = vmatpush1.msra.mxu0 %v1860
    %1998 = vmatprep.mubr.f32.mxu0 %v1697
    %1999 = vmatmul.mubr.f32.gmra.mrb[0].mxu0 %v1699
    %v2000 = vpop.f32.mrb[0].mxu0
    %v2001 = vadd.f32 0.0, %v2000
    %v2002 = vpop.f32.mrb[0].mxu0
    %v2003 = vadd.f32 0.0, %v2002
    %2004 = vdwg.mxu0
    %2005 = vmatprep.subr.mxu0 0.0
    %2006 = vmatpush1.msra.mxu0 %v1707
    %2007 = vmatprep.subr.mxu0 0.0
    %2008 = vmatpush1.msra.mxu0 %v1712
    %2009 = vmatprep.subr.mxu0 0.0
    %2010 = vmatpush1.msra.mxu0 %v1717
    %2011 = vmatprep.subr.mxu0 0.0
    %2012 = vmatpush1.msra.mxu0 %v1722
    %2013 = vmatprep.subr.mxu0 0.0
    %2014 = vmatpush1.msra.mxu0 %v1727
    %2015 = vmatprep.subr.mxu0 0.0
    %2016 = vmatpush1.msra.mxu0 %v1732
    %2017 = vmatprep.subr.mxu0 0.0
    %2018 = vmatpush1.msra.mxu0 %v1737
    %2019 = vmatprep.subr.mxu0 0.0
    %2020 = vmatpush1.msra.mxu0 %v1742
    %2021 = vmatprep.subr.mxu0 0.0
    %2022 = vmatpush1.msra.mxu0 %v1747
    %2023 = vmatprep.subr.mxu0 0.0
    %2024 = vmatpush1.msra.mxu0 %v1752
    %2025 = vmatprep.subr.mxu0 0.0
    %2026 = vmatpush1.msra.mxu0 %v1757
    %2027 = vmatprep.subr.mxu0 0.0
    %2028 = vmatpush1.msra.mxu0 %v1762
    %2029 = vmatprep.subr.mxu0 0.0
    %2030 = vmatpush1.msra.mxu0 %v1767
    %2031 = vmatprep.subr.mxu0 0.0
    %2032 = vmatpush1.msra.mxu0 %v1772
    %2033 = vmatprep.subr.mxu0 0.0
    %2034 = vmatpush1.msra.mxu0 %v1777
    %2035 = vmatprep.subr.mxu0 0.0
    %2036 = vmatpush1.msra.mxu0 %v1782
    %2037 = vmatprep.subr.mxu0 0.0
    %2038 = vmatpush1.msra.mxu0 %v1787
    %2039 = vmatprep.subr.mxu0 0.0
    %2040 = vmatpush1.msra.mxu0 %v1792
    %2041 = vmatprep.subr.mxu0 0.0
    %2042 = vmatpush1.msra.mxu0 %v1797
    %2043 = vmatprep.subr.mxu0 0.0
    %2044 = vmatpush1.msra.mxu0 %v1802
    %2045 = vmatprep.subr.mxu0 0.0
    %2046 = vmatpush1.msra.mxu0 %v1807
    %2047 = vmatprep.subr.mxu0 0.0
    %2048 = vmatpush1.msra.mxu0 %v1812
    %2049 = vmatprep.subr.mxu0 0.0
    %2050 = vmatpush1.msra.mxu0 %v1817
    %2051 = vmatprep.subr.mxu0 0.0
    %2052 = vmatpush1.msra.mxu0 %v1822
    %2053 = vmatprep.subr.mxu0 0.0
    %2054 = vmatpush1.msra.mxu0 %v1827
    %2055 = vmatprep.subr.mxu0 0.0
    %2056 = vmatpush1.msra.mxu0 %v1832
    %2057 = vmatprep.subr.mxu0 0.0
    %2058 = vmatpush1.msra.mxu0 %v1837
    %2059 = vmatprep.subr.mxu0 0.0
    %2060 = vmatpush1.msra.mxu0 %v1842
    %2061 = vmatprep.subr.mxu0 0.0
    %2062 = vmatpush1.msra.mxu0 %v1847
    %2063 = vmatprep.subr.mxu0 0.0
    %2064 = vmatpush1.msra.mxu0 %v1852
    %2065 = vmatprep.subr.mxu0 0.0
    %2066 = vmatpush1.msra.mxu0 %v1857
    %2067 = vmatprep.subr.mxu0 0.0
    %2068 = vmatpush1.msra.mxu0 %v1862
    %2069 = vmatprep.mubr.f32.mxu0 %v1697
    %2070 = vmatmul.mubr.f32.gmra.mrb[0].mxu0 %v1699
    %v2071 = vpop.f32.mrb[0].mxu0
    %v2072 = vadd.f32 0.0, %v2071
    %v2073 = vpop.f32.mrb[0].mxu0
    %2074 = vdwg.mxu0
    %v2075 = vadd.f32 %v2072, %v809
    %v2076 = vtanh.pop %v2075
    %2078 = vset.pattern.permute.xlu0 0
    %2079 = vperm.xlu0 %2078, %v425
    %v2080 = vpop.permute.xlu0 %2079
    %v2082 = vmul.f32 %v2076, %v2080
    %v2083 = vadd.f32 %v1697, %v2082
    %s2084 = scalar_lea.vmem [#allocation2], 96
    %v2085 = vld [vmem:[%s2084] sm:$0xff]
    %v2086 = vld [vmem:[%s2084 + $0x8] sm:$0xff]
    %v2087 = vld [vmem:[%s2084 + $0x10] sm:$0xff]
    %v2088 = vld [vmem:[%s2084 + $0x18] sm:$0xff]
    %v2089 = vadd.f32 %v1930, %v2085
    %v2090 = vadd.f32 %v1932, %v2086
    %v2091 = vadd.f32 %v2001, %v2087
    %v2092 = vadd.f32 %v2003, %v2088
    %v2093 = vxor.u32 %v2089, 2147483648
    %v2094 = vxor.u32 %v2090, 2147483648
    %v2095 = vxor.u32 %v2091, 2147483648
    %v2096 = vxor.u32 %v2092, 2147483648
    %v2097 = vmul.f32 %v2093, 1.442695
    %v2098 = vpow.pop %v2097
    %v2099 = vmul.f32 %v2094, 1.442695
    %v2100 = vpow.pop %v2099
    %v2101 = vmul.f32 %v2095, 1.442695
    %v2102 = vpow.pop %v2101
    %v2103 = vmul.f32 %v2096, 1.442695
    %v2104 = vpow.pop %v2103
    %v2105 = vadd.f32 %v2098, 1.0
    %v2106 = vadd.f32 %v2100, 1.0
    %v2107 = vadd.f32 %v2102, 1.0
    %v2108 = vadd.f32 %v2104, 1.0
    %v2109 = vrcp.pop %v2105
    %v2110 = vmul.f32 1.0, %v2109
    %v2111 = vrcp.pop %v2106
    %v2112 = vmul.f32 1.0, %v2111
    %v2113 = vrcp.pop %v2107
    %v2114 = vmul.f32 1.0, %v2113
    %v2115 = vrcp.pop %v2108
    %v2116 = vmul.f32 1.0, %v2115
    %v2117 = vmul.f32 %v2110, %v2083
    %v2118 = vmul.f32 %v2112, %v2116
    %v2119 = vadd.f32 %v2117, %v2118
    %v2120 = vtanh.pop %v2119
    %v2121 = vmul.f32 %v2114, %v2120
    %s2122 = scalar_lea.vmem [#allocation10], 24
    %2123 = vst [vmem:[%s2122] sm:$0xff] %v2121
    %v2124 = vadd.f32 %v1702, %v2121
    %v2125 = vld [vmem:[#allocation5] sm:$0xff]
    %v2126 = vld [vmem:[#allocation5 + $0x8] sm:$0xff]
    %v2127 = vld [vmem:[#allocation5 + $0x10] sm:$0xff]
    %v2128 = vld [vmem:[#allocation5 + $0x18] sm:$0xff]
    %v2129 = vld [vmem:[#allocation5 + $0x20] sm:$0xff]
    %v2130 = vld [vmem:[#allocation5 + $0x28] sm:$0xff]
    %v2131 = vld [vmem:[#allocation5 + $0x30] sm:$0xff]
    %v2132 = vld [vmem:[#allocation5 + $0x38] sm:$0xff]
    %v2133 = vld [vmem:[#allocation5 + $0x40] sm:$0xff]
    %v2134 = vld [vmem:[#allocation5 + $0x48] sm:$0xff]
    %v2135 = vld [vmem:[#allocation5 + $0x50] sm:$0xff]
    %v2136 = vld [vmem:[#allocation5 + $0x58] sm:$0xff]
    %v2137 = vld [vmem:[#allocation5 + $0x60] sm:$0xff]
    %v2138 = vld [vmem:[#allocation5 + $0x68] sm:$0xff]
    %v2139 = vld [vmem:[#allocation5 + $0x70] sm:$0xff]
    %v2140 = vld [vmem:[#allocation5 + $0x78] sm:$0xff]
    %v2141 = vld [vmem:[#allocation5 + $0x80] sm:$0xff]
    %v2142 = vld [vmem:[#allocation5 + $0x88] sm:$0xff]
    %v2143 = vld [vmem:[#allocation5 + $0x90] sm:$0xff]
    %v2144 = vld [vmem:[#allocation5 + $0x98] sm:$0xff]
    %v2145 = vld [vmem:[#allocation5 + $0xa0] sm:$0xff]
    %v2146 = vld [vmem:[#allocation5 + $0xa8] sm:$0xff]
    %v2147 = vld [vmem:[#allocation5 + $0xb0] sm:$0xff]
    %v2148 = vld [vmem:[#allocation5 + $0xb8] sm:$0xff]
    %v2149 = vld [vmem:[#allocation5 + $0xc0] sm:$0xff]
    %v2150 = vld [vmem:[#allocation5 + $0xc8] sm:$0xff]
    %v2151 = vld [vmem:[#allocation5 + $0xd0] sm:$0xff]
    %v2152 = vld [vmem:[#allocation5 + $0xd8] sm:$0xff]
    %v2153 = vld [vmem:[#allocation5 + $0xe0] sm:$0xff]
    %v2154 = vld [vmem:[#allocation5 + $0xe8] sm:$0xff]
    %v2155 = vld [vmem:[#allocation5 + $0xf0] sm:$0xff]
    %v2156 = vld [vmem:[#allocation5 + $0xf8] sm:$0xff]
    %v2157 = vld [vmem:[#allocation5 + $0x100] sm:$0xff]
    %v2158 = vld [vmem:[#allocation5 + $0x108] sm:$0xff]
    %v2159 = vld [vmem:[#allocation5 + $0x110] sm:$0xff]
    %v2160 = vld [vmem:[#allocation5 + $0x118] sm:$0xff]
    %v2161 = vld [vmem:[#allocation5 + $0x120] sm:$0xff]
    %v2162 = vld [vmem:[#allocation5 + $0x128] sm:$0xff]
    %v2163 = vld [vmem:[#allocation5 + $0x130] sm:$0xff]
    %v2164 = vld [vmem:[#allocation5 + $0x138] sm:$0xff]
    %v2165 = vld [vmem:[#allocation5 + $0x140] sm:$0xff]
    %v2166 = vld [vmem:[#allocation5 + $0x148] sm:$0xff]
    %v2167 = vld [vmem:[#allocation5 + $0x150] sm:$0xff]
    %v2168 = vld [vmem:[#allocation5 + $0x158] sm:$0xff]
    %v2169 = vld [vmem:[#allocation5 + $0x160] sm:$0xff]
    %v2170 = vld [vmem:[#allocation5 + $0x168] sm:$0xff]
    %v2171 = vld [vmem:[#allocation5 + $0x170] sm:$0xff]
    %v2172 = vld [vmem:[#allocation5 + $0x178] sm:$0xff]
    %v2173 = vld [vmem:[#allocation5 + $0x180] sm:$0xff]
    %v2174 = vld [vmem:[#allocation5 + $0x188] sm:$0xff]
    %v2175 = vld [vmem:[#allocation5 + $0x190] sm:$0xff]
    %v2176 = vld [vmem:[#allocation5 + $0x198] sm:$0xff]
    %v2177 = vld [vmem:[#allocation5 + $0x1a0] sm:$0xff]
    %v2178 = vld [vmem:[#allocation5 + $0x1a8] sm:$0xff]
    %v2179 = vld [vmem:[#allocation5 + $0x1b0] sm:$0xff]
    %v2180 = vld [vmem:[#allocation5 + $0x1b8] sm:$0xff]
    %v2181 = vld [vmem:[#allocation5 + $0x1c0] sm:$0xff]
    %v2182 = vld [vmem:[#allocation5 + $0x1c8] sm:$0xff]
    %v2183 = vld [vmem:[#allocation5 + $0x1d0] sm:$0xff]
    %v2184 = vld [vmem:[#allocation5 + $0x1d8] sm:$0xff]
    %v2185 = vld [vmem:[#allocation5 + $0x1e0] sm:$0xff]
    %v2186 = vld [vmem:[#allocation5 + $0x1e8] sm:$0xff]
    %v2187 = vld [vmem:[#allocation5 + $0x1f0] sm:$0xff]
    %v2188 = vld [vmem:[#allocation5 + $0x1f8] sm:$0xff]
    %v2189 = vld [vmem:[#allocation5 + $0x200] sm:$0xff]
    %v2190 = vld [vmem:[#allocation5 + $0x208] sm:$0xff]
    %v2191 = vld [vmem:[#allocation5 + $0x210] sm:$0xff]
    %v2192 = vld [vmem:[#allocation5 + $0x218] sm:$0xff]
    %v2193 = vld [vmem:[#allocation5 + $0x220] sm:$0xff]
    %v2194 = vld [vmem:[#allocation5 + $0x228] sm:$0xff]
    %v2195 = vld [vmem:[#allocation5 + $0x230] sm:$0xff]
    %v2196 = vld [vmem:[#allocation5 + $0x238] sm:$0xff]
    %v2197 = vld [vmem:[#allocation5 + $0x240] sm:$0xff]
    %v2198 = vld [vmem:[#allocation5 + $0x248] sm:$0xff]
    %v2199 = vld [vmem:[#allocation5 + $0x250] sm:$0xff]
    %v2200 = vld [vmem:[#allocation5 + $0x258] sm:$0xff]
    %v2201 = vld [vmem:[#allocation5 + $0x260] sm:$0xff]
    %v2202 = vld [vmem:[#allocation5 + $0x268] sm:$0xff]
    %v2203 = vld [vmem:[#allocation5 + $0x270] sm:$0xff]
    %v2204 = vld [vmem:[#allocation5 + $0x278] sm:$0xff]
    %v2205 = vld [vmem:[#allocation5 + $0x280] sm:$0xff]
    %v2206 = vld [vmem:[#allocation5 + $0x288] sm:$0xff]
    %v2207 = vld [vmem:[#allocation5 + $0x290] sm:$0xff]
    %v2208 = vld [vmem:[#allocation5 + $0x298] sm:$0xff]
    %v2209 = vld [vmem:[#allocation5 + $0x2a0] sm:$0xff]
    %v2210 = vld [vmem:[#allocation5 + $0x2a8] sm:$0xff]
    %v2211 = vld [vmem:[#allocation5 + $0x2b0] sm:$0xff]
    %v2212 = vld [vmem:[#allocation5 + $0x2b8] sm:$0xff]
    %v2213 = vld [vmem:[#allocation5 + $0x2c0] sm:$0xff]
    %v2214 = vld [vmem:[#allocation5 + $0x2c8] sm:$0xff]
    %v2215 = vld [vmem:[#allocation5 + $0x2d0] sm:$0xff]
    %v2216 = vld [vmem:[#allocation5 + $0x2d8] sm:$0xff]
    %v2217 = vld [vmem:[#allocation5 + $0x2e0] sm:$0xff]
    %v2218 = vld [vmem:[#allocation5 + $0x2e8] sm:$0xff]
    %v2219 = vld [vmem:[#allocation5 + $0x2f0] sm:$0xff]
    %v2220 = vld [vmem:[#allocation5 + $0x2f8] sm:$0xff]
    %v2221 = vld [vmem:[#allocation5 + $0x300] sm:$0xff]
    %v2222 = vld [vmem:[#allocation5 + $0x308] sm:$0xff]
    %v2223 = vld [vmem:[#allocation5 + $0x310] sm:$0xff]
    %v2224 = vld [vmem:[#allocation5 + $0x318] sm:$0xff]
    %v2225 = vld [vmem:[#allocation5 + $0x320] sm:$0xff]
    %v2226 = vld [vmem:[#allocation5 + $0x328] sm:$0xff]
    %v2227 = vld [vmem:[#allocation5 + $0x330] sm:$0xff]
    %v2228 = vld [vmem:[#allocation5 + $0x338] sm:$0xff]
    %v2229 = vld [vmem:[#allocation5 + $0x340] sm:$0xff]
    %v2230 = vld [vmem:[#allocation5 + $0x348] sm:$0xff]
    %v2231 = vld [vmem:[#allocation5 + $0x350] sm:$0xff]
    %v2232 = vld [vmem:[#allocation5 + $0x358] sm:$0xff]
    %v2233 = vld [vmem:[#allocation5 + $0x360] sm:$0xff]
    %v2234 = vld [vmem:[#allocation5 + $0x368] sm:$0xff]
    %v2235 = vld [vmem:[#allocation5 + $0x370] sm:$0xff]
    %v2236 = vld [vmem:[#allocation5 + $0x378] sm:$0xff]
    %v2237 = vld [vmem:[#allocation5 + $0x380] sm:$0xff]
    %v2238 = vld [vmem:[#allocation5 + $0x388] sm:$0xff]
    %v2239 = vld [vmem:[#allocation5 + $0x390] sm:$0xff]
    %v2240 = vld [vmem:[#allocation5 + $0x398] sm:$0xff]
    %v2241 = vld [vmem:[#allocation5 + $0x3a0] sm:$0xff]
    %v2242 = vld [vmem:[#allocation5 + $0x3a8] sm:$0xff]
    %v2243 = vld [vmem:[#allocation5 + $0x3b0] sm:$0xff]
    %v2244 = vld [vmem:[#allocation5 + $0x3b8] sm:$0xff]
    %v2245 = vld [vmem:[#allocation5 + $0x3c0] sm:$0xff]
    %v2246 = vld [vmem:[#allocation5 + $0x3c8] sm:$0xff]
    %v2247 = vld [vmem:[#allocation5 + $0x3d0] sm:$0xff]
    %v2248 = vld [vmem:[#allocation5 + $0x3d8] sm:$0xff]
    %v2249 = vld [vmem:[#allocation5 + $0x3e0] sm:$0xff]
    %v2250 = vld [vmem:[#allocation5 + $0x3e8] sm:$0xff]
    %v2251 = vld [vmem:[#allocation5 + $0x3f0] sm:$0xff]
    %v2252 = vld [vmem:[#allocation5 + $0x3f8] sm:$0xff]
    %v2253 = vld [vmem:[#allocation5 + $0x400] sm:$0xff]
    %v2254 = vld [vmem:[#allocation5 + $0x408] sm:$0xff]
    %v2255 = vld [vmem:[#allocation5 + $0x410] sm:$0xff]
    %v2256 = vld [vmem:[#allocation5 + $0x418] sm:$0xff]
    %v2257 = vld [vmem:[#allocation5 + $0x420] sm:$0xff]
    %v2258 = vld [vmem:[#allocation5 + $0x428] sm:$0xff]
    %v2259 = vld [vmem:[#allocation5 + $0x430] sm:$0xff]
    %v2260 = vld [vmem:[#allocation5 + $0x438] sm:$0xff]
    %v2261 = vld [vmem:[#allocation5 + $0x440] sm:$0xff]
    %v2262 = vld [vmem:[#allocation5 + $0x448] sm:$0xff]
    %v2263 = vld [vmem:[#allocation5 + $0x450] sm:$0xff]
    %v2264 = vld [vmem:[#allocation5 + $0x458] sm:$0xff]
    %v2265 = vld [vmem:[#allocation5 + $0x460] sm:$0xff]
    %v2266 = vld [vmem:[#allocation5 + $0x468] sm:$0xff]
    %v2267 = vld [vmem:[#allocation5 + $0x470] sm:$0xff]
    %v2268 = vld [vmem:[#allocation5 + $0x478] sm:$0xff]
    %v2269 = vld [vmem:[#allocation5 + $0x480] sm:$0xff]
    %v2270 = vld [vmem:[#allocation5 + $0x488] sm:$0xff]
    %v2271 = vld [vmem:[#allocation5 + $0x490] sm:$0xff]
    %v2272 = vld [vmem:[#allocation5 + $0x498] sm:$0xff]
    %v2273 = vld [vmem:[#allocation5 + $0x4a0] sm:$0xff]
    %v2274 = vld [vmem:[#allocation5 + $0x4a8] sm:$0xff]
    %v2275 = vld [vmem:[#allocation5 + $0x4b0] sm:$0xff]
    %v2276 = vld [vmem:[#allocation5 + $0x4b8] sm:$0xff]
    %v2277 = vld [vmem:[#allocation5 + $0x4c0] sm:$0xff]
    %v2278 = vld [vmem:[#allocation5 + $0x4c8] sm:$0xff]
    %v2279 = vld [vmem:[#allocation5 + $0x4d0] sm:$0xff]
    %v2280 = vld [vmem:[#allocation5 + $0x4d8] sm:$0xff]
    %v2281 = vld [vmem:[#allocation5 + $0x4e0] sm:$0xff]
    %v2282 = vld [vmem:[#allocation5 + $0x4e8] sm:$0xff]
    %v2283 = vld [vmem:[#allocation5 + $0x4f0] sm:$0xff]
    %v2284 = vld [vmem:[#allocation5 + $0x4f8] sm:$0xff]
    %2285 = vmatprep.subr.mxu0 %v2126
    %2286 = vmatpush1.msra.mxu0 %v2125
    %2287 = vmatprep.subr.mxu0 %v2131
    %2288 = vmatpush1.msra.mxu0 %v2130
    %2289 = vmatprep.subr.mxu0 %v2136
    %2290 = vmatpush1.msra.mxu0 %v2135
    %2291 = vmatprep.subr.mxu0 %v2141
    %2292 = vmatpush1.msra.mxu0 %v2140
    %2293 = vmatprep.subr.mxu0 %v2146
    %2294 = vmatpush1.msra.mxu0 %v2145
    %2295 = vmatprep.subr.mxu0 %v2151
    %2296 = vmatpush1.msra.mxu0 %v2150
    %2297 = vmatprep.subr.mxu0 %v2156
    %2298 = vmatpush1.msra.mxu0 %v2155
    %2299 = vmatprep.subr.mxu0 %v2161
    %2300 = vmatpush1.msra.mxu0 %v2160
    %2301 = vmatprep.subr.mxu0 %v2166
    %2302 = vmatpush1.msra.mxu0 %v2165
    %2303 = vmatprep.subr.mxu0 %v2171
    %2304 = vmatpush1.msra.mxu0 %v2170
    %2305 = vmatprep.subr.mxu0 %v2176
    %2306 = vmatpush1.msra.mxu0 %v2175
    %2307 = vmatprep.subr.mxu0 %v2181
    %2308 = vmatpush1.msra.mxu0 %v2180
    %2309 = vmatprep.subr.mxu0 %v2186
    %2310 = vmatpush1.msra.mxu0 %v2185
    %2311 = vmatprep.subr.mxu0 %v2191
    %2312 = vmatpush1.msra.mxu0 %v2190
    %2313 = vmatprep.subr.mxu0 %v2196
    %2314 = vmatpush1.msra.mxu0 %v2195
    %2315 = vmatprep.subr.mxu0 %v2201
    %2316 = vmatpush1.msra.mxu0 %v2200
    %2317 = vmatprep.subr.mxu0 %v2206
    %2318 = vmatpush1.msra.mxu0 %v2205
    %2319 = vmatprep.subr.mxu0 %v2211
    %2320 = vmatpush1.msra.mxu0 %v2210
    %2321 = vmatprep.subr.mxu0 %v2216
    %2322 = vmatpush1.msra.mxu0 %v2215
    %2323 = vmatprep.subr.mxu0 %v2221
    %2324 = vmatpush1.msra.mxu0 %v2220
    %2325 = vmatprep.subr.mxu0 %v2226
    %2326 = vmatpush1.msra.mxu0 %v2225
    %2327 = vmatprep.subr.mxu0 %v2231
    %2328 = vmatpush1.msra.mxu0 %v2230
    %2329 = vmatprep.subr.mxu0 %v2236
    %2330 = vmatpush1.msra.mxu0 %v2235
    %2331 = vmatprep.subr.mxu0 %v2241
    %2332 = vmatpush1.msra.mxu0 %v2240
    %2333 = vmatprep.subr.mxu0 %v2246
    %2334 = vmatpush1.msra.mxu0 %v2245
    %2335 = vmatprep.subr.mxu0 %v2251
    %2336 = vmatpush1.msra.mxu0 %v2250
    %2337 = vmatprep.subr.mxu0 %v2256
    %2338 = vmatpush1.msra.mxu0 %v2255
    %2339 = vmatprep.subr.mxu0 %v2261
    %2340 = vmatpush1.msra.mxu0 %v2260
    %2341 = vmatprep.subr.mxu0 %v2266
    %2342 = vmatpush1.msra.mxu0 %v2265
    %2343 = vmatprep.subr.mxu0 %v2271
    %2344 = vmatpush1.msra.mxu0 %v2270
    %2345 = vmatprep.subr.mxu0 %v2276
    %2346 = vmatpush1.msra.mxu0 %v2275
    %2347 = vmatprep.subr.mxu0 %v2281
    %2348 = vmatpush1.msra.mxu0 %v2280
    %2349 = vmatprep.mubr.f32.mxu0 %v2119
    %2350 = vmatmul.mubr.f32.gmra.mrb[0].mxu0 %v2121
    %v2351 = vpop.f32.mrb[0].mxu0
    %v2352 = vadd.f32 0.0, %v2351
    %v2353 = vpop.f32.mrb[0].mxu0
    %v2354 = vadd.f32 0.0, %v2353
    %2355 = vdwg.mxu0
    %2356 = vmatprep.subr.mxu0 %v2128
    %2357 = vmatpush1.msra.mxu0 %v2127
    %2358 = vmatprep.subr.mxu0 %v2133
    %2359 = vmatpush1.msra.mxu0 %v2132
    %2360 = vmatprep.subr.mxu0 %v2138
    %2361 = vmatpush1.msra.mxu0 %v2137
    %2362 = vmatprep.subr.mxu0 %v2143
    %2363 = vmatpush1.msra.mxu0 %v2142
    %2364 = vmatprep.subr.mxu0 %v2148
    %2365 = vmatpush1.msra.mxu0 %v2147
    %2366 = vmatprep.subr.mxu0 %v2153
    %2367 = vmatpush1.msra.mxu0 %v2152
    %2368 = vmatprep.subr.mxu0 %v2158
    %2369 = vmatpush1.msra.mxu0 %v2157
    %2370 = vmatprep.subr.mxu0 %v2163
    %2371 = vmatpush1.msra.mxu0 %v2162
    %2372 = vmatprep.subr.mxu0 %v2168
    %2373 = vmatpush1.msra.mxu0 %v2167
    %2374 = vmatprep.subr.mxu0 %v2173
    %2375 = vmatpush1.msra.mxu0 %v2172
    %2376 = vmatprep.subr.mxu0 %v2178
    %2377 = vmatpush1.msra.mxu0 %v2177
    %2378 = vmatprep.subr.mxu0 %v2183
    %2379 = vmatpush1.msra.mxu0 %v2182
    %2380 = vmatprep.subr.mxu0 %v2188
    %2381 = vmatpush1.msra.mxu0 %v2187
    %2382 = vmatprep.subr.mxu0 %v2193
    %2383 = vmatpush1.msra.mxu0 %v2192
    %2384 = vmatprep.subr.mxu0 %v2198
    %2385 = vmatpush1.msra.mxu0 %v2197
    %2386 = vmatprep.subr.mxu0 %v2203
    %2387 = vmatpush1.msra.mxu0 %v2202
    %2388 = vmatprep.subr.mxu0 %v2208
    %2389 = vmatpush1.msra.mxu0 %v2207
    %2390 = vmatprep.subr.mxu0 %v2213
    %2391 = vmatpush1.msra.mxu0 %v2212
    %2392 = vmatprep.subr.mxu0 %v2218
    %2393 = vmatpush1.msra.mxu0 %v2217
    %2394 = vmatprep.subr.mxu0 %v2223
    %2395 = vmatpush1.msra.mxu0 %v2222
    %2396 = vmatprep.subr.mxu0 %v2228
    %2397 = vmatpush1.msra.mxu0 %v2227
    %2398 = vmatprep.subr.mxu0 %v2233
    %2399 = vmatpush1.msra.mxu0 %v2232
    %2400 = vmatprep.subr.mxu0 %v2238
    %2401 = vmatpush1.msra.mxu0 %v2237
    %2402 = vmatprep.subr.mxu0 %v2243
    %2403 = vmatpush1.msra.mxu0 %v2242
    %2404 = vmatprep.subr.mxu0 %v2248
    %2405 = vmatpush1.msra.mxu0 %v2247
    %2406 = vmatprep.subr.mxu0 %v2253
    %2407 = vmatpush1.msra.mxu0 %v2252
    %2408 = vmatprep.subr.mxu0 %v2258
    %2409 = vmatpush1.msra.mxu0 %v2257
    %2410 = vmatprep.subr.mxu0 %v2263
    %2411 = vmatpush1.msra.mxu0 %v2262
    %2412 = vmatprep.subr.mxu0 %v2268
    %2413 = vmatpush1.msra.mxu0 %v2267
    %2414 = vmatprep.subr.mxu0 %v2273
    %2415 = vmatpush1.msra.mxu0 %v2272
    %2416 = vmatprep.subr.mxu0 %v2278
    %2417 = vmatpush1.msra.mxu0 %v2277
    %2418 = vmatprep.subr.mxu0 %v2283
    %2419 = vmatpush1.msra.mxu0 %v2282
    %2420 = vmatprep.mubr.f32.mxu0 %v2119
    %2421 = vmatmul.mubr.f32.gmra.mrb[0].mxu0 %v2121
    %v2422 = vpop.f32.mrb[0].mxu0
    %v2423 = vadd.f32 0.0, %v2422
    %v2424 = vpop.f32.mrb[0].mxu0
    %v2425 = vadd.f32 0.0, %v2424
    %2426 = vdwg.mxu0
    %2427 = vmatprep.subr.mxu0 0.0
    %2428 = vmatpush1.msra.mxu0 %v2129
    %2429 = vmatprep.subr.mxu0 0.0
    %2430 = vmatpush1.msra.mxu0 %v2134
    %2431 = vmatprep.subr.mxu0 0.0
    %2432 = vmatpush1.msra.mxu0 %v2139
    %2433 = vmatprep.subr.mxu0 0.0
    %2434 = vmatpush1.msra.mxu0 %v2144
    %2435 = vmatprep.subr.mxu0 0.0
    %2436 = vmatpush1.msra.mxu0 %v2149
    %2437 = vmatprep.subr.mxu0 0.0
    %2438 = vmatpush1.msra.mxu0 %v2154
    %2439 = vmatprep.subr.mxu0 0.0
    %2440 = vmatpush1.msra.mxu0 %v2159
    %2441 = vmatprep.subr.mxu0 0.0
    %2442 = vmatpush1.msra.mxu0 %v2164
    %2443 = vmatprep.subr.mxu0 0.0
    %2444 = vmatpush1.msra.mxu0 %v2169
    %2445 = vmatprep.subr.mxu0 0.0
    %2446 = vmatpush1.msra.mxu0 %v2174
    %2447 = vmatprep.subr.mxu0 0.0
    %2448 = vmatpush1.msra.mxu0 %v2179
    %2449 = vmatprep.subr.mxu0 0.0
    %2450 = vmatpush1.msra.mxu0 %v2184
    %2451 = vmatprep.subr.mxu0 0.0
    %2452 = vmatpush1.msra.mxu0 %v2189
    %2453 = vmatprep.subr.mxu0 0.0
    %2454 = vmatpush1.msra.mxu0 %v2194
    %2455 = vmatprep.subr.mxu0 0.0
    %2456 = vmatpush1.msra.mxu0 %v2199
    %2457 = vmatprep.subr.mxu0 0.0
    %2458 = vmatpush1.msra.mxu0 %v2204
    %2459 = vmatprep.subr.mxu0 0.0
    %2460 = vmatpush1.msra.mxu0 %v2209
    %2461 = vmatprep.subr.mxu0 0.0
    %2462 = vmatpush1.msra.mxu0 %v2214
    %2463 = vmatprep.subr.mxu0 0.0
    %2464 = vmatpush1.msra.mxu0 %v2219
    %2465 = vmatprep.subr.mxu0 0.0
    %2466 = vmatpush1.msra.mxu0 %v2224
    %2467 = vmatprep.subr.mxu0 0.0
    %2468 = vmatpush1.msra.mxu0 %v2229
    %2469 = vmatprep.subr.mxu0 0.0
    %2470 = vmatpush1.msra.mxu0 %v2234
    %2471 = vmatprep.subr.mxu0 0.0
    %2472 = vmatpush1.msra.mxu0 %v2239
    %2473 = vmatprep.subr.mxu0 0.0
    %2474 = vmatpush1.msra.mxu0 %v2244
    %2475 = vmatprep.subr.mxu0 0.0
    %2476 = vmatpush1.msra.mxu0 %v2249
    %2477 = vmatprep.subr.mxu0 0.0
    %2478 = vmatpush1.msra.mxu0 %v2254
    %2479 = vmatprep.subr.mxu0 0.0
    %2480 = vmatpush1.msra.mxu0 %v2259
    %2481 = vmatprep.subr.mxu0 0.0
    %2482 = vmatpush1.msra.mxu0 %v2264
    %2483 = vmatprep.subr.mxu0 0.0
    %2484 = vmatpush1.msra.mxu0 %v2269
    %2485 = vmatprep.subr.mxu0 0.0
    %2486 = vmatpush1.msra.mxu0 %v2274
    %2487 = vmatprep.subr.mxu0 0.0
    %2488 = vmatpush1.msra.mxu0 %v2279
    %2489 = vmatprep.subr.mxu0 0.0
    %2490 = vmatpush1.msra.mxu0 %v2284
    %2491 = vmatprep.mubr.f32.mxu0 %v2119
    %2492 = vmatmul.mubr.f32.gmra.mrb[0].mxu0 %v2121
    %v2493 = vpop.f32.mrb[0].mxu0
    %v2494 = vadd.f32 0.0, %v2493
    %v2495 = vpop.f32.mrb[0].mxu0
    %2496 = vdwg.mxu0
    %v2497 = vadd.f32 %v2494, %v809
    %v2498 = vtanh.pop %v2497
    %2500 = vset.pattern.permute.xlu0 0
    %2501 = vperm.xlu0 %2500, %v426
    %v2502 = vpop.permute.xlu0 %2501
    %v2504 = vmul.f32 %v2498, %v2502
    %v2505 = vadd.f32 %v2119, %v2504
    %s2506 = scalar_lea.vmem [#allocation2], 128
    %v2507 = vld [vmem:[%s2506] sm:$0xff]
    %v2508 = vld [vmem:[%s2506 + $0x8] sm:$0xff]
    %v2509 = vld [vmem:[%s2506 + $0x10] sm:$0xff]
    %v2510 = vld [vmem:[%s2506 + $0x18] sm:$0xff]
    %v2511 = vadd.f32 %v2352, %v2507
    %v2512 = vadd.f32 %v2354, %v2508
    %v2513 = vadd.f32 %v2423, %v2509
    %v2514 = vadd.f32 %v2425, %v2510
    %v2515 = vxor.u32 %v2511, 2147483648
    %v2516 = vxor.u32 %v2512, 2147483648
    %v2517 = vxor.u32 %v2513, 2147483648
    %v2518 = vxor.u32 %v2514, 2147483648
    %v2519 = vmul.f32 %v2515, 1.442695
    %v2520 = vpow.pop %v2519
    %v2521 = vmul.f32 %v2516, 1.442695
    %v2522 = vpow.pop %v2521
    %v2523 = vmul.f32 %v2517, 1.442695
    %v2524 = vpow.pop %v2523
    %v2525 = vmul.f32 %v2518, 1.442695
    %v2526 = vpow.pop %v2525
    %v2527 = vadd.f32 %v2520, 1.0
    %v2528 = vadd.f32 %v2522, 1.0
    %v2529 = vadd.f32 %v2524, 1.0
    %v2530 = vadd.f32 %v2526, 1.0
    %v2531 = vrcp.pop %v2527
    %v2532 = vmul.f32 1.0, %v2531
    %v2533 = vrcp.pop %v2528
    %v2534 = vmul.f32 1.0, %v2533
    %v2535 = vrcp.pop %v2529
    %v2536 = vmul.f32 1.0, %v2535
    %v2537 = vrcp.pop %v2530
    %v2538 = vmul.f32 1.0, %v2537
    %v2539 = vmul.f32 %v2532, %v2505
    %v2540 = vmul.f32 %v2534, %v2538
    %v2541 = vadd.f32 %v2539, %v2540
    %v2542 = vtanh.pop %v2541
    %v2543 = vmul.f32 %v2536, %v2542
    %s2544 = scalar_lea.vmem [#allocation10], 32
    %2545 = vst [vmem:[%s2544] sm:$0xff] %v2543
    %v2546 = vadd.f32 %v2124, %v2543
    %v2547 = vld [vmem:[#allocation5] sm:$0xff]
    %v2548 = vld [vmem:[#allocation5 + $0x8] sm:$0xff]
    %v2549 = vld [vmem:[#allocation5 + $0x10] sm:$0xff]
    %v2550 = vld [vmem:[#allocation5 + $0x18] sm:$0xff]
    %v2551 = vld [vmem:[#allocation5 + $0x20] sm:$0xff]
    %v2552 = vld [vmem:[#allocation5 + $0x28] sm:$0xff]
    %v2553 = vld [vmem:[#allocation5 + $0x30] sm:$0xff]
    %v2554 = vld [vmem:[#allocation5 + $0x38] sm:$0xff]
    %v2555 = vld [vmem:[#allocation5 + $0x40] sm:$0xff]
    %v2556 = vld [vmem:[#allocation5 + $0x48] sm:$0xff]
    %v2557 = vld [vmem:[#allocation5 + $0x50] sm:$0xff]
    %v2558 = vld [vmem:[#allocation5 + $0x58] sm:$0xff]
    %v2559 = vld [vmem:[#allocation5 + $0x60] sm:$0xff]
    %v2560 = vld [vmem:[#allocation5 + $0x68] sm:$0xff]
    %v2561 = vld [vmem:[#allocation5 + $0x70] sm:$0xff]
    %v2562 = vld [vmem:[#allocation5 + $0x78] sm:$0xff]
    %v2563 = vld [vmem:[#allocation5 + $0x80] sm:$0xff]
    %v2564 = vld [vmem:[#allocation5 + $0x88] sm:$0xff]
    %v2565 = vld [vmem:[#allocation5 + $0x90] sm:$0xff]
    %v2566 = vld [vmem:[#allocation5 + $0x98] sm:$0xff]
    %v2567 = vld [vmem:[#allocation5 + $0xa0] sm:$0xff]
    %v2568 = vld [vmem:[#allocation5 + $0xa8] sm:$0xff]
    %v2569 = vld [vmem:[#allocation5 + $0xb0] sm:$0xff]
    %v2570 = vld [vmem:[#allocation5 + $0xb8] sm:$0xff]
    %v2571 = vld [vmem:[#allocation5 + $0xc0] sm:$0xff]
    %v2572 = vld [vmem:[#allocation5 + $0xc8] sm:$0xff]
    %v2573 = vld [vmem:[#allocation5 + $0xd0] sm:$0xff]
    %v2574 = vld [vmem:[#allocation5 + $0xd8] sm:$0xff]
    %v2575 = vld [vmem:[#allocation5 + $0xe0] sm:$0xff]
    %v2576 = vld [vmem:[#allocation5 + $0xe8] sm:$0xff]
    %v2577 = vld [vmem:[#allocation5 + $0xf0] sm:$0xff]
    %v2578 = vld [vmem:[#allocation5 + $0xf8] sm:$0xff]
    %v2579 = vld [vmem:[#allocation5 + $0x100] sm:$0xff]
    %v2580 = vld [vmem:[#allocation5 + $0x108] sm:$0xff]
    %v2581 = vld [vmem:[#allocation5 + $0x110] sm:$0xff]
    %v2582 = vld [vmem:[#allocation5 + $0x118] sm:$0xff]
    %v2583 = vld [vmem:[#allocation5 + $0x120] sm:$0xff]
    %v2584 = vld [vmem:[#allocation5 + $0x128] sm:$0xff]
    %v2585 = vld [vmem:[#allocation5 + $0x130] sm:$0xff]
    %v2586 = vld [vmem:[#allocation5 + $0x138] sm:$0xff]
    %v2587 = vld [vmem:[#allocation5 + $0x140] sm:$0xff]
    %v2588 = vld [vmem:[#allocation5 + $0x148] sm:$0xff]
    %v2589 = vld [vmem:[#allocation5 + $0x150] sm:$0xff]
    %v2590 = vld [vmem:[#allocation5 + $0x158] sm:$0xff]
    %v2591 = vld [vmem:[#allocation5 + $0x160] sm:$0xff]
    %v2592 = vld [vmem:[#allocation5 + $0x168] sm:$0xff]
    %v2593 = vld [vmem:[#allocation5 + $0x170] sm:$0xff]
    %v2594 = vld [vmem:[#allocation5 + $0x178] sm:$0xff]
    %v2595 = vld [vmem:[#allocation5 + $0x180] sm:$0xff]
    %v2596 = vld [vmem:[#allocation5 + $0x188] sm:$0xff]
    %v2597 = vld [vmem:[#allocation5 + $0x190] sm:$0xff]
    %v2598 = vld [vmem:[#allocation5 + $0x198] sm:$0xff]
    %v2599 = vld [vmem:[#allocation5 + $0x1a0] sm:$0xff]
    %v2600 = vld [vmem:[#allocation5 + $0x1a8] sm:$0xff]
    %v2601 = vld [vmem:[#allocation5 + $0x1b0] sm:$0xff]
    %v2602 = vld [vmem:[#allocation5 + $0x1b8] sm:$0xff]
    %v2603 = vld [vmem:[#allocation5 + $0x1c0] sm:$0xff]
    %v2604 = vld [vmem:[#allocation5 + $0x1c8] sm:$0xff]
    %v2605 = vld [vmem:[#allocation5 + $0x1d0] sm:$0xff]
    %v2606 = vld [vmem:[#allocation5 + $0x1d8] sm:$0xff]
    %v2607 = vld [vmem:[#allocation5 + $0x1e0] sm:$0xff]
    %v2608 = vld [vmem:[#allocation5 + $0x1e8] sm:$0xff]
    %v2609 = vld [vmem:[#allocation5 + $0x1f0] sm:$0xff]
    %v2610 = vld [vmem:[#allocation5 + $0x1f8] sm:$0xff]
    %v2611 = vld [vmem:[#allocation5 + $0x200] sm:$0xff]
    %v2612 = vld [vmem:[#allocation5 + $0x208] sm:$0xff]
    %v2613 = vld [vmem:[#allocation5 + $0x210] sm:$0xff]
    %v2614 = vld [vmem:[#allocation5 + $0x218] sm:$0xff]
    %v2615 = vld [vmem:[#allocation5 + $0x220] sm:$0xff]
    %v2616 = vld [vmem:[#allocation5 + $0x228] sm:$0xff]
    %v2617 = vld [vmem:[#allocation5 + $0x230] sm:$0xff]
    %v2618 = vld [vmem:[#allocation5 + $0x238] sm:$0xff]
    %v2619 = vld [vmem:[#allocation5 + $0x240] sm:$0xff]
    %v2620 = vld [vmem:[#allocation5 + $0x248] sm:$0xff]
    %v2621 = vld [vmem:[#allocation5 + $0x250] sm:$0xff]
    %v2622 = vld [vmem:[#allocation5 + $0x258] sm:$0xff]
    %v2623 = vld [vmem:[#allocation5 + $0x260] sm:$0xff]
    %v2624 = vld [vmem:[#allocation5 + $0x268] sm:$0xff]
    %v2625 = vld [vmem:[#allocation5 + $0x270] sm:$0xff]
    %v2626 = vld [vmem:[#allocation5 + $0x278] sm:$0xff]
    %v2627 = vld [vmem:[#allocation5 + $0x280] sm:$0xff]
    %v2628 = vld [vmem:[#allocation5 + $0x288] sm:$0xff]
    %v2629 = vld [vmem:[#allocation5 + $0x290] sm:$0xff]
    %v2630 = vld [vmem:[#allocation5 + $0x298] sm:$0xff]
    %v2631 = vld [vmem:[#allocation5 + $0x2a0] sm:$0xff]
    %v2632 = vld [vmem:[#allocation5 + $0x2a8] sm:$0xff]
    %v2633 = vld [vmem:[#allocation5 + $0x2b0] sm:$0xff]
    %v2634 = vld [vmem:[#allocation5 + $0x2b8] sm:$0xff]
    %v2635 = vld [vmem:[#allocation5 + $0x2c0] sm:$0xff]
    %v2636 = vld [vmem:[#allocation5 + $0x2c8] sm:$0xff]
    %v2637 = vld [vmem:[#allocation5 + $0x2d0] sm:$0xff]
    %v2638 = vld [vmem:[#allocation5 + $0x2d8] sm:$0xff]
    %v2639 = vld [vmem:[#allocation5 + $0x2e0] sm:$0xff]
    %v2640 = vld [vmem:[#allocation5 + $0x2e8] sm:$0xff]
    %v2641 = vld [vmem:[#allocation5 + $0x2f0] sm:$0xff]
    %v2642 = vld [vmem:[#allocation5 + $0x2f8] sm:$0xff]
    %v2643 = vld [vmem:[#allocation5 + $0x300] sm:$0xff]
    %v2644 = vld [vmem:[#allocation5 + $0x308] sm:$0xff]
    %v2645 = vld [vmem:[#allocation5 + $0x310] sm:$0xff]
    %v2646 = vld [vmem:[#allocation5 + $0x318] sm:$0xff]
    %v2647 = vld [vmem:[#allocation5 + $0x320] sm:$0xff]
    %v2648 = vld [vmem:[#allocation5 + $0x328] sm:$0xff]
    %v2649 = vld [vmem:[#allocation5 + $0x330] sm:$0xff]
    %v2650 = vld [vmem:[#allocation5 + $0x338] sm:$0xff]
    %v2651 = vld [vmem:[#allocation5 + $0x340] sm:$0xff]
    %v2652 = vld [vmem:[#allocation5 + $0x348] sm:$0xff]
    %v2653 = vld [vmem:[#allocation5 + $0x350] sm:$0xff]
    %v2654 = vld [vmem:[#allocation5 + $0x358] sm:$0xff]
    %v2655 = vld [vmem:[#allocation5 + $0x360] sm:$0xff]
    %v2656 = vld [vmem:[#allocation5 + $0x368] sm:$0xff]
    %v2657 = vld [vmem:[#allocation5 + $0x370] sm:$0xff]
    %v2658 = vld [vmem:[#allocation5 + $0x378] sm:$0xff]
    %v2659 = vld [vmem:[#allocation5 + $0x380] sm:$0xff]
    %v2660 = vld [vmem:[#allocation5 + $0x388] sm:$0xff]
    %v2661 = vld [vmem:[#allocation5 + $0x390] sm:$0xff]
    %v2662 = vld [vmem:[#allocation5 + $0x398] sm:$0xff]
    %v2663 = vld [vmem:[#allocation5 + $0x3a0] sm:$0xff]
    %v2664 = vld [vmem:[#allocation5 + $0x3a8] sm:$0xff]
    %v2665 = vld [vmem:[#allocation5 + $0x3b0] sm:$0xff]
    %v2666 = vld [vmem:[#allocation5 + $0x3b8] sm:$0xff]
    %v2667 = vld [vmem:[#allocation5 + $0x3c0] sm:$0xff]
    %v2668 = vld [vmem:[#allocation5 + $0x3c8] sm:$0xff]
    %v2669 = vld [vmem:[#allocation5 + $0x3d0] sm:$0xff]
    %v2670 = vld [vmem:[#allocation5 + $0x3d8] sm:$0xff]
    %v2671 = vld [vmem:[#allocation5 + $0x3e0] sm:$0xff]
    %v2672 = vld [vmem:[#allocation5 + $0x3e8] sm:$0xff]
    %v2673 = vld [vmem:[#allocation5 + $0x3f0] sm:$0xff]
    %v2674 = vld [vmem:[#allocation5 + $0x3f8] sm:$0xff]
    %v2675 = vld [vmem:[#allocation5 + $0x400] sm:$0xff]
    %v2676 = vld [vmem:[#allocation5 + $0x408] sm:$0xff]
    %v2677 = vld [vmem:[#allocation5 + $0x410] sm:$0xff]
    %v2678 = vld [vmem:[#allocation5 + $0x418] sm:$0xff]
    %v2679 = vld [vmem:[#allocation5 + $0x420] sm:$0xff]
    %v2680 = vld [vmem:[#allocation5 + $0x428] sm:$0xff]
    %v2681 = vld [vmem:[#allocation5 + $0x430] sm:$0xff]
    %v2682 = vld [vmem:[#allocation5 + $0x438] sm:$0xff]
    %v2683 = vld [vmem:[#allocation5 + $0x440] sm:$0xff]
    %v2684 = vld [vmem:[#allocation5 + $0x448] sm:$0xff]
    %v2685 = vld [vmem:[#allocation5 + $0x450] sm:$0xff]
    %v2686 = vld [vmem:[#allocation5 + $0x458] sm:$0xff]
    %v2687 = vld [vmem:[#allocation5 + $0x460] sm:$0xff]
    %v2688 = vld [vmem:[#allocation5 + $0x468] sm:$0xff]
    %v2689 = vld [vmem:[#allocation5 + $0x470] sm:$0xff]
    %v2690 = vld [vmem:[#allocation5 + $0x478] sm:$0xff]
    %v2691 = vld [vmem:[#allocation5 + $0x480] sm:$0xff]
    %v2692 = vld [vmem:[#allocation5 + $0x488] sm:$0xff]
    %v2693 = vld [vmem:[#allocation5 + $0x490] sm:$0xff]
    %v2694 = vld [vmem:[#allocation5 + $0x498] sm:$0xff]
    %v2695 = vld [vmem:[#allocation5 + $0x4a0] sm:$0xff]
    %v2696 = vld [vmem:[#allocation5 + $0x4a8] sm:$0xff]
    %v2697 = vld [vmem:[#allocation5 + $0x4b0] sm:$0xff]
    %v2698 = vld [vmem:[#allocation5 + $0x4b8] sm:$0xff]
    %v2699 = vld [vmem:[#allocation5 + $0x4c0] sm:$0xff]
    %v2700 = vld [vmem:[#allocation5 + $0x4c8] sm:$0xff]
    %v2701 = vld [vmem:[#allocation5 + $0x4d0] sm:$0xff]
    %v2702 = vld [vmem:[#allocation5 + $0x4d8] sm:$0xff]
    %v2703 = vld [vmem:[#allocation5 + $0x4e0] sm:$0xff]
    %v2704 = vld [vmem:[#allocation5 + $0x4e8] sm:$0xff]
    %v2705 = vld [vmem:[#allocation5 + $0x4f0] sm:$0xff]
    %v2706 = vld [vmem:[#allocation5 + $0x4f8] sm:$0xff]
    %2707 = vmatprep.subr.mxu0 %v2548
    %2708 = vmatpush1.msra.mxu0 %v2547
    %2709 = vmatprep.subr.mxu0 %v2553
    %2710 = vmatpush1.msra.mxu0 %v2552
    %2711 = vmatprep.subr.mxu0 %v2558
    %2712 = vmatpush1.msra.mxu0 %v2557
    %2713 = vmatprep.subr.mxu0 %v2563
    %2714 = vmatpush1.msra.mxu0 %v2562
    %2715 = vmatprep.subr.mxu0 %v2568
    %2716 = vmatpush1.msra.mxu0 %v2567
    %2717 = vmatprep.subr.mxu0 %v2573
    %2718 = vmatpush1.msra.mxu0 %v2572
    %2719 = vmatprep.subr.mxu0 %v2578
    %2720 = vmatpush1.msra.mxu0 %v2577
    %2721 = vmatprep.subr.mxu0 %v2583
    %2722 = vmatpush1.msra.mxu0 %v2582
    %2723 = vmatprep.subr.mxu0 %v2588
    %2724 = vmatpush1.msra.mxu0 %v2587
    %2725 = vmatprep.subr.mxu0 %v2593
    %2726 = vmatpush1.msra.mxu0 %v2592
    %2727 = vmatprep.subr.mxu0 %v2598
    %2728 = vmatpush1.msra.mxu0 %v2597
    %2729 = vmatprep.subr.mxu0 %v2603
    %2730 = vmatpush1.msra.mxu0 %v2602
    %2731 = vmatprep.subr.mxu0 %v2608
    %2732 = vmatpush1.msra.mxu0 %v2607
    %2733 = vmatprep.subr.mxu0 %v2613
    %2734 = vmatpush1.msra.mxu0 %v2612
    %2735 = vmatprep.subr.mxu0 %v2618
    %2736 = vmatpush1.msra.mxu0 %v2617
    %2737 = vmatprep.subr.mxu0 %v2623
    %2738 = vmatpush1.msra.mxu0 %v2622
    %2739 = vmatprep.subr.mxu0 %v2628
    %2740 = vmatpush1.msra.mxu0 %v2627
    %2741 = vmatprep.subr.mxu0 %v2633
    %2742 = vmatpush1.msra.mxu0 %v2632
    %2743 = vmatprep.subr.mxu0 %v2638
    %2744 = vmatpush1.msra.mxu0 %v2637
    %2745 = vmatprep.subr.mxu0 %v2643
    %2746 = vmatpush1.msra.mxu0 %v2642
    %2747 = vmatprep.subr.mxu0 %v2648
    %2748 = vmatpush1.msra.mxu0 %v2647
    %2749 = vmatprep.subr.mxu0 %v2653
    %2750 = vmatpush1.msra.mxu0 %v2652
    %2751 = vmatprep.subr.mxu0 %v2658
    %2752 = vmatpush1.msra.mxu0 %v2657
    %2753 = vmatprep.subr.mxu0 %v2663
    %2754 = vmatpush1.msra.mxu0 %v2662
    %2755 = vmatprep.subr.mxu0 %v2668
    %2756 = vmatpush1.msra.mxu0 %v2667
    %2757 = vmatprep.subr.mxu0 %v2673
    %2758 = vmatpush1.msra.mxu0 %v2672
    %2759 = vmatprep.subr.mxu0 %v2678
    %2760 = vmatpush1.msra.mxu0 %v2677
    %2761 = vmatprep.subr.mxu0 %v2683
    %2762 = vmatpush1.msra.mxu0 %v2682
    %2763 = vmatprep.subr.mxu0 %v2688
    %2764 = vmatpush1.msra.mxu0 %v2687
    %2765 = vmatprep.subr.mxu0 %v2693
    %2766 = vmatpush1.msra.mxu0 %v2692
    %2767 = vmatprep.subr.mxu0 %v2698
    %2768 = vmatpush1.msra.mxu0 %v2697
    %2769 = vmatprep.subr.mxu0 %v2703
    %2770 = vmatpush1.msra.mxu0 %v2702
    %2771 = vmatprep.mubr.f32.mxu0 %v2541
    %2772 = vmatmul.mubr.f32.gmra.mrb[0].mxu0 %v2543
    %v2773 = vpop.f32.mrb[0].mxu0
    %v2774 = vadd.f32 0.0, %v2773
    %v2775 = vpop.f32.mrb[0].mxu0
    %v2776 = vadd.f32 0.0, %v2775
    %2777 = vdwg.mxu0
    %2778 = vmatprep.subr.mxu0 %v2550
    %2779 = vmatpush1.msra.mxu0 %v2549
    %2780 = vmatprep.subr.mxu0 %v2555
    %2781 = vmatpush1.msra.mxu0 %v2554
    %2782 = vmatprep.subr.mxu0 %v2560
    %2783 = vmatpush1.msra.mxu0 %v2559
    %2784 = vmatprep.subr.mxu0 %v2565
    %2785 = vmatpush1.msra.mxu0 %v2564
    %2786 = vmatprep.subr.mxu0 %v2570
    %2787 = vmatpush1.msra.mxu0 %v2569
    %2788 = vmatprep.subr.mxu0 %v2575
    %2789 = vmatpush1.msra.mxu0 %v2574
    %2790 = vmatprep.subr.mxu0 %v2580
    %2791 = vmatpush1.msra.mxu0 %v2579
    %2792 = vmatprep.subr.mxu0 %v2585
    %2793 = vmatpush1.msra.mxu0 %v2584
    %2794 = vmatprep.subr.mxu0 %v2590
    %2795 = vmatpush1.msra.mxu0 %v2589
    %2796 = vmatprep.subr.mxu0 %v2595
    %2797 = vmatpush1.msra.mxu0 %v2594
    %2798 = vmatprep.subr.mxu0 %v2600
    %2799 = vmatpush1.msra.mxu0 %v2599
    %2800 = vmatprep.subr.mxu0 %v2605
    %2801 = vmatpush1.msra.mxu0 %v2604
    %2802 = vmatprep.subr.mxu0 %v2610
    %2803 = vmatpush1.msra.mxu0 %v2609
    %2804 = vmatprep.subr.mxu0 %v2615
    %2805 = vmatpush1.msra.mxu0 %v2614
    %2806 = vmatprep.subr.mxu0 %v2620
    %2807 = vmatpush1.msra.mxu0 %v2619
    %2808 = vmatprep.subr.mxu0 %v2625
    %2809 = vmatpush1.msra.mxu0 %v2624
    %2810 = vmatprep.subr.mxu0 %v2630
    %2811 = vmatpush1.msra.mxu0 %v2629
    %2812 = vmatprep.subr.mxu0 %v2635
    %2813 = vmatpush1.msra.mxu0 %v2634
    %2814 = vmatprep.subr.mxu0 %v2640
    %2815 = vmatpush1.msra.mxu0 %v2639
    %2816 = vmatprep.subr.mxu0 %v2645
    %2817 = vmatpush1.msra.mxu0 %v2644
    %2818 = vmatprep.subr.mxu0 %v2650
    %2819 = vmatpush1.msra.mxu0 %v2649
    %2820 = vmatprep.subr.mxu0 %v2655
    %2821 = vmatpush1.msra.mxu0 %v2654
    %2822 = vmatprep.subr.mxu0 %v2660
    %2823 = vmatpush1.msra.mxu0 %v2659
    %2824 = vmatprep.subr.mxu0 %v2665
    %2825 = vmatpush1.msra.mxu0 %v2664
    %2826 = vmatprep.subr.mxu0 %v2670
    %2827 = vmatpush1.msra.mxu0 %v2669
    %2828 = vmatprep.subr.mxu0 %v2675
    %2829 = vmatpush1.msra.mxu0 %v2674
    %2830 = vmatprep.subr.mxu0 %v2680
    %2831 = vmatpush1.msra.mxu0 %v2679
    %2832 = vmatprep.subr.mxu0 %v2685
    %2833 = vmatpush1.msra.mxu0 %v2684
    %2834 = vmatprep.subr.mxu0 %v2690
    %2835 = vmatpush1.msra.mxu0 %v2689
    %2836 = vmatprep.subr.mxu0 %v2695
    %2837 = vmatpush1.msra.mxu0 %v2694
    %2838 = vmatprep.subr.mxu0 %v2700
    %2839 = vmatpush1.msra.mxu0 %v2699
    %2840 = vmatprep.subr.mxu0 %v2705
    %2841 = vmatpush1.msra.mxu0 %v2704
    %2842 = vmatprep.mubr.f32.mxu0 %v2541
    %2843 = vmatmul.mubr.f32.gmra.mrb[0].mxu0 %v2543
    %v2844 = vpop.f32.mrb[0].mxu0
    %v2845 = vadd.f32 0.0, %v2844
    %v2846 = vpop.f32.mrb[0].mxu0
    %v2847 = vadd.f32 0.0, %v2846
    %2848 = vdwg.mxu0
    %2849 = vmatprep.subr.mxu0 0.0
    %2850 = vmatpush1.msra.mxu0 %v2551
    %2851 = vmatprep.subr.mxu0 0.0
    %2852 = vmatpush1.msra.mxu0 %v2556
    %2853 = vmatprep.subr.mxu0 0.0
    %2854 = vmatpush1.msra.mxu0 %v2561
    %2855 = vmatprep.subr.mxu0 0.0
    %2856 = vmatpush1.msra.mxu0 %v2566
    %2857 = vmatprep.subr.mxu0 0.0
    %2858 = vmatpush1.msra.mxu0 %v2571
    %2859 = vmatprep.subr.mxu0 0.0
    %2860 = vmatpush1.msra.mxu0 %v2576
    %2861 = vmatprep.subr.mxu0 0.0
    %2862 = vmatpush1.msra.mxu0 %v2581
    %2863 = vmatprep.subr.mxu0 0.0
    %2864 = vmatpush1.msra.mxu0 %v2586
    %2865 = vmatprep.subr.mxu0 0.0
    %2866 = vmatpush1.msra.mxu0 %v2591
    %2867 = vmatprep.subr.mxu0 0.0
    %2868 = vmatpush1.msra.mxu0 %v2596
    %2869 = vmatprep.subr.mxu0 0.0
    %2870 = vmatpush1.msra.mxu0 %v2601
    %2871 = vmatprep.subr.mxu0 0.0
    %2872 = vmatpush1.msra.mxu0 %v2606
    %2873 = vmatprep.subr.mxu0 0.0
    %2874 = vmatpush1.msra.mxu0 %v2611
    %2875 = vmatprep.subr.mxu0 0.0
    %2876 = vmatpush1.msra.mxu0 %v2616
    %2877 = vmatprep.subr.mxu0 0.0
    %2878 = vmatpush1.msra.mxu0 %v2621
    %2879 = vmatprep.subr.mxu0 0.0
    %2880 = vmatpush1.msra.mxu0 %v2626
    %2881 = vmatprep.subr.mxu0 0.0
    %2882 = vmatpush1.msra.mxu0 %v2631
    %2883 = vmatprep.subr.mxu0 0.0
    %2884 = vmatpush1.msra.mxu0 %v2636
    %2885 = vmatprep.subr.mxu0 0.0
    %2886 = vmatpush1.msra.mxu0 %v2641
    %2887 = vmatprep.subr.mxu0 0.0
    %2888 = vmatpush1.msra.mxu0 %v2646
    %2889 = vmatprep.subr.mxu0 0.0
    %2890 = vmatpush1.msra.mxu0 %v2651
    %2891 = vmatprep.subr.mxu0 0.0
    %2892 = vmatpush1.msra.mxu0 %v2656
    %2893 = vmatprep.subr.mxu0 0.0
    %2894 = vmatpush1.msra.mxu0 %v2661
    %2895 = vmatprep.subr.mxu0 0.0
    %2896 = vmatpush1.msra.mxu0 %v2666
    %2897 = vmatprep.subr.mxu0 0.0
    %2898 = vmatpush1.msra.mxu0 %v2671
    %2899 = vmatprep.subr.mxu0 0.0
    %2900 = vmatpush1.msra.mxu0 %v2676
    %2901 = vmatprep.subr.mxu0 0.0
    %2902 = vmatpush1.msra.mxu0 %v2681
    %2903 = vmatprep.subr.mxu0 0.0
    %2904 = vmatpush1.msra.mxu0 %v2686
    %2905 = vmatprep.subr.mxu0 0.0
    %2906 = vmatpush1.msra.mxu0 %v2691
    %2907 = vmatprep.subr.mxu0 0.0
    %2908 = vmatpush1.msra.mxu0 %v2696
    %2909 = vmatprep.subr.mxu0 0.0
    %2910 = vmatpush1.msra.mxu0 %v2701
    %2911 = vmatprep.subr.mxu0 0.0
    %2912 = vmatpush1.msra.mxu0 %v2706
    %2913 = vmatprep.mubr.f32.mxu0 %v2541
    %2914 = vmatmul.mubr.f32.gmra.mrb[0].mxu0 %v2543
    %v2915 = vpop.f32.mrb[0].mxu0
    %v2916 = vadd.f32 0.0, %v2915
    %v2917 = vpop.f32.mrb[0].mxu0
    %2918 = vdwg.mxu0
    %v2919 = vadd.f32 %v2916, %v809
    %v2920 = vtanh.pop %v2919
    %2922 = vset.pattern.permute.xlu0 0
    %2923 = vperm.xlu0 %2922, %v427
    %v2924 = vpop.permute.xlu0 %2923
    %v2926 = vmul.f32 %v2920, %v2924
    %v2927 = vadd.f32 %v2541, %v2926
    %s2928 = scalar_lea.vmem [#allocation2], 160
    %v2929 = vld [vmem:[%s2928] sm:$0xff]
    %v2930 = vld [vmem:[%s2928 + $0x8] sm:$0xff]
    %v2931 = vld [vmem:[%s2928 + $0x10] sm:$0xff]
    %v2932 = vld [vmem:[%s2928 + $0x18] sm:$0xff]
    %v2933 = vadd.f32 %v2774, %v2929
    %v2934 = vadd.f32 %v2776, %v2930
    %v2935 = vadd.f32 %v2845, %v2931
    %v2936 = vadd.f32 %v2847, %v2932
    %v2937 = vxor.u32 %v2933, 2147483648
    %v2938 = vxor.u32 %v2934, 2147483648
    %v2939 = vxor.u32 %v2935, 2147483648
    %v2940 = vxor.u32 %v2936, 2147483648
    %v2941 = vmul.f32 %v2937, 1.442695
    %v2942 = vpow.pop %v2941
    %v2943 = vmul.f32 %v2938, 1.442695
    %v2944 = vpow.pop %v2943
    %v2945 = vmul.f32 %v2939, 1.442695
    %v2946 = vpow.pop %v2945
    %v2947 = vmul.f32 %v2940, 1.442695
    %v2948 = vpow.pop %v2947
    %v2949 = vadd.f32 %v2942, 1.0
    %v2950 = vadd.f32 %v2944, 1.0
    %v2951 = vadd.f32 %v2946, 1.0
    %v2952 = vadd.f32 %v2948, 1.0
    %v2953 = vrcp.pop %v2949
    %v2954 = vmul.f32 1.0, %v2953
    %v2955 = vrcp.pop %v2950
    %v2956 = vmul.f32 1.0, %v2955
    %v2957 = vrcp.pop %v2951
    %v2958 = vmul.f32 1.0, %v2957
    %v2959 = vrcp.pop %v2952
    %v2960 = vmul.f32 1.0, %v2959
    %v2961 = vmul.f32 %v2954, %v2927
    %v2962 = vmul.f32 %v2956, %v2960
    %v2963 = vadd.f32 %v2961, %v2962
    %v2964 = vtanh.pop %v2963
    %v2965 = vmul.f32 %v2958, %v2964
    %s2966 = scalar_lea.vmem [#allocation10], 40
    %2967 = vst [vmem:[%s2966] sm:$0xff] %v2965
    %v2968 = vadd.f32 %v2546, %v2965
    %v2969 = vld [vmem:[#allocation5] sm:$0xff]
    %v2970 = vld [vmem:[#allocation5 + $0x8] sm:$0xff]
    %v2971 = vld [vmem:[#allocation5 + $0x10] sm:$0xff]
    %v2972 = vld [vmem:[#allocation5 + $0x18] sm:$0xff]
    %v2973 = vld [vmem:[#allocation5 + $0x20] sm:$0xff]
    %v2974 = vld [vmem:[#allocation5 + $0x28] sm:$0xff]
    %v2975 = vld [vmem:[#allocation5 + $0x30] sm:$0xff]
    %v2976 = vld [vmem:[#allocation5 + $0x38] sm:$0xff]
    %v2977 = vld [vmem:[#allocation5 + $0x40] sm:$0xff]
    %v2978 = vld [vmem:[#allocation5 + $0x48] sm:$0xff]
    %v2979 = vld [vmem:[#allocation5 + $0x50] sm:$0xff]
    %v2980 = vld [vmem:[#allocation5 + $0x58] sm:$0xff]
    %v2981 = vld [vmem:[#allocation5 + $0x60] sm:$0xff]
    %v2982 = vld [vmem:[#allocation5 + $0x68] sm:$0xff]
    %v2983 = vld [vmem:[#allocation5 + $0x70] sm:$0xff]
    %v2984 = vld [vmem:[#allocation5 + $0x78] sm:$0xff]
    %v2985 = vld [vmem:[#allocation5 + $0x80] sm:$0xff]
    %v2986 = vld [vmem:[#allocation5 + $0x88] sm:$0xff]
    %v2987 = vld [vmem:[#allocation5 + $0x90] sm:$0xff]
    %v2988 = vld [vmem:[#allocation5 + $0x98] sm:$0xff]
    %v2989 = vld [vmem:[#allocation5 + $0xa0] sm:$0xff]
    %v2990 = vld [vmem:[#allocation5 + $0xa8] sm:$0xff]
    %v2991 = vld [vmem:[#allocation5 + $0xb0] sm:$0xff]
    %v2992 = vld [vmem:[#allocation5 + $0xb8] sm:$0xff]
    %v2993 = vld [vmem:[#allocation5 + $0xc0] sm:$0xff]
    %v2994 = vld [vmem:[#allocation5 + $0xc8] sm:$0xff]
    %v2995 = vld [vmem:[#allocation5 + $0xd0] sm:$0xff]
    %v2996 = vld [vmem:[#allocation5 + $0xd8] sm:$0xff]
    %v2997 = vld [vmem:[#allocation5 + $0xe0] sm:$0xff]
    %v2998 = vld [vmem:[#allocation5 + $0xe8] sm:$0xff]
    %v2999 = vld [vmem:[#allocation5 + $0xf0] sm:$0xff]
    %v3000 = vld [vmem:[#allocation5 + $0xf8] sm:$0xff]
    %v3001 = vld [vmem:[#allocation5 + $0x100] sm:$0xff]
    %v3002 = vld [vmem:[#allocation5 + $0x108] sm:$0xff]
    %v3003 = vld [vmem:[#allocation5 + $0x110] sm:$0xff]
    %v3004 = vld [vmem:[#allocation5 + $0x118] sm:$0xff]
    %v3005 = vld [vmem:[#allocation5 + $0x120] sm:$0xff]
    %v3006 = vld [vmem:[#allocation5 + $0x128] sm:$0xff]
    %v3007 = vld [vmem:[#allocation5 + $0x130] sm:$0xff]
    %v3008 = vld [vmem:[#allocation5 + $0x138] sm:$0xff]
    %v3009 = vld [vmem:[#allocation5 + $0x140] sm:$0xff]
    %v3010 = vld [vmem:[#allocation5 + $0x148] sm:$0xff]
    %v3011 = vld [vmem:[#allocation5 + $0x150] sm:$0xff]
    %v3012 = vld [vmem:[#allocation5 + $0x158] sm:$0xff]
    %v3013 = vld [vmem:[#allocation5 + $0x160] sm:$0xff]
    %v3014 = vld [vmem:[#allocation5 + $0x168] sm:$0xff]
    %v3015 = vld [vmem:[#allocation5 + $0x170] sm:$0xff]
    %v3016 = vld [vmem:[#allocation5 + $0x178] sm:$0xff]
    %v3017 = vld [vmem:[#allocation5 + $0x180] sm:$0xff]
    %v3018 = vld [vmem:[#allocation5 + $0x188] sm:$0xff]
    %v3019 = vld [vmem:[#allocation5 + $0x190] sm:$0xff]
    %v3020 = vld [vmem:[#allocation5 + $0x198] sm:$0xff]
    %v3021 = vld [vmem:[#allocation5 + $0x1a0] sm:$0xff]
    %v3022 = vld [vmem:[#allocation5 + $0x1a8] sm:$0xff]
    %v3023 = vld [vmem:[#allocation5 + $0x1b0] sm:$0xff]
    %v3024 = vld [vmem:[#allocation5 + $0x1b8] sm:$0xff]
    %v3025 = vld [vmem:[#allocation5 + $0x1c0] sm:$0xff]
    %v3026 = vld [vmem:[#allocation5 + $0x1c8] sm:$0xff]
    %v3027 = vld [vmem:[#allocation5 + $0x1d0] sm:$0xff]
    %v3028 = vld [vmem:[#allocation5 + $0x1d8] sm:$0xff]
    %v3029 = vld [vmem:[#allocation5 + $0x1e0] sm:$0xff]
    %v3030 = vld [vmem:[#allocation5 + $0x1e8] sm:$0xff]
    %v3031 = vld [vmem:[#allocation5 + $0x1f0] sm:$0xff]
    %v3032 = vld [vmem:[#allocation5 + $0x1f8] sm:$0xff]
    %v3033 = vld [vmem:[#allocation5 + $0x200] sm:$0xff]
    %v3034 = vld [vmem:[#allocation5 + $0x208] sm:$0xff]
    %v3035 = vld [vmem:[#allocation5 + $0x210] sm:$0xff]
    %v3036 = vld [vmem:[#allocation5 + $0x218] sm:$0xff]
    %v3037 = vld [vmem:[#allocation5 + $0x220] sm:$0xff]
    %v3038 = vld [vmem:[#allocation5 + $0x228] sm:$0xff]
    %v3039 = vld [vmem:[#allocation5 + $0x230] sm:$0xff]
    %v3040 = vld [vmem:[#allocation5 + $0x238] sm:$0xff]
    %v3041 = vld [vmem:[#allocation5 + $0x240] sm:$0xff]
    %v3042 = vld [vmem:[#allocation5 + $0x248] sm:$0xff]
    %v3043 = vld [vmem:[#allocation5 + $0x250] sm:$0xff]
    %v3044 = vld [vmem:[#allocation5 + $0x258] sm:$0xff]
    %v3045 = vld [vmem:[#allocation5 + $0x260] sm:$0xff]
    %v3046 = vld [vmem:[#allocation5 + $0x268] sm:$0xff]
    %v3047 = vld [vmem:[#allocation5 + $0x270] sm:$0xff]
    %v3048 = vld [vmem:[#allocation5 + $0x278] sm:$0xff]
    %v3049 = vld [vmem:[#allocation5 + $0x280] sm:$0xff]
    %v3050 = vld [vmem:[#allocation5 + $0x288] sm:$0xff]
    %v3051 = vld [vmem:[#allocation5 + $0x290] sm:$0xff]
    %v3052 = vld [vmem:[#allocation5 + $0x298] sm:$0xff]
    %v3053 = vld [vmem:[#allocation5 + $0x2a0] sm:$0xff]
    %v3054 = vld [vmem:[#allocation5 + $0x2a8] sm:$0xff]
    %v3055 = vld [vmem:[#allocation5 + $0x2b0] sm:$0xff]
    %v3056 = vld [vmem:[#allocation5 + $0x2b8] sm:$0xff]
    %v3057 = vld [vmem:[#allocation5 + $0x2c0] sm:$0xff]
    %v3058 = vld [vmem:[#allocation5 + $0x2c8] sm:$0xff]
    %v3059 = vld [vmem:[#allocation5 + $0x2d0] sm:$0xff]
    %v3060 = vld [vmem:[#allocation5 + $0x2d8] sm:$0xff]
    %v3061 = vld [vmem:[#allocation5 + $0x2e0] sm:$0xff]
    %v3062 = vld [vmem:[#allocation5 + $0x2e8] sm:$0xff]
    %v3063 = vld [vmem:[#allocation5 + $0x2f0] sm:$0xff]
    %v3064 = vld [vmem:[#allocation5 + $0x2f8] sm:$0xff]
    %v3065 = vld [vmem:[#allocation5 + $0x300] sm:$0xff]
    %v3066 = vld [vmem:[#allocation5 + $0x308] sm:$0xff]
    %v3067 = vld [vmem:[#allocation5 + $0x310] sm:$0xff]
    %v3068 = vld [vmem:[#allocation5 + $0x318] sm:$0xff]
    %v3069 = vld [vmem:[#allocation5 + $0x320] sm:$0xff]
    %v3070 = vld [vmem:[#allocation5 + $0x328] sm:$0xff]
    %v3071 = vld [vmem:[#allocation5 + $0x330] sm:$0xff]
    %v3072 = vld [vmem:[#allocation5 + $0x338] sm:$0xff]
    %v3073 = vld [vmem:[#allocation5 + $0x340] sm:$0xff]
    %v3074 = vld [vmem:[#allocation5 + $0x348] sm:$0xff]
    %v3075 = vld [vmem:[#allocation5 + $0x350] sm:$0xff]
    %v3076 = vld [vmem:[#allocation5 + $0x358] sm:$0xff]
    %v3077 = vld [vmem:[#allocation5 + $0x360] sm:$0xff]
    %v3078 = vld [vmem:[#allocation5 + $0x368] sm:$0xff]
    %v3079 = vld [vmem:[#allocation5 + $0x370] sm:$0xff]
    %v3080 = vld [vmem:[#allocation5 + $0x378] sm:$0xff]
    %v3081 = vld [vmem:[#allocation5 + $0x380] sm:$0xff]
    %v3082 = vld [vmem:[#allocation5 + $0x388] sm:$0xff]
    %v3083 = vld [vmem:[#allocation5 + $0x390] sm:$0xff]
    %v3084 = vld [vmem:[#allocation5 + $0x398] sm:$0xff]
    %v3085 = vld [vmem:[#allocation5 + $0x3a0] sm:$0xff]
    %v3086 = vld [vmem:[#allocation5 + $0x3a8] sm:$0xff]
    %v3087 = vld [vmem:[#allocation5 + $0x3b0] sm:$0xff]
    %v3088 = vld [vmem:[#allocation5 + $0x3b8] sm:$0xff]
    %v3089 = vld [vmem:[#allocation5 + $0x3c0] sm:$0xff]
    %v3090 = vld [vmem:[#allocation5 + $0x3c8] sm:$0xff]
    %v3091 = vld [vmem:[#allocation5 + $0x3d0] sm:$0xff]
    %v3092 = vld [vmem:[#allocation5 + $0x3d8] sm:$0xff]
    %v3093 = vld [vmem:[#allocation5 + $0x3e0] sm:$0xff]
    %v3094 = vld [vmem:[#allocation5 + $0x3e8] sm:$0xff]
    %v3095 = vld [vmem:[#allocation5 + $0x3f0] sm:$0xff]
    %v3096 = vld [vmem:[#allocation5 + $0x3f8] sm:$0xff]
    %v3097 = vld [vmem:[#allocation5 + $0x400] sm:$0xff]
    %v3098 = vld [vmem:[#allocation5 + $0x408] sm:$0xff]
    %v3099 = vld [vmem:[#allocation5 + $0x410] sm:$0xff]
    %v3100 = vld [vmem:[#allocation5 + $0x418] sm:$0xff]
    %v3101 = vld [vmem:[#allocation5 + $0x420] sm:$0xff]
    %v3102 = vld [vmem:[#allocation5 + $0x428] sm:$0xff]
    %v3103 = vld [vmem:[#allocation5 + $0x430] sm:$0xff]
    %v3104 = vld [vmem:[#allocation5 + $0x438] sm:$0xff]
    %v3105 = vld [vmem:[#allocation5 + $0x440] sm:$0xff]
    %v3106 = vld [vmem:[#allocation5 + $0x448] sm:$0xff]
    %v3107 = vld [vmem:[#allocation5 + $0x450] sm:$0xff]
    %v3108 = vld [vmem:[#allocation5 + $0x458] sm:$0xff]
    %v3109 = vld [vmem:[#allocation5 + $0x460] sm:$0xff]
    %v3110 = vld [vmem:[#allocation5 + $0x468] sm:$0xff]
    %v3111 = vld [vmem:[#allocation5 + $0x470] sm:$0xff]
    %v3112 = vld [vmem:[#allocation5 + $0x478] sm:$0xff]
    %v3113 = vld [vmem:[#allocation5 + $0x480] sm:$0xff]
    %v3114 = vld [vmem:[#allocation5 + $0x488] sm:$0xff]
    %v3115 = vld [vmem:[#allocation5 + $0x490] sm:$0xff]
    %v3116 = vld [vmem:[#allocation5 + $0x498] sm:$0xff]
    %v3117 = vld [vmem:[#allocation5 + $0x4a0] sm:$0xff]
    %v3118 = vld [vmem:[#allocation5 + $0x4a8] sm:$0xff]
    %v3119 = vld [vmem:[#allocation5 + $0x4b0] sm:$0xff]
    %v3120 = vld [vmem:[#allocation5 + $0x4b8] sm:$0xff]
    %v3121 = vld [vmem:[#allocation5 + $0x4c0] sm:$0xff]
    %v3122 = vld [vmem:[#allocation5 + $0x4c8] sm:$0xff]
    %v3123 = vld [vmem:[#allocation5 + $0x4d0] sm:$0xff]
    %v3124 = vld [vmem:[#allocation5 + $0x4d8] sm:$0xff]
    %v3125 = vld [vmem:[#allocation5 + $0x4e0] sm:$0xff]
    %v3126 = vld [vmem:[#allocation5 + $0x4e8] sm:$0xff]
    %v3127 = vld [vmem:[#allocation5 + $0x4f0] sm:$0xff]
    %v3128 = vld [vmem:[#allocation5 + $0x4f8] sm:$0xff]
    %3129 = vmatprep.subr.mxu0 %v2970
    %3130 = vmatpush1.msra.mxu0 %v2969
    %3131 = vmatprep.subr.mxu0 %v2975
    %3132 = vmatpush1.msra.mxu0 %v2974
    %3133 = vmatprep.subr.mxu0 %v2980
    %3134 = vmatpush1.msra.mxu0 %v2979
    %3135 = vmatprep.subr.mxu0 %v2985
    %3136 = vmatpush1.msra.mxu0 %v2984
    %3137 = vmatprep.subr.mxu0 %v2990
    %3138 = vmatpush1.msra.mxu0 %v2989
    %3139 = vmatprep.subr.mxu0 %v2995
    %3140 = vmatpush1.msra.mxu0 %v2994
    %3141 = vmatprep.subr.mxu0 %v3000
    %3142 = vmatpush1.msra.mxu0 %v2999
    %3143 = vmatprep.subr.mxu0 %v3005
    %3144 = vmatpush1.msra.mxu0 %v3004
    %3145 = vmatprep.subr.mxu0 %v3010
    %3146 = vmatpush1.msra.mxu0 %v3009
    %3147 = vmatprep.subr.mxu0 %v3015
    %3148 = vmatpush1.msra.mxu0 %v3014
    %3149 = vmatprep.subr.mxu0 %v3020
    %3150 = vmatpush1.msra.mxu0 %v3019
    %3151 = vmatprep.subr.mxu0 %v3025
    %3152 = vmatpush1.msra.mxu0 %v3024
    %3153 = vmatprep.subr.mxu0 %v3030
    %3154 = vmatpush1.msra.mxu0 %v3029
    %3155 = vmatprep.subr.mxu0 %v3035
    %3156 = vmatpush1.msra.mxu0 %v3034
    %3157 = vmatprep.subr.mxu0 %v3040
    %3158 = vmatpush1.msra.mxu0 %v3039
    %3159 = vmatprep.subr.mxu0 %v3045
    %3160 = vmatpush1.msra.mxu0 %v3044
    %3161 = vmatprep.subr.mxu0 %v3050
    %3162 = vmatpush1.msra.mxu0 %v3049
    %3163 = vmatprep.subr.mxu0 %v3055
    %3164 = vmatpush1.msra.mxu0 %v3054
    %3165 = vmatprep.subr.mxu0 %v3060
    %3166 = vmatpush1.msra.mxu0 %v3059
    %3167 = vmatprep.subr.mxu0 %v3065
    %3168 = vmatpush1.msra.mxu0 %v3064
    %3169 = vmatprep.subr.mxu0 %v3070
    %3170 = vmatpush1.msra.mxu0 %v3069
    %3171 = vmatprep.subr.mxu0 %v3075
    %3172 = vmatpush1.msra.mxu0 %v3074
    %3173 = vmatprep.subr.mxu0 %v3080
    %3174 = vmatpush1.msra.mxu0 %v3079
    %3175 = vmatprep.subr.mxu0 %v3085
    %3176 = vmatpush1.msra.mxu0 %v3084
    %3177 = vmatprep.subr.mxu0 %v3090
    %3178 = vmatpush1.msra.mxu0 %v3089
    %3179 = vmatprep.subr.mxu0 %v3095
    %3180 = vmatpush1.msra.mxu0 %v3094
    %3181 = vmatprep.subr.mxu0 %v3100
    %3182 = vmatpush1.msra.mxu0 %v3099
    %3183 = vmatprep.subr.mxu0 %v3105
    %3184 = vmatpush1.msra.mxu0 %v3104
    %3185 = vmatprep.subr.mxu0 %v3110
    %3186 = vmatpush1.msra.mxu0 %v3109
    %3187 = vmatprep.subr.mxu0 %v3115
    %3188 = vmatpush1.msra.mxu0 %v3114
    %3189 = vmatprep.subr.mxu0 %v3120
    %3190 = vmatpush1.msra.mxu0 %v3119
    %3191 = vmatprep.subr.mxu0 %v3125
    %3192 = vmatpush1.msra.mxu0 %v3124
    %3193 = vmatprep.mubr.f32.mxu0 %v2963
    %3194 = vmatmul.mubr.f32.gmra.mrb[0].mxu0 %v2965
    %v3195 = vpop.f32.mrb[0].mxu0
    %v3196 = vadd.f32 0.0, %v3195
    %v3197 = vpop.f32.mrb[0].mxu0
    %v3198 = vadd.f32 0.0, %v3197
    %3199 = vdwg.mxu0
    %3200 = vmatprep.subr.mxu0 %v2972
    %3201 = vmatpush1.msra.mxu0 %v2971
    %3202 = vmatprep.subr.mxu0 %v2977
    %3203 = vmatpush1.msra.mxu0 %v2976
    %3204 = vmatprep.subr.mxu0 %v2982
    %3205 = vmatpush1.msra.mxu0 %v2981
    %3206 = vmatprep.subr.mxu0 %v2987
    %3207 = vmatpush1.msra.mxu0 %v2986
    %3208 = vmatprep.subr.mxu0 %v2992
    %3209 = vmatpush1.msra.mxu0 %v2991
    %3210 = vmatprep.subr.mxu0 %v2997
    %3211 = vmatpush1.msra.mxu0 %v2996
    %3212 = vmatprep.subr.mxu0 %v3002
    %3213 = vmatpush1.msra.mxu0 %v3001
    %3214 = vmatprep.subr.mxu0 %v3007
    %3215 = vmatpush1.msra.mxu0 %v3006
    %3216 = vmatprep.subr.mxu0 %v3012
    %3217 = vmatpush1.msra.mxu0 %v3011
    %3218 = vmatprep.subr.mxu0 %v3017
    %3219 = vmatpush1.msra.mxu0 %v3016
    %3220 = vmatprep.subr.mxu0 %v3022
    %3221 = vmatpush1.msra.mxu0 %v3021
    %3222 = vmatprep.subr.mxu0 %v3027
    %3223 = vmatpush1.msra.mxu0 %v3026
    %3224 = vmatprep.subr.mxu0 %v3032
    %3225 = vmatpush1.msra.mxu0 %v3031
    %3226 = vmatprep.subr.mxu0 %v3037
    %3227 = vmatpush1.msra.mxu0 %v3036
    %3228 = vmatprep.subr.mxu0 %v3042
    %3229 = vmatpush1.msra.mxu0 %v3041
    %3230 = vmatprep.subr.mxu0 %v3047
    %3231 = vmatpush1.msra.mxu0 %v3046
    %3232 = vmatprep.subr.mxu0 %v3052
    %3233 = vmatpush1.msra.mxu0 %v3051
    %3234 = vmatprep.subr.mxu0 %v3057
    %3235 = vmatpush1.msra.mxu0 %v3056
    %3236 = vmatprep.subr.mxu0 %v3062
    %3237 = vmatpush1.msra.mxu0 %v3061
    %3238 = vmatprep.subr.mxu0 %v3067
    %3239 = vmatpush1.msra.mxu0 %v3066
    %3240 = vmatprep.subr.mxu0 %v3072
    %3241 = vmatpush1.msra.mxu0 %v3071
    %3242 = vmatprep.subr.mxu0 %v3077
    %3243 = vmatpush1.msra.mxu0 %v3076
    %3244 = vmatprep.subr.mxu0 %v3082
    %3245 = vmatpush1.msra.mxu0 %v3081
    %3246 = vmatprep.subr.mxu0 %v3087
    %3247 = vmatpush1.msra.mxu0 %v3086
    %3248 = vmatprep.subr.mxu0 %v3092
    %3249 = vmatpush1.msra.mxu0 %v3091
    %3250 = vmatprep.subr.mxu0 %v3097
    %3251 = vmatpush1.msra.mxu0 %v3096
    %3252 = vmatprep.subr.mxu0 %v3102
    %3253 = vmatpush1.msra.mxu0 %v3101
    %3254 = vmatprep.subr.mxu0 %v3107
    %3255 = vmatpush1.msra.mxu0 %v3106
    %3256 = vmatprep.subr.mxu0 %v3112
    %3257 = vmatpush1.msra.mxu0 %v3111
    %3258 = vmatprep.subr.mxu0 %v3117
    %3259 = vmatpush1.msra.mxu0 %v3116
    %3260 = vmatprep.subr.mxu0 %v3122
    %3261 = vmatpush1.msra.mxu0 %v3121
    %3262 = vmatprep.subr.mxu0 %v3127
    %3263 = vmatpush1.msra.mxu0 %v3126
    %3264 = vmatprep.mubr.f32.mxu0 %v2963
    %3265 = vmatmul.mubr.f32.gmra.mrb[0].mxu0 %v2965
    %v3266 = vpop.f32.mrb[0].mxu0
    %v3267 = vadd.f32 0.0, %v3266
    %v3268 = vpop.f32.mrb[0].mxu0
    %v3269 = vadd.f32 0.0, %v3268
    %3270 = vdwg.mxu0
    %3271 = vmatprep.subr.mxu0 0.0
    %3272 = vmatpush1.msra.mxu0 %v2973
    %3273 = vmatprep.subr.mxu0 0.0
    %3274 = vmatpush1.msra.mxu0 %v2978
    %3275 = vmatprep.subr.mxu0 0.0
    %3276 = vmatpush1.msra.mxu0 %v2983
    %3277 = vmatprep.subr.mxu0 0.0
    %3278 = vmatpush1.msra.mxu0 %v2988
    %3279 = vmatprep.subr.mxu0 0.0
    %3280 = vmatpush1.msra.mxu0 %v2993
    %3281 = vmatprep.subr.mxu0 0.0
    %3282 = vmatpush1.msra.mxu0 %v2998
    %3283 = vmatprep.subr.mxu0 0.0
    %3284 = vmatpush1.msra.mxu0 %v3003
    %3285 = vmatprep.subr.mxu0 0.0
    %3286 = vmatpush1.msra.mxu0 %v3008
    %3287 = vmatprep.subr.mxu0 0.0
    %3288 = vmatpush1.msra.mxu0 %v3013
    %3289 = vmatprep.subr.mxu0 0.0
    %3290 = vmatpush1.msra.mxu0 %v3018
    %3291 = vmatprep.subr.mxu0 0.0
    %3292 = vmatpush1.msra.mxu0 %v3023
    %3293 = vmatprep.subr.mxu0 0.0
    %3294 = vmatpush1.msra.mxu0 %v3028
    %3295 = vmatprep.subr.mxu0 0.0
    %3296 = vmatpush1.msra.mxu0 %v3033
    %3297 = vmatprep.subr.mxu0 0.0
    %3298 = vmatpush1.msra.mxu0 %v3038
    %3299 = vmatprep.subr.mxu0 0.0
    %3300 = vmatpush1.msra.mxu0 %v3043
    %3301 = vmatprep.subr.mxu0 0.0
    %3302 = vmatpush1.msra.mxu0 %v3048
    %3303 = vmatprep.subr.mxu0 0.0
    %3304 = vmatpush1.msra.mxu0 %v3053
    %3305 = vmatprep.subr.mxu0 0.0
    %3306 = vmatpush1.msra.mxu0 %v3058
    %3307 = vmatprep.subr.mxu0 0.0
    %3308 = vmatpush1.msra.mxu0 %v3063
    %3309 = vmatprep.subr.mxu0 0.0
    %3310 = vmatpush1.msra.mxu0 %v3068
    %3311 = vmatprep.subr.mxu0 0.0
    %3312 = vmatpush1.msra.mxu0 %v3073
    %3313 = vmatprep.subr.mxu0 0.0
    %3314 = vmatpush1.msra.mxu0 %v3078
    %3315 = vmatprep.subr.mxu0 0.0
    %3316 = vmatpush1.msra.mxu0 %v3083
    %3317 = vmatprep.subr.mxu0 0.0
    %3318 = vmatpush1.msra.mxu0 %v3088
    %3319 = vmatprep.subr.mxu0 0.0
    %3320 = vmatpush1.msra.mxu0 %v3093
    %3321 = vmatprep.subr.mxu0 0.0
    %3322 = vmatpush1.msra.mxu0 %v3098
    %3323 = vmatprep.subr.mxu0 0.0
    %3324 = vmatpush1.msra.mxu0 %v3103
    %3325 = vmatprep.subr.mxu0 0.0
    %3326 = vmatpush1.msra.mxu0 %v3108
    %3327 = vmatprep.subr.mxu0 0.0
    %3328 = vmatpush1.msra.mxu0 %v3113
    %3329 = vmatprep.subr.mxu0 0.0
    %3330 = vmatpush1.msra.mxu0 %v3118
    %3331 = vmatprep.subr.mxu0 0.0
    %3332 = vmatpush1.msra.mxu0 %v3123
    %3333 = vmatprep.subr.mxu0 0.0
    %3334 = vmatpush1.msra.mxu0 %v3128
    %3335 = vmatprep.mubr.f32.mxu0 %v2963
    %3336 = vmatmul.mubr.f32.gmra.mrb[0].mxu0 %v2965
    %v3337 = vpop.f32.mrb[0].mxu0
    %v3338 = vadd.f32 0.0, %v3337
    %v3339 = vpop.f32.mrb[0].mxu0
    %3340 = vdwg.mxu0
    %v3341 = vadd.f32 %v3338, %v809
    %v3342 = vtanh.pop %v3341
    %3344 = vset.pattern.permute.xlu0 0
    %3345 = vperm.xlu0 %3344, %v428
    %v3346 = vpop.permute.xlu0 %3345
    %v3348 = vmul.f32 %v3342, %v3346
    %v3349 = vadd.f32 %v2963, %v3348
    %s3350 = scalar_lea.vmem [#allocation2], 192
    %v3351 = vld [vmem:[%s3350] sm:$0xff]
    %v3352 = vld [vmem:[%s3350 + $0x8] sm:$0xff]
    %v3353 = vld [vmem:[%s3350 + $0x10] sm:$0xff]
    %v3354 = vld [vmem:[%s3350 + $0x18] sm:$0xff]
    %v3355 = vadd.f32 %v3196, %v3351
    %v3356 = vadd.f32 %v3198, %v3352
    %v3357 = vadd.f32 %v3267, %v3353
    %v3358 = vadd.f32 %v3269, %v3354
    %v3359 = vxor.u32 %v3355, 2147483648
    %v3360 = vxor.u32 %v3356, 2147483648
    %v3361 = vxor.u32 %v3357, 2147483648
    %v3362 = vxor.u32 %v3358, 2147483648
    %v3363 = vmul.f32 %v3359, 1.442695
    %v3364 = vpow.pop %v3363
    %v3365 = vmul.f32 %v3360, 1.442695
    %v3366 = vpow.pop %v3365
    %v3367 = vmul.f32 %v3361, 1.442695
    %v3368 = vpow.pop %v3367
    %v3369 = vmul.f32 %v3362, 1.442695
    %v3370 = vpow.pop %v3369
    %v3371 = vadd.f32 %v3364, 1.0
    %v3372 = vadd.f32 %v3366, 1.0
    %v3373 = vadd.f32 %v3368, 1.0
    %v3374 = vadd.f32 %v3370, 1.0
    %v3375 = vrcp.pop %v3371
    %v3376 = vmul.f32 1.0, %v3375
    %v3377 = vrcp.pop %v3372
    %v3378 = vmul.f32 1.0, %v3377
    %v3379 = vrcp.pop %v3373
    %v3380 = vmul.f32 1.0, %v3379
    %v3381 = vrcp.pop %v3374
    %v3382 = vmul.f32 1.0, %v3381
    %v3383 = vmul.f32 %v3376, %v3349
    %v3384 = vmul.f32 %v3378, %v3382
    %v3385 = vadd.f32 %v3383, %v3384
    %v3386 = vtanh.pop %v3385
    %v3387 = vmul.f32 %v3380, %v3386
    %s3388 = scalar_lea.vmem [#allocation10], 48
    %3389 = vst [vmem:[%s3388] sm:$0xff] %v3387
    %v3390 = vadd.f32 %v2968, %v3387
    %v3391 = vld [vmem:[#allocation5] sm:$0xff]
    %v3392 = vld [vmem:[#allocation5 + $0x8] sm:$0xff]
    %v3393 = vld [vmem:[#allocation5 + $0x10] sm:$0xff]
    %v3394 = vld [vmem:[#allocation5 + $0x18] sm:$0xff]
    %v3395 = vld [vmem:[#allocation5 + $0x20] sm:$0xff]
    %v3396 = vld [vmem:[#allocation5 + $0x28] sm:$0xff]
    %v3397 = vld [vmem:[#allocation5 + $0x30] sm:$0xff]
    %v3398 = vld [vmem:[#allocation5 + $0x38] sm:$0xff]
    %v3399 = vld [vmem:[#allocation5 + $0x40] sm:$0xff]
    %v3400 = vld [vmem:[#allocation5 + $0x48] sm:$0xff]
    %v3401 = vld [vmem:[#allocation5 + $0x50] sm:$0xff]
    %v3402 = vld [vmem:[#allocation5 + $0x58] sm:$0xff]
    %v3403 = vld [vmem:[#allocation5 + $0x60] sm:$0xff]
    %v3404 = vld [vmem:[#allocation5 + $0x68] sm:$0xff]
    %v3405 = vld [vmem:[#allocation5 + $0x70] sm:$0xff]
    %v3406 = vld [vmem:[#allocation5 + $0x78] sm:$0xff]
    %v3407 = vld [vmem:[#allocation5 + $0x80] sm:$0xff]
    %v3408 = vld [vmem:[#allocation5 + $0x88] sm:$0xff]
    %v3409 = vld [vmem:[#allocation5 + $0x90] sm:$0xff]
    %v3410 = vld [vmem:[#allocation5 + $0x98] sm:$0xff]
    %v3411 = vld [vmem:[#allocation5 + $0xa0] sm:$0xff]
    %v3412 = vld [vmem:[#allocation5 + $0xa8] sm:$0xff]
    %v3413 = vld [vmem:[#allocation5 + $0xb0] sm:$0xff]
    %v3414 = vld [vmem:[#allocation5 + $0xb8] sm:$0xff]
    %v3415 = vld [vmem:[#allocation5 + $0xc0] sm:$0xff]
    %v3416 = vld [vmem:[#allocation5 + $0xc8] sm:$0xff]
    %v3417 = vld [vmem:[#allocation5 + $0xd0] sm:$0xff]
    %v3418 = vld [vmem:[#allocation5 + $0xd8] sm:$0xff]
    %v3419 = vld [vmem:[#allocation5 + $0xe0] sm:$0xff]
    %v3420 = vld [vmem:[#allocation5 + $0xe8] sm:$0xff]
    %v3421 = vld [vmem:[#allocation5 + $0xf0] sm:$0xff]
    %v3422 = vld [vmem:[#allocation5 + $0xf8] sm:$0xff]
    %v3423 = vld [vmem:[#allocation5 + $0x100] sm:$0xff]
    %v3424 = vld [vmem:[#allocation5 + $0x108] sm:$0xff]
    %v3425 = vld [vmem:[#allocation5 + $0x110] sm:$0xff]
    %v3426 = vld [vmem:[#allocation5 + $0x118] sm:$0xff]
    %v3427 = vld [vmem:[#allocation5 + $0x120] sm:$0xff]
    %v3428 = vld [vmem:[#allocation5 + $0x128] sm:$0xff]
    %v3429 = vld [vmem:[#allocation5 + $0x130] sm:$0xff]
    %v3430 = vld [vmem:[#allocation5 + $0x138] sm:$0xff]
    %v3431 = vld [vmem:[#allocation5 + $0x140] sm:$0xff]
    %v3432 = vld [vmem:[#allocation5 + $0x148] sm:$0xff]
    %v3433 = vld [vmem:[#allocation5 + $0x150] sm:$0xff]
    %v3434 = vld [vmem:[#allocation5 + $0x158] sm:$0xff]
    %v3435 = vld [vmem:[#allocation5 + $0x160] sm:$0xff]
    %v3436 = vld [vmem:[#allocation5 + $0x168] sm:$0xff]
    %v3437 = vld [vmem:[#allocation5 + $0x170] sm:$0xff]
    %v3438 = vld [vmem:[#allocation5 + $0x178] sm:$0xff]
    %v3439 = vld [vmem:[#allocation5 + $0x180] sm:$0xff]
    %v3440 = vld [vmem:[#allocation5 + $0x188] sm:$0xff]
    %v3441 = vld [vmem:[#allocation5 + $0x190] sm:$0xff]
    %v3442 = vld [vmem:[#allocation5 + $0x198] sm:$0xff]
    %v3443 = vld [vmem:[#allocation5 + $0x1a0] sm:$0xff]
    %v3444 = vld [vmem:[#allocation5 + $0x1a8] sm:$0xff]
    %v3445 = vld [vmem:[#allocation5 + $0x1b0] sm:$0xff]
    %v3446 = vld [vmem:[#allocation5 + $0x1b8] sm:$0xff]
    %v3447 = vld [vmem:[#allocation5 + $0x1c0] sm:$0xff]
    %v3448 = vld [vmem:[#allocation5 + $0x1c8] sm:$0xff]
    %v3449 = vld [vmem:[#allocation5 + $0x1d0] sm:$0xff]
    %v3450 = vld [vmem:[#allocation5 + $0x1d8] sm:$0xff]
    %v3451 = vld [vmem:[#allocation5 + $0x1e0] sm:$0xff]
    %v3452 = vld [vmem:[#allocation5 + $0x1e8] sm:$0xff]
    %v3453 = vld [vmem:[#allocation5 + $0x1f0] sm:$0xff]
    %v3454 = vld [vmem:[#allocation5 + $0x1f8] sm:$0xff]
    %v3455 = vld [vmem:[#allocation5 + $0x200] sm:$0xff]
    %v3456 = vld [vmem:[#allocation5 + $0x208] sm:$0xff]
    %v3457 = vld [vmem:[#allocation5 + $0x210] sm:$0xff]
    %v3458 = vld [vmem:[#allocation5 + $0x218] sm:$0xff]
    %v3459 = vld [vmem:[#allocation5 + $0x220] sm:$0xff]
    %v3460 = vld [vmem:[#allocation5 + $0x228] sm:$0xff]
    %v3461 = vld [vmem:[#allocation5 + $0x230] sm:$0xff]
    %v3462 = vld [vmem:[#allocation5 + $0x238] sm:$0xff]
    %v3463 = vld [vmem:[#allocation5 + $0x240] sm:$0xff]
    %v3464 = vld [vmem:[#allocation5 + $0x248] sm:$0xff]
    %v3465 = vld [vmem:[#allocation5 + $0x250] sm:$0xff]
    %v3466 = vld [vmem:[#allocation5 + $0x258] sm:$0xff]
    %v3467 = vld [vmem:[#allocation5 + $0x260] sm:$0xff]
    %v3468 = vld [vmem:[#allocation5 + $0x268] sm:$0xff]
    %v3469 = vld [vmem:[#allocation5 + $0x270] sm:$0xff]
    %v3470 = vld [vmem:[#allocation5 + $0x278] sm:$0xff]
    %v3471 = vld [vmem:[#allocation5 + $0x280] sm:$0xff]
    %v3472 = vld [vmem:[#allocation5 + $0x288] sm:$0xff]
    %v3473 = vld [vmem:[#allocation5 + $0x290] sm:$0xff]
    %v3474 = vld [vmem:[#allocation5 + $0x298] sm:$0xff]
    %v3475 = vld [vmem:[#allocation5 + $0x2a0] sm:$0xff]
    %v3476 = vld [vmem:[#allocation5 + $0x2a8] sm:$0xff]
    %v3477 = vld [vmem:[#allocation5 + $0x2b0] sm:$0xff]
    %v3478 = vld [vmem:[#allocation5 + $0x2b8] sm:$0xff]
    %v3479 = vld [vmem:[#allocation5 + $0x2c0] sm:$0xff]
    %v3480 = vld [vmem:[#allocation5 + $0x2c8] sm:$0xff]
    %v3481 = vld [vmem:[#allocation5 + $0x2d0] sm:$0xff]
    %v3482 = vld [vmem:[#allocation5 + $0x2d8] sm:$0xff]
    %v3483 = vld [vmem:[#allocation5 + $0x2e0] sm:$0xff]
    %v3484 = vld [vmem:[#allocation5 + $0x2e8] sm:$0xff]
    %v3485 = vld [vmem:[#allocation5 + $0x2f0] sm:$0xff]
    %v3486 = vld [vmem:[#allocation5 + $0x2f8] sm:$0xff]
    %v3487 = vld [vmem:[#allocation5 + $0x300] sm:$0xff]
    %v3488 = vld [vmem:[#allocation5 + $0x308] sm:$0xff]
    %v3489 = vld [vmem:[#allocation5 + $0x310] sm:$0xff]
    %v3490 = vld [vmem:[#allocation5 + $0x318] sm:$0xff]
    %v3491 = vld [vmem:[#allocation5 + $0x320] sm:$0xff]
    %v3492 = vld [vmem:[#allocation5 + $0x328] sm:$0xff]
    %v3493 = vld [vmem:[#allocation5 + $0x330] sm:$0xff]
    %v3494 = vld [vmem:[#allocation5 + $0x338] sm:$0xff]
    %v3495 = vld [vmem:[#allocation5 + $0x340] sm:$0xff]
    %v3496 = vld [vmem:[#allocation5 + $0x348] sm:$0xff]
    %v3497 = vld [vmem:[#allocation5 + $0x350] sm:$0xff]
    %v3498 = vld [vmem:[#allocation5 + $0x358] sm:$0xff]
    %v3499 = vld [vmem:[#allocation5 + $0x360] sm:$0xff]
    %v3500 = vld [vmem:[#allocation5 + $0x368] sm:$0xff]
    %v3501 = vld [vmem:[#allocation5 + $0x370] sm:$0xff]
    %v3502 = vld [vmem:[#allocation5 + $0x378] sm:$0xff]
    %v3503 = vld [vmem:[#allocation5 + $0x380] sm:$0xff]
    %v3504 = vld [vmem:[#allocation5 + $0x388] sm:$0xff]
    %v3505 = vld [vmem:[#allocation5 + $0x390] sm:$0xff]
    %v3506 = vld [vmem:[#allocation5 + $0x398] sm:$0xff]
    %v3507 = vld [vmem:[#allocation5 + $0x3a0] sm:$0xff]
    %v3508 = vld [vmem:[#allocation5 + $0x3a8] sm:$0xff]
    %v3509 = vld [vmem:[#allocation5 + $0x3b0] sm:$0xff]
    %v3510 = vld [vmem:[#allocation5 + $0x3b8] sm:$0xff]
    %v3511 = vld [vmem:[#allocation5 + $0x3c0] sm:$0xff]
    %v3512 = vld [vmem:[#allocation5 + $0x3c8] sm:$0xff]
    %v3513 = vld [vmem:[#allocation5 + $0x3d0] sm:$0xff]
    %v3514 = vld [vmem:[#allocation5 + $0x3d8] sm:$0xff]
    %v3515 = vld [vmem:[#allocation5 + $0x3e0] sm:$0xff]
    %v3516 = vld [vmem:[#allocation5 + $0x3e8] sm:$0xff]
    %v3517 = vld [vmem:[#allocation5 + $0x3f0] sm:$0xff]
    %v3518 = vld [vmem:[#allocation5 + $0x3f8] sm:$0xff]
    %v3519 = vld [vmem:[#allocation5 + $0x400] sm:$0xff]
    %v3520 = vld [vmem:[#allocation5 + $0x408] sm:$0xff]
    %v3521 = vld [vmem:[#allocation5 + $0x410] sm:$0xff]
    %v3522 = vld [vmem:[#allocation5 + $0x418] sm:$0xff]
    %v3523 = vld [vmem:[#allocation5 + $0x420] sm:$0xff]
    %v3524 = vld [vmem:[#allocation5 + $0x428] sm:$0xff]
    %v3525 = vld [vmem:[#allocation5 + $0x430] sm:$0xff]
    %v3526 = vld [vmem:[#allocation5 + $0x438] sm:$0xff]
    %v3527 = vld [vmem:[#allocation5 + $0x440] sm:$0xff]
    %v3528 = vld [vmem:[#allocation5 + $0x448] sm:$0xff]
    %v3529 = vld [vmem:[#allocation5 + $0x450] sm:$0xff]
    %v3530 = vld [vmem:[#allocation5 + $0x458] sm:$0xff]
    %v3531 = vld [vmem:[#allocation5 + $0x460] sm:$0xff]
    %v3532 = vld [vmem:[#allocation5 + $0x468] sm:$0xff]
    %v3533 = vld [vmem:[#allocation5 + $0x470] sm:$0xff]
    %v3534 = vld [vmem:[#allocation5 + $0x478] sm:$0xff]
    %v3535 = vld [vmem:[#allocation5 + $0x480] sm:$0xff]
    %v3536 = vld [vmem:[#allocation5 + $0x488] sm:$0xff]
    %v3537 = vld [vmem:[#allocation5 + $0x490] sm:$0xff]
    %v3538 = vld [vmem:[#allocation5 + $0x498] sm:$0xff]
    %v3539 = vld [vmem:[#allocation5 + $0x4a0] sm:$0xff]
    %v3540 = vld [vmem:[#allocation5 + $0x4a8] sm:$0xff]
    %v3541 = vld [vmem:[#allocation5 + $0x4b0] sm:$0xff]
    %v3542 = vld [vmem:[#allocation5 + $0x4b8] sm:$0xff]
    %v3543 = vld [vmem:[#allocation5 + $0x4c0] sm:$0xff]
    %v3544 = vld [vmem:[#allocation5 + $0x4c8] sm:$0xff]
    %v3545 = vld [vmem:[#allocation5 + $0x4d0] sm:$0xff]
    %v3546 = vld [vmem:[#allocation5 + $0x4d8] sm:$0xff]
    %v3547 = vld [vmem:[#allocation5 + $0x4e0] sm:$0xff]
    %v3548 = vld [vmem:[#allocation5 + $0x4e8] sm:$0xff]
    %v3549 = vld [vmem:[#allocation5 + $0x4f0] sm:$0xff]
    %v3550 = vld [vmem:[#allocation5 + $0x4f8] sm:$0xff]
    %3551 = vmatprep.subr.mxu0 %v3392
    %3552 = vmatpush1.msra.mxu0 %v3391
    %3553 = vmatprep.subr.mxu0 %v3397
    %3554 = vmatpush1.msra.mxu0 %v3396
    %3555 = vmatprep.subr.mxu0 %v3402
    %3556 = vmatpush1.msra.mxu0 %v3401
    %3557 = vmatprep.subr.mxu0 %v3407
    %3558 = vmatpush1.msra.mxu0 %v3406
    %3559 = vmatprep.subr.mxu0 %v3412
    %3560 = vmatpush1.msra.mxu0 %v3411
    %3561 = vmatprep.subr.mxu0 %v3417
    %3562 = vmatpush1.msra.mxu0 %v3416
    %3563 = vmatprep.subr.mxu0 %v3422
    %3564 = vmatpush1.msra.mxu0 %v3421
    %3565 = vmatprep.subr.mxu0 %v3427
    %3566 = vmatpush1.msra.mxu0 %v3426
    %3567 = vmatprep.subr.mxu0 %v3432
    %3568 = vmatpush1.msra.mxu0 %v3431
    %3569 = vmatprep.subr.mxu0 %v3437
    %3570 = vmatpush1.msra.mxu0 %v3436
    %3571 = vmatprep.subr.mxu0 %v3442
    %3572 = vmatpush1.msra.mxu0 %v3441
    %3573 = vmatprep.subr.mxu0 %v3447
    %3574 = vmatpush1.msra.mxu0 %v3446
    %3575 = vmatprep.subr.mxu0 %v3452
    %3576 = vmatpush1.msra.mxu0 %v3451
    %3577 = vmatprep.subr.mxu0 %v3457
    %3578 = vmatpush1.msra.mxu0 %v3456
    %3579 = vmatprep.subr.mxu0 %v3462
    %3580 = vmatpush1.msra.mxu0 %v3461
    %3581 = vmatprep.subr.mxu0 %v3467
    %3582 = vmatpush1.msra.mxu0 %v3466
    %3583 = vmatprep.subr.mxu0 %v3472
    %3584 = vmatpush1.msra.mxu0 %v3471
    %3585 = vmatprep.subr.mxu0 %v3477
    %3586 = vmatpush1.msra.mxu0 %v3476
    %3587 = vmatprep.subr.mxu0 %v3482
    %3588 = vmatpush1.msra.mxu0 %v3481
    %3589 = vmatprep.subr.mxu0 %v3487
    %3590 = vmatpush1.msra.mxu0 %v3486
    %3591 = vmatprep.subr.mxu0 %v3492
    %3592 = vmatpush1.msra.mxu0 %v3491
    %3593 = vmatprep.subr.mxu0 %v3497
    %3594 = vmatpush1.msra.mxu0 %v3496
    %3595 = vmatprep.subr.mxu0 %v3502
    %3596 = vmatpush1.msra.mxu0 %v3501
    %3597 = vmatprep.subr.mxu0 %v3507
    %3598 = vmatpush1.msra.mxu0 %v3506
    %3599 = vmatprep.subr.mxu0 %v3512
    %3600 = vmatpush1.msra.mxu0 %v3511
    %3601 = vmatprep.subr.mxu0 %v3517
    %3602 = vmatpush1.msra.mxu0 %v3516
    %3603 = vmatprep.subr.mxu0 %v3522
    %3604 = vmatpush1.msra.mxu0 %v3521
    %3605 = vmatprep.subr.mxu0 %v3527
    %3606 = vmatpush1.msra.mxu0 %v3526
    %3607 = vmatprep.subr.mxu0 %v3532
    %3608 = vmatpush1.msra.mxu0 %v3531
    %3609 = vmatprep.subr.mxu0 %v3537
    %3610 = vmatpush1.msra.mxu0 %v3536
    %3611 = vmatprep.subr.mxu0 %v3542
    %3612 = vmatpush1.msra.mxu0 %v3541
    %3613 = vmatprep.subr.mxu0 %v3547
    %3614 = vmatpush1.msra.mxu0 %v3546
    %3615 = vmatprep.mubr.f32.mxu0 %v3385
    %3616 = vmatmul.mubr.f32.gmra.mrb[0].mxu0 %v3387
    %v3617 = vpop.f32.mrb[0].mxu0
    %v3618 = vadd.f32 0.0, %v3617
    %v3619 = vpop.f32.mrb[0].mxu0
    %v3620 = vadd.f32 0.0, %v3619
    %3621 = vdwg.mxu0
    %3622 = vmatprep.subr.mxu0 %v3394
    %3623 = vmatpush1.msra.mxu0 %v3393
    %3624 = vmatprep.subr.mxu0 %v3399
    %3625 = vmatpush1.msra.mxu0 %v3398
    %3626 = vmatprep.subr.mxu0 %v3404
    %3627 = vmatpush1.msra.mxu0 %v3403
    %3628 = vmatprep.subr.mxu0 %v3409
    %3629 = vmatpush1.msra.mxu0 %v3408
    %3630 = vmatprep.subr.mxu0 %v3414
    %3631 = vmatpush1.msra.mxu0 %v3413
    %3632 = vmatprep.subr.mxu0 %v3419
    %3633 = vmatpush1.msra.mxu0 %v3418
    %3634 = vmatprep.subr.mxu0 %v3424
    %3635 = vmatpush1.msra.mxu0 %v3423
    %3636 = vmatprep.subr.mxu0 %v3429
    %3637 = vmatpush1.msra.mxu0 %v3428
    %3638 = vmatprep.subr.mxu0 %v3434
    %3639 = vmatpush1.msra.mxu0 %v3433
    %3640 = vmatprep.subr.mxu0 %v3439
    %3641 = vmatpush1.msra.mxu0 %v3438
    %3642 = vmatprep.subr.mxu0 %v3444
    %3643 = vmatpush1.msra.mxu0 %v3443
    %3644 = vmatprep.subr.mxu0 %v3449
    %3645 = vmatpush1.msra.mxu0 %v3448
    %3646 = vmatprep.subr.mxu0 %v3454
    %3647 = vmatpush1.msra.mxu0 %v3453
    %3648 = vmatprep.subr.mxu0 %v3459
    %3649 = vmatpush1.msra.mxu0 %v3458
    %3650 = vmatprep.subr.mxu0 %v3464
    %3651 = vmatpush1.msra.mxu0 %v3463
    %3652 = vmatprep.subr.mxu0 %v3469
    %3653 = vmatpush1.msra.mxu0 %v3468
    %3654 = vmatprep.subr.mxu0 %v3474
    %3655 = vmatpush1.msra.mxu0 %v3473
    %3656 = vmatprep.subr.mxu0 %v3479
    %3657 = vmatpush1.msra.mxu0 %v3478
    %3658 = vmatprep.subr.mxu0 %v3484
    %3659 = vmatpush1.msra.mxu0 %v3483
    %3660 = vmatprep.subr.mxu0 %v3489
    %3661 = vmatpush1.msra.mxu0 %v3488
    %3662 = vmatprep.subr.mxu0 %v3494
    %3663 = vmatpush1.msra.mxu0 %v3493
    %3664 = vmatprep.subr.mxu0 %v3499
    %3665 = vmatpush1.msra.mxu0 %v3498
    %3666 = vmatprep.subr.mxu0 %v3504
    %3667 = vmatpush1.msra.mxu0 %v3503
    %3668 = vmatprep.subr.mxu0 %v3509
    %3669 = vmatpush1.msra.mxu0 %v3508
    %3670 = vmatprep.subr.mxu0 %v3514
    %3671 = vmatpush1.msra.mxu0 %v3513
    %3672 = vmatprep.subr.mxu0 %v3519
    %3673 = vmatpush1.msra.mxu0 %v3518
    %3674 = vmatprep.subr.mxu0 %v3524
    %3675 = vmatpush1.msra.mxu0 %v3523
    %3676 = vmatprep.subr.mxu0 %v3529
    %3677 = vmatpush1.msra.mxu0 %v3528
    %3678 = vmatprep.subr.mxu0 %v3534
    %3679 = vmatpush1.msra.mxu0 %v3533
    %3680 = vmatprep.subr.mxu0 %v3539
    %3681 = vmatpush1.msra.mxu0 %v3538
    %3682 = vmatprep.subr.mxu0 %v3544
    %3683 = vmatpush1.msra.mxu0 %v3543
    %3684 = vmatprep.subr.mxu0 %v3549
    %3685 = vmatpush1.msra.mxu0 %v3548
    %3686 = vmatprep.mubr.f32.mxu0 %v3385
    %3687 = vmatmul.mubr.f32.gmra.mrb[0].mxu0 %v3387
    %v3688 = vpop.f32.mrb[0].mxu0
    %v3689 = vadd.f32 0.0, %v3688
    %v3690 = vpop.f32.mrb[0].mxu0
    %v3691 = vadd.f32 0.0, %v3690
    %3692 = vdwg.mxu0
    %3693 = vmatprep.subr.mxu0 0.0
    %3694 = vmatpush1.msra.mxu0 %v3395
    %3695 = vmatprep.subr.mxu0 0.0
    %3696 = vmatpush1.msra.mxu0 %v3400
    %3697 = vmatprep.subr.mxu0 0.0
    %3698 = vmatpush1.msra.mxu0 %v3405
    %3699 = vmatprep.subr.mxu0 0.0
    %3700 = vmatpush1.msra.mxu0 %v3410
    %3701 = vmatprep.subr.mxu0 0.0
    %3702 = vmatpush1.msra.mxu0 %v3415
    %3703 = vmatprep.subr.mxu0 0.0
    %3704 = vmatpush1.msra.mxu0 %v3420
    %3705 = vmatprep.subr.mxu0 0.0
    %3706 = vmatpush1.msra.mxu0 %v3425
    %3707 = vmatprep.subr.mxu0 0.0
    %3708 = vmatpush1.msra.mxu0 %v3430
    %3709 = vmatprep.subr.mxu0 0.0
    %3710 = vmatpush1.msra.mxu0 %v3435
    %3711 = vmatprep.subr.mxu0 0.0
    %3712 = vmatpush1.msra.mxu0 %v3440
    %3713 = vmatprep.subr.mxu0 0.0
    %3714 = vmatpush1.msra.mxu0 %v3445
    %3715 = vmatprep.subr.mxu0 0.0
    %3716 = vmatpush1.msra.mxu0 %v3450
    %3717 = vmatprep.subr.mxu0 0.0
    %3718 = vmatpush1.msra.mxu0 %v3455
    %3719 = vmatprep.subr.mxu0 0.0
    %3720 = vmatpush1.msra.mxu0 %v3460
    %3721 = vmatprep.subr.mxu0 0.0
    %3722 = vmatpush1.msra.mxu0 %v3465
    %3723 = vmatprep.subr.mxu0 0.0
    %3724 = vmatpush1.msra.mxu0 %v3470
    %3725 = vmatprep.subr.mxu0 0.0
    %3726 = vmatpush1.msra.mxu0 %v3475
    %3727 = vmatprep.subr.mxu0 0.0
    %3728 = vmatpush1.msra.mxu0 %v3480
    %3729 = vmatprep.subr.mxu0 0.0
    %3730 = vmatpush1.msra.mxu0 %v3485
    %3731 = vmatprep.subr.mxu0 0.0
    %3732 = vmatpush1.msra.mxu0 %v3490
    %3733 = vmatprep.subr.mxu0 0.0
    %3734 = vmatpush1.msra.mxu0 %v3495
    %3735 = vmatprep.subr.mxu0 0.0
    %3736 = vmatpush1.msra.mxu0 %v3500
    %3737 = vmatprep.subr.mxu0 0.0
    %3738 = vmatpush1.msra.mxu0 %v3505
    %3739 = vmatprep.subr.mxu0 0.0
    %3740 = vmatpush1.msra.mxu0 %v3510
    %3741 = vmatprep.subr.mxu0 0.0
    %3742 = vmatpush1.msra.mxu0 %v3515
    %3743 = vmatprep.subr.mxu0 0.0
    %3744 = vmatpush1.msra.mxu0 %v3520
    %3745 = vmatprep.subr.mxu0 0.0
    %3746 = vmatpush1.msra.mxu0 %v3525
    %3747 = vmatprep.subr.mxu0 0.0
    %3748 = vmatpush1.msra.mxu0 %v3530
    %3749 = vmatprep.subr.mxu0 0.0
    %3750 = vmatpush1.msra.mxu0 %v3535
    %3751 = vmatprep.subr.mxu0 0.0
    %3752 = vmatpush1.msra.mxu0 %v3540
    %3753 = vmatprep.subr.mxu0 0.0
    %3754 = vmatpush1.msra.mxu0 %v3545
    %3755 = vmatprep.subr.mxu0 0.0
    %3756 = vmatpush1.msra.mxu0 %v3550
    %3757 = vmatprep.mubr.f32.mxu0 %v3385
    %3758 = vmatmul.mubr.f32.gmra.mrb[0].mxu0 %v3387
    %v3759 = vpop.f32.mrb[0].mxu0
    %v3760 = vadd.f32 0.0, %v3759
    %v3761 = vpop.f32.mrb[0].mxu0
    %3762 = vdwg.mxu0
    %v3763 = vadd.f32 %v3760, %v809
    %v3764 = vtanh.pop %v3763
    %3766 = vset.pattern.permute.xlu0 0
    %3767 = vperm.xlu0 %3766, %v429
    %v3768 = vpop.permute.xlu0 %3767
    %v3770 = vmul.f32 %v3764, %v3768
    %v3771 = vadd.f32 %v3385, %v3770
    %s3772 = scalar_lea.vmem [#allocation2], 224
    %v3773 = vld [vmem:[%s3772] sm:$0xff]
    %v3774 = vld [vmem:[%s3772 + $0x8] sm:$0xff]
    %v3775 = vld [vmem:[%s3772 + $0x10] sm:$0xff]
    %v3776 = vld [vmem:[%s3772 + $0x18] sm:$0xff]
    %v3777 = vadd.f32 %v3618, %v3773
    %v3778 = vadd.f32 %v3620, %v3774
    %v3779 = vadd.f32 %v3689, %v3775
    %v3780 = vadd.f32 %v3691, %v3776
    %v3781 = vxor.u32 %v3777, 2147483648
    %v3782 = vxor.u32 %v3778, 2147483648
    %v3783 = vxor.u32 %v3779, 2147483648
    %v3784 = vxor.u32 %v3780, 2147483648
    %v3785 = vmul.f32 %v3781, 1.442695
    %v3786 = vpow.pop %v3785
    %v3787 = vmul.f32 %v3782, 1.442695
    %v3788 = vpow.pop %v3787
    %v3789 = vmul.f32 %v3783, 1.442695
    %v3790 = vpow.pop %v3789
    %v3791 = vmul.f32 %v3784, 1.442695
    %v3792 = vpow.pop %v3791
    %v3793 = vadd.f32 %v3786, 1.0
    %v3794 = vadd.f32 %v3788, 1.0
    %v3795 = vadd.f32 %v3790, 1.0
    %v3796 = vadd.f32 %v3792, 1.0
    %v3797 = vrcp.pop %v3793
    %v3798 = vmul.f32 1.0, %v3797
    %v3799 = vrcp.pop %v3794
    %v3800 = vmul.f32 1.0, %v3799
    %v3801 = vrcp.pop %v3795
    %v3802 = vmul.f32 1.0, %v3801
    %v3803 = vrcp.pop %v3796
    %v3804 = vmul.f32 1.0, %v3803
    %v3805 = vmul.f32 %v3798, %v3771
    %v3806 = vmul.f32 %v3800, %v3804
    %v3807 = vadd.f32 %v3805, %v3806
    %v3808 = vtanh.pop %v3807
    %v3809 = vmul.f32 %v3802, %v3808
    %s3810 = scalar_lea.vmem [#allocation10], 56
    %3811 = vst [vmem:[%s3810] sm:$0xff] %v3809
    %v3812 = vadd.f32 %v3390, %v3809
    %3813 = vst [vmem:[#allocation3] sm:$0xff] %v3809
    %3814 = vst [vmem:[#allocation4] sm:$0xff] %v3807
    %v3815 = vld [vmem:[#allocation11] sm:$0xff]
    %v3816 = vmul.f32 %v3812, 0.125
    %v3817 = vadd.f32 %v3815, %v3816
    %3818 = vst [vmem:[#allocation11] sm:$0xff] %v3817
    // Predicated region
    $region38: #{tpu_custom_call.1} parent=1 // pred_check
      _
    $region39: #{tpu_custom_call.1} parent=1 // pred_check_branch
      %3820 = sbr.rel (0) target = $region41
    $region40: #{tpu_custom_call.1} parent=1 // pred_region
      %s3822 = ssub.s32 1024, 1024
      %3823 = vsyncadd [#allocation7], %s3822
      %s3824 = sshll.u32 [#allocation10], 4
      %s3825 = int_to_ptr.vmem [resolvable:$true] %s3824
      %3830 = dma.vmem_to_hbm [thread:$0]  %s3825, 1024, %s6, [#allocation7], 128, 128, 8
    $region41: #{tpu_custom_call.1} parent=1 // pred_fallthru
      _
    // Predicated region
    $region42: #{tpu_custom_call.1} parent=1 // pred_check
      _
    $region43: #{tpu_custom_call.1} parent=1 // pred_check_branch
      %3832 = sbr.rel (0) target = $region45
    $region44: #{tpu_custom_call.1} parent=1 // pred_region
      %s3834 = ssub.s32 128, 128
      %3835 = vsyncadd [#allocation12], %s3834
      %s3837 = sshll.u32 [#allocation11], 4
      %s3838 = int_to_ptr.vmem [resolvable:$true] %s3837
      %3840 = dma.vmem_to_hbm [thread:$0]  %s3838, 128, %s7, [#allocation12]
    $region45: #{tpu_custom_call.1} parent=1 // pred_fallthru
      _
    // Predicated region
    $region46: #{tpu_custom_call.1} parent=1 // pred_check
      _
    $region47: #{tpu_custom_call.1} parent=1 // pred_check_branch
      %3842 = sbr.rel (0) target = $region49
    $region48: #{tpu_custom_call.1} parent=1 // pred_region
      %3843 = dma.done [#allocation7], 1024
    $region49: #{tpu_custom_call.1} parent=1 // pred_fallthru
      _
    // Predicated region
    $region50: #{tpu_custom_call.1} parent=1 // pred_check
      _
    $region51: #{tpu_custom_call.1} parent=1 // pred_check_branch
      %3845 = sbr.rel (0) target = $region53
    $region52: #{tpu_custom_call.1} parent=1 // pred_region
      %3846 = dma.done [#allocation12], 128
    $region53: #{tpu_custom_call.1} parent=1 // pred_fallthru
      _
    %3847 = vsyncpa [#allocation6], 1
    %3848 = vsyncpa [#allocation9], 1
    %3849 = vsyncpa [#allocation7], 1
    %3850 = vsyncpa [#allocation12], 1

// kernel: tpu_custom_call.1
$region0: #{tpu_custom_call.1}
  #allocation0 [shape = 'u32[]', space=smem, size = 0x4, offset = 0x4, fixed_abs, tag = 'smem constant byte address 0x4 - core index']
  #allocation1 [shape = 'u32[144,128]{1,0:T(1,128)}', space=vmem, size = 0x12000, scoped, tag = 'internal scratch']
  #allocation2 [shape = 'f32[8,8,512]{2,1,0:T(8,128)}', space=vmem, size = 0x20000, scoped, tag = 'scratch operand']
  #allocation3 [shape = 'f32[8,128]{1,0:T(8,128)}', space=vmem, size = 0x1000, scoped, tag = 'scratch operand']
  #allocation4 [shape = 'f32[8,128]{1,0:T(8,128)}', space=vmem, size = 0x1000, scoped, tag = 'scratch operand']
  %s0 = inlined_call_operand.vmem [shape: f32[8,8,128], index: 0, kind: input, shape index: {}]
  %s1 = inlined_call_operand.vmem [shape: f32[8,8,1], index: 1, kind: input, shape index: {}]
  %s2 = inlined_call_operand.hbm [shape: f32[256,640], index: 2, kind: input, shape index: {}]
  %s3 = inlined_call_operand.hbm [shape: f32[128,512], index: 3, kind: input, shape index: {}]
  %s4 = inlined_call_operand.vmem [shape: f32[1,512], index: 4, kind: input, shape index: {}]
  %s5 = inlined_call_operand.vmem [shape: f32[1,128], index: 5, kind: input, shape index: {}]
  %s6 = inlined_call_operand.hbm [shape: f32[8,8,128], index: 6, kind: output, shape index: {0}]
  %s7 = inlined_call_operand.hbm [shape: f32[8,128], index: 7, kind: output, shape index: {1}]
  %8 = xla_tuple %s6, %s7
  %s9 = sld [smem:[#allocation0]]
  $region54: #{tpu_custom_call.1} parent=0
    _
  %s11 = ssub.s32 1, %s9
  %s12 = scalar_select 0, %s11, %s9
  $region1: #{tpu_custom_call.1} parent=0
    #allocation5 [shape = 'u8[655360]{0}', space=vmem, size = 0xa0000, scoped, tag = 'input window, operand 2, single buffered']
    #allocation6 [shape = 's32[1]{0}', space=sflag, size = 0x4, scoped, tag = 'scoped memory for tpu_custom_call.1']
    #allocation7 [shape = 's32[1]{0}', space=sflag, size = 0x4, scoped, tag = 'scoped memory for tpu_custom_call.1']
    #allocation8 [shape = 'u8[262144]{0}', space=vmem, size = 0x40000, scoped, tag = 'input window, operand 3, single buffered']
    #allocation9 [shape = 's32[1]{0}', space=sflag, size = 0x4, scoped, tag = 'scoped memory for tpu_custom_call.1']
    #allocation10 [shape = 'u8[32768]{0}', space=vmem, size = 0x8000, scoped, tag = 'output window, operand 0, single buffered']
    #allocation11 [shape = 'u8[4096]{0}', space=vmem, size = 0x1000, scoped, tag = 'output window, operand 1, single buffered']
    #allocation12 [shape = 's32[1]{0}', space=sflag, size = 0x4, scoped, tag = 'scoped memory for tpu_custom_call.1']
    %13 = vsyncpa [#allocation6], 0
    %14 = vsyncpa [#allocation9], 0
    %15 = vsyncpa [#allocation7], 0
    %16 = vsyncpa [#allocation12], 0
    // Predicated region
    $region2: #{tpu_custom_call.1} parent=1 // pred_check
      _
    $region3: #{tpu_custom_call.1} parent=1 // pred_check_branch
      %18 = sbr.rel (0) target = $region5
    $region4: #{tpu_custom_call.1} parent=1 // pred_region
      _
    $region5: #{tpu_custom_call.1} parent=1 // pred_fallthru
      _
    // Predicated region
    $region6: #{tpu_custom_call.1} parent=1 // pred_check
      _
    $region7: #{tpu_custom_call.1} parent=1 // pred_check_branch
      %20 = sbr.rel (0) target = $region9
    $region8: #{tpu_custom_call.1} parent=1 // pred_region
      _
    $region9: #{tpu_custom_call.1} parent=1 // pred_fallthru
      _
    // Predicated region
    $region10: #{tpu_custom_call.1} parent=1 // pred_check
      _
    $region11: #{tpu_custom_call.1} parent=1 // pred_check_branch
      %22 = sbr.rel (0) target = $region13
    $region12: #{tpu_custom_call.1} parent=1 // pred_region
      %s24 = ssub.s32 20480, 20480
      %25 = vsyncadd [#allocation6], %s24
      %s26 = sshll.u32 [#allocation5], 4
      %s27 = int_to_ptr.vmem [resolvable:$true] %s26
      %32 = dma.hbm_to_vmem [thread:$0]  %s2, 20480, %s27, [#allocation6], 640, 640, 40
    $region13: #{tpu_custom_call.1} parent=1 // pred_fallthru
      _
    // Predicated region
    $region14: #{tpu_custom_call.1} parent=1 // pred_check
      _
    $region15: #{tpu_custom_call.1} parent=1 // pred_check_branch
      %34 = sbr.rel (0) target = $region17
    $region16: #{tpu_custom_call.1} parent=1 // pred_region
      %s36 = ssub.s32 8192, 8192
      %37 = vsyncadd [#allocation9], %s36
      %s38 = sshll.u32 [#allocation8], 4
      %s39 = int_to_ptr.vmem [resolvable:$true] %s38
      %44 = dma.hbm_to_vmem [thread:$0]  %s3, 8192, %s39, [#allocation9], 512, 512, 32
    $region17: #{tpu_custom_call.1} parent=1 // pred_fallthru
      _
    // Predicated region
    $region18: #{tpu_custom_call.1} parent=1 // pred_check
      _
    $region19: #{tpu_custom_call.1} parent=1 // pred_check_branch
      %46 = sbr.rel (0) target = $region21
    $region20: #{tpu_custom_call.1} parent=1 // pred_region
      _
    $region21: #{tpu_custom_call.1} parent=1 // pred_fallthru
      _
    // Predicated region
    $region22: #{tpu_custom_call.1} parent=1 // pred_check
      _
    $region23: #{tpu_custom_call.1} parent=1 // pred_check_branch
      %48 = sbr.rel (0) target = $region25
    $region24: #{tpu_custom_call.1} parent=1 // pred_region
      _
    $region25: #{tpu_custom_call.1} parent=1 // pred_fallthru
      _
    // Predicated region
    $region26: #{tpu_custom_call.1} parent=1 // pred_check
      _
    $region27: #{tpu_custom_call.1} parent=1 // pred_check_branch
      %50 = sbr.rel (0) target = $region29
    $region28: #{tpu_custom_call.1} parent=1 // pred_region
      %51 = dma.done [#allocation6], 20480
    $region29: #{tpu_custom_call.1} parent=1 // pred_fallthru
      _
    // Predicated region
    $region30: #{tpu_custom_call.1} parent=1 // pred_check
      _
    $region31: #{tpu_custom_call.1} parent=1 // pred_check_branch
      %53 = sbr.rel (0) target = $region33
    $region32: #{tpu_custom_call.1} parent=1 // pred_region
      %54 = dma.done [#allocation9], 8192
    $region33: #{tpu_custom_call.1} parent=1 // pred_fallthru
      _
    %p55 = scmp.eq.s32.totalorder 0, 0
    // Predicated region
    $region34: #{tpu_custom_call.1} parent=1 // pred_check
      %p56 = pneg %p55
    $region35: #{tpu_custom_call.1} parent=1 // pred_check_branch
      %58 = sbr.rel (%p56) target = $region37
    $region36: #{tpu_custom_call.1} parent=1 // pred_region
      %59 = vst [vmem:[#allocation3] sm:$0xff] 0.0
      %60 = vst [vmem:[#allocation4] sm:$0xff] 0.0
      %61 = vst [vmem:[#allocation11] sm:$0xff] 0.0
    $region37: #{tpu_custom_call.1} parent=1 // pred_fallthru
      _
    %v62 = vld [vmem:[%s0] sm:$0xff]
    %v63 = vld [vmem:[%s0 + $0x8] sm:$0xff]
    %v64 = vld [vmem:[%s0 + $0x10] sm:$0xff]
    %v65 = vld [vmem:[%s0 + $0x18] sm:$0xff]
    %v66 = vld [vmem:[%s0 + $0x20] sm:$0xff]
    %v67 = vld [vmem:[%s0 + $0x28] sm:$0xff]
    %v68 = vld [vmem:[%s0 + $0x30] sm:$0xff]
    %v69 = vld [vmem:[%s0 + $0x38] sm:$0xff]
    %v70 = vld [vmem:[#allocation8] sm:$0xff]
    %v71 = vld [vmem:[#allocation8 + $0x8] sm:$0xff]
    %v72 = vld [vmem:[#allocation8 + $0x10] sm:$0xff]
    %v73 = vld [vmem:[#allocation8 + $0x18] sm:$0xff]
    %v74 = vld [vmem:[#allocation8 + $0x20] sm:$0xff]
    %v75 = vld [vmem:[#allocation8 + $0x28] sm:$0xff]
    %v76 = vld [vmem:[#allocation8 + $0x30] sm:$0xff]
    %v77 = vld [vmem:[#allocation8 + $0x38] sm:$0xff]
    %v78 = vld [vmem:[#allocation8 + $0x40] sm:$0xff]
    %v79 = vld [vmem:[#allocation8 + $0x48] sm:$0xff]
    %v80 = vld [vmem:[#allocation8 + $0x50] sm:$0xff]
    %v81 = vld [vmem:[#allocation8 + $0x58] sm:$0xff]
    %v82 = vld [vmem:[#allocation8 + $0x60] sm:$0xff]
    %v83 = vld [vmem:[#allocation8 + $0x68] sm:$0xff]
    %v84 = vld [vmem:[#allocation8 + $0x70] sm:$0xff]
    %v85 = vld [vmem:[#allocation8 + $0x78] sm:$0xff]
    %v86 = vld [vmem:[#allocation8 + $0x80] sm:$0xff]
    %v87 = vld [vmem:[#allocation8 + $0x88] sm:$0xff]
    %v88 = vld [vmem:[#allocation8 + $0x90] sm:$0xff]
    %v89 = vld [vmem:[#allocation8 + $0x98] sm:$0xff]
    %v90 = vld [vmem:[#allocation8 + $0xa0] sm:$0xff]
    %v91 = vld [vmem:[#allocation8 + $0xa8] sm:$0xff]
    %v92 = vld [vmem:[#allocation8 + $0xb0] sm:$0xff]
    %v93 = vld [vmem:[#allocation8 + $0xb8] sm:$0xff]
    %v94 = vld [vmem:[#allocation8 + $0xc0] sm:$0xff]
    %v95 = vld [vmem:[#allocation8 + $0xc8] sm:$0xff]
    %v96 = vld [vmem:[#allocation8 + $0xd0] sm:$0xff]
    %v97 = vld [vmem:[#allocation8 + $0xd8] sm:$0xff]
    %v98 = vld [vmem:[#allocation8 + $0xe0] sm:$0xff]
    %v99 = vld [vmem:[#allocation8 + $0xe8] sm:$0xff]
    %v100 = vld [vmem:[#allocation8 + $0xf0] sm:$0xff]
    %v101 = vld [vmem:[#allocation8 + $0xf8] sm:$0xff]
    %v102 = vld [vmem:[#allocation8 + $0x100] sm:$0xff]
    %v103 = vld [vmem:[#allocation8 + $0x108] sm:$0xff]
    %v104 = vld [vmem:[#allocation8 + $0x110] sm:$0xff]
    %v105 = vld [vmem:[#allocation8 + $0x118] sm:$0xff]
    %v106 = vld [vmem:[#allocation8 + $0x120] sm:$0xff]
    %v107 = vld [vmem:[#allocation8 + $0x128] sm:$0xff]
    %v108 = vld [vmem:[#allocation8 + $0x130] sm:$0xff]
    %v109 = vld [vmem:[#allocation8 + $0x138] sm:$0xff]
    %v110 = vld [vmem:[#allocation8 + $0x140] sm:$0xff]
    %v111 = vld [vmem:[#allocation8 + $0x148] sm:$0xff]
    %v112 = vld [vmem:[#allocation8 + $0x150] sm:$0xff]
    %v113 = vld [vmem:[#allocation8 + $0x158] sm:$0xff]
    %v114 = vld [vmem:[#allocation8 + $0x160] sm:$0xff]
    %v115 = vld [vmem:[#allocation8 + $0x168] sm:$0xff]
    %v116 = vld [vmem:[#allocation8 + $0x170] sm:$0xff]
    %v117 = vld [vmem:[#allocation8 + $0x178] sm:$0xff]
    %v118 = vld [vmem:[#allocation8 + $0x180] sm:$0xff]
    %v119 = vld [vmem:[#allocation8 + $0x188] sm:$0xff]
    %v120 = vld [vmem:[#allocation8 + $0x190] sm:$0xff]
    %v121 = vld [vmem:[#allocation8 + $0x198] sm:$0xff]
    %v122 = vld [vmem:[#allocation8 + $0x1a0] sm:$0xff]
    %v123 = vld [vmem:[#allocation8 + $0x1a8] sm:$0xff]
    %v124 = vld [vmem:[#allocation8 + $0x1b0] sm:$0xff]
    %v125 = vld [vmem:[#allocation8 + $0x1b8] sm:$0xff]
    %v126 = vld [vmem:[#allocation8 + $0x1c0] sm:$0xff]
    %v127 = vld [vmem:[#allocation8 + $0x1c8] sm:$0xff]
    %v128 = vld [vmem:[#allocation8 + $0x1d0] sm:$0xff]
    %v129 = vld [vmem:[#allocation8 + $0x1d8] sm:$0xff]
    %v130 = vld [vmem:[#allocation8 + $0x1e0] sm:$0xff]
    %v131 = vld [vmem:[#allocation8 + $0x1e8] sm:$0xff]
    %v132 = vld [vmem:[#allocation8 + $0x1f0] sm:$0xff]
    %v133 = vld [vmem:[#allocation8 + $0x1f8] sm:$0xff]
    %v134 = vld [vmem:[%s4] sm:$0xf]
    %v136 = vlaneseq
    %v137 = vshrl.u32 %v136, 7
    %v138 = vsub.s32 0, %v137
    %v139 = vrot.slane %v134, %v138
    %v140 = vlaneseq
    %v141 = vshrl.u32 %v140, 7
    %v142 = vsub.s32 1, %v141
    %v143 = vrot.slane %v134, %v142
    %v144 = vlaneseq
    %v145 = vshrl.u32 %v144, 7
    %v146 = vsub.s32 2, %v145
    %v147 = vrot.slane %v134, %v146
    %v148 = vlaneseq
    %v149 = vshrl.u32 %v148, 7
    %v150 = vsub.s32 3, %v149
    %v151 = vrot.slane %v134, %v150
    %156 = vmatprep.subr.mxu0 %v71
    %157 = vmatpush1.msra.mxu0 %v70
    %158 = vmatprep.subr.mxu0 %v75
    %159 = vmatpush1.msra.mxu0 %v74
    %160 = vmatprep.subr.mxu0 %v79
    %161 = vmatpush1.msra.mxu0 %v78
    %162 = vmatprep.subr.mxu0 %v83
    %163 = vmatpush1.msra.mxu0 %v82
    %164 = vmatprep.subr.mxu0 %v87
    %165 = vmatpush1.msra.mxu0 %v86
    %166 = vmatprep.subr.mxu0 %v91
    %167 = vmatpush1.msra.mxu0 %v90
    %168 = vmatprep.subr.mxu0 %v95
    %169 = vmatpush1.msra.mxu0 %v94
    %170 = vmatprep.subr.mxu0 %v99
    %171 = vmatpush1.msra.mxu0 %v98
    %172 = vmatprep.subr.mxu0 %v103
    %173 = vmatpush1.msra.mxu0 %v102
    %174 = vmatprep.subr.mxu0 %v107
    %175 = vmatpush1.msra.mxu0 %v106
    %176 = vmatprep.subr.mxu0 %v111
    %177 = vmatpush1.msra.mxu0 %v110
    %178 = vmatprep.subr.mxu0 %v115
    %179 = vmatpush1.msra.mxu0 %v114
    %180 = vmatprep.subr.mxu0 %v119
    %181 = vmatpush1.msra.mxu0 %v118
    %182 = vmatprep.subr.mxu0 %v123
    %183 = vmatpush1.msra.mxu0 %v122
    %184 = vmatprep.subr.mxu0 %v127
    %185 = vmatpush1.msra.mxu0 %v126
    %186 = vmatprep.subr.mxu0 %v131
    %187 = vmatpush1.msra.mxu0 %v130
    %188 = vmatprep.subr.mxu0 0.0
    %189 = vmatpush1.msra.mxu0 0.0
    %190 = vmatprep.subr.mxu0 0.0
    %191 = vmatpush1.msra.mxu0 0.0
    %192 = vmatprep.subr.mxu0 0.0
    %193 = vmatpush1.msra.mxu0 0.0
    %194 = vmatprep.subr.mxu0 0.0
    %195 = vmatpush1.msra.mxu0 0.0
    %196 = vmatprep.subr.mxu0 0.0
    %197 = vmatpush1.msra.mxu0 0.0
    %198 = vmatprep.subr.mxu0 0.0
    %199 = vmatpush1.msra.mxu0 0.0
    %200 = vmatprep.subr.mxu0 0.0
    %201 = vmatpush1.msra.mxu0 0.0
    %202 = vmatprep.subr.mxu0 0.0
    %203 = vmatpush1.msra.mxu0 0.0
    %204 = vmatprep.subr.mxu0 0.0
    %205 = vmatpush1.msra.mxu0 0.0
    %206 = vmatprep.subr.mxu0 0.0
    %207 = vmatpush1.msra.mxu0 0.0
    %208 = vmatprep.subr.mxu0 0.0
    %209 = vmatpush1.msra.mxu0 0.0
    %210 = vmatprep.subr.mxu0 0.0
    %211 = vmatpush1.msra.mxu0 0.0
    %212 = vmatprep.subr.mxu0 0.0
    %213 = vmatpush1.msra.mxu0 0.0
    %214 = vmatprep.subr.mxu0 0.0
    %215 = vmatpush1.msra.mxu0 0.0
    %216 = vmatprep.subr.mxu0 0.0
    %217 = vmatpush1.msra.mxu0 0.0
    %218 = vmatprep.subr.mxu0 0.0
    %219 = vmatpush1.msra.mxu0 0.0
    %220 = vmatprep.mubr.f32.mxu0 0.0
    %221 = vmatmul.mubr.f32.gmra.mrb[0].mxu0 %v62
    %v222 = vpop.f32.mrb[0].mxu0
    %v223 = vadd.f32 %v139, %v222
    %v224 = vpop.f32.mrb[0].mxu0
    %v225 = vadd.f32 %v143, %v224
    %226 = vmatprep.mubr.f32.mxu0 0.0
    %227 = vmatmul.mubr.f32.gmra.mrb[0].mxu0 %v63
    %v228 = vpop.f32.mrb[0].mxu0
    %v229 = vadd.f32 %v139, %v228
    %v230 = vpop.f32.mrb[0].mxu0
    %v231 = vadd.f32 %v143, %v230
    %232 = vmatprep.mubr.f32.mxu0 0.0
    %233 = vmatmul.mubr.f32.gmra.mrb[0].mxu0 %v64
    %v234 = vpop.f32.mrb[0].mxu0
    %v235 = vadd.f32 %v139, %v234
    %v236 = vpop.f32.mrb[0].mxu0
    %v237 = vadd.f32 %v143, %v236
    %238 = vmatprep.mubr.f32.mxu0 0.0
    %239 = vmatmul.mubr.f32.gmra.mrb[0].mxu0 %v65
    %v240 = vpop.f32.mrb[0].mxu0
    %v241 = vadd.f32 %v139, %v240
    %v242 = vpop.f32.mrb[0].mxu0
    %v243 = vadd.f32 %v143, %v242
    %244 = vmatprep.mubr.f32.mxu0 0.0
    %245 = vmatmul.mubr.f32.gmra.mrb[0].mxu0 %v66
    %v246 = vpop.f32.mrb[0].mxu0
    %v247 = vadd.f32 %v139, %v246
    %v248 = vpop.f32.mrb[0].mxu0
    %v249 = vadd.f32 %v143, %v248
    %250 = vmatprep.mubr.f32.mxu0 0.0
    %251 = vmatmul.mubr.f32.gmra.mrb[0].mxu0 %v67
    %v252 = vpop.f32.mrb[0].mxu0
    %v253 = vadd.f32 %v139, %v252
    %v254 = vpop.f32.mrb[0].mxu0
    %v255 = vadd.f32 %v143, %v254
    %256 = vmatprep.mubr.f32.mxu0 0.0
    %257 = vmatmul.mubr.f32.gmra.mrb[0].mxu0 %v68
    %v258 = vpop.f32.mrb[0].mxu0
    %v259 = vadd.f32 %v139, %v258
    %v260 = vpop.f32.mrb[0].mxu0
    %v261 = vadd.f32 %v143, %v260
    %262 = vmatprep.mubr.f32.mxu0 0.0
    %263 = vmatmul.mubr.f32.gmra.mrb[0].mxu0 %v69
    %v264 = vpop.f32.mrb[0].mxu0
    %v265 = vadd.f32 %v139, %v264
    %v266 = vpop.f32.mrb[0].mxu0
    %v267 = vadd.f32 %v143, %v266
    %268 = vdwg.mxu0
    %269 = vmatprep.subr.mxu0 %v73
    %270 = vmatpush1.msra.mxu0 %v72
    %271 = vmatprep.subr.mxu0 %v77
    %272 = vmatpush1.msra.mxu0 %v76
    %273 = vmatprep.subr.mxu0 %v81
    %274 = vmatpush1.msra.mxu0 %v80
    %275 = vmatprep.subr.mxu0 %v85
    %276 = vmatpush1.msra.mxu0 %v84
    %277 = vmatprep.subr.mxu0 %v89
    %278 = vmatpush1.msra.mxu0 %v88
    %279 = vmatprep.subr.mxu0 %v93
    %280 = vmatpush1.msra.mxu0 %v92
    %281 = vmatprep.subr.mxu0 %v97
    %282 = vmatpush1.msra.mxu0 %v96
    %283 = vmatprep.subr.mxu0 %v101
    %284 = vmatpush1.msra.mxu0 %v100
    %285 = vmatprep.subr.mxu0 %v105
    %286 = vmatpush1.msra.mxu0 %v104
    %287 = vmatprep.subr.mxu0 %v109
    %288 = vmatpush1.msra.mxu0 %v108
    %289 = vmatprep.subr.mxu0 %v113
    %290 = vmatpush1.msra.mxu0 %v112
    %291 = vmatprep.subr.mxu0 %v117
    %292 = vmatpush1.msra.mxu0 %v116
    %293 = vmatprep.subr.mxu0 %v121
    %294 = vmatpush1.msra.mxu0 %v120
    %295 = vmatprep.subr.mxu0 %v125
    %296 = vmatpush1.msra.mxu0 %v124
    %297 = vmatprep.subr.mxu0 %v129
    %298 = vmatpush1.msra.mxu0 %v128
    %299 = vmatprep.subr.mxu0 %v133
    %300 = vmatpush1.msra.mxu0 %v132
    %301 = vmatprep.subr.mxu0 0.0
    %302 = vmatpush1.msra.mxu0 0.0
    %303 = vmatprep.subr.mxu0 0.0
    %304 = vmatpush1.msra.mxu0 0.0
    %305 = vmatprep.subr.mxu0 0.0
    %306 = vmatpush1.msra.mxu0 0.0
    %307 = vmatprep.subr.mxu0 0.0
    %308 = vmatpush1.msra.mxu0 0.0
    %309 = vmatprep.subr.mxu0 0.0
    %310 = vmatpush1.msra.mxu0 0.0
    %311 = vmatprep.subr.mxu0 0.0
    %312 = vmatpush1.msra.mxu0 0.0
    %313 = vmatprep.subr.mxu0 0.0
    %314 = vmatpush1.msra.mxu0 0.0
    %315 = vmatprep.subr.mxu0 0.0
    %316 = vmatpush1.msra.mxu0 0.0
    %317 = vmatprep.subr.mxu0 0.0
    %318 = vmatpush1.msra.mxu0 0.0
    %319 = vmatprep.subr.mxu0 0.0
    %320 = vmatpush1.msra.mxu0 0.0
    %321 = vmatprep.subr.mxu0 0.0
    %322 = vmatpush1.msra.mxu0 0.0
    %323 = vmatprep.subr.mxu0 0.0
    %324 = vmatpush1.msra.mxu0 0.0
    %325 = vmatprep.subr.mxu0 0.0
    %326 = vmatpush1.msra.mxu0 0.0
    %327 = vmatprep.subr.mxu0 0.0
    %328 = vmatpush1.msra.mxu0 0.0
    %329 = vmatprep.subr.mxu0 0.0
    %330 = vmatpush1.msra.mxu0 0.0
    %331 = vmatprep.subr.mxu0 0.0
    %332 = vmatpush1.msra.mxu0 0.0
    %333 = vmatprep.mubr.f32.mxu0 0.0
    %334 = vmatmul.mubr.f32.gmra.mrb[0].mxu0 %v62
    %v335 = vpop.f32.mrb[0].mxu0
    %v336 = vadd.f32 %v147, %v335
    %v337 = vpop.f32.mrb[0].mxu0
    %v338 = vadd.f32 %v151, %v337
    %339 = vmatprep.mubr.f32.mxu0 0.0
    %340 = vmatmul.mubr.f32.gmra.mrb[0].mxu0 %v63
    %v341 = vpop.f32.mrb[0].mxu0
    %v342 = vadd.f32 %v147, %v341
    %v343 = vpop.f32.mrb[0].mxu0
    %v344 = vadd.f32 %v151, %v343
    %345 = vmatprep.mubr.f32.mxu0 0.0
    %346 = vmatmul.mubr.f32.gmra.mrb[0].mxu0 %v64
    %v347 = vpop.f32.mrb[0].mxu0
    %v348 = vadd.f32 %v147, %v347
    %v349 = vpop.f32.mrb[0].mxu0
    %v350 = vadd.f32 %v151, %v349
    %351 = vmatprep.mubr.f32.mxu0 0.0
    %352 = vmatmul.mubr.f32.gmra.mrb[0].mxu0 %v65
    %v353 = vpop.f32.mrb[0].mxu0
    %v354 = vadd.f32 %v147, %v353
    %v355 = vpop.f32.mrb[0].mxu0
    %v356 = vadd.f32 %v151, %v355
    %357 = vmatprep.mubr.f32.mxu0 0.0
    %358 = vmatmul.mubr.f32.gmra.mrb[0].mxu0 %v66
    %v359 = vpop.f32.mrb[0].mxu0
    %v360 = vadd.f32 %v147, %v359
    %v361 = vpop.f32.mrb[0].mxu0
    %v362 = vadd.f32 %v151, %v361
    %363 = vmatprep.mubr.f32.mxu0 0.0
    %364 = vmatmul.mubr.f32.gmra.mrb[0].mxu0 %v67
    %v365 = vpop.f32.mrb[0].mxu0
    %v366 = vadd.f32 %v147, %v365
    %v367 = vpop.f32.mrb[0].mxu0
    %v368 = vadd.f32 %v151, %v367
    %369 = vmatprep.mubr.f32.mxu0 0.0
    %370 = vmatmul.mubr.f32.gmra.mrb[0].mxu0 %v68
    %v371 = vpop.f32.mrb[0].mxu0
    %v372 = vadd.f32 %v147, %v371
    %v373 = vpop.f32.mrb[0].mxu0
    %v374 = vadd.f32 %v151, %v373
    %375 = vmatprep.mubr.f32.mxu0 0.0
    %376 = vmatmul.mubr.f32.gmra.mrb[0].mxu0 %v69
    %v377 = vpop.f32.mrb[0].mxu0
    %v378 = vadd.f32 %v147, %v377
    %v379 = vpop.f32.mrb[0].mxu0
    %v380 = vadd.f32 %v151, %v379
    %381 = vdwg.mxu0
    %382 = vst [vmem:[#allocation2] sm:$0xff] %v223
    %383 = vst [vmem:[#allocation2 + $0x8] sm:$0xff] %v225
    %384 = vst [vmem:[#allocation2 + $0x10] sm:$0xff] %v336
    %385 = vst [vmem:[#allocation2 + $0x18] sm:$0xff] %v338
    %386 = vst [vmem:[#allocation2 + $0x20] sm:$0xff] %v229
    %387 = vst [vmem:[#allocation2 + $0x28] sm:$0xff] %v231
    %388 = vst [vmem:[#allocation2 + $0x30] sm:$0xff] %v342
    %389 = vst [vmem:[#allocation2 + $0x38] sm:$0xff] %v344
    %390 = vst [vmem:[#allocation2 + $0x40] sm:$0xff] %v235
    %391 = vst [vmem:[#allocation2 + $0x48] sm:$0xff] %v237
    %392 = vst [vmem:[#allocation2 + $0x50] sm:$0xff] %v348
    %393 = vst [vmem:[#allocation2 + $0x58] sm:$0xff] %v350
    %394 = vst [vmem:[#allocation2 + $0x60] sm:$0xff] %v241
    %395 = vst [vmem:[#allocation2 + $0x68] sm:$0xff] %v243
    %396 = vst [vmem:[#allocation2 + $0x70] sm:$0xff] %v354
    %397 = vst [vmem:[#allocation2 + $0x78] sm:$0xff] %v356
    %398 = vst [vmem:[#allocation2 + $0x80] sm:$0xff] %v247
    %399 = vst [vmem:[#allocation2 + $0x88] sm:$0xff] %v249
    %400 = vst [vmem:[#allocation2 + $0x90] sm:$0xff] %v360
    %401 = vst [vmem:[#allocation2 + $0x98] sm:$0xff] %v362
    %402 = vst [vmem:[#allocation2 + $0xa0] sm:$0xff] %v253
    %403 = vst [vmem:[#allocation2 + $0xa8] sm:$0xff] %v255
    %404 = vst [vmem:[#allocation2 + $0xb0] sm:$0xff] %v366
    %405 = vst [vmem:[#allocation2 + $0xb8] sm:$0xff] %v368
    %406 = vst [vmem:[#allocation2 + $0xc0] sm:$0xff] %v259
    %407 = vst [vmem:[#allocation2 + $0xc8] sm:$0xff] %v261
    %408 = vst [vmem:[#allocation2 + $0xd0] sm:$0xff] %v372
    %409 = vst [vmem:[#allocation2 + $0xd8] sm:$0xff] %v374
    %410 = vst [vmem:[#allocation2 + $0xe0] sm:$0xff] %v265
    %411 = vst [vmem:[#allocation2 + $0xe8] sm:$0xff] %v267
    %412 = vst [vmem:[#allocation2 + $0xf0] sm:$0xff] %v378
    %413 = vst [vmem:[#allocation2 + $0xf8] sm:$0xff] %v380
    %v414 = vld [vmem:[%s1] sm:$0xff]
    %v415 = vld [vmem:[%s1 + $0x8] sm:$0xff]
    %v416 = vld [vmem:[%s1 + $0x10] sm:$0xff]
    %v417 = vld [vmem:[%s1 + $0x18] sm:$0xff]
    %v418 = vld [vmem:[%s1 + $0x20] sm:$0xff]
    %v419 = vld [vmem:[%s1 + $0x28] sm:$0xff]
    %v420 = vld [vmem:[%s1 + $0x30] sm:$0xff]
    %v421 = vld [vmem:[%s1 + $0x38] sm:$0xff]
    %v422 = vsub.f32 %v414, 1.0
    %v423 = vsub.f32 %v415, 1.0
    %v424 = vsub.f32 %v416, 1.0
    %v425 = vsub.f32 %v417, 1.0
    %v426 = vsub.f32 %v418, 1.0
    %v427 = vsub.f32 %v419, 1.0
    %v428 = vsub.f32 %v420, 1.0
    %v429 = vsub.f32 %v421, 1.0
    %v430 = vld [vmem:[%s5] sm:$0x1]
    %v431 = vld [vmem:[#allocation3] sm:$0xff]
    %v432 = vld [vmem:[#allocation4] sm:$0xff]
    %v433 = vld [vmem:[#allocation5] sm:$0xff]
    %v434 = vld [vmem:[#allocation5 + $0x8] sm:$0xff]
    %v435 = vld [vmem:[#allocation5 + $0x10] sm:$0xff]
    %v436 = vld [vmem:[#allocation5 + $0x18] sm:$0xff]
    %v437 = vld [vmem:[#allocation5 + $0x20] sm:$0xff]
    %v438 = vld [vmem:[#allocation5 + $0x28] sm:$0xff]
    %v439 = vld [vmem:[#allocation5 + $0x30] sm:$0xff]
    %v440 = vld [vmem:[#allocation5 + $0x38] sm:$0xff]
    %v441 = vld [vmem:[#allocation5 + $0x40] sm:$0xff]
    %v442 = vld [vmem:[#allocation5 + $0x48] sm:$0xff]
    %v443 = vld [vmem:[#allocation5 + $0x50] sm:$0xff]
    %v444 = vld [vmem:[#allocation5 + $0x58] sm:$0xff]
    %v445 = vld [vmem:[#allocation5 + $0x60] sm:$0xff]
    %v446 = vld [vmem:[#allocation5 + $0x68] sm:$0xff]
    %v447 = vld [vmem:[#allocation5 + $0x70] sm:$0xff]
    %v448 = vld [vmem:[#allocation5 + $0x78] sm:$0xff]
    %v449 = vld [vmem:[#allocation5 + $0x80] sm:$0xff]
    %v450 = vld [vmem:[#allocation5 + $0x88] sm:$0xff]
    %v451 = vld [vmem:[#allocation5 + $0x90] sm:$0xff]
    %v452 = vld [vmem:[#allocation5 + $0x98] sm:$0xff]
    %v453 = vld [vmem:[#allocation5 + $0xa0] sm:$0xff]
    %v454 = vld [vmem:[#allocation5 + $0xa8] sm:$0xff]
    %v455 = vld [vmem:[#allocation5 + $0xb0] sm:$0xff]
    %v456 = vld [vmem:[#allocation5 + $0xb8] sm:$0xff]
    %v457 = vld [vmem:[#allocation5 + $0xc0] sm:$0xff]
    %v458 = vld [vmem:[#allocation5 + $0xc8] sm:$0xff]
    %v459 = vld [vmem:[#allocation5 + $0xd0] sm:$0xff]
    %v460 = vld [vmem:[#allocation5 + $0xd8] sm:$0xff]
    %v461 = vld [vmem:[#allocation5 + $0xe0] sm:$0xff]
    %v462 = vld [vmem:[#allocation5 + $0xe8] sm:$0xff]
    %v463 = vld [vmem:[#allocation5 + $0xf0] sm:$0xff]
    %v464 = vld [vmem:[#allocation5 + $0xf8] sm:$0xff]
    %v465 = vld [vmem:[#allocation5 + $0x100] sm:$0xff]
    %v466 = vld [vmem:[#allocation5 + $0x108] sm:$0xff]
    %v467 = vld [vmem:[#allocation5 + $0x110] sm:$0xff]
    %v468 = vld [vmem:[#allocation5 + $0x118] sm:$0xff]
    %v469 = vld [vmem:[#allocation5 + $0x120] sm:$0xff]
    %v470 = vld [vmem:[#allocation5 + $0x128] sm:$0xff]
    %v471 = vld [vmem:[#allocation5 + $0x130] sm:$0xff]
    %v472 = vld [vmem:[#allocation5 + $0x138] sm:$0xff]
    %v473 = vld [vmem:[#allocation5 + $0x140] sm:$0xff]
    %v474 = vld [vmem:[#allocation5 + $0x148] sm:$0xff]
    %v475 = vld [vmem:[#allocation5 + $0x150] sm:$0xff]
    %v476 = vld [vmem:[#allocation5 + $0x158] sm:$0xff]
    %v477 = vld [vmem:[#allocation5 + $0x160] sm:$0xff]
    %v478 = vld [vmem:[#allocation5 + $0x168] sm:$0xff]
    %v479 = vld [vmem:[#allocation5 + $0x170] sm:$0xff]
    %v480 = vld [vmem:[#allocation5 + $0x178] sm:$0xff]
    %v481 = vld [vmem:[#allocation5 + $0x180] sm:$0xff]
    %v482 = vld [vmem:[#allocation5 + $0x188] sm:$0xff]
    %v483 = vld [vmem:[#allocation5 + $0x190] sm:$0xff]
    %v484 = vld [vmem:[#allocation5 + $0x198] sm:$0xff]
    %v485 = vld [vmem:[#allocation5 + $0x1a0] sm:$0xff]
    %v486 = vld [vmem:[#allocation5 + $0x1a8] sm:$0xff]
    %v487 = vld [vmem:[#allocation5 + $0x1b0] sm:$0xff]
    %v488 = vld [vmem:[#allocation5 + $0x1b8] sm:$0xff]
    %v489 = vld [vmem:[#allocation5 + $0x1c0] sm:$0xff]
    %v490 = vld [vmem:[#allocation5 + $0x1c8] sm:$0xff]
    %v491 = vld [vmem:[#allocation5 + $0x1d0] sm:$0xff]
    %v492 = vld [vmem:[#allocation5 + $0x1d8] sm:$0xff]
    %v493 = vld [vmem:[#allocation5 + $0x1e0] sm:$0xff]
    %v494 = vld [vmem:[#allocation5 + $0x1e8] sm:$0xff]
    %v495 = vld [vmem:[#allocation5 + $0x1f0] sm:$0xff]
    %v496 = vld [vmem:[#allocation5 + $0x1f8] sm:$0xff]
    %v497 = vld [vmem:[#allocation5 + $0x200] sm:$0xff]
    %v498 = vld [vmem:[#allocation5 + $0x208] sm:$0xff]
    %v499 = vld [vmem:[#allocation5 + $0x210] sm:$0xff]
    %v500 = vld [vmem:[#allocation5 + $0x218] sm:$0xff]
    %v501 = vld [vmem:[#allocation5 + $0x220] sm:$0xff]
    %v502 = vld [vmem:[#allocation5 + $0x228] sm:$0xff]
    %v503 = vld [vmem:[#allocation5 + $0x230] sm:$0xff]
    %v504 = vld [vmem:[#allocation5 + $0x238] sm:$0xff]
    %v505 = vld [vmem:[#allocation5 + $0x240] sm:$0xff]
    %v506 = vld [vmem:[#allocation5 + $0x248] sm:$0xff]
    %v507 = vld [vmem:[#allocation5 + $0x250] sm:$0xff]
    %v508 = vld [vmem:[#allocation5 + $0x258] sm:$0xff]
    %v509 = vld [vmem:[#allocation5 + $0x260] sm:$0xff]
    %v510 = vld [vmem:[#allocation5 + $0x268] sm:$0xff]
    %v511 = vld [vmem:[#allocation5 + $0x270] sm:$0xff]
    %v512 = vld [vmem:[#allocation5 + $0x278] sm:$0xff]
    %v513 = vld [vmem:[#allocation5 + $0x280] sm:$0xff]
    %v514 = vld [vmem:[#allocation5 + $0x288] sm:$0xff]
    %v515 = vld [vmem:[#allocation5 + $0x290] sm:$0xff]
    %v516 = vld [vmem:[#allocation5 + $0x298] sm:$0xff]
    %v517 = vld [vmem:[#allocation5 + $0x2a0] sm:$0xff]
    %v518 = vld [vmem:[#allocation5 + $0x2a8] sm:$0xff]
    %v519 = vld [vmem:[#allocation5 + $0x2b0] sm:$0xff]
    %v520 = vld [vmem:[#allocation5 + $0x2b8] sm:$0xff]
    %v521 = vld [vmem:[#allocation5 + $0x2c0] sm:$0xff]
    %v522 = vld [vmem:[#allocation5 + $0x2c8] sm:$0xff]
    %v523 = vld [vmem:[#allocation5 + $0x2d0] sm:$0xff]
    %v524 = vld [vmem:[#allocation5 + $0x2d8] sm:$0xff]
    %v525 = vld [vmem:[#allocation5 + $0x2e0] sm:$0xff]
    %v526 = vld [vmem:[#allocation5 + $0x2e8] sm:$0xff]
    %v527 = vld [vmem:[#allocation5 + $0x2f0] sm:$0xff]
    %v528 = vld [vmem:[#allocation5 + $0x2f8] sm:$0xff]
    %v529 = vld [vmem:[#allocation5 + $0x300] sm:$0xff]
    %v530 = vld [vmem:[#allocation5 + $0x308] sm:$0xff]
    %v531 = vld [vmem:[#allocation5 + $0x310] sm:$0xff]
    %v532 = vld [vmem:[#allocation5 + $0x318] sm:$0xff]
    %v533 = vld [vmem:[#allocation5 + $0x320] sm:$0xff]
    %v534 = vld [vmem:[#allocation5 + $0x328] sm:$0xff]
    %v535 = vld [vmem:[#allocation5 + $0x330] sm:$0xff]
    %v536 = vld [vmem:[#allocation5 + $0x338] sm:$0xff]
    %v537 = vld [vmem:[#allocation5 + $0x340] sm:$0xff]
    %v538 = vld [vmem:[#allocation5 + $0x348] sm:$0xff]
    %v539 = vld [vmem:[#allocation5 + $0x350] sm:$0xff]
    %v540 = vld [vmem:[#allocation5 + $0x358] sm:$0xff]
    %v541 = vld [vmem:[#allocation5 + $0x360] sm:$0xff]
    %v542 = vld [vmem:[#allocation5 + $0x368] sm:$0xff]
    %v543 = vld [vmem:[#allocation5 + $0x370] sm:$0xff]
    %v544 = vld [vmem:[#allocation5 + $0x378] sm:$0xff]
    %v545 = vld [vmem:[#allocation5 + $0x380] sm:$0xff]
    %v546 = vld [vmem:[#allocation5 + $0x388] sm:$0xff]
    %v547 = vld [vmem:[#allocation5 + $0x390] sm:$0xff]
    %v548 = vld [vmem:[#allocation5 + $0x398] sm:$0xff]
    %v549 = vld [vmem:[#allocation5 + $0x3a0] sm:$0xff]
    %v550 = vld [vmem:[#allocation5 + $0x3a8] sm:$0xff]
    %v551 = vld [vmem:[#allocation5 + $0x3b0] sm:$0xff]
    %v552 = vld [vmem:[#allocation5 + $0x3b8] sm:$0xff]
    %v553 = vld [vmem:[#allocation5 + $0x3c0] sm:$0xff]
    %v554 = vld [vmem:[#allocation5 + $0x3c8] sm:$0xff]
    %v555 = vld [vmem:[#allocation5 + $0x3d0] sm:$0xff]
    %v556 = vld [vmem:[#allocation5 + $0x3d8] sm:$0xff]
    %v557 = vld [vmem:[#allocation5 + $0x3e0] sm:$0xff]
    %v558 = vld [vmem:[#allocation5 + $0x3e8] sm:$0xff]
    %v559 = vld [vmem:[#allocation5 + $0x3f0] sm:$0xff]
    %v560 = vld [vmem:[#allocation5 + $0x3f8] sm:$0xff]
    %v561 = vld [vmem:[#allocation5 + $0x400] sm:$0xff]
    %v562 = vld [vmem:[#allocation5 + $0x408] sm:$0xff]
    %v563 = vld [vmem:[#allocation5 + $0x410] sm:$0xff]
    %v564 = vld [vmem:[#allocation5 + $0x418] sm:$0xff]
    %v565 = vld [vmem:[#allocation5 + $0x420] sm:$0xff]
    %v566 = vld [vmem:[#allocation5 + $0x428] sm:$0xff]
    %v567 = vld [vmem:[#allocation5 + $0x430] sm:$0xff]
    %v568 = vld [vmem:[#allocation5 + $0x438] sm:$0xff]
    %v569 = vld [vmem:[#allocation5 + $0x440] sm:$0xff]
    %v570 = vld [vmem:[#allocation5 + $0x448] sm:$0xff]
    %v571 = vld [vmem:[#allocation5 + $0x450] sm:$0xff]
    %v572 = vld [vmem:[#allocation5 + $0x458] sm:$0xff]
    %v573 = vld [vmem:[#allocation5 + $0x460] sm:$0xff]
    %v574 = vld [vmem:[#allocation5 + $0x468] sm:$0xff]
    %v575 = vld [vmem:[#allocation5 + $0x470] sm:$0xff]
    %v576 = vld [vmem:[#allocation5 + $0x478] sm:$0xff]
    %v577 = vld [vmem:[#allocation5 + $0x480] sm:$0xff]
    %v578 = vld [vmem:[#allocation5 + $0x488] sm:$0xff]
    %v579 = vld [vmem:[#allocation5 + $0x490] sm:$0xff]
    %v580 = vld [vmem:[#allocation5 + $0x498] sm:$0xff]
    %v581 = vld [vmem:[#allocation5 + $0x4a0] sm:$0xff]
    %v582 = vld [vmem:[#allocation5 + $0x4a8] sm:$0xff]
    %v583 = vld [vmem:[#allocation5 + $0x4b0] sm:$0xff]
    %v584 = vld [vmem:[#allocation5 + $0x4b8] sm:$0xff]
    %v585 = vld [vmem:[#allocation5 + $0x4c0] sm:$0xff]
    %v586 = vld [vmem:[#allocation5 + $0x4c8] sm:$0xff]
    %v587 = vld [vmem:[#allocation5 + $0x4d0] sm:$0xff]
    %v588 = vld [vmem:[#allocation5 + $0x4d8] sm:$0xff]
    %v589 = vld [vmem:[#allocation5 + $0x4e0] sm:$0xff]
    %v590 = vld [vmem:[#allocation5 + $0x4e8] sm:$0xff]
    %v591 = vld [vmem:[#allocation5 + $0x4f0] sm:$0xff]
    %v592 = vld [vmem:[#allocation5 + $0x4f8] sm:$0xff]
    %593 = vmatprep.subr.mxu0 %v434
    %594 = vmatpush1.msra.mxu0 %v433
    %595 = vmatprep.subr.mxu0 %v439
    %596 = vmatpush1.msra.mxu0 %v438
    %597 = vmatprep.subr.mxu0 %v444
    %598 = vmatpush1.msra.mxu0 %v443
    %599 = vmatprep.subr.mxu0 %v449
    %600 = vmatpush1.msra.mxu0 %v448
    %601 = vmatprep.subr.mxu0 %v454
    %602 = vmatpush1.msra.mxu0 %v453
    %603 = vmatprep.subr.mxu0 %v459
    %604 = vmatpush1.msra.mxu0 %v458
    %605 = vmatprep.subr.mxu0 %v464
    %606 = vmatpush1.msra.mxu0 %v463
    %607 = vmatprep.subr.mxu0 %v469
    %608 = vmatpush1.msra.mxu0 %v468
    %609 = vmatprep.subr.mxu0 %v474
    %610 = vmatpush1.msra.mxu0 %v473
    %611 = vmatprep.subr.mxu0 %v479
    %612 = vmatpush1.msra.mxu0 %v478
    %613 = vmatprep.subr.mxu0 %v484
    %614 = vmatpush1.msra.mxu0 %v483
    %615 = vmatprep.subr.mxu0 %v489
    %616 = vmatpush1.msra.mxu0 %v488
    %617 = vmatprep.subr.mxu0 %v494
    %618 = vmatpush1.msra.mxu0 %v493
    %619 = vmatprep.subr.mxu0 %v499
    %620 = vmatpush1.msra.mxu0 %v498
    %621 = vmatprep.subr.mxu0 %v504
    %622 = vmatpush1.msra.mxu0 %v503
    %623 = vmatprep.subr.mxu0 %v509
    %624 = vmatpush1.msra.mxu0 %v508
    %625 = vmatprep.subr.mxu0 %v514
    %626 = vmatpush1.msra.mxu0 %v513
    %627 = vmatprep.subr.mxu0 %v519
    %628 = vmatpush1.msra.mxu0 %v518
    %629 = vmatprep.subr.mxu0 %v524
    %630 = vmatpush1.msra.mxu0 %v523
    %631 = vmatprep.subr.mxu0 %v529
    %632 = vmatpush1.msra.mxu0 %v528
    %633 = vmatprep.subr.mxu0 %v534
    %634 = vmatpush1.msra.mxu0 %v533
    %635 = vmatprep.subr.mxu0 %v539
    %636 = vmatpush1.msra.mxu0 %v538
    %637 = vmatprep.subr.mxu0 %v544
    %638 = vmatpush1.msra.mxu0 %v543
    %639 = vmatprep.subr.mxu0 %v549
    %640 = vmatpush1.msra.mxu0 %v548
    %641 = vmatprep.subr.mxu0 %v554
    %642 = vmatpush1.msra.mxu0 %v553
    %643 = vmatprep.subr.mxu0 %v559
    %644 = vmatpush1.msra.mxu0 %v558
    %645 = vmatprep.subr.mxu0 %v564
    %646 = vmatpush1.msra.mxu0 %v563
    %647 = vmatprep.subr.mxu0 %v569
    %648 = vmatpush1.msra.mxu0 %v568
    %649 = vmatprep.subr.mxu0 %v574
    %650 = vmatpush1.msra.mxu0 %v573
    %651 = vmatprep.subr.mxu0 %v579
    %652 = vmatpush1.msra.mxu0 %v578
    %653 = vmatprep.subr.mxu0 %v584
    %654 = vmatpush1.msra.mxu0 %v583
    %655 = vmatprep.subr.mxu0 %v589
    %656 = vmatpush1.msra.mxu0 %v588
    %657 = vmatprep.mubr.f32.mxu0 %v432
    %658 = vmatmul.mubr.f32.gmra.mrb[0].mxu0 %v431
    %v659 = vpop.f32.mrb[0].mxu0
    %v660 = vadd.f32 0.0, %v659
    %v661 = vpop.f32.mrb[0].mxu0
    %v662 = vadd.f32 0.0, %v661
    %663 = vdwg.mxu0
    %664 = vmatprep.subr.mxu0 %v436
    %665 = vmatpush1.msra.mxu0 %v435
    %666 = vmatprep.subr.mxu0 %v441
    %667 = vmatpush1.msra.mxu0 %v440
    %668 = vmatprep.subr.mxu0 %v446
    %669 = vmatpush1.msra.mxu0 %v445
    %670 = vmatprep.subr.mxu0 %v451
    %671 = vmatpush1.msra.mxu0 %v450
    %672 = vmatprep.subr.mxu0 %v456
    %673 = vmatpush1.msra.mxu0 %v455
    %674 = vmatprep.subr.mxu0 %v461
    %675 = vmatpush1.msra.mxu0 %v460
    %676 = vmatprep.subr.mxu0 %v466
    %677 = vmatpush1.msra.mxu0 %v465
    %678 = vmatprep.subr.mxu0 %v471
    %679 = vmatpush1.msra.mxu0 %v470
    %680 = vmatprep.subr.mxu0 %v476
    %681 = vmatpush1.msra.mxu0 %v475
    %682 = vmatprep.subr.mxu0 %v481
    %683 = vmatpush1.msra.mxu0 %v480
    %684 = vmatprep.subr.mxu0 %v486
    %685 = vmatpush1.msra.mxu0 %v485
    %686 = vmatprep.subr.mxu0 %v491
    %687 = vmatpush1.msra.mxu0 %v490
    %688 = vmatprep.subr.mxu0 %v496
    %689 = vmatpush1.msra.mxu0 %v495
    %690 = vmatprep.subr.mxu0 %v501
    %691 = vmatpush1.msra.mxu0 %v500
    %692 = vmatprep.subr.mxu0 %v506
    %693 = vmatpush1.msra.mxu0 %v505
    %694 = vmatprep.subr.mxu0 %v511
    %695 = vmatpush1.msra.mxu0 %v510
    %696 = vmatprep.subr.mxu0 %v516
    %697 = vmatpush1.msra.mxu0 %v515
    %698 = vmatprep.subr.mxu0 %v521
    %699 = vmatpush1.msra.mxu0 %v520
    %700 = vmatprep.subr.mxu0 %v526
    %701 = vmatpush1.msra.mxu0 %v525
    %702 = vmatprep.subr.mxu0 %v531
    %703 = vmatpush1.msra.mxu0 %v530
    %704 = vmatprep.subr.mxu0 %v536
    %705 = vmatpush1.msra.mxu0 %v535
    %706 = vmatprep.subr.mxu0 %v541
    %707 = vmatpush1.msra.mxu0 %v540
    %708 = vmatprep.subr.mxu0 %v546
    %709 = vmatpush1.msra.mxu0 %v545
    %710 = vmatprep.subr.mxu0 %v551
    %711 = vmatpush1.msra.mxu0 %v550
    %712 = vmatprep.subr.mxu0 %v556
    %713 = vmatpush1.msra.mxu0 %v555
    %714 = vmatprep.subr.mxu0 %v561
    %715 = vmatpush1.msra.mxu0 %v560
    %716 = vmatprep.subr.mxu0 %v566
    %717 = vmatpush1.msra.mxu0 %v565
    %718 = vmatprep.subr.mxu0 %v571
    %719 = vmatpush1.msra.mxu0 %v570
    %720 = vmatprep.subr.mxu0 %v576
    %721 = vmatpush1.msra.mxu0 %v575
    %722 = vmatprep.subr.mxu0 %v581
    %723 = vmatpush1.msra.mxu0 %v580
    %724 = vmatprep.subr.mxu0 %v586
    %725 = vmatpush1.msra.mxu0 %v585
    %726 = vmatprep.subr.mxu0 %v591
    %727 = vmatpush1.msra.mxu0 %v590
    %728 = vmatprep.mubr.f32.mxu0 %v432
    %729 = vmatmul.mubr.f32.gmra.mrb[0].mxu0 %v431
    %v730 = vpop.f32.mrb[0].mxu0
    %v731 = vadd.f32 0.0, %v730
    %v732 = vpop.f32.mrb[0].mxu0
    %v733 = vadd.f32 0.0, %v732
    %734 = vdwg.mxu0
    %735 = vmatprep.subr.mxu0 0.0
    %736 = vmatpush1.msra.mxu0 %v437
    %737 = vmatprep.subr.mxu0 0.0
    %738 = vmatpush1.msra.mxu0 %v442
    %739 = vmatprep.subr.mxu0 0.0
    %740 = vmatpush1.msra.mxu0 %v447
    %741 = vmatprep.subr.mxu0 0.0
    %742 = vmatpush1.msra.mxu0 %v452
    %743 = vmatprep.subr.mxu0 0.0
    %744 = vmatpush1.msra.mxu0 %v457
    %745 = vmatprep.subr.mxu0 0.0
    %746 = vmatpush1.msra.mxu0 %v462
    %747 = vmatprep.subr.mxu0 0.0
    %748 = vmatpush1.msra.mxu0 %v467
    %749 = vmatprep.subr.mxu0 0.0
    %750 = vmatpush1.msra.mxu0 %v472
    %751 = vmatprep.subr.mxu0 0.0
    %752 = vmatpush1.msra.mxu0 %v477
    %753 = vmatprep.subr.mxu0 0.0
    %754 = vmatpush1.msra.mxu0 %v482
    %755 = vmatprep.subr.mxu0 0.0
    %756 = vmatpush1.msra.mxu0 %v487
    %757 = vmatprep.subr.mxu0 0.0
    %758 = vmatpush1.msra.mxu0 %v492
    %759 = vmatprep.subr.mxu0 0.0
    %760 = vmatpush1.msra.mxu0 %v497
    %761 = vmatprep.subr.mxu0 0.0
    %762 = vmatpush1.msra.mxu0 %v502
    %763 = vmatprep.subr.mxu0 0.0
    %764 = vmatpush1.msra.mxu0 %v507
    %765 = vmatprep.subr.mxu0 0.0
    %766 = vmatpush1.msra.mxu0 %v512
    %767 = vmatprep.subr.mxu0 0.0
    %768 = vmatpush1.msra.mxu0 %v517
    %769 = vmatprep.subr.mxu0 0.0
    %770 = vmatpush1.msra.mxu0 %v522
    %771 = vmatprep.subr.mxu0 0.0
    %772 = vmatpush1.msra.mxu0 %v527
    %773 = vmatprep.subr.mxu0 0.0
    %774 = vmatpush1.msra.mxu0 %v532
    %775 = vmatprep.subr.mxu0 0.0
    %776 = vmatpush1.msra.mxu0 %v537
    %777 = vmatprep.subr.mxu0 0.0
    %778 = vmatpush1.msra.mxu0 %v542
    %779 = vmatprep.subr.mxu0 0.0
    %780 = vmatpush1.msra.mxu0 %v547
    %781 = vmatprep.subr.mxu0 0.0
    %782 = vmatpush1.msra.mxu0 %v552
    %783 = vmatprep.subr.mxu0 0.0
    %784 = vmatpush1.msra.mxu0 %v557
    %785 = vmatprep.subr.mxu0 0.0
    %786 = vmatpush1.msra.mxu0 %v562
    %787 = vmatprep.subr.mxu0 0.0
    %788 = vmatpush1.msra.mxu0 %v567
    %789 = vmatprep.subr.mxu0 0.0
    %790 = vmatpush1.msra.mxu0 %v572
    %791 = vmatprep.subr.mxu0 0.0
    %792 = vmatpush1.msra.mxu0 %v577
    %793 = vmatprep.subr.mxu0 0.0
    %794 = vmatpush1.msra.mxu0 %v582
    %795 = vmatprep.subr.mxu0 0.0
    %796 = vmatpush1.msra.mxu0 %v587
    %797 = vmatprep.subr.mxu0 0.0
    %798 = vmatpush1.msra.mxu0 %v592
    %799 = vmatprep.mubr.f32.mxu0 %v432
    %800 = vmatmul.mubr.f32.gmra.mrb[0].mxu0 %v431
    %v801 = vpop.f32.mrb[0].mxu0
    %v802 = vadd.f32 0.0, %v801
    %v803 = vpop.f32.mrb[0].mxu0
    %804 = vdwg.mxu0
    %v806 = vlaneseq
    %v807 = vshrl.u32 %v806, 7
    %v808 = vsub.s32 0, %v807
    %v809 = vrot.slane %v430, %v808
    %v811 = vadd.f32 %v802, %v809
    %v812 = vtanh.pop %v811
    %814 = vset.pattern.permute.xlu0 0
    %815 = vperm.xlu0 %814, %v422
    %v816 = vpop.permute.xlu0 %815
    %v818 = vmul.f32 %v812, %v816
    %v819 = vadd.f32 %v432, %v818
    %v820 = vld [vmem:[#allocation2] sm:$0xff]
    %v821 = vld [vmem:[#allocation2 + $0x8] sm:$0xff]
    %v822 = vld [vmem:[#allocation2 + $0x10] sm:$0xff]
    %v823 = vld [vmem:[#allocation2 + $0x18] sm:$0xff]
    %v824 = vadd.f32 %v660, %v820
    %v825 = vadd.f32 %v662, %v821
    %v826 = vadd.f32 %v731, %v822
    %v827 = vadd.f32 %v733, %v823
    %v828 = vxor.u32 %v824, 2147483648
    %v829 = vxor.u32 %v825, 2147483648
    %v830 = vxor.u32 %v826, 2147483648
    %v831 = vxor.u32 %v827, 2147483648
    %v832 = vmul.f32 %v828, 1.442695
    %v833 = vpow.pop %v832
    %v834 = vmul.f32 %v829, 1.442695
    %v835 = vpow.pop %v834
    %v836 = vmul.f32 %v830, 1.442695
    %v837 = vpow.pop %v836
    %v838 = vmul.f32 %v831, 1.442695
    %v839 = vpow.pop %v838
    %v840 = vadd.f32 %v833, 1.0
    %v841 = vadd.f32 %v835, 1.0
    %v842 = vadd.f32 %v837, 1.0
    %v843 = vadd.f32 %v839, 1.0
    %v844 = vrcp.pop %v840
    %v845 = vmul.f32 1.0, %v844
    %v846 = vrcp.pop %v841
    %v847 = vmul.f32 1.0, %v846
    %v848 = vrcp.pop %v842
    %v849 = vmul.f32 1.0, %v848
    %v850 = vrcp.pop %v843
    %v851 = vmul.f32 1.0, %v850
    %v852 = vmul.f32 %v845, %v819
    %v853 = vmul.f32 %v847, %v851
    %v854 = vadd.f32 %v852, %v853
    %v855 = vtanh.pop %v854
    %v856 = vmul.f32 %v849, %v855
    %857 = vst [vmem:[#allocation10] sm:$0xff] %v856
    %v858 = vadd.f32 %v856, 0.0
    %v859 = vld [vmem:[#allocation5] sm:$0xff]
    %v860 = vld [vmem:[#allocation5 + $0x8] sm:$0xff]
    %v861 = vld [vmem:[#allocation5 + $0x10] sm:$0xff]
    %v862 = vld [vmem:[#allocation5 + $0x18] sm:$0xff]
    %v863 = vld [vmem:[#allocation5 + $0x20] sm:$0xff]
    %v864 = vld [vmem:[#allocation5 + $0x28] sm:$0xff]
    %v865 = vld [vmem:[#allocation5 + $0x30] sm:$0xff]
    %v866 = vld [vmem:[#allocation5 + $0x38] sm:$0xff]
    %v867 = vld [vmem:[#allocation5 + $0x40] sm:$0xff]
    %v868 = vld [vmem:[#allocation5 + $0x48] sm:$0xff]
    %v869 = vld [vmem:[#allocation5 + $0x50] sm:$0xff]
    %v870 = vld [vmem:[#allocation5 + $0x58] sm:$0xff]
    %v871 = vld [vmem:[#allocation5 + $0x60] sm:$0xff]
    %v872 = vld [vmem:[#allocation5 + $0x68] sm:$0xff]
    %v873 = vld [vmem:[#allocation5 + $0x70] sm:$0xff]
    %v874 = vld [vmem:[#allocation5 + $0x78] sm:$0xff]
    %v875 = vld [vmem:[#allocation5 + $0x80] sm:$0xff]
    %v876 = vld [vmem:[#allocation5 + $0x88] sm:$0xff]
    %v877 = vld [vmem:[#allocation5 + $0x90] sm:$0xff]
    %v878 = vld [vmem:[#allocation5 + $0x98] sm:$0xff]
    %v879 = vld [vmem:[#allocation5 + $0xa0] sm:$0xff]
    %v880 = vld [vmem:[#allocation5 + $0xa8] sm:$0xff]
    %v881 = vld [vmem:[#allocation5 + $0xb0] sm:$0xff]
    %v882 = vld [vmem:[#allocation5 + $0xb8] sm:$0xff]
    %v883 = vld [vmem:[#allocation5 + $0xc0] sm:$0xff]
    %v884 = vld [vmem:[#allocation5 + $0xc8] sm:$0xff]
    %v885 = vld [vmem:[#allocation5 + $0xd0] sm:$0xff]
    %v886 = vld [vmem:[#allocation5 + $0xd8] sm:$0xff]
    %v887 = vld [vmem:[#allocation5 + $0xe0] sm:$0xff]
    %v888 = vld [vmem:[#allocation5 + $0xe8] sm:$0xff]
    %v889 = vld [vmem:[#allocation5 + $0xf0] sm:$0xff]
    %v890 = vld [vmem:[#allocation5 + $0xf8] sm:$0xff]
    %v891 = vld [vmem:[#allocation5 + $0x100] sm:$0xff]
    %v892 = vld [vmem:[#allocation5 + $0x108] sm:$0xff]
    %v893 = vld [vmem:[#allocation5 + $0x110] sm:$0xff]
    %v894 = vld [vmem:[#allocation5 + $0x118] sm:$0xff]
    %v895 = vld [vmem:[#allocation5 + $0x120] sm:$0xff]
    %v896 = vld [vmem:[#allocation5 + $0x128] sm:$0xff]
    %v897 = vld [vmem:[#allocation5 + $0x130] sm:$0xff]
    %v898 = vld [vmem:[#allocation5 + $0x138] sm:$0xff]
    %v899 = vld [vmem:[#allocation5 + $0x140] sm:$0xff]
    %v900 = vld [vmem:[#allocation5 + $0x148] sm:$0xff]
    %v901 = vld [vmem:[#allocation5 + $0x150] sm:$0xff]
    %v902 = vld [vmem:[#allocation5 + $0x158] sm:$0xff]
    %v903 = vld [vmem:[#allocation5 + $0x160] sm:$0xff]
    %v904 = vld [vmem:[#allocation5 + $0x168] sm:$0xff]
    %v905 = vld [vmem:[#allocation5 + $0x170] sm:$0xff]
    %v906 = vld [vmem:[#allocation5 + $0x178] sm:$0xff]
    %v907 = vld [vmem:[#allocation5 + $0x180] sm:$0xff]
    %v908 = vld [vmem:[#allocation5 + $0x188] sm:$0xff]
    %v909 = vld [vmem:[#allocation5 + $0x190] sm:$0xff]
    %v910 = vld [vmem:[#allocation5 + $0x198] sm:$0xff]
    %v911 = vld [vmem:[#allocation5 + $0x1a0] sm:$0xff]
    %v912 = vld [vmem:[#allocation5 + $0x1a8] sm:$0xff]
    %v913 = vld [vmem:[#allocation5 + $0x1b0] sm:$0xff]
    %v914 = vld [vmem:[#allocation5 + $0x1b8] sm:$0xff]
    %v915 = vld [vmem:[#allocation5 + $0x1c0] sm:$0xff]
    %v916 = vld [vmem:[#allocation5 + $0x1c8] sm:$0xff]
    %v917 = vld [vmem:[#allocation5 + $0x1d0] sm:$0xff]
    %v918 = vld [vmem:[#allocation5 + $0x1d8] sm:$0xff]
    %v919 = vld [vmem:[#allocation5 + $0x1e0] sm:$0xff]
    %v920 = vld [vmem:[#allocation5 + $0x1e8] sm:$0xff]
    %v921 = vld [vmem:[#allocation5 + $0x1f0] sm:$0xff]
    %v922 = vld [vmem:[#allocation5 + $0x1f8] sm:$0xff]
    %v923 = vld [vmem:[#allocation5 + $0x200] sm:$0xff]
    %v924 = vld [vmem:[#allocation5 + $0x208] sm:$0xff]
    %v925 = vld [vmem:[#allocation5 + $0x210] sm:$0xff]
    %v926 = vld [vmem:[#allocation5 + $0x218] sm:$0xff]
    %v927 = vld [vmem:[#allocation5 + $0x220] sm:$0xff]
    %v928 = vld [vmem:[#allocation5 + $0x228] sm:$0xff]
    %v929 = vld [vmem:[#allocation5 + $0x230] sm:$0xff]
    %v930 = vld [vmem:[#allocation5 + $0x238] sm:$0xff]
    %v931 = vld [vmem:[#allocation5 + $0x240] sm:$0xff]
    %v932 = vld [vmem:[#allocation5 + $0x248] sm:$0xff]
    %v933 = vld [vmem:[#allocation5 + $0x250] sm:$0xff]
    %v934 = vld [vmem:[#allocation5 + $0x258] sm:$0xff]
    %v935 = vld [vmem:[#allocation5 + $0x260] sm:$0xff]
    %v936 = vld [vmem:[#allocation5 + $0x268] sm:$0xff]
    %v937 = vld [vmem:[#allocation5 + $0x270] sm:$0xff]
    %v938 = vld [vmem:[#allocation5 + $0x278] sm:$0xff]
    %v939 = vld [vmem:[#allocation5 + $0x280] sm:$0xff]
    %v940 = vld [vmem:[#allocation5 + $0x288] sm:$0xff]
    %v941 = vld [vmem:[#allocation5 + $0x290] sm:$0xff]
    %v942 = vld [vmem:[#allocation5 + $0x298] sm:$0xff]
    %v943 = vld [vmem:[#allocation5 + $0x2a0] sm:$0xff]
    %v944 = vld [vmem:[#allocation5 + $0x2a8] sm:$0xff]
    %v945 = vld [vmem:[#allocation5 + $0x2b0] sm:$0xff]
    %v946 = vld [vmem:[#allocation5 + $0x2b8] sm:$0xff]
    %v947 = vld [vmem:[#allocation5 + $0x2c0] sm:$0xff]
    %v948 = vld [vmem:[#allocation5 + $0x2c8] sm:$0xff]
    %v949 = vld [vmem:[#allocation5 + $0x2d0] sm:$0xff]
    %v950 = vld [vmem:[#allocation5 + $0x2d8] sm:$0xff]
    %v951 = vld [vmem:[#allocation5 + $0x2e0] sm:$0xff]
    %v952 = vld [vmem:[#allocation5 + $0x2e8] sm:$0xff]
    %v953 = vld [vmem:[#allocation5 + $0x2f0] sm:$0xff]
    %v954 = vld [vmem:[#allocation5 + $0x2f8] sm:$0xff]
    %v955 = vld [vmem:[#allocation5 + $0x300] sm:$0xff]
    %v956 = vld [vmem:[#allocation5 + $0x308] sm:$0xff]
    %v957 = vld [vmem:[#allocation5 + $0x310] sm:$0xff]
    %v958 = vld [vmem:[#allocation5 + $0x318] sm:$0xff]
    %v959 = vld [vmem:[#allocation5 + $0x320] sm:$0xff]
    %v960 = vld [vmem:[#allocation5 + $0x328] sm:$0xff]
    %v961 = vld [vmem:[#allocation5 + $0x330] sm:$0xff]
    %v962 = vld [vmem:[#allocation5 + $0x338] sm:$0xff]
    %v963 = vld [vmem:[#allocation5 + $0x340] sm:$0xff]
    %v964 = vld [vmem:[#allocation5 + $0x348] sm:$0xff]
    %v965 = vld [vmem:[#allocation5 + $0x350] sm:$0xff]
    %v966 = vld [vmem:[#allocation5 + $0x358] sm:$0xff]
    %v967 = vld [vmem:[#allocation5 + $0x360] sm:$0xff]
    %v968 = vld [vmem:[#allocation5 + $0x368] sm:$0xff]
    %v969 = vld [vmem:[#allocation5 + $0x370] sm:$0xff]
    %v970 = vld [vmem:[#allocation5 + $0x378] sm:$0xff]
    %v971 = vld [vmem:[#allocation5 + $0x380] sm:$0xff]
    %v972 = vld [vmem:[#allocation5 + $0x388] sm:$0xff]
    %v973 = vld [vmem:[#allocation5 + $0x390] sm:$0xff]
    %v974 = vld [vmem:[#allocation5 + $0x398] sm:$0xff]
    %v975 = vld [vmem:[#allocation5 + $0x3a0] sm:$0xff]
    %v976 = vld [vmem:[#allocation5 + $0x3a8] sm:$0xff]
    %v977 = vld [vmem:[#allocation5 + $0x3b0] sm:$0xff]
    %v978 = vld [vmem:[#allocation5 + $0x3b8] sm:$0xff]
    %v979 = vld [vmem:[#allocation5 + $0x3c0] sm:$0xff]
    %v980 = vld [vmem:[#allocation5 + $0x3c8] sm:$0xff]
    %v981 = vld [vmem:[#allocation5 + $0x3d0] sm:$0xff]
    %v982 = vld [vmem:[#allocation5 + $0x3d8] sm:$0xff]
    %v983 = vld [vmem:[#allocation5 + $0x3e0] sm:$0xff]
    %v984 = vld [vmem:[#allocation5 + $0x3e8] sm:$0xff]
    %v985 = vld [vmem:[#allocation5 + $0x3f0] sm:$0xff]
    %v986 = vld [vmem:[#allocation5 + $0x3f8] sm:$0xff]
    %v987 = vld [vmem:[#allocation5 + $0x400] sm:$0xff]
    %v988 = vld [vmem:[#allocation5 + $0x408] sm:$0xff]
    %v989 = vld [vmem:[#allocation5 + $0x410] sm:$0xff]
    %v990 = vld [vmem:[#allocation5 + $0x418] sm:$0xff]
    %v991 = vld [vmem:[#allocation5 + $0x420] sm:$0xff]
    %v992 = vld [vmem:[#allocation5 + $0x428] sm:$0xff]
    %v993 = vld [vmem:[#allocation5 + $0x430] sm:$0xff]
    %v994 = vld [vmem:[#allocation5 + $0x438] sm:$0xff]
    %v995 = vld [vmem:[#allocation5 + $0x440] sm:$0xff]
    %v996 = vld [vmem:[#allocation5 + $0x448] sm:$0xff]
    %v997 = vld [vmem:[#allocation5 + $0x450] sm:$0xff]
    %v998 = vld [vmem:[#allocation5 + $0x458] sm:$0xff]
    %v999 = vld [vmem:[#allocation5 + $0x460] sm:$0xff]
    %v1000 = vld [vmem:[#allocation5 + $0x468] sm:$0xff]
    %v1001 = vld [vmem:[#allocation5 + $0x470] sm:$0xff]
    %v1002 = vld [vmem:[#allocation5 + $0x478] sm:$0xff]
    %v1003 = vld [vmem:[#allocation5 + $0x480] sm:$0xff]
    %v1004 = vld [vmem:[#allocation5 + $0x488] sm:$0xff]
    %v1005 = vld [vmem:[#allocation5 + $0x490] sm:$0xff]
    %v1006 = vld [vmem:[#allocation5 + $0x498] sm:$0xff]
    %v1007 = vld [vmem:[#allocation5 + $0x4a0] sm:$0xff]
    %v1008 = vld [vmem:[#allocation5 + $0x4a8] sm:$0xff]
    %v1009 = vld [vmem:[#allocation5 + $0x4b0] sm:$0xff]
    %v1010 = vld [vmem:[#allocation5 + $0x4b8] sm:$0xff]
    %v1011 = vld [vmem:[#allocation5 + $0x4c0] sm:$0xff]
    %v1012 = vld [vmem:[#allocation5 + $0x4c8] sm:$0xff]
    %v1013 = vld [vmem:[#allocation5 + $0x4d0] sm:$0xff]
    %v1014 = vld [vmem:[#allocation5 + $0x4d8] sm:$0xff]
    %v1015 = vld [vmem:[#allocation5 + $0x4e0] sm:$0xff]
    %v1016 = vld [vmem:[#allocation5 + $0x4e8] sm:$0xff]
    %v1017 = vld [vmem:[#allocation5 + $0x4f0] sm:$0xff]
    %v1018 = vld [vmem:[#allocation5 + $0x4f8] sm:$0xff]
    %1019 = vmatprep.subr.mxu0 %v860
    %1020 = vmatpush1.msra.mxu0 %v859
    %1021 = vmatprep.subr.mxu0 %v865
    %1022 = vmatpush1.msra.mxu0 %v864
    %1023 = vmatprep.subr.mxu0 %v870
    %1024 = vmatpush1.msra.mxu0 %v869
    %1025 = vmatprep.subr.mxu0 %v875
    %1026 = vmatpush1.msra.mxu0 %v874
    %1027 = vmatprep.subr.mxu0 %v880
    %1028 = vmatpush1.msra.mxu0 %v879
    %1029 = vmatprep.subr.mxu0 %v885
    %1030 = vmatpush1.msra.mxu0 %v884
    %1031 = vmatprep.subr.mxu0 %v890
    %1032 = vmatpush1.msra.mxu0 %v889
    %1033 = vmatprep.subr.mxu0 %v895
    %1034 = vmatpush1.msra.mxu0 %v894
    %1035 = vmatprep.subr.mxu0 %v900
    %1036 = vmatpush1.msra.mxu0 %v899
    %1037 = vmatprep.subr.mxu0 %v905
    %1038 = vmatpush1.msra.mxu0 %v904
    %1039 = vmatprep.subr.mxu0 %v910
    %1040 = vmatpush1.msra.mxu0 %v909
    %1041 = vmatprep.subr.mxu0 %v915
    %1042 = vmatpush1.msra.mxu0 %v914
    %1043 = vmatprep.subr.mxu0 %v920
    %1044 = vmatpush1.msra.mxu0 %v919
    %1045 = vmatprep.subr.mxu0 %v925
    %1046 = vmatpush1.msra.mxu0 %v924
    %1047 = vmatprep.subr.mxu0 %v930
    %1048 = vmatpush1.msra.mxu0 %v929
    %1049 = vmatprep.subr.mxu0 %v935
    %1050 = vmatpush1.msra.mxu0 %v934
    %1051 = vmatprep.subr.mxu0 %v940
    %1052 = vmatpush1.msra.mxu0 %v939
    %1053 = vmatprep.subr.mxu0 %v945
    %1054 = vmatpush1.msra.mxu0 %v944
    %1055 = vmatprep.subr.mxu0 %v950
    %1056 = vmatpush1.msra.mxu0 %v949
    %1057 = vmatprep.subr.mxu0 %v955
    %1058 = vmatpush1.msra.mxu0 %v954
    %1059 = vmatprep.subr.mxu0 %v960
    %1060 = vmatpush1.msra.mxu0 %v959
    %1061 = vmatprep.subr.mxu0 %v965
    %1062 = vmatpush1.msra.mxu0 %v964
    %1063 = vmatprep.subr.mxu0 %v970
    %1064 = vmatpush1.msra.mxu0 %v969
    %1065 = vmatprep.subr.mxu0 %v975
    %1066 = vmatpush1.msra.mxu0 %v974
    %1067 = vmatprep.subr.mxu0 %v980
    %1068 = vmatpush1.msra.mxu0 %v979
    %1069 = vmatprep.subr.mxu0 %v985
    %1070 = vmatpush1.msra.mxu0 %v984
    %1071 = vmatprep.subr.mxu0 %v990
    %1072 = vmatpush1.msra.mxu0 %v989
    %1073 = vmatprep.subr.mxu0 %v995
    %1074 = vmatpush1.msra.mxu0 %v994
    %1075 = vmatprep.subr.mxu0 %v1000
    %1076 = vmatpush1.msra.mxu0 %v999
    %1077 = vmatprep.subr.mxu0 %v1005
    %1078 = vmatpush1.msra.mxu0 %v1004
    %1079 = vmatprep.subr.mxu0 %v1010
    %1080 = vmatpush1.msra.mxu0 %v1009
    %1081 = vmatprep.subr.mxu0 %v1015
    %1082 = vmatpush1.msra.mxu0 %v1014
    %1083 = vmatprep.mubr.f32.mxu0 %v854
    %1084 = vmatmul.mubr.f32.gmra.mrb[0].mxu0 %v856
    %v1085 = vpop.f32.mrb[0].mxu0
    %v1086 = vadd.f32 0.0, %v1085
    %v1087 = vpop.f32.mrb[0].mxu0
    %v1088 = vadd.f32 0.0, %v1087
    %1089 = vdwg.mxu0
    %1090 = vmatprep.subr.mxu0 %v862
    %1091 = vmatpush1.msra.mxu0 %v861
    %1092 = vmatprep.subr.mxu0 %v867
    %1093 = vmatpush1.msra.mxu0 %v866
    %1094 = vmatprep.subr.mxu0 %v872
    %1095 = vmatpush1.msra.mxu0 %v871
    %1096 = vmatprep.subr.mxu0 %v877
    %1097 = vmatpush1.msra.mxu0 %v876
    %1098 = vmatprep.subr.mxu0 %v882
    %1099 = vmatpush1.msra.mxu0 %v881
    %1100 = vmatprep.subr.mxu0 %v887
    %1101 = vmatpush1.msra.mxu0 %v886
    %1102 = vmatprep.subr.mxu0 %v892
    %1103 = vmatpush1.msra.mxu0 %v891
    %1104 = vmatprep.subr.mxu0 %v897
    %1105 = vmatpush1.msra.mxu0 %v896
    %1106 = vmatprep.subr.mxu0 %v902
    %1107 = vmatpush1.msra.mxu0 %v901
    %1108 = vmatprep.subr.mxu0 %v907
    %1109 = vmatpush1.msra.mxu0 %v906
    %1110 = vmatprep.subr.mxu0 %v912
    %1111 = vmatpush1.msra.mxu0 %v911
    %1112 = vmatprep.subr.mxu0 %v917
    %1113 = vmatpush1.msra.mxu0 %v916
    %1114 = vmatprep.subr.mxu0 %v922
    %1115 = vmatpush1.msra.mxu0 %v921
    %1116 = vmatprep.subr.mxu0 %v927
    %1117 = vmatpush1.msra.mxu0 %v926
    %1118 = vmatprep.subr.mxu0 %v932
    %1119 = vmatpush1.msra.mxu0 %v931
    %1120 = vmatprep.subr.mxu0 %v937
    %1121 = vmatpush1.msra.mxu0 %v936
    %1122 = vmatprep.subr.mxu0 %v942
    %1123 = vmatpush1.msra.mxu0 %v941
    %1124 = vmatprep.subr.mxu0 %v947
    %1125 = vmatpush1.msra.mxu0 %v946
    %1126 = vmatprep.subr.mxu0 %v952
    %1127 = vmatpush1.msra.mxu0 %v951
    %1128 = vmatprep.subr.mxu0 %v957
    %1129 = vmatpush1.msra.mxu0 %v956
    %1130 = vmatprep.subr.mxu0 %v962
    %1131 = vmatpush1.msra.mxu0 %v961
    %1132 = vmatprep.subr.mxu0 %v967
    %1133 = vmatpush1.msra.mxu0 %v966
    %1134 = vmatprep.subr.mxu0 %v972
    %1135 = vmatpush1.msra.mxu0 %v971
    %1136 = vmatprep.subr.mxu0 %v977
    %1137 = vmatpush1.msra.mxu0 %v976
    %1138 = vmatprep.subr.mxu0 %v982
    %1139 = vmatpush1.msra.mxu0 %v981
    %1140 = vmatprep.subr.mxu0 %v987
    %1141 = vmatpush1.msra.mxu0 %v986
    %1142 = vmatprep.subr.mxu0 %v992
    %1143 = vmatpush1.msra.mxu0 %v991
    %1144 = vmatprep.subr.mxu0 %v997
    %1145 = vmatpush1.msra.mxu0 %v996
    %1146 = vmatprep.subr.mxu0 %v1002
    %1147 = vmatpush1.msra.mxu0 %v1001
    %1148 = vmatprep.subr.mxu0 %v1007
    %1149 = vmatpush1.msra.mxu0 %v1006
    %1150 = vmatprep.subr.mxu0 %v1012
    %1151 = vmatpush1.msra.mxu0 %v1011
    %1152 = vmatprep.subr.mxu0 %v1017
    %1153 = vmatpush1.msra.mxu0 %v1016
    %1154 = vmatprep.mubr.f32.mxu0 %v854
    %1155 = vmatmul.mubr.f32.gmra.mrb[0].mxu0 %v856
    %v1156 = vpop.f32.mrb[0].mxu0
    %v1157 = vadd.f32 0.0, %v1156
    %v1158 = vpop.f32.mrb[0].mxu0
    %v1159 = vadd.f32 0.0, %v1158
    %1160 = vdwg.mxu0
    %1161 = vmatprep.subr.mxu0 0.0
    %1162 = vmatpush1.msra.mxu0 %v863
    %1163 = vmatprep.subr.mxu0 0.0
    %1164 = vmatpush1.msra.mxu0 %v868
    %1165 = vmatprep.subr.mxu0 0.0
    %1166 = vmatpush1.msra.mxu0 %v873
    %1167 = vmatprep.subr.mxu0 0.0
    %1168 = vmatpush1.msra.mxu0 %v878
    %1169 = vmatprep.subr.mxu0 0.0
    %1170 = vmatpush1.msra.mxu0 %v883
    %1171 = vmatprep.subr.mxu0 0.0
    %1172 = vmatpush1.msra.mxu0 %v888
    %1173 = vmatprep.subr.mxu0 0.0
    %1174 = vmatpush1.msra.mxu0 %v893
    %1175 = vmatprep.subr.mxu0 0.0
    %1176 = vmatpush1.msra.mxu0 %v898
    %1177 = vmatprep.subr.mxu0 0.0
    %1178 = vmatpush1.msra.mxu0 %v903
    %1179 = vmatprep.subr.mxu0 0.0
    %1180 = vmatpush1.msra.mxu0 %v908
    %1181 = vmatprep.subr.mxu0 0.0
    %1182 = vmatpush1.msra.mxu0 %v913
    %1183 = vmatprep.subr.mxu0 0.0
    %1184 = vmatpush1.msra.mxu0 %v918
    %1185 = vmatprep.subr.mxu0 0.0
    %1186 = vmatpush1.msra.mxu0 %v923
    %1187 = vmatprep.subr.mxu0 0.0
    %1188 = vmatpush1.msra.mxu0 %v928
    %1189 = vmatprep.subr.mxu0 0.0
    %1190 = vmatpush1.msra.mxu0 %v933
    %1191 = vmatprep.subr.mxu0 0.0
    %1192 = vmatpush1.msra.mxu0 %v938
    %1193 = vmatprep.subr.mxu0 0.0
    %1194 = vmatpush1.msra.mxu0 %v943
    %1195 = vmatprep.subr.mxu0 0.0
    %1196 = vmatpush1.msra.mxu0 %v948
    %1197 = vmatprep.subr.mxu0 0.0
    %1198 = vmatpush1.msra.mxu0 %v953
    %1199 = vmatprep.subr.mxu0 0.0
    %1200 = vmatpush1.msra.mxu0 %v958
    %1201 = vmatprep.subr.mxu0 0.0
    %1202 = vmatpush1.msra.mxu0 %v963
    %1203 = vmatprep.subr.mxu0 0.0
    %1204 = vmatpush1.msra.mxu0 %v968
    %1205 = vmatprep.subr.mxu0 0.0
    %1206 = vmatpush1.msra.mxu0 %v973
    %1207 = vmatprep.subr.mxu0 0.0
    %1208 = vmatpush1.msra.mxu0 %v978
    %1209 = vmatprep.subr.mxu0 0.0
    %1210 = vmatpush1.msra.mxu0 %v983
    %1211 = vmatprep.subr.mxu0 0.0
    %1212 = vmatpush1.msra.mxu0 %v988
    %1213 = vmatprep.subr.mxu0 0.0
    %1214 = vmatpush1.msra.mxu0 %v993
    %1215 = vmatprep.subr.mxu0 0.0
    %1216 = vmatpush1.msra.mxu0 %v998
    %1217 = vmatprep.subr.mxu0 0.0
    %1218 = vmatpush1.msra.mxu0 %v1003
    %1219 = vmatprep.subr.mxu0 0.0
    %1220 = vmatpush1.msra.mxu0 %v1008
    %1221 = vmatprep.subr.mxu0 0.0
    %1222 = vmatpush1.msra.mxu0 %v1013
    %1223 = vmatprep.subr.mxu0 0.0
    %1224 = vmatpush1.msra.mxu0 %v1018
    %1225 = vmatprep.mubr.f32.mxu0 %v854
    %1226 = vmatmul.mubr.f32.gmra.mrb[0].mxu0 %v856
    %v1227 = vpop.f32.mrb[0].mxu0
    %v1228 = vadd.f32 0.0, %v1227
    %v1229 = vpop.f32.mrb[0].mxu0
    %1230 = vdwg.mxu0
    %v1231 = vadd.f32 %v1228, %v809
    %v1232 = vtanh.pop %v1231
    %1234 = vset.pattern.permute.xlu0 0
    %1235 = vperm.xlu0 %1234, %v423
    %v1236 = vpop.permute.xlu0 %1235
    %v1238 = vmul.f32 %v1232, %v1236
    %v1239 = vadd.f32 %v854, %v1238
    %s1240 = scalar_lea.vmem [#allocation2], 32
    %v1241 = vld [vmem:[%s1240] sm:$0xff]
    %v1242 = vld [vmem:[%s1240 + $0x8] sm:$0xff]
    %v1243 = vld [vmem:[%s1240 + $0x10] sm:$0xff]
    %v1244 = vld [vmem:[%s1240 + $0x18] sm:$0xff]
    %v1245 = vadd.f32 %v1086, %v1241
    %v1246 = vadd.f32 %v1088, %v1242
    %v1247 = vadd.f32 %v1157, %v1243
    %v1248 = vadd.f32 %v1159, %v1244
    %v1249 = vxor.u32 %v1245, 2147483648
    %v1250 = vxor.u32 %v1246, 2147483648
    %v1251 = vxor.u32 %v1247, 2147483648
    %v1252 = vxor.u32 %v1248, 2147483648
    %v1253 = vmul.f32 %v1249, 1.442695
    %v1254 = vpow.pop %v1253
    %v1255 = vmul.f32 %v1250, 1.442695
    %v1256 = vpow.pop %v1255
    %v1257 = vmul.f32 %v1251, 1.442695
    %v1258 = vpow.pop %v1257
    %v1259 = vmul.f32 %v1252, 1.442695
    %v1260 = vpow.pop %v1259
    %v1261 = vadd.f32 %v1254, 1.0
    %v1262 = vadd.f32 %v1256, 1.0
    %v1263 = vadd.f32 %v1258, 1.0
    %v1264 = vadd.f32 %v1260, 1.0
    %v1265 = vrcp.pop %v1261
    %v1266 = vmul.f32 1.0, %v1265
    %v1267 = vrcp.pop %v1262
    %v1268 = vmul.f32 1.0, %v1267
    %v1269 = vrcp.pop %v1263
    %v1270 = vmul.f32 1.0, %v1269
    %v1271 = vrcp.pop %v1264
    %v1272 = vmul.f32 1.0, %v1271
    %v1273 = vmul.f32 %v1266, %v1239
    %v1274 = vmul.f32 %v1268, %v1272
    %v1275 = vadd.f32 %v1273, %v1274
    %v1276 = vtanh.pop %v1275
    %v1277 = vmul.f32 %v1270, %v1276
    %s1278 = scalar_lea.vmem [#allocation10], 8
    %1279 = vst [vmem:[%s1278] sm:$0xff] %v1277
    %v1280 = vadd.f32 %v858, %v1277
    %v1281 = vld [vmem:[#allocation5] sm:$0xff]
    %v1282 = vld [vmem:[#allocation5 + $0x8] sm:$0xff]
    %v1283 = vld [vmem:[#allocation5 + $0x10] sm:$0xff]
    %v1284 = vld [vmem:[#allocation5 + $0x18] sm:$0xff]
    %v1285 = vld [vmem:[#allocation5 + $0x20] sm:$0xff]
    %v1286 = vld [vmem:[#allocation5 + $0x28] sm:$0xff]
    %v1287 = vld [vmem:[#allocation5 + $0x30] sm:$0xff]
    %v1288 = vld [vmem:[#allocation5 + $0x38] sm:$0xff]
    %v1289 = vld [vmem:[#allocation5 + $0x40] sm:$0xff]
    %v1290 = vld [vmem:[#allocation5 + $0x48] sm:$0xff]
    %v1291 = vld [vmem:[#allocation5 + $0x50] sm:$0xff]
    %v1292 = vld [vmem:[#allocation5 + $0x58] sm:$0xff]
    %v1293 = vld [vmem:[#allocation5 + $0x60] sm:$0xff]
    %v1294 = vld [vmem:[#allocation5 + $0x68] sm:$0xff]
    %v1295 = vld [vmem:[#allocation5 + $0x70] sm:$0xff]
    %v1296 = vld [vmem:[#allocation5 + $0x78] sm:$0xff]
    %v1297 = vld [vmem:[#allocation5 + $0x80] sm:$0xff]
    %v1298 = vld [vmem:[#allocation5 + $0x88] sm:$0xff]
    %v1299 = vld [vmem:[#allocation5 + $0x90] sm:$0xff]
    %v1300 = vld [vmem:[#allocation5 + $0x98] sm:$0xff]
    %v1301 = vld [vmem:[#allocation5 + $0xa0] sm:$0xff]
    %v1302 = vld [vmem:[#allocation5 + $0xa8] sm:$0xff]
    %v1303 = vld [vmem:[#allocation5 + $0xb0] sm:$0xff]
    %v1304 = vld [vmem:[#allocation5 + $0xb8] sm:$0xff]
    %v1305 = vld [vmem:[#allocation5 + $0xc0] sm:$0xff]
    %v1306 = vld [vmem:[#allocation5 + $0xc8] sm:$0xff]
    %v1307 = vld [vmem:[#allocation5 + $0xd0] sm:$0xff]
    %v1308 = vld [vmem:[#allocation5 + $0xd8] sm:$0xff]
    %v1309 = vld [vmem:[#allocation5 + $0xe0] sm:$0xff]
    %v1310 = vld [vmem:[#allocation5 + $0xe8] sm:$0xff]
    %v1311 = vld [vmem:[#allocation5 + $0xf0] sm:$0xff]
    %v1312 = vld [vmem:[#allocation5 + $0xf8] sm:$0xff]
    %v1313 = vld [vmem:[#allocation5 + $0x100] sm:$0xff]
    %v1314 = vld [vmem:[#allocation5 + $0x108] sm:$0xff]
    %v1315 = vld [vmem:[#allocation5 + $0x110] sm:$0xff]
    %v1316 = vld [vmem:[#allocation5 + $0x118] sm:$0xff]
    %v1317 = vld [vmem:[#allocation5 + $0x120] sm:$0xff]
    %v1318 = vld [vmem:[#allocation5 + $0x128] sm:$0xff]
    %v1319 = vld [vmem:[#allocation5 + $0x130] sm:$0xff]
    %v1320 = vld [vmem:[#allocation5 + $0x138] sm:$0xff]
    %v1321 = vld [vmem:[#allocation5 + $0x140] sm:$0xff]
    %v1322 = vld [vmem:[#allocation5 + $0x148] sm:$0xff]
    %v1323 = vld [vmem:[#allocation5 + $0x150] sm:$0xff]
    %v1324 = vld [vmem:[#allocation5 + $0x158] sm:$0xff]
    %v1325 = vld [vmem:[#allocation5 + $0x160] sm:$0xff]
    %v1326 = vld [vmem:[#allocation5 + $0x168] sm:$0xff]
    %v1327 = vld [vmem:[#allocation5 + $0x170] sm:$0xff]
    %v1328 = vld [vmem:[#allocation5 + $0x178] sm:$0xff]
    %v1329 = vld [vmem:[#allocation5 + $0x180] sm:$0xff]
    %v1330 = vld [vmem:[#allocation5 + $0x188] sm:$0xff]
    %v1331 = vld [vmem:[#allocation5 + $0x190] sm:$0xff]
    %v1332 = vld [vmem:[#allocation5 + $0x198] sm:$0xff]
    %v1333 = vld [vmem:[#allocation5 + $0x1a0] sm:$0xff]
    %v1334 = vld [vmem:[#allocation5 + $0x1a8] sm:$0xff]
    %v1335 = vld [vmem:[#allocation5 + $0x1b0] sm:$0xff]
    %v1336 = vld [vmem:[#allocation5 + $0x1b8] sm:$0xff]
    %v1337 = vld [vmem:[#allocation5 + $0x1c0] sm:$0xff]
    %v1338 = vld [vmem:[#allocation5 + $0x1c8] sm:$0xff]
    %v1339 = vld [vmem:[#allocation5 + $0x1d0] sm:$0xff]
    %v1340 = vld [vmem:[#allocation5 + $0x1d8] sm:$0xff]
    %v1341 = vld [vmem:[#allocation5 + $0x1e0] sm:$0xff]
    %v1342 = vld [vmem:[#allocation5 + $0x1e8] sm:$0xff]
    %v1343 = vld [vmem:[#allocation5 + $0x1f0] sm:$0xff]
    %v1344 = vld [vmem:[#allocation5 + $0x1f8] sm:$0xff]
    %v1345 = vld [vmem:[#allocation5 + $0x200] sm:$0xff]
    %v1346 = vld [vmem:[#allocation5 + $0x208] sm:$0xff]
    %v1347 = vld [vmem:[#allocation5 + $0x210] sm:$0xff]
    %v1348 = vld [vmem:[#allocation5 + $0x218] sm:$0xff]
    %v1349 = vld [vmem:[#allocation5 + $0x220] sm:$0xff]
    %v1350 = vld [vmem:[#allocation5 + $0x228] sm:$0xff]
    %v1351 = vld [vmem:[#allocation5 + $0x230] sm:$0xff]
    %v1352 = vld [vmem:[#allocation5 + $0x238] sm:$0xff]
    %v1353 = vld [vmem:[#allocation5 + $0x240] sm:$0xff]
    %v1354 = vld [vmem:[#allocation5 + $0x248] sm:$0xff]
    %v1355 = vld [vmem:[#allocation5 + $0x250] sm:$0xff]
    %v1356 = vld [vmem:[#allocation5 + $0x258] sm:$0xff]
    %v1357 = vld [vmem:[#allocation5 + $0x260] sm:$0xff]
    %v1358 = vld [vmem:[#allocation5 + $0x268] sm:$0xff]
    %v1359 = vld [vmem:[#allocation5 + $0x270] sm:$0xff]
    %v1360 = vld [vmem:[#allocation5 + $0x278] sm:$0xff]
    %v1361 = vld [vmem:[#allocation5 + $0x280] sm:$0xff]
    %v1362 = vld [vmem:[#allocation5 + $0x288] sm:$0xff]
    %v1363 = vld [vmem:[#allocation5 + $0x290] sm:$0xff]
    %v1364 = vld [vmem:[#allocation5 + $0x298] sm:$0xff]
    %v1365 = vld [vmem:[#allocation5 + $0x2a0] sm:$0xff]
    %v1366 = vld [vmem:[#allocation5 + $0x2a8] sm:$0xff]
    %v1367 = vld [vmem:[#allocation5 + $0x2b0] sm:$0xff]
    %v1368 = vld [vmem:[#allocation5 + $0x2b8] sm:$0xff]
    %v1369 = vld [vmem:[#allocation5 + $0x2c0] sm:$0xff]
    %v1370 = vld [vmem:[#allocation5 + $0x2c8] sm:$0xff]
    %v1371 = vld [vmem:[#allocation5 + $0x2d0] sm:$0xff]
    %v1372 = vld [vmem:[#allocation5 + $0x2d8] sm:$0xff]
    %v1373 = vld [vmem:[#allocation5 + $0x2e0] sm:$0xff]
    %v1374 = vld [vmem:[#allocation5 + $0x2e8] sm:$0xff]
    %v1375 = vld [vmem:[#allocation5 + $0x2f0] sm:$0xff]
    %v1376 = vld [vmem:[#allocation5 + $0x2f8] sm:$0xff]
    %v1377 = vld [vmem:[#allocation5 + $0x300] sm:$0xff]
    %v1378 = vld [vmem:[#allocation5 + $0x308] sm:$0xff]
    %v1379 = vld [vmem:[#allocation5 + $0x310] sm:$0xff]
    %v1380 = vld [vmem:[#allocation5 + $0x318] sm:$0xff]
    %v1381 = vld [vmem:[#allocation5 + $0x320] sm:$0xff]
    %v1382 = vld [vmem:[#allocation5 + $0x328] sm:$0xff]
    %v1383 = vld [vmem:[#allocation5 + $0x330] sm:$0xff]
    %v1384 = vld [vmem:[#allocation5 + $0x338] sm:$0xff]
    %v1385 = vld [vmem:[#allocation5 + $0x340] sm:$0xff]
    %v1386 = vld [vmem:[#allocation5 + $0x348] sm:$0xff]
    %v1387 = vld [vmem:[#allocation5 + $0x350] sm:$0xff]
    %v1388 = vld [vmem:[#allocation5 + $0x358] sm:$0xff]
    %v1389 = vld [vmem:[#allocation5 + $0x360] sm:$0xff]
    %v1390 = vld [vmem:[#allocation5 + $0x368] sm:$0xff]
    %v1391 = vld [vmem:[#allocation5 + $0x370] sm:$0xff]
    %v1392 = vld [vmem:[#allocation5 + $0x378] sm:$0xff]
    %v1393 = vld [vmem:[#allocation5 + $0x380] sm:$0xff]
    %v1394 = vld [vmem:[#allocation5 + $0x388] sm:$0xff]
    %v1395 = vld [vmem:[#allocation5 + $0x390] sm:$0xff]
    %v1396 = vld [vmem:[#allocation5 + $0x398] sm:$0xff]
    %v1397 = vld [vmem:[#allocation5 + $0x3a0] sm:$0xff]
    %v1398 = vld [vmem:[#allocation5 + $0x3a8] sm:$0xff]
    %v1399 = vld [vmem:[#allocation5 + $0x3b0] sm:$0xff]
    %v1400 = vld [vmem:[#allocation5 + $0x3b8] sm:$0xff]
    %v1401 = vld [vmem:[#allocation5 + $0x3c0] sm:$0xff]
    %v1402 = vld [vmem:[#allocation5 + $0x3c8] sm:$0xff]
    %v1403 = vld [vmem:[#allocation5 + $0x3d0] sm:$0xff]
    %v1404 = vld [vmem:[#allocation5 + $0x3d8] sm:$0xff]
    %v1405 = vld [vmem:[#allocation5 + $0x3e0] sm:$0xff]
    %v1406 = vld [vmem:[#allocation5 + $0x3e8] sm:$0xff]
    %v1407 = vld [vmem:[#allocation5 + $0x3f0] sm:$0xff]
    %v1408 = vld [vmem:[#allocation5 + $0x3f8] sm:$0xff]
    %v1409 = vld [vmem:[#allocation5 + $0x400] sm:$0xff]
    %v1410 = vld [vmem:[#allocation5 + $0x408] sm:$0xff]
    %v1411 = vld [vmem:[#allocation5 + $0x410] sm:$0xff]
    %v1412 = vld [vmem:[#allocation5 + $0x418] sm:$0xff]
    %v1413 = vld [vmem:[#allocation5 + $0x420] sm:$0xff]
    %v1414 = vld [vmem:[#allocation5 + $0x428] sm:$0xff]
    %v1415 = vld [vmem:[#allocation5 + $0x430] sm:$0xff]
    %v1416 = vld [vmem:[#allocation5 + $0x438] sm:$0xff]
    %v1417 = vld [vmem:[#allocation5 + $0x440] sm:$0xff]
    %v1418 = vld [vmem:[#allocation5 + $0x448] sm:$0xff]
    %v1419 = vld [vmem:[#allocation5 + $0x450] sm:$0xff]
    %v1420 = vld [vmem:[#allocation5 + $0x458] sm:$0xff]
    %v1421 = vld [vmem:[#allocation5 + $0x460] sm:$0xff]
    %v1422 = vld [vmem:[#allocation5 + $0x468] sm:$0xff]
    %v1423 = vld [vmem:[#allocation5 + $0x470] sm:$0xff]
    %v1424 = vld [vmem:[#allocation5 + $0x478] sm:$0xff]
    %v1425 = vld [vmem:[#allocation5 + $0x480] sm:$0xff]
    %v1426 = vld [vmem:[#allocation5 + $0x488] sm:$0xff]
    %v1427 = vld [vmem:[#allocation5 + $0x490] sm:$0xff]
    %v1428 = vld [vmem:[#allocation5 + $0x498] sm:$0xff]
    %v1429 = vld [vmem:[#allocation5 + $0x4a0] sm:$0xff]
    %v1430 = vld [vmem:[#allocation5 + $0x4a8] sm:$0xff]
    %v1431 = vld [vmem:[#allocation5 + $0x4b0] sm:$0xff]
    %v1432 = vld [vmem:[#allocation5 + $0x4b8] sm:$0xff]
    %v1433 = vld [vmem:[#allocation5 + $0x4c0] sm:$0xff]
    %v1434 = vld [vmem:[#allocation5 + $0x4c8] sm:$0xff]
    %v1435 = vld [vmem:[#allocation5 + $0x4d0] sm:$0xff]
    %v1436 = vld [vmem:[#allocation5 + $0x4d8] sm:$0xff]
    %v1437 = vld [vmem:[#allocation5 + $0x4e0] sm:$0xff]
    %v1438 = vld [vmem:[#allocation5 + $0x4e8] sm:$0xff]
    %v1439 = vld [vmem:[#allocation5 + $0x4f0] sm:$0xff]
    %v1440 = vld [vmem:[#allocation5 + $0x4f8] sm:$0xff]
    %1441 = vmatprep.subr.mxu0 %v1282
    %1442 = vmatpush1.msra.mxu0 %v1281
    %1443 = vmatprep.subr.mxu0 %v1287
    %1444 = vmatpush1.msra.mxu0 %v1286
    %1445 = vmatprep.subr.mxu0 %v1292
    %1446 = vmatpush1.msra.mxu0 %v1291
    %1447 = vmatprep.subr.mxu0 %v1297
    %1448 = vmatpush1.msra.mxu0 %v1296
    %1449 = vmatprep.subr.mxu0 %v1302
    %1450 = vmatpush1.msra.mxu0 %v1301
    %1451 = vmatprep.subr.mxu0 %v1307
    %1452 = vmatpush1.msra.mxu0 %v1306
    %1453 = vmatprep.subr.mxu0 %v1312
    %1454 = vmatpush1.msra.mxu0 %v1311
    %1455 = vmatprep.subr.mxu0 %v1317
    %1456 = vmatpush1.msra.mxu0 %v1316
    %1457 = vmatprep.subr.mxu0 %v1322
    %1458 = vmatpush1.msra.mxu0 %v1321
    %1459 = vmatprep.subr.mxu0 %v1327
    %1460 = vmatpush1.msra.mxu0 %v1326
    %1461 = vmatprep.subr.mxu0 %v1332
    %1462 = vmatpush1.msra.mxu0 %v1331
    %1463 = vmatprep.subr.mxu0 %v1337
    %1464 = vmatpush1.msra.mxu0 %v1336
    %1465 = vmatprep.subr.mxu0 %v1342
    %1466 = vmatpush1.msra.mxu0 %v1341
    %1467 = vmatprep.subr.mxu0 %v1347
    %1468 = vmatpush1.msra.mxu0 %v1346
    %1469 = vmatprep.subr.mxu0 %v1352
    %1470 = vmatpush1.msra.mxu0 %v1351
    %1471 = vmatprep.subr.mxu0 %v1357
    %1472 = vmatpush1.msra.mxu0 %v1356
    %1473 = vmatprep.subr.mxu0 %v1362
    %1474 = vmatpush1.msra.mxu0 %v1361
    %1475 = vmatprep.subr.mxu0 %v1367
    %1476 = vmatpush1.msra.mxu0 %v1366
    %1477 = vmatprep.subr.mxu0 %v1372
    %1478 = vmatpush1.msra.mxu0 %v1371
    %1479 = vmatprep.subr.mxu0 %v1377
    %1480 = vmatpush1.msra.mxu0 %v1376
    %1481 = vmatprep.subr.mxu0 %v1382
    %1482 = vmatpush1.msra.mxu0 %v1381
    %1483 = vmatprep.subr.mxu0 %v1387
    %1484 = vmatpush1.msra.mxu0 %v1386
    %1485 = vmatprep.subr.mxu0 %v1392
    %1486 = vmatpush1.msra.mxu0 %v1391
    %1487 = vmatprep.subr.mxu0 %v1397
    %1488 = vmatpush1.msra.mxu0 %v1396
    %1489 = vmatprep.subr.mxu0 %v1402
    %1490 = vmatpush1.msra.mxu0 %v1401
    %1491 = vmatprep.subr.mxu0 %v1407
    %1492 = vmatpush1.msra.mxu0 %v1406
    %1493 = vmatprep.subr.mxu0 %v1412
    %1494 = vmatpush1.msra.mxu0 %v1411
    %1495 = vmatprep.subr.mxu0 %v1417
    %1496 = vmatpush1.msra.mxu0 %v1416
    %1497 = vmatprep.subr.mxu0 %v1422
    %1498 = vmatpush1.msra.mxu0 %v1421
    %1499 = vmatprep.subr.mxu0 %v1427
    %1500 = vmatpush1.msra.mxu0 %v1426
    %1501 = vmatprep.subr.mxu0 %v1432
    %1502 = vmatpush1.msra.mxu0 %v1431
    %1503 = vmatprep.subr.mxu0 %v1437
    %1504 = vmatpush1.msra.mxu0 %v1436
    %1505 = vmatprep.mubr.f32.mxu0 %v1275
    %1506 = vmatmul.mubr.f32.gmra.mrb[0].mxu0 %v1277
    %v1507 = vpop.f32.mrb[0].mxu0
    %v1508 = vadd.f32 0.0, %v1507
    %v1509 = vpop.f32.mrb[0].mxu0
    %v1510 = vadd.f32 0.0, %v1509
    %1511 = vdwg.mxu0
    %1512 = vmatprep.subr.mxu0 %v1284
    %1513 = vmatpush1.msra.mxu0 %v1283
    %1514 = vmatprep.subr.mxu0 %v1289
    %1515 = vmatpush1.msra.mxu0 %v1288
    %1516 = vmatprep.subr.mxu0 %v1294
    %1517 = vmatpush1.msra.mxu0 %v1293
    %1518 = vmatprep.subr.mxu0 %v1299
    %1519 = vmatpush1.msra.mxu0 %v1298
    %1520 = vmatprep.subr.mxu0 %v1304
    %1521 = vmatpush1.msra.mxu0 %v1303
    %1522 = vmatprep.subr.mxu0 %v1309
    %1523 = vmatpush1.msra.mxu0 %v1308
    %1524 = vmatprep.subr.mxu0 %v1314
    %1525 = vmatpush1.msra.mxu0 %v1313
    %1526 = vmatprep.subr.mxu0 %v1319
    %1527 = vmatpush1.msra.mxu0 %v1318
    %1528 = vmatprep.subr.mxu0 %v1324
    %1529 = vmatpush1.msra.mxu0 %v1323
    %1530 = vmatprep.subr.mxu0 %v1329
    %1531 = vmatpush1.msra.mxu0 %v1328
    %1532 = vmatprep.subr.mxu0 %v1334
    %1533 = vmatpush1.msra.mxu0 %v1333
    %1534 = vmatprep.subr.mxu0 %v1339
    %1535 = vmatpush1.msra.mxu0 %v1338
    %1536 = vmatprep.subr.mxu0 %v1344
    %1537 = vmatpush1.msra.mxu0 %v1343
    %1538 = vmatprep.subr.mxu0 %v1349
    %1539 = vmatpush1.msra.mxu0 %v1348
    %1540 = vmatprep.subr.mxu0 %v1354
    %1541 = vmatpush1.msra.mxu0 %v1353
    %1542 = vmatprep.subr.mxu0 %v1359
    %1543 = vmatpush1.msra.mxu0 %v1358
    %1544 = vmatprep.subr.mxu0 %v1364
    %1545 = vmatpush1.msra.mxu0 %v1363
    %1546 = vmatprep.subr.mxu0 %v1369
    %1547 = vmatpush1.msra.mxu0 %v1368
    %1548 = vmatprep.subr.mxu0 %v1374
    %1549 = vmatpush1.msra.mxu0 %v1373
    %1550 = vmatprep.subr.mxu0 %v1379
    %1551 = vmatpush1.msra.mxu0 %v1378
    %1552 = vmatprep.subr.mxu0 %v1384
    %1553 = vmatpush1.msra.mxu0 %v1383
    %1554 = vmatprep.subr.mxu0 %v1389
    %1555 = vmatpush1.msra.mxu0 %v1388
    %1556 = vmatprep.subr.mxu0 %v1394
    %1557 = vmatpush1.msra.mxu0 %v1393
    %1558 = vmatprep.subr.mxu0 %v1399
    %1559 = vmatpush1.msra.mxu0 %v1398
    %1560 = vmatprep.subr.mxu0 %v1404
    %1561 = vmatpush1.msra.mxu0 %v1403
    %1562 = vmatprep.subr.mxu0 %v1409
    %1563 = vmatpush1.msra.mxu0 %v1408
    %1564 = vmatprep.subr.mxu0 %v1414
    %1565 = vmatpush1.msra.mxu0 %v1413
    %1566 = vmatprep.subr.mxu0 %v1419
    %1567 = vmatpush1.msra.mxu0 %v1418
    %1568 = vmatprep.subr.mxu0 %v1424
    %1569 = vmatpush1.msra.mxu0 %v1423
    %1570 = vmatprep.subr.mxu0 %v1429
    %1571 = vmatpush1.msra.mxu0 %v1428
    %1572 = vmatprep.subr.mxu0 %v1434
    %1573 = vmatpush1.msra.mxu0 %v1433
    %1574 = vmatprep.subr.mxu0 %v1439
    %1575 = vmatpush1.msra.mxu0 %v1438
    %1576 = vmatprep.mubr.f32.mxu0 %v1275
    %1577 = vmatmul.mubr.f32.gmra.mrb[0].mxu0 %v1277
    %v1578 = vpop.f32.mrb[0].mxu0
    %v1579 = vadd.f32 0.0, %v1578
    %v1580 = vpop.f32.mrb[0].mxu0
    %v1581 = vadd.f32 0.0, %v1580
    %1582 = vdwg.mxu0
    %1583 = vmatprep.subr.mxu0 0.0
    %1584 = vmatpush1.msra.mxu0 %v1285
    %1585 = vmatprep.subr.mxu0 0.0
    %1586 = vmatpush1.msra.mxu0 %v1290
    %1587 = vmatprep.subr.mxu0 0.0
    %1588 = vmatpush1.msra.mxu0 %v1295
    %1589 = vmatprep.subr.mxu0 0.0
    %1590 = vmatpush1.msra.mxu0 %v1300
    %1591 = vmatprep.subr.mxu0 0.0
    %1592 = vmatpush1.msra.mxu0 %v1305
    %1593 = vmatprep.subr.mxu0 0.0
    %1594 = vmatpush1.msra.mxu0 %v1310
    %1595 = vmatprep.subr.mxu0 0.0
    %1596 = vmatpush1.msra.mxu0 %v1315
    %1597 = vmatprep.subr.mxu0 0.0
    %1598 = vmatpush1.msra.mxu0 %v1320
    %1599 = vmatprep.subr.mxu0 0.0
    %1600 = vmatpush1.msra.mxu0 %v1325
    %1601 = vmatprep.subr.mxu0 0.0
    %1602 = vmatpush1.msra.mxu0 %v1330
    %1603 = vmatprep.subr.mxu0 0.0
    %1604 = vmatpush1.msra.mxu0 %v1335
    %1605 = vmatprep.subr.mxu0 0.0
    %1606 = vmatpush1.msra.mxu0 %v1340
    %1607 = vmatprep.subr.mxu0 0.0
    %1608 = vmatpush1.msra.mxu0 %v1345
    %1609 = vmatprep.subr.mxu0 0.0
    %1610 = vmatpush1.msra.mxu0 %v1350
    %1611 = vmatprep.subr.mxu0 0.0
    %1612 = vmatpush1.msra.mxu0 %v1355
    %1613 = vmatprep.subr.mxu0 0.0
    %1614 = vmatpush1.msra.mxu0 %v1360
    %1615 = vmatprep.subr.mxu0 0.0
    %1616 = vmatpush1.msra.mxu0 %v1365
    %1617 = vmatprep.subr.mxu0 0.0
    %1618 = vmatpush1.msra.mxu0 %v1370
    %1619 = vmatprep.subr.mxu0 0.0
    %1620 = vmatpush1.msra.mxu0 %v1375
    %1621 = vmatprep.subr.mxu0 0.0
    %1622 = vmatpush1.msra.mxu0 %v1380
    %1623 = vmatprep.subr.mxu0 0.0
    %1624 = vmatpush1.msra.mxu0 %v1385
    %1625 = vmatprep.subr.mxu0 0.0
    %1626 = vmatpush1.msra.mxu0 %v1390
    %1627 = vmatprep.subr.mxu0 0.0
    %1628 = vmatpush1.msra.mxu0 %v1395
    %1629 = vmatprep.subr.mxu0 0.0
    %1630 = vmatpush1.msra.mxu0 %v1400
    %1631 = vmatprep.subr.mxu0 0.0
    %1632 = vmatpush1.msra.mxu0 %v1405
    %1633 = vmatprep.subr.mxu0 0.0
    %1634 = vmatpush1.msra.mxu0 %v1410
    %1635 = vmatprep.subr.mxu0 0.0
    %1636 = vmatpush1.msra.mxu0 %v1415
    %1637 = vmatprep.subr.mxu0 0.0
    %1638 = vmatpush1.msra.mxu0 %v1420
    %1639 = vmatprep.subr.mxu0 0.0
    %1640 = vmatpush1.msra.mxu0 %v1425
    %1641 = vmatprep.subr.mxu0 0.0
    %1642 = vmatpush1.msra.mxu0 %v1430
    %1643 = vmatprep.subr.mxu0 0.0
    %1644 = vmatpush1.msra.mxu0 %v1435
    %1645 = vmatprep.subr.mxu0 0.0
    %1646 = vmatpush1.msra.mxu0 %v1440
    %1647 = vmatprep.mubr.f32.mxu0 %v1275
    %1648 = vmatmul.mubr.f32.gmra.mrb[0].mxu0 %v1277
    %v1649 = vpop.f32.mrb[0].mxu0
    %v1650 = vadd.f32 0.0, %v1649
    %v1651 = vpop.f32.mrb[0].mxu0
    %1652 = vdwg.mxu0
    %v1653 = vadd.f32 %v1650, %v809
    %v1654 = vtanh.pop %v1653
    %1656 = vset.pattern.permute.xlu0 0
    %1657 = vperm.xlu0 %1656, %v424
    %v1658 = vpop.permute.xlu0 %1657
    %v1660 = vmul.f32 %v1654, %v1658
    %v1661 = vadd.f32 %v1275, %v1660
    %s1662 = scalar_lea.vmem [#allocation2], 64
    %v1663 = vld [vmem:[%s1662] sm:$0xff]
    %v1664 = vld [vmem:[%s1662 + $0x8] sm:$0xff]
    %v1665 = vld [vmem:[%s1662 + $0x10] sm:$0xff]
    %v1666 = vld [vmem:[%s1662 + $0x18] sm:$0xff]
    %v1667 = vadd.f32 %v1508, %v1663
    %v1668 = vadd.f32 %v1510, %v1664
    %v1669 = vadd.f32 %v1579, %v1665
    %v1670 = vadd.f32 %v1581, %v1666
    %v1671 = vxor.u32 %v1667, 2147483648
    %v1672 = vxor.u32 %v1668, 2147483648
    %v1673 = vxor.u32 %v1669, 2147483648
    %v1674 = vxor.u32 %v1670, 2147483648
    %v1675 = vmul.f32 %v1671, 1.442695
    %v1676 = vpow.pop %v1675
    %v1677 = vmul.f32 %v1672, 1.442695
    %v1678 = vpow.pop %v1677
    %v1679 = vmul.f32 %v1673, 1.442695
    %v1680 = vpow.pop %v1679
    %v1681 = vmul.f32 %v1674, 1.442695
    %v1682 = vpow.pop %v1681
    %v1683 = vadd.f32 %v1676, 1.0
    %v1684 = vadd.f32 %v1678, 1.0
    %v1685 = vadd.f32 %v1680, 1.0
    %v1686 = vadd.f32 %v1682, 1.0
    %v1687 = vrcp.pop %v1683
    %v1688 = vmul.f32 1.0, %v1687
    %v1689 = vrcp.pop %v1684
    %v1690 = vmul.f32 1.0, %v1689
    %v1691 = vrcp.pop %v1685
    %v1692 = vmul.f32 1.0, %v1691
    %v1693 = vrcp.pop %v1686
    %v1694 = vmul.f32 1.0, %v1693
    %v1695 = vmul.f32 %v1688, %v1661
    %v1696 = vmul.f32 %v1690, %v1694
    %v1697 = vadd.f32 %v1695, %v1696
    %v1698 = vtanh.pop %v1697
    %v1699 = vmul.f32 %v1692, %v1698
    %s1700 = scalar_lea.vmem [#allocation10], 16
    %1701 = vst [vmem:[%s1700] sm:$0xff] %v1699
    %v1702 = vadd.f32 %v1280, %v1699
    %v1703 = vld [vmem:[#allocation5] sm:$0xff]
    %v1704 = vld [vmem:[#allocation5 + $0x8] sm:$0xff]
    %v1705 = vld [vmem:[#allocation5 + $0x10] sm:$0xff]
    %v1706 = vld [vmem:[#allocation5 + $0x18] sm:$0xff]
    %v1707 = vld [vmem:[#allocation5 + $0x20] sm:$0xff]
    %v1708 = vld [vmem:[#allocation5 + $0x28] sm:$0xff]
    %v1709 = vld [vmem:[#allocation5 + $0x30] sm:$0xff]
    %v1710 = vld [vmem:[#allocation5 + $0x38] sm:$0xff]
    %v1711 = vld [vmem:[#allocation5 + $0x40] sm:$0xff]
    %v1712 = vld [vmem:[#allocation5 + $0x48] sm:$0xff]
    %v1713 = vld [vmem:[#allocation5 + $0x50] sm:$0xff]
    %v1714 = vld [vmem:[#allocation5 + $0x58] sm:$0xff]
    %v1715 = vld [vmem:[#allocation5 + $0x60] sm:$0xff]
    %v1716 = vld [vmem:[#allocation5 + $0x68] sm:$0xff]
    %v1717 = vld [vmem:[#allocation5 + $0x70] sm:$0xff]
    %v1718 = vld [vmem:[#allocation5 + $0x78] sm:$0xff]
    %v1719 = vld [vmem:[#allocation5 + $0x80] sm:$0xff]
    %v1720 = vld [vmem:[#allocation5 + $0x88] sm:$0xff]
    %v1721 = vld [vmem:[#allocation5 + $0x90] sm:$0xff]
    %v1722 = vld [vmem:[#allocation5 + $0x98] sm:$0xff]
    %v1723 = vld [vmem:[#allocation5 + $0xa0] sm:$0xff]
    %v1724 = vld [vmem:[#allocation5 + $0xa8] sm:$0xff]
    %v1725 = vld [vmem:[#allocation5 + $0xb0] sm:$0xff]
    %v1726 = vld [vmem:[#allocation5 + $0xb8] sm:$0xff]
    %v1727 = vld [vmem:[#allocation5 + $0xc0] sm:$0xff]
    %v1728 = vld [vmem:[#allocation5 + $0xc8] sm:$0xff]
    %v1729 = vld [vmem:[#allocation5 + $0xd0] sm:$0xff]
    %v1730 = vld [vmem:[#allocation5 + $0xd8] sm:$0xff]
    %v1731 = vld [vmem:[#allocation5 + $0xe0] sm:$0xff]
    %v1732 = vld [vmem:[#allocation5 + $0xe8] sm:$0xff]
    %v1733 = vld [vmem:[#allocation5 + $0xf0] sm:$0xff]
    %v1734 = vld [vmem:[#allocation5 + $0xf8] sm:$0xff]
    %v1735 = vld [vmem:[#allocation5 + $0x100] sm:$0xff]
    %v1736 = vld [vmem:[#allocation5 + $0x108] sm:$0xff]
    %v1737 = vld [vmem:[#allocation5 + $0x110] sm:$0xff]
    %v1738 = vld [vmem:[#allocation5 + $0x118] sm:$0xff]
    %v1739 = vld [vmem:[#allocation5 + $0x120] sm:$0xff]
    %v1740 = vld [vmem:[#allocation5 + $0x128] sm:$0xff]
    %v1741 = vld [vmem:[#allocation5 + $0x130] sm:$0xff]
    %v1742 = vld [vmem:[#allocation5 + $0x138] sm:$0xff]
    %v1743 = vld [vmem:[#allocation5 + $0x140] sm:$0xff]
    %v1744 = vld [vmem:[#allocation5 + $0x148] sm:$0xff]
    %v1745 = vld [vmem:[#allocation5 + $0x150] sm:$0xff]
    %v1746 = vld [vmem:[#allocation5 + $0x158] sm:$0xff]
    %v1747 = vld [vmem:[#allocation5 + $0x160] sm:$0xff]
    %v1748 = vld [vmem:[#allocation5 + $0x168] sm:$0xff]
    %v1749 = vld [vmem:[#allocation5 + $0x170] sm:$0xff]
    %v1750 = vld [vmem:[#allocation5 + $0x178] sm:$0xff]
    %v1751 = vld [vmem:[#allocation5 + $0x180] sm:$0xff]
    %v1752 = vld [vmem:[#allocation5 + $0x188] sm:$0xff]
    %v1753 = vld [vmem:[#allocation5 + $0x190] sm:$0xff]
    %v1754 = vld [vmem:[#allocation5 + $0x198] sm:$0xff]
    %v1755 = vld [vmem:[#allocation5 + $0x1a0] sm:$0xff]
    %v1756 = vld [vmem:[#allocation5 + $0x1a8] sm:$0xff]
    %v1757 = vld [vmem:[#allocation5 + $0x1b0] sm:$0xff]
    %v1758 = vld [vmem:[#allocation5 + $0x1b8] sm:$0xff]
    %v1759 = vld [vmem:[#allocation5 + $0x1c0] sm:$0xff]
    %v1760 = vld [vmem:[#allocation5 + $0x1c8] sm:$0xff]
    %v1761 = vld [vmem:[#allocation5 + $0x1d0] sm:$0xff]
    %v1762 = vld [vmem:[#allocation5 + $0x1d8] sm:$0xff]
    %v1763 = vld [vmem:[#allocation5 + $0x1e0] sm:$0xff]
    %v1764 = vld [vmem:[#allocation5 + $0x1e8] sm:$0xff]
    %v1765 = vld [vmem:[#allocation5 + $0x1f0] sm:$0xff]
    %v1766 = vld [vmem:[#allocation5 + $0x1f8] sm:$0xff]
    %v1767 = vld [vmem:[#allocation5 + $0x200] sm:$0xff]
    %v1768 = vld [vmem:[#allocation5 + $0x208] sm:$0xff]
    %v1769 = vld [vmem:[#allocation5 + $0x210] sm:$0xff]
    %v1770 = vld [vmem:[#allocation5 + $0x218] sm:$0xff]
    %v1771 = vld [vmem:[#allocation5 + $0x220] sm:$0xff]
    %v1772 = vld [vmem:[#allocation5 + $0x228] sm:$0xff]
    %v1773 = vld [vmem:[#allocation5 + $0x230] sm:$0xff]
    %v1774 = vld [vmem:[#allocation5 + $0x238] sm:$0xff]
    %v1775 = vld [vmem:[#allocation5 + $0x240] sm:$0xff]
    %v1776 = vld [vmem:[#allocation5 + $0x248] sm:$0xff]
    %v1777 = vld [vmem:[#allocation5 + $0x250] sm:$0xff]
    %v1778 = vld [vmem:[#allocation5 + $0x258] sm:$0xff]
    %v1779 = vld [vmem:[#allocation5 + $0x260] sm:$0xff]
    %v1780 = vld [vmem:[#allocation5 + $0x268] sm:$0xff]
    %v1781 = vld [vmem:[#allocation5 + $0x270] sm:$0xff]
    %v1782 = vld [vmem:[#allocation5 + $0x278] sm:$0xff]
    %v1783 = vld [vmem:[#allocation5 + $0x280] sm:$0xff]
    %v1784 = vld [vmem:[#allocation5 + $0x288] sm:$0xff]
    %v1785 = vld [vmem:[#allocation5 + $0x290] sm:$0xff]
    %v1786 = vld [vmem:[#allocation5 + $0x298] sm:$0xff]
    %v1787 = vld [vmem:[#allocation5 + $0x2a0] sm:$0xff]
    %v1788 = vld [vmem:[#allocation5 + $0x2a8] sm:$0xff]
    %v1789 = vld [vmem:[#allocation5 + $0x2b0] sm:$0xff]
    %v1790 = vld [vmem:[#allocation5 + $0x2b8] sm:$0xff]
    %v1791 = vld [vmem:[#allocation5 + $0x2c0] sm:$0xff]
    %v1792 = vld [vmem:[#allocation5 + $0x2c8] sm:$0xff]
    %v1793 = vld [vmem:[#allocation5 + $0x2d0] sm:$0xff]
    %v1794 = vld [vmem:[#allocation5 + $0x2d8] sm:$0xff]
    %v1795 = vld [vmem:[#allocation5 + $0x2e0] sm:$0xff]
    %v1796 = vld [vmem:[#allocation5 + $0x2e8] sm:$0xff]
    %v1797 = vld [vmem:[#allocation5 + $0x2f0] sm:$0xff]
    %v1798 = vld [vmem:[#allocation5 + $0x2f8] sm:$0xff]
    %v1799 = vld [vmem:[#allocation5 + $0x300] sm:$0xff]
    %v1800 = vld [vmem:[#allocation5 + $0x308] sm:$0xff]
    %v1801 = vld [vmem:[#allocation5 + $0x310] sm:$0xff]
    %v1802 = vld [vmem:[#allocation5 + $0x318] sm:$0xff]
    %v1803 = vld [vmem:[#allocation5 + $0x320] sm:$0xff]
    %v1804 = vld [vmem:[#allocation5 + $0x328] sm:$0xff]
    %v1805 = vld [vmem:[#allocation5 + $0x330] sm:$0xff]
    %v1806 = vld [vmem:[#allocation5 + $0x338] sm:$0xff]
    %v1807 = vld [vmem:[#allocation5 + $0x340] sm:$0xff]
    %v1808 = vld [vmem:[#allocation5 + $0x348] sm:$0xff]
    %v1809 = vld [vmem:[#allocation5 + $0x350] sm:$0xff]
    %v1810 = vld [vmem:[#allocation5 + $0x358] sm:$0xff]
    %v1811 = vld [vmem:[#allocation5 + $0x360] sm:$0xff]
    %v1812 = vld [vmem:[#allocation5 + $0x368] sm:$0xff]
    %v1813 = vld [vmem:[#allocation5 + $0x370] sm:$0xff]
    %v1814 = vld [vmem:[#allocation5 + $0x378] sm:$0xff]
    %v1815 = vld [vmem:[#allocation5 + $0x380] sm:$0xff]
    %v1816 = vld [vmem:[#allocation5 + $0x388] sm:$0xff]
    %v1817 = vld [vmem:[#allocation5 + $0x390] sm:$0xff]
    %v1818 = vld [vmem:[#allocation5 + $0x398] sm:$0xff]
    %v1819 = vld [vmem:[#allocation5 + $0x3a0] sm:$0xff]
    %v1820 = vld [vmem:[#allocation5 + $0x3a8] sm:$0xff]
    %v1821 = vld [vmem:[#allocation5 + $0x3b0] sm:$0xff]
    %v1822 = vld [vmem:[#allocation5 + $0x3b8] sm:$0xff]
    %v1823 = vld [vmem:[#allocation5 + $0x3c0] sm:$0xff]
    %v1824 = vld [vmem:[#allocation5 + $0x3c8] sm:$0xff]
    %v1825 = vld [vmem:[#allocation5 + $0x3d0] sm:$0xff]
    %v1826 = vld [vmem:[#allocation5 + $0x3d8] sm:$0xff]
    %v1827 = vld [vmem:[#allocation5 + $0x3e0] sm:$0xff]
    %v1828 = vld [vmem:[#allocation5 + $0x3e8] sm:$0xff]
    %v1829 = vld [vmem:[#allocation5 + $0x3f0] sm:$0xff]
    %v1830 = vld [vmem:[#allocation5 + $0x3f8] sm:$0xff]
    %v1831 = vld [vmem:[#allocation5 + $0x400] sm:$0xff]
    %v1832 = vld [vmem:[#allocation5 + $0x408] sm:$0xff]
    %v1833 = vld [vmem:[#allocation5 + $0x410] sm:$0xff]
    %v1834 = vld [vmem:[#allocation5 + $0x418] sm:$0xff]
    %v1835 = vld [vmem:[#allocation5 + $0x420] sm:$0xff]
    %v1836 = vld [vmem:[#allocation5 + $0x428] sm:$0xff]
    %v1837 = vld [vmem:[#allocation5 + $0x430] sm:$0xff]
    %v1838 = vld [vmem:[#allocation5 + $0x438] sm:$0xff]
    %v1839 = vld [vmem:[#allocation5 + $0x440] sm:$0xff]
    %v1840 = vld [vmem:[#allocation5 + $0x448] sm:$0xff]
    %v1841 = vld [vmem:[#allocation5 + $0x450] sm:$0xff]
    %v1842 = vld [vmem:[#allocation5 + $0x458] sm:$0xff]
    %v1843 = vld [vmem:[#allocation5 + $0x460] sm:$0xff]
    %v1844 = vld [vmem:[#allocation5 + $0x468] sm:$0xff]
    %v1845 = vld [vmem:[#allocation5 + $0x470] sm:$0xff]
    %v1846 = vld [vmem:[#allocation5 + $0x478] sm:$0xff]
    %v1847 = vld [vmem:[#allocation5 + $0x480] sm:$0xff]
    %v1848 = vld [vmem:[#allocation5 + $0x488] sm:$0xff]
    %v1849 = vld [vmem:[#allocation5 + $0x490] sm:$0xff]
    %v1850 = vld [vmem:[#allocation5 + $0x498] sm:$0xff]
    %v1851 = vld [vmem:[#allocation5 + $0x4a0] sm:$0xff]
    %v1852 = vld [vmem:[#allocation5 + $0x4a8] sm:$0xff]
    %v1853 = vld [vmem:[#allocation5 + $0x4b0] sm:$0xff]
    %v1854 = vld [vmem:[#allocation5 + $0x4b8] sm:$0xff]
    %v1855 = vld [vmem:[#allocation5 + $0x4c0] sm:$0xff]
    %v1856 = vld [vmem:[#allocation5 + $0x4c8] sm:$0xff]
    %v1857 = vld [vmem:[#allocation5 + $0x4d0] sm:$0xff]
    %v1858 = vld [vmem:[#allocation5 + $0x4d8] sm:$0xff]
    %v1859 = vld [vmem:[#allocation5 + $0x4e0] sm:$0xff]
    %v1860 = vld [vmem:[#allocation5 + $0x4e8] sm:$0xff]
    %v1861 = vld [vmem:[#allocation5 + $0x4f0] sm:$0xff]
    %v1862 = vld [vmem:[#allocation5 + $0x4f8] sm:$0xff]
    %1863 = vmatprep.subr.mxu0 %v1704
    %1864 = vmatpush1.msra.mxu0 %v1703
    %1865 = vmatprep.subr.mxu0 %v1709
    %1866 = vmatpush1.msra.mxu0 %v1708
    %1867 = vmatprep.subr.mxu0 %v1714
    %1868 = vmatpush1.msra.mxu0 %v1713
    %1869 = vmatprep.subr.mxu0 %v1719
    %1870 = vmatpush1.msra.mxu0 %v1718
    %1871 = vmatprep.subr.mxu0 %v1724
    %1872 = vmatpush1.msra.mxu0 %v1723
    %1873 = vmatprep.subr.mxu0 %v1729
    %1874 = vmatpush1.msra.mxu0 %v1728
    %1875 = vmatprep.subr.mxu0 %v1734
    %1876 = vmatpush1.msra.mxu0 %v1733
    %1877 = vmatprep.subr.mxu0 %v1739
    %1878 = vmatpush1.msra.mxu0 %v1738
    %1879 = vmatprep.subr.mxu0 %v1744
    %1880 = vmatpush1.msra.mxu0 %v1743
    %1881 = vmatprep.subr.mxu0 %v1749
    %1882 = vmatpush1.msra.mxu0 %v1748
    %1883 = vmatprep.subr.mxu0 %v1754
    %1884 = vmatpush1.msra.mxu0 %v1753
    %1885 = vmatprep.subr.mxu0 %v1759
    %1886 = vmatpush1.msra.mxu0 %v1758
    %1887 = vmatprep.subr.mxu0 %v1764
    %1888 = vmatpush1.msra.mxu0 %v1763
    %1889 = vmatprep.subr.mxu0 %v1769
    %1890 = vmatpush1.msra.mxu0 %v1768
    %1891 = vmatprep.subr.mxu0 %v1774
    %1892 = vmatpush1.msra.mxu0 %v1773
    %1893 = vmatprep.subr.mxu0 %v1779
    %1894 = vmatpush1.msra.mxu0 %v1778
    %1895 = vmatprep.subr.mxu0 %v1784
    %1896 = vmatpush1.msra.mxu0 %v1783
    %1897 = vmatprep.subr.mxu0 %v1789
    %1898 = vmatpush1.msra.mxu0 %v1788
    %1899 = vmatprep.subr.mxu0 %v1794
    %1900 = vmatpush1.msra.mxu0 %v1793
    %1901 = vmatprep.subr.mxu0 %v1799
    %1902 = vmatpush1.msra.mxu0 %v1798
    %1903 = vmatprep.subr.mxu0 %v1804
    %1904 = vmatpush1.msra.mxu0 %v1803
    %1905 = vmatprep.subr.mxu0 %v1809
    %1906 = vmatpush1.msra.mxu0 %v1808
    %1907 = vmatprep.subr.mxu0 %v1814
    %1908 = vmatpush1.msra.mxu0 %v1813
    %1909 = vmatprep.subr.mxu0 %v1819
    %1910 = vmatpush1.msra.mxu0 %v1818
    %1911 = vmatprep.subr.mxu0 %v1824
    %1912 = vmatpush1.msra.mxu0 %v1823
    %1913 = vmatprep.subr.mxu0 %v1829
    %1914 = vmatpush1.msra.mxu0 %v1828
    %1915 = vmatprep.subr.mxu0 %v1834
    %1916 = vmatpush1.msra.mxu0 %v1833
    %1917 = vmatprep.subr.mxu0 %v1839
    %1918 = vmatpush1.msra.mxu0 %v1838
    %1919 = vmatprep.subr.mxu0 %v1844
    %1920 = vmatpush1.msra.mxu0 %v1843
    %1921 = vmatprep.subr.mxu0 %v1849
    %1922 = vmatpush1.msra.mxu0 %v1848
    %1923 = vmatprep.subr.mxu0 %v1854
    %1924 = vmatpush1.msra.mxu0 %v1853
    %1925 = vmatprep.subr.mxu0 %v1859
    %1926 = vmatpush1.msra.mxu0 %v1858
    %1927 = vmatprep.mubr.f32.mxu0 %v1697
    %1928 = vmatmul.mubr.f32.gmra.mrb[0].mxu0 %v1699
    %v1929 = vpop.f32.mrb[0].mxu0
    %v1930 = vadd.f32 0.0, %v1929
    %v1931 = vpop.f32.mrb[0].mxu0
    %v1932 = vadd.f32 0.0, %v1931
    %1933 = vdwg.mxu0
    %1934 = vmatprep.subr.mxu0 %v1706
    %1935 = vmatpush1.msra.mxu0 %v1705
    %1936 = vmatprep.subr.mxu0 %v1711
    %1937 = vmatpush1.msra.mxu0 %v1710
    %1938 = vmatprep.subr.mxu0 %v1716
    %1939 = vmatpush1.msra.mxu0 %v1715
    %1940 = vmatprep.subr.mxu0 %v1721
    %1941 = vmatpush1.msra.mxu0 %v1720
    %1942 = vmatprep.subr.mxu0 %v1726
    %1943 = vmatpush1.msra.mxu0 %v1725
    %1944 = vmatprep.subr.mxu0 %v1731
    %1945 = vmatpush1.msra.mxu0 %v1730
    %1946 = vmatprep.subr.mxu0 %v1736
    %1947 = vmatpush1.msra.mxu0 %v1735
    %1948 = vmatprep.subr.mxu0 %v1741
    %1949 = vmatpush1.msra.mxu0 %v1740
    %1950 = vmatprep.subr.mxu0 %v1746
    %1951 = vmatpush1.msra.mxu0 %v1745
    %1952 = vmatprep.subr.mxu0 %v1751
    %1953 = vmatpush1.msra.mxu0 %v1750
    %1954 = vmatprep.subr.mxu0 %v1756
    %1955 = vmatpush1.msra.mxu0 %v1755
    %1956 = vmatprep.subr.mxu0 %v1761
    %1957 = vmatpush1.msra.mxu0 %v1760
    %1958 = vmatprep.subr.mxu0 %v1766
    %1959 = vmatpush1.msra.mxu0 %v1765
    %1960 = vmatprep.subr.mxu0 %v1771
    %1961 = vmatpush1.msra.mxu0 %v1770
    %1962 = vmatprep.subr.mxu0 %v1776
    %1963 = vmatpush1.msra.mxu0 %v1775
    %1964 = vmatprep.subr.mxu0 %v1781
    %1965 = vmatpush1.msra.mxu0 %v1780
    %1966 = vmatprep.subr.mxu0 %v1786
    %1967 = vmatpush1.msra.mxu0 %v1785
    %1968 = vmatprep.subr.mxu0 %v1791
    %1969 = vmatpush1.msra.mxu0 %v1790
    %1970 = vmatprep.subr.mxu0 %v1796
    %1971 = vmatpush1.msra.mxu0 %v1795
    %1972 = vmatprep.subr.mxu0 %v1801
    %1973 = vmatpush1.msra.mxu0 %v1800
    %1974 = vmatprep.subr.mxu0 %v1806
    %1975 = vmatpush1.msra.mxu0 %v1805
    %1976 = vmatprep.subr.mxu0 %v1811
    %1977 = vmatpush1.msra.mxu0 %v1810
    %1978 = vmatprep.subr.mxu0 %v1816
    %1979 = vmatpush1.msra.mxu0 %v1815
    %1980 = vmatprep.subr.mxu0 %v1821
    %1981 = vmatpush1.msra.mxu0 %v1820
    %1982 = vmatprep.subr.mxu0 %v1826
    %1983 = vmatpush1.msra.mxu0 %v1825
    %1984 = vmatprep.subr.mxu0 %v1831
    %1985 = vmatpush1.msra.mxu0 %v1830
    %1986 = vmatprep.subr.mxu0 %v1836
    %1987 = vmatpush1.msra.mxu0 %v1835
    %1988 = vmatprep.subr.mxu0 %v1841
    %1989 = vmatpush1.msra.mxu0 %v1840
    %1990 = vmatprep.subr.mxu0 %v1846
    %1991 = vmatpush1.msra.mxu0 %v1845
    %1992 = vmatprep.subr.mxu0 %v1851
    %1993 = vmatpush1.msra.mxu0 %v1850
    %1994 = vmatprep.subr.mxu0 %v1856
    %1995 = vmatpush1.msra.mxu0 %v1855
    %1996 = vmatprep.subr.mxu0 %v1861
    %1997 = vmatpush1.msra.mxu0 %v1860
    %1998 = vmatprep.mubr.f32.mxu0 %v1697
    %1999 = vmatmul.mubr.f32.gmra.mrb[0].mxu0 %v1699
    %v2000 = vpop.f32.mrb[0].mxu0
    %v2001 = vadd.f32 0.0, %v2000
    %v2002 = vpop.f32.mrb[0].mxu0
    %v2003 = vadd.f32 0.0, %v2002
    %2004 = vdwg.mxu0
    %2005 = vmatprep.subr.mxu0 0.0
    %2006 = vmatpush1.msra.mxu0 %v1707
    %2007 = vmatprep.subr.mxu0 0.0
    %2008 = vmatpush1.msra.mxu0 %v1712
    %2009 = vmatprep.subr.mxu0 0.0
    %2010 = vmatpush1.msra.mxu0 %v1717
    %2011 = vmatprep.subr.mxu0 0.0
    %2012 = vmatpush1.msra.mxu0 %v1722
    %2013 = vmatprep.subr.mxu0 0.0
    %2014 = vmatpush1.msra.mxu0 %v1727
    %2015 = vmatprep.subr.mxu0 0.0
    %2016 = vmatpush1.msra.mxu0 %v1732
    %2017 = vmatprep.subr.mxu0 0.0
    %2018 = vmatpush1.msra.mxu0 %v1737
    %2019 = vmatprep.subr.mxu0 0.0
    %2020 = vmatpush1.msra.mxu0 %v1742
    %2021 = vmatprep.subr.mxu0 0.0
    %2022 = vmatpush1.msra.mxu0 %v1747
    %2023 = vmatprep.subr.mxu0 0.0
    %2024 = vmatpush1.msra.mxu0 %v1752
    %2025 = vmatprep.subr.mxu0 0.0
    %2026 = vmatpush1.msra.mxu0 %v1757
    %2027 = vmatprep.subr.mxu0 0.0
    %2028 = vmatpush1.msra.mxu0 %v1762
    %2029 = vmatprep.subr.mxu0 0.0
    %2030 = vmatpush1.msra.mxu0 %v1767
    %2031 = vmatprep.subr.mxu0 0.0
    %2032 = vmatpush1.msra.mxu0 %v1772
    %2033 = vmatprep.subr.mxu0 0.0
    %2034 = vmatpush1.msra.mxu0 %v1777
    %2035 = vmatprep.subr.mxu0 0.0
    %2036 = vmatpush1.msra.mxu0 %v1782
    %2037 = vmatprep.subr.mxu0 0.0
    %2038 = vmatpush1.msra.mxu0 %v1787
    %2039 = vmatprep.subr.mxu0 0.0
    %2040 = vmatpush1.msra.mxu0 %v1792
    %2041 = vmatprep.subr.mxu0 0.0
    %2042 = vmatpush1.msra.mxu0 %v1797
    %2043 = vmatprep.subr.mxu0 0.0
    %2044 = vmatpush1.msra.mxu0 %v1802
    %2045 = vmatprep.subr.mxu0 0.0
    %2046 = vmatpush1.msra.mxu0 %v1807
    %2047 = vmatprep.subr.mxu0 0.0
    %2048 = vmatpush1.msra.mxu0 %v1812
    %2049 = vmatprep.subr.mxu0 0.0
    %2050 = vmatpush1.msra.mxu0 %v1817
    %2051 = vmatprep.subr.mxu0 0.0
    %2052 = vmatpush1.msra.mxu0 %v1822
    %2053 = vmatprep.subr.mxu0 0.0
    %2054 = vmatpush1.msra.mxu0 %v1827
    %2055 = vmatprep.subr.mxu0 0.0
    %2056 = vmatpush1.msra.mxu0 %v1832
    %2057 = vmatprep.subr.mxu0 0.0
    %2058 = vmatpush1.msra.mxu0 %v1837
    %2059 = vmatprep.subr.mxu0 0.0
    %2060 = vmatpush1.msra.mxu0 %v1842
    %2061 = vmatprep.subr.mxu0 0.0
    %2062 = vmatpush1.msra.mxu0 %v1847
    %2063 = vmatprep.subr.mxu0 0.0
    %2064 = vmatpush1.msra.mxu0 %v1852
    %2065 = vmatprep.subr.mxu0 0.0
    %2066 = vmatpush1.msra.mxu0 %v1857
    %2067 = vmatprep.subr.mxu0 0.0
    %2068 = vmatpush1.msra.mxu0 %v1862
    %2069 = vmatprep.mubr.f32.mxu0 %v1697
    %2070 = vmatmul.mubr.f32.gmra.mrb[0].mxu0 %v1699
    %v2071 = vpop.f32.mrb[0].mxu0
    %v2072 = vadd.f32 0.0, %v2071
    %v2073 = vpop.f32.mrb[0].mxu0
    %2074 = vdwg.mxu0
    %v2075 = vadd.f32 %v2072, %v809
    %v2076 = vtanh.pop %v2075
    %2078 = vset.pattern.permute.xlu0 0
    %2079 = vperm.xlu0 %2078, %v425
    %v2080 = vpop.permute.xlu0 %2079
    %v2082 = vmul.f32 %v2076, %v2080
    %v2083 = vadd.f32 %v1697, %v2082
    %s2084 = scalar_lea.vmem [#allocation2], 96
    %v2085 = vld [vmem:[%s2084] sm:$0xff]
    %v2086 = vld [vmem:[%s2084 + $0x8] sm:$0xff]
    %v2087 = vld [vmem:[%s2084 + $0x10] sm:$0xff]
    %v2088 = vld [vmem:[%s2084 + $0x18] sm:$0xff]
    %v2089 = vadd.f32 %v1930, %v2085
    %v2090 = vadd.f32 %v1932, %v2086
    %v2091 = vadd.f32 %v2001, %v2087
    %v2092 = vadd.f32 %v2003, %v2088
    %v2093 = vxor.u32 %v2089, 2147483648
    %v2094 = vxor.u32 %v2090, 2147483648
    %v2095 = vxor.u32 %v2091, 2147483648
    %v2096 = vxor.u32 %v2092, 2147483648
    %v2097 = vmul.f32 %v2093, 1.442695
    %v2098 = vpow.pop %v2097
    %v2099 = vmul.f32 %v2094, 1.442695
    %v2100 = vpow.pop %v2099
    %v2101 = vmul.f32 %v2095, 1.442695
    %v2102 = vpow.pop %v2101
    %v2103 = vmul.f32 %v2096, 1.442695
    %v2104 = vpow.pop %v2103
    %v2105 = vadd.f32 %v2098, 1.0
    %v2106 = vadd.f32 %v2100, 1.0
    %v2107 = vadd.f32 %v2102, 1.0
    %v2108 = vadd.f32 %v2104, 1.0
    %v2109 = vrcp.pop %v2105
    %v2110 = vmul.f32 1.0, %v2109
    %v2111 = vrcp.pop %v2106
    %v2112 = vmul.f32 1.0, %v2111
    %v2113 = vrcp.pop %v2107
    %v2114 = vmul.f32 1.0, %v2113
    %v2115 = vrcp.pop %v2108
    %v2116 = vmul.f32 1.0, %v2115
    %v2117 = vmul.f32 %v2110, %v2083
    %v2118 = vmul.f32 %v2112, %v2116
    %v2119 = vadd.f32 %v2117, %v2118
    %v2120 = vtanh.pop %v2119
    %v2121 = vmul.f32 %v2114, %v2120
    %s2122 = scalar_lea.vmem [#allocation10], 24
    %2123 = vst [vmem:[%s2122] sm:$0xff] %v2121
    %v2124 = vadd.f32 %v1702, %v2121
    %v2125 = vld [vmem:[#allocation5] sm:$0xff]
    %v2126 = vld [vmem:[#allocation5 + $0x8] sm:$0xff]
    %v2127 = vld [vmem:[#allocation5 + $0x10] sm:$0xff]
    %v2128 = vld [vmem:[#allocation5 + $0x18] sm:$0xff]
    %v2129 = vld [vmem:[#allocation5 + $0x20] sm:$0xff]
    %v2130 = vld [vmem:[#allocation5 + $0x28] sm:$0xff]
    %v2131 = vld [vmem:[#allocation5 + $0x30] sm:$0xff]
    %v2132 = vld [vmem:[#allocation5 + $0x38] sm:$0xff]
    %v2133 = vld [vmem:[#allocation5 + $0x40] sm:$0xff]
    %v2134 = vld [vmem:[#allocation5 + $0x48] sm:$0xff]
    %v2135 = vld [vmem:[#allocation5 + $0x50] sm:$0xff]
    %v2136 = vld [vmem:[#allocation5 + $0x58] sm:$0xff]
    %v2137 = vld [vmem:[#allocation5 + $0x60] sm:$0xff]
    %v2138 = vld [vmem:[#allocation5 + $0x68] sm:$0xff]
    %v2139 = vld [vmem:[#allocation5 + $0x70] sm:$0xff]
    %v2140 = vld [vmem:[#allocation5 + $0x78] sm:$0xff]
    %v2141 = vld [vmem:[#allocation5 + $0x80] sm:$0xff]
    %v2142 = vld [vmem:[#allocation5 + $0x88] sm:$0xff]
    %v2143 = vld [vmem:[#allocation5 + $0x90] sm:$0xff]
    %v2144 = vld [vmem:[#allocation5 + $0x98] sm:$0xff]
    %v2145 = vld [vmem:[#allocation5 + $0xa0] sm:$0xff]
    %v2146 = vld [vmem:[#allocation5 + $0xa8] sm:$0xff]
    %v2147 = vld [vmem:[#allocation5 + $0xb0] sm:$0xff]
    %v2148 = vld [vmem:[#allocation5 + $0xb8] sm:$0xff]
    %v2149 = vld [vmem:[#allocation5 + $0xc0] sm:$0xff]
    %v2150 = vld [vmem:[#allocation5 + $0xc8] sm:$0xff]
    %v2151 = vld [vmem:[#allocation5 + $0xd0] sm:$0xff]
    %v2152 = vld [vmem:[#allocation5 + $0xd8] sm:$0xff]
    %v2153 = vld [vmem:[#allocation5 + $0xe0] sm:$0xff]
    %v2154 = vld [vmem:[#allocation5 + $0xe8] sm:$0xff]
    %v2155 = vld [vmem:[#allocation5 + $0xf0] sm:$0xff]
    %v2156 = vld [vmem:[#allocation5 + $0xf8] sm:$0xff]
    %v2157 = vld [vmem:[#allocation5 + $0x100] sm:$0xff]
    %v2158 = vld [vmem:[#allocation5 + $0x108] sm:$0xff]
    %v2159 = vld [vmem:[#allocation5 + $0x110] sm:$0xff]
    %v2160 = vld [vmem:[#allocation5 + $0x118] sm:$0xff]
    %v2161 = vld [vmem:[#allocation5 + $0x120] sm:$0xff]
    %v2162 = vld [vmem:[#allocation5 + $0x128] sm:$0xff]
    %v2163 = vld [vmem:[#allocation5 + $0x130] sm:$0xff]
    %v2164 = vld [vmem:[#allocation5 + $0x138] sm:$0xff]
    %v2165 = vld [vmem:[#allocation5 + $0x140] sm:$0xff]
    %v2166 = vld [vmem:[#allocation5 + $0x148] sm:$0xff]
    %v2167 = vld [vmem:[#allocation5 + $0x150] sm:$0xff]
    %v2168 = vld [vmem:[#allocation5 + $0x158] sm:$0xff]
    %v2169 = vld [vmem:[#allocation5 + $0x160] sm:$0xff]
    %v2170 = vld [vmem:[#allocation5 + $0x168] sm:$0xff]
    %v2171 = vld [vmem:[#allocation5 + $0x170] sm:$0xff]
    %v2172 = vld [vmem:[#allocation5 + $0x178] sm:$0xff]
    %v2173 = vld [vmem:[#allocation5 + $0x180] sm:$0xff]
    %v2174 = vld [vmem:[#allocation5 + $0x188] sm:$0xff]
    %v2175 = vld [vmem:[#allocation5 + $0x190] sm:$0xff]
    %v2176 = vld [vmem:[#allocation5 + $0x198] sm:$0xff]
    %v2177 = vld [vmem:[#allocation5 + $0x1a0] sm:$0xff]
    %v2178 = vld [vmem:[#allocation5 + $0x1a8] sm:$0xff]
    %v2179 = vld [vmem:[#allocation5 + $0x1b0] sm:$0xff]
    %v2180 = vld [vmem:[#allocation5 + $0x1b8] sm:$0xff]
    %v2181 = vld [vmem:[#allocation5 + $0x1c0] sm:$0xff]
    %v2182 = vld [vmem:[#allocation5 + $0x1c8] sm:$0xff]
    %v2183 = vld [vmem:[#allocation5 + $0x1d0] sm:$0xff]
    %v2184 = vld [vmem:[#allocation5 + $0x1d8] sm:$0xff]
    %v2185 = vld [vmem:[#allocation5 + $0x1e0] sm:$0xff]
    %v2186 = vld [vmem:[#allocation5 + $0x1e8] sm:$0xff]
    %v2187 = vld [vmem:[#allocation5 + $0x1f0] sm:$0xff]
    %v2188 = vld [vmem:[#allocation5 + $0x1f8] sm:$0xff]
    %v2189 = vld [vmem:[#allocation5 + $0x200] sm:$0xff]
    %v2190 = vld [vmem:[#allocation5 + $0x208] sm:$0xff]
    %v2191 = vld [vmem:[#allocation5 + $0x210] sm:$0xff]
    %v2192 = vld [vmem:[#allocation5 + $0x218] sm:$0xff]
    %v2193 = vld [vmem:[#allocation5 + $0x220] sm:$0xff]
    %v2194 = vld [vmem:[#allocation5 + $0x228] sm:$0xff]
    %v2195 = vld [vmem:[#allocation5 + $0x230] sm:$0xff]
    %v2196 = vld [vmem:[#allocation5 + $0x238] sm:$0xff]
    %v2197 = vld [vmem:[#allocation5 + $0x240] sm:$0xff]
    %v2198 = vld [vmem:[#allocation5 + $0x248] sm:$0xff]
    %v2199 = vld [vmem:[#allocation5 + $0x250] sm:$0xff]
    %v2200 = vld [vmem:[#allocation5 + $0x258] sm:$0xff]
    %v2201 = vld [vmem:[#allocation5 + $0x260] sm:$0xff]
    %v2202 = vld [vmem:[#allocation5 + $0x268] sm:$0xff]
    %v2203 = vld [vmem:[#allocation5 + $0x270] sm:$0xff]
    %v2204 = vld [vmem:[#allocation5 + $0x278] sm:$0xff]
    %v2205 = vld [vmem:[#allocation5 + $0x280] sm:$0xff]
    %v2206 = vld [vmem:[#allocation5 + $0x288] sm:$0xff]
    %v2207 = vld [vmem:[#allocation5 + $0x290] sm:$0xff]
    %v2208 = vld [vmem:[#allocation5 + $0x298] sm:$0xff]
    %v2209 = vld [vmem:[#allocation5 + $0x2a0] sm:$0xff]
    %v2210 = vld [vmem:[#allocation5 + $0x2a8] sm:$0xff]
    %v2211 = vld [vmem:[#allocation5 + $0x2b0] sm:$0xff]
    %v2212 = vld [vmem:[#allocation5 + $0x2b8] sm:$0xff]
    %v2213 = vld [vmem:[#allocation5 + $0x2c0] sm:$0xff]
    %v2214 = vld [vmem:[#allocation5 + $0x2c8] sm:$0xff]
    %v2215 = vld [vmem:[#allocation5 + $0x2d0] sm:$0xff]
    %v2216 = vld [vmem:[#allocation5 + $0x2d8] sm:$0xff]
    %v2217 = vld [vmem:[#allocation5 + $0x2e0] sm:$0xff]
    %v2218 = vld [vmem:[#allocation5 + $0x2e8] sm:$0xff]
    %v2219 = vld [vmem:[#allocation5 + $0x2f0] sm:$0xff]
    %v2220 = vld [vmem:[#allocation5 + $0x2f8] sm:$0xff]
    %v2221 = vld [vmem:[#allocation5 + $0x300] sm:$0xff]
    %v2222 = vld [vmem:[#allocation5 + $0x308] sm:$0xff]
    %v2223 = vld [vmem:[#allocation5 + $0x310] sm:$0xff]
    %v2224 = vld [vmem:[#allocation5 + $0x318] sm:$0xff]
    %v2225 = vld [vmem:[#allocation5 + $0x320] sm:$0xff]
    %v2226 = vld [vmem:[#allocation5 + $0x328] sm:$0xff]
    %v2227 = vld [vmem:[#allocation5 + $0x330] sm:$0xff]
    %v2228 = vld [vmem:[#allocation5 + $0x338] sm:$0xff]
    %v2229 = vld [vmem:[#allocation5 + $0x340] sm:$0xff]
    %v2230 = vld [vmem:[#allocation5 + $0x348] sm:$0xff]
    %v2231 = vld [vmem:[#allocation5 + $0x350] sm:$0xff]
    %v2232 = vld [vmem:[#allocation5 + $0x358] sm:$0xff]
    %v2233 = vld [vmem:[#allocation5 + $0x360] sm:$0xff]
    %v2234 = vld [vmem:[#allocation5 + $0x368] sm:$0xff]
    %v2235 = vld [vmem:[#allocation5 + $0x370] sm:$0xff]
    %v2236 = vld [vmem:[#allocation5 + $0x378] sm:$0xff]
    %v2237 = vld [vmem:[#allocation5 + $0x380] sm:$0xff]
    %v2238 = vld [vmem:[#allocation5 + $0x388] sm:$0xff]
    %v2239 = vld [vmem:[#allocation5 + $0x390] sm:$0xff]
    %v2240 = vld [vmem:[#allocation5 + $0x398] sm:$0xff]
    %v2241 = vld [vmem:[#allocation5 + $0x3a0] sm:$0xff]
    %v2242 = vld [vmem:[#allocation5 + $0x3a8] sm:$0xff]
    %v2243 = vld [vmem:[#allocation5 + $0x3b0] sm:$0xff]
    %v2244 = vld [vmem:[#allocation5 + $0x3b8] sm:$0xff]
    %v2245 = vld [vmem:[#allocation5 + $0x3c0] sm:$0xff]
    %v2246 = vld [vmem:[#allocation5 + $0x3c8] sm:$0xff]
    %v2247 = vld [vmem:[#allocation5 + $0x3d0] sm:$0xff]
    %v2248 = vld [vmem:[#allocation5 + $0x3d8] sm:$0xff]
    %v2249 = vld [vmem:[#allocation5 + $0x3e0] sm:$0xff]
    %v2250 = vld [vmem:[#allocation5 + $0x3e8] sm:$0xff]
    %v2251 = vld [vmem:[#allocation5 + $0x3f0] sm:$0xff]
    %v2252 = vld [vmem:[#allocation5 + $0x3f8] sm:$0xff]
    %v2253 = vld [vmem:[#allocation5 + $0x400] sm:$0xff]
    %v2254 = vld [vmem:[#allocation5 + $0x408] sm:$0xff]
    %v2255 = vld [vmem:[#allocation5 + $0x410] sm:$0xff]
    %v2256 = vld [vmem:[#allocation5 + $0x418] sm:$0xff]
    %v2257 = vld [vmem:[#allocation5 + $0x420] sm:$0xff]
    %v2258 = vld [vmem:[#allocation5 + $0x428] sm:$0xff]
    %v2259 = vld [vmem:[#allocation5 + $0x430] sm:$0xff]
    %v2260 = vld [vmem:[#allocation5 + $0x438] sm:$0xff]
    %v2261 = vld [vmem:[#allocation5 + $0x440] sm:$0xff]
    %v2262 = vld [vmem:[#allocation5 + $0x448] sm:$0xff]
    %v2263 = vld [vmem:[#allocation5 + $0x450] sm:$0xff]
    %v2264 = vld [vmem:[#allocation5 + $0x458] sm:$0xff]
    %v2265 = vld [vmem:[#allocation5 + $0x460] sm:$0xff]
    %v2266 = vld [vmem:[#allocation5 + $0x468] sm:$0xff]
    %v2267 = vld [vmem:[#allocation5 + $0x470] sm:$0xff]
    %v2268 = vld [vmem:[#allocation5 + $0x478] sm:$0xff]
    %v2269 = vld [vmem:[#allocation5 + $0x480] sm:$0xff]
    %v2270 = vld [vmem:[#allocation5 + $0x488] sm:$0xff]
    %v2271 = vld [vmem:[#allocation5 + $0x490] sm:$0xff]
    %v2272 = vld [vmem:[#allocation5 + $0x498] sm:$0xff]
    %v2273 = vld [vmem:[#allocation5 + $0x4a0] sm:$0xff]
    %v2274 = vld [vmem:[#allocation5 + $0x4a8] sm:$0xff]
    %v2275 = vld [vmem:[#allocation5 + $0x4b0] sm:$0xff]
    %v2276 = vld [vmem:[#allocation5 + $0x4b8] sm:$0xff]
    %v2277 = vld [vmem:[#allocation5 + $0x4c0] sm:$0xff]
    %v2278 = vld [vmem:[#allocation5 + $0x4c8] sm:$0xff]
    %v2279 = vld [vmem:[#allocation5 + $0x4d0] sm:$0xff]
    %v2280 = vld [vmem:[#allocation5 + $0x4d8] sm:$0xff]
    %v2281 = vld [vmem:[#allocation5 + $0x4e0] sm:$0xff]
    %v2282 = vld [vmem:[#allocation5 + $0x4e8] sm:$0xff]
    %v2283 = vld [vmem:[#allocation5 + $0x4f0] sm:$0xff]
    %v2284 = vld [vmem:[#allocation5 + $0x4f8] sm:$0xff]
    %2285 = vmatprep.subr.mxu0 %v2126
    %2286 = vmatpush1.msra.mxu0 %v2125
    %2287 = vmatprep.subr.mxu0 %v2131
    %2288 = vmatpush1.msra.mxu0 %v2130
    %2289 = vmatprep.subr.mxu0 %v2136
    %2290 = vmatpush1.msra.mxu0 %v2135
    %2291 = vmatprep.subr.mxu0 %v2141
    %2292 = vmatpush1.msra.mxu0 %v2140
    %2293 = vmatprep.subr.mxu0 %v2146
    %2294 = vmatpush1.msra.mxu0 %v2145
    %2295 = vmatprep.subr.mxu0 %v2151
    %2296 = vmatpush1.msra.mxu0 %v2150
    %2297 = vmatprep.subr.mxu0 %v2156
    %2298 = vmatpush1.msra.mxu0 %v2155
    %2299 = vmatprep.subr.mxu0 %v2161
    %2300 = vmatpush1.msra.mxu0 %v2160
    %2301 = vmatprep.subr.mxu0 %v2166
    %2302 = vmatpush1.msra.mxu0 %v2165
    %2303 = vmatprep.subr.mxu0 %v2171
    %2304 = vmatpush1.msra.mxu0 %v2170
    %2305 = vmatprep.subr.mxu0 %v2176
    %2306 = vmatpush1.msra.mxu0 %v2175
    %2307 = vmatprep.subr.mxu0 %v2181
    %2308 = vmatpush1.msra.mxu0 %v2180
    %2309 = vmatprep.subr.mxu0 %v2186
    %2310 = vmatpush1.msra.mxu0 %v2185
    %2311 = vmatprep.subr.mxu0 %v2191
    %2312 = vmatpush1.msra.mxu0 %v2190
    %2313 = vmatprep.subr.mxu0 %v2196
    %2314 = vmatpush1.msra.mxu0 %v2195
    %2315 = vmatprep.subr.mxu0 %v2201
    %2316 = vmatpush1.msra.mxu0 %v2200
    %2317 = vmatprep.subr.mxu0 %v2206
    %2318 = vmatpush1.msra.mxu0 %v2205
    %2319 = vmatprep.subr.mxu0 %v2211
    %2320 = vmatpush1.msra.mxu0 %v2210
    %2321 = vmatprep.subr.mxu0 %v2216
    %2322 = vmatpush1.msra.mxu0 %v2215
    %2323 = vmatprep.subr.mxu0 %v2221
    %2324 = vmatpush1.msra.mxu0 %v2220
    %2325 = vmatprep.subr.mxu0 %v2226
    %2326 = vmatpush1.msra.mxu0 %v2225
    %2327 = vmatprep.subr.mxu0 %v2231
    %2328 = vmatpush1.msra.mxu0 %v2230
    %2329 = vmatprep.subr.mxu0 %v2236
    %2330 = vmatpush1.msra.mxu0 %v2235
    %2331 = vmatprep.subr.mxu0 %v2241
    %2332 = vmatpush1.msra.mxu0 %v2240
    %2333 = vmatprep.subr.mxu0 %v2246
    %2334 = vmatpush1.msra.mxu0 %v2245
    %2335 = vmatprep.subr.mxu0 %v2251
    %2336 = vmatpush1.msra.mxu0 %v2250
    %2337 = vmatprep.subr.mxu0 %v2256
    %2338 = vmatpush1.msra.mxu0 %v2255
    %2339 = vmatprep.subr.mxu0 %v2261
    %2340 = vmatpush1.msra.mxu0 %v2260
    %2341 = vmatprep.subr.mxu0 %v2266
    %2342 = vmatpush1.msra.mxu0 %v2265
    %2343 = vmatprep.subr.mxu0 %v2271
    %2344 = vmatpush1.msra.mxu0 %v2270
    %2345 = vmatprep.subr.mxu0 %v2276
    %2346 = vmatpush1.msra.mxu0 %v2275
    %2347 = vmatprep.subr.mxu0 %v2281
    %2348 = vmatpush1.msra.mxu0 %v2280
    %2349 = vmatprep.mubr.f32.mxu0 %v2119
    %2350 = vmatmul.mubr.f32.gmra.mrb[0].mxu0 %v2121
    %v2351 = vpop.f32.mrb[0].mxu0
    %v2352 = vadd.f32 0.0, %v2351
    %v2353 = vpop.f32.mrb[0].mxu0
    %v2354 = vadd.f32 0.0, %v2353
    %2355 = vdwg.mxu0
    %2356 = vmatprep.subr.mxu0 %v2128
    %2357 = vmatpush1.msra.mxu0 %v2127
    %2358 = vmatprep.subr.mxu0 %v2133
    %2359 = vmatpush1.msra.mxu0 %v2132
    %2360 = vmatprep.subr.mxu0 %v2138
    %2361 = vmatpush1.msra.mxu0 %v2137
    %2362 = vmatprep.subr.mxu0 %v2143
    %2363 = vmatpush1.msra.mxu0 %v2142
    %2364 = vmatprep.subr.mxu0 %v2148
    %2365 = vmatpush1.msra.mxu0 %v2147
    %2366 = vmatprep.subr.mxu0 %v2153
    %2367 = vmatpush1.msra.mxu0 %v2152
    %2368 = vmatprep.subr.mxu0 %v2158
    %2369 = vmatpush1.msra.mxu0 %v2157
    %2370 = vmatprep.subr.mxu0 %v2163
    %2371 = vmatpush1.msra.mxu0 %v2162
    %2372 = vmatprep.subr.mxu0 %v2168
    %2373 = vmatpush1.msra.mxu0 %v2167
    %2374 = vmatprep.subr.mxu0 %v2173
    %2375 = vmatpush1.msra.mxu0 %v2172
    %2376 = vmatprep.subr.mxu0 %v2178
    %2377 = vmatpush1.msra.mxu0 %v2177
    %2378 = vmatprep.subr.mxu0 %v2183
    %2379 = vmatpush1.msra.mxu0 %v2182
    %2380 = vmatprep.subr.mxu0 %v2188
    %2381 = vmatpush1.msra.mxu0 %v2187
    %2382 = vmatprep.subr.mxu0 %v2193
    %2383 = vmatpush1.msra.mxu0 %v2192
    %2384 = vmatprep.subr.mxu0 %v2198
    %2385 = vmatpush1.msra.mxu0 %v2197
    %2386 = vmatprep.subr.mxu0 %v2203
    %2387 = vmatpush1.msra.mxu0 %v2202
    %2388 = vmatprep.subr.mxu0 %v2208
    %2389 = vmatpush1.msra.mxu0 %v2207
    %2390 = vmatprep.subr.mxu0 %v2213
    %2391 = vmatpush1.msra.mxu0 %v2212
    %2392 = vmatprep.subr.mxu0 %v2218
    %2393 = vmatpush1.msra.mxu0 %v2217
    %2394 = vmatprep.subr.mxu0 %v2223
    %2395 = vmatpush1.msra.mxu0 %v2222
    %2396 = vmatprep.subr.mxu0 %v2228
    %2397 = vmatpush1.msra.mxu0 %v2227
    %2398 = vmatprep.subr.mxu0 %v2233
    %2399 = vmatpush1.msra.mxu0 %v2232
    %2400 = vmatprep.subr.mxu0 %v2238
    %2401 = vmatpush1.msra.mxu0 %v2237
    %2402 = vmatprep.subr.mxu0 %v2243
    %2403 = vmatpush1.msra.mxu0 %v2242
    %2404 = vmatprep.subr.mxu0 %v2248
    %2405 = vmatpush1.msra.mxu0 %v2247
    %2406 = vmatprep.subr.mxu0 %v2253
    %2407 = vmatpush1.msra.mxu0 %v2252
    %2408 = vmatprep.subr.mxu0 %v2258
    %2409 = vmatpush1.msra.mxu0 %v2257
    %2410 = vmatprep.subr.mxu0 %v2263
    %2411 = vmatpush1.msra.mxu0 %v2262
    %2412 = vmatprep.subr.mxu0 %v2268
    %2413 = vmatpush1.msra.mxu0 %v2267
    %2414 = vmatprep.subr.mxu0 %v2273
    %2415 = vmatpush1.msra.mxu0 %v2272
    %2416 = vmatprep.subr.mxu0 %v2278
    %2417 = vmatpush1.msra.mxu0 %v2277
    %2418 = vmatprep.subr.mxu0 %v2283
    %2419 = vmatpush1.msra.mxu0 %v2282
    %2420 = vmatprep.mubr.f32.mxu0 %v2119
    %2421 = vmatmul.mubr.f32.gmra.mrb[0].mxu0 %v2121
    %v2422 = vpop.f32.mrb[0].mxu0
    %v2423 = vadd.f32 0.0, %v2422
    %v2424 = vpop.f32.mrb[0].mxu0
    %v2425 = vadd.f32 0.0, %v2424
    %2426 = vdwg.mxu0
    %2427 = vmatprep.subr.mxu0 0.0
    %2428 = vmatpush1.msra.mxu0 %v2129
    %2429 = vmatprep.subr.mxu0 0.0
    %2430 = vmatpush1.msra.mxu0 %v2134
    %2431 = vmatprep.subr.mxu0 0.0
    %2432 = vmatpush1.msra.mxu0 %v2139
    %2433 = vmatprep.subr.mxu0 0.0
    %2434 = vmatpush1.msra.mxu0 %v2144
    %2435 = vmatprep.subr.mxu0 0.0
    %2436 = vmatpush1.msra.mxu0 %v2149
    %2437 = vmatprep.subr.mxu0 0.0
    %2438 = vmatpush1.msra.mxu0 %v2154
    %2439 = vmatprep.subr.mxu0 0.0
    %2440 = vmatpush1.msra.mxu0 %v2159
    %2441 = vmatprep.subr.mxu0 0.0
    %2442 = vmatpush1.msra.mxu0 %v2164
    %2443 = vmatprep.subr.mxu0 0.0
    %2444 = vmatpush1.msra.mxu0 %v2169
    %2445 = vmatprep.subr.mxu0 0.0
    %2446 = vmatpush1.msra.mxu0 %v2174
    %2447 = vmatprep.subr.mxu0 0.0
    %2448 = vmatpush1.msra.mxu0 %v2179
    %2449 = vmatprep.subr.mxu0 0.0
    %2450 = vmatpush1.msra.mxu0 %v2184
    %2451 = vmatprep.subr.mxu0 0.0
    %2452 = vmatpush1.msra.mxu0 %v2189
    %2453 = vmatprep.subr.mxu0 0.0
    %2454 = vmatpush1.msra.mxu0 %v2194
    %2455 = vmatprep.subr.mxu0 0.0
    %2456 = vmatpush1.msra.mxu0 %v2199
    %2457 = vmatprep.subr.mxu0 0.0
    %2458 = vmatpush1.msra.mxu0 %v2204
    %2459 = vmatprep.subr.mxu0 0.0
    %2460 = vmatpush1.msra.mxu0 %v2209
    %2461 = vmatprep.subr.mxu0 0.0
    %2462 = vmatpush1.msra.mxu0 %v2214
    %2463 = vmatprep.subr.mxu0 0.0
    %2464 = vmatpush1.msra.mxu0 %v2219
    %2465 = vmatprep.subr.mxu0 0.0
    %2466 = vmatpush1.msra.mxu0 %v2224
    %2467 = vmatprep.subr.mxu0 0.0
    %2468 = vmatpush1.msra.mxu0 %v2229
    %2469 = vmatprep.subr.mxu0 0.0
    %2470 = vmatpush1.msra.mxu0 %v2234
    %2471 = vmatprep.subr.mxu0 0.0
    %2472 = vmatpush1.msra.mxu0 %v2239
    %2473 = vmatprep.subr.mxu0 0.0
    %2474 = vmatpush1.msra.mxu0 %v2244
    %2475 = vmatprep.subr.mxu0 0.0
    %2476 = vmatpush1.msra.mxu0 %v2249
    %2477 = vmatprep.subr.mxu0 0.0
    %2478 = vmatpush1.msra.mxu0 %v2254
    %2479 = vmatprep.subr.mxu0 0.0
    %2480 = vmatpush1.msra.mxu0 %v2259
    %2481 = vmatprep.subr.mxu0 0.0
    %2482 = vmatpush1.msra.mxu0 %v2264
    %2483 = vmatprep.subr.mxu0 0.0
    %2484 = vmatpush1.msra.mxu0 %v2269
    %2485 = vmatprep.subr.mxu0 0.0
    %2486 = vmatpush1.msra.mxu0 %v2274
    %2487 = vmatprep.subr.mxu0 0.0
    %2488 = vmatpush1.msra.mxu0 %v2279
    %2489 = vmatprep.subr.mxu0 0.0
    %2490 = vmatpush1.msra.mxu0 %v2284
    %2491 = vmatprep.mubr.f32.mxu0 %v2119
    %2492 = vmatmul.mubr.f32.gmra.mrb[0].mxu0 %v2121
    %v2493 = vpop.f32.mrb[0].mxu0
    %v2494 = vadd.f32 0.0, %v2493
    %v2495 = vpop.f32.mrb[0].mxu0
    %2496 = vdwg.mxu0
    %v2497 = vadd.f32 %v2494, %v809
    %v2498 = vtanh.pop %v2497
    %2500 = vset.pattern.permute.xlu0 0
    %2501 = vperm.xlu0 %2500, %v426
    %v2502 = vpop.permute.xlu0 %2501
    %v2504 = vmul.f32 %v2498, %v2502
    %v2505 = vadd.f32 %v2119, %v2504
    %s2506 = scalar_lea.vmem [#allocation2], 128
    %v2507 = vld [vmem:[%s2506] sm:$0xff]
    %v2508 = vld [vmem:[%s2506 + $0x8] sm:$0xff]
    %v2509 = vld [vmem:[%s2506 + $0x10] sm:$0xff]
    %v2510 = vld [vmem:[%s2506 + $0x18] sm:$0xff]
    %v2511 = vadd.f32 %v2352, %v2507
    %v2512 = vadd.f32 %v2354, %v2508
    %v2513 = vadd.f32 %v2423, %v2509
    %v2514 = vadd.f32 %v2425, %v2510
    %v2515 = vxor.u32 %v2511, 2147483648
    %v2516 = vxor.u32 %v2512, 2147483648
    %v2517 = vxor.u32 %v2513, 2147483648
    %v2518 = vxor.u32 %v2514, 2147483648
    %v2519 = vmul.f32 %v2515, 1.442695
    %v2520 = vpow.pop %v2519
    %v2521 = vmul.f32 %v2516, 1.442695
    %v2522 = vpow.pop %v2521
    %v2523 = vmul.f32 %v2517, 1.442695
    %v2524 = vpow.pop %v2523
    %v2525 = vmul.f32 %v2518, 1.442695
    %v2526 = vpow.pop %v2525
    %v2527 = vadd.f32 %v2520, 1.0
    %v2528 = vadd.f32 %v2522, 1.0
    %v2529 = vadd.f32 %v2524, 1.0
    %v2530 = vadd.f32 %v2526, 1.0
    %v2531 = vrcp.pop %v2527
    %v2532 = vmul.f32 1.0, %v2531
    %v2533 = vrcp.pop %v2528
    %v2534 = vmul.f32 1.0, %v2533
    %v2535 = vrcp.pop %v2529
    %v2536 = vmul.f32 1.0, %v2535
    %v2537 = vrcp.pop %v2530
    %v2538 = vmul.f32 1.0, %v2537
    %v2539 = vmul.f32 %v2532, %v2505
    %v2540 = vmul.f32 %v2534, %v2538
    %v2541 = vadd.f32 %v2539, %v2540
    %v2542 = vtanh.pop %v2541
    %v2543 = vmul.f32 %v2536, %v2542
    %s2544 = scalar_lea.vmem [#allocation10], 32
    %2545 = vst [vmem:[%s2544] sm:$0xff] %v2543
    %v2546 = vadd.f32 %v2124, %v2543
    %v2547 = vld [vmem:[#allocation5] sm:$0xff]
    %v2548 = vld [vmem:[#allocation5 + $0x8] sm:$0xff]
    %v2549 = vld [vmem:[#allocation5 + $0x10] sm:$0xff]
    %v2550 = vld [vmem:[#allocation5 + $0x18] sm:$0xff]
    %v2551 = vld [vmem:[#allocation5 + $0x20] sm:$0xff]
    %v2552 = vld [vmem:[#allocation5 + $0x28] sm:$0xff]
    %v2553 = vld [vmem:[#allocation5 + $0x30] sm:$0xff]
    %v2554 = vld [vmem:[#allocation5 + $0x38] sm:$0xff]
    %v2555 = vld [vmem:[#allocation5 + $0x40] sm:$0xff]
    %v2556 = vld [vmem:[#allocation5 + $0x48] sm:$0xff]
    %v2557 = vld [vmem:[#allocation5 + $0x50] sm:$0xff]
    %v2558 = vld [vmem:[#allocation5 + $0x58] sm:$0xff]
    %v2559 = vld [vmem:[#allocation5 + $0x60] sm:$0xff]
    %v2560 = vld [vmem:[#allocation5 + $0x68] sm:$0xff]
    %v2561 = vld [vmem:[#allocation5 + $0x70] sm:$0xff]
    %v2562 = vld [vmem:[#allocation5 + $0x78] sm:$0xff]
    %v2563 = vld [vmem:[#allocation5 + $0x80] sm:$0xff]
    %v2564 = vld [vmem:[#allocation5 + $0x88] sm:$0xff]
    %v2565 = vld [vmem:[#allocation5 + $0x90] sm:$0xff]
    %v2566 = vld [vmem:[#allocation5 + $0x98] sm:$0xff]
    %v2567 = vld [vmem:[#allocation5 + $0xa0] sm:$0xff]
    %v2568 = vld [vmem:[#allocation5 + $0xa8] sm:$0xff]
    %v2569 = vld [vmem:[#allocation5 + $0xb0] sm:$0xff]
    %v2570 = vld [vmem:[#allocation5 + $0xb8] sm:$0xff]
    %v2571 = vld [vmem:[#allocation5 + $0xc0] sm:$0xff]
    %v2572 = vld [vmem:[#allocation5 + $0xc8] sm:$0xff]
    %v2573 = vld [vmem:[#allocation5 + $0xd0] sm:$0xff]
    %v2574 = vld [vmem:[#allocation5 + $0xd8] sm:$0xff]
    %v2575 = vld [vmem:[#allocation5 + $0xe0] sm:$0xff]
    %v2576 = vld [vmem:[#allocation5 + $0xe8] sm:$0xff]
    %v2577 = vld [vmem:[#allocation5 + $0xf0] sm:$0xff]
    %v2578 = vld [vmem:[#allocation5 + $0xf8] sm:$0xff]
    %v2579 = vld [vmem:[#allocation5 + $0x100] sm:$0xff]
    %v2580 = vld [vmem:[#allocation5 + $0x108] sm:$0xff]
    %v2581 = vld [vmem:[#allocation5 + $0x110] sm:$0xff]
    %v2582 = vld [vmem:[#allocation5 + $0x118] sm:$0xff]
    %v2583 = vld [vmem:[#allocation5 + $0x120] sm:$0xff]
    %v2584 = vld [vmem:[#allocation5 + $0x128] sm:$0xff]
    %v2585 = vld [vmem:[#allocation5 + $0x130] sm:$0xff]
    %v2586 = vld [vmem:[#allocation5 + $0x138] sm:$0xff]
    %v2587 = vld [vmem:[#allocation5 + $0x140] sm:$0xff]
    %v2588 = vld [vmem:[#allocation5 + $0x148] sm:$0xff]
    %v2589 = vld [vmem:[#allocation5 + $0x150] sm:$0xff]
    %v2590 = vld [vmem:[#allocation5 + $0x158] sm:$0xff]
    %v2591 = vld [vmem:[#allocation5 + $0x160] sm:$0xff]
    %v2592 = vld [vmem:[#allocation5 + $0x168] sm:$0xff]
    %v2593 = vld [vmem:[#allocation5 + $0x170] sm:$0xff]
    %v2594 = vld [vmem:[#allocation5 + $0x178] sm:$0xff]
    %v2595 = vld [vmem:[#allocation5 + $0x180] sm:$0xff]
    %v2596 = vld [vmem:[#allocation5 + $0x188] sm:$0xff]
    %v2597 = vld [vmem:[#allocation5 + $0x190] sm:$0xff]
    %v2598 = vld [vmem:[#allocation5 + $0x198] sm:$0xff]
    %v2599 = vld [vmem:[#allocation5 + $0x1a0] sm:$0xff]
    %v2600 = vld [vmem:[#allocation5 + $0x1a8] sm:$0xff]
    %v2601 = vld [vmem:[#allocation5 + $0x1b0] sm:$0xff]
    %v2602 = vld [vmem:[#allocation5 + $0x1b8] sm:$0xff]
    %v2603 = vld [vmem:[#allocation5 + $0x1c0] sm:$0xff]
    %v2604 = vld [vmem:[#allocation5 + $0x1c8] sm:$0xff]
    %v2605 = vld [vmem:[#allocation5 + $0x1d0] sm:$0xff]
    %v2606 = vld [vmem:[#allocation5 + $0x1d8] sm:$0xff]
    %v2607 = vld [vmem:[#allocation5 + $0x1e0] sm:$0xff]
    %v2608 = vld [vmem:[#allocation5 + $0x1e8] sm:$0xff]
    %v2609 = vld [vmem:[#allocation5 + $0x1f0] sm:$0xff]
    %v2610 = vld [vmem:[#allocation5 + $0x1f8] sm:$0xff]
    %v2611 = vld [vmem:[#allocation5 + $0x200] sm:$0xff]
    %v2612 = vld [vmem:[#allocation5 + $0x208] sm:$0xff]
    %v2613 = vld [vmem:[#allocation5 + $0x210] sm:$0xff]
    %v2614 = vld [vmem:[#allocation5 + $0x218] sm:$0xff]
    %v2615 = vld [vmem:[#allocation5 + $0x220] sm:$0xff]
    %v2616 = vld [vmem:[#allocation5 + $0x228] sm:$0xff]
    %v2617 = vld [vmem:[#allocation5 + $0x230] sm:$0xff]
    %v2618 = vld [vmem:[#allocation5 + $0x238] sm:$0xff]
    %v2619 = vld [vmem:[#allocation5 + $0x240] sm:$0xff]
    %v2620 = vld [vmem:[#allocation5 + $0x248] sm:$0xff]
    %v2621 = vld [vmem:[#allocation5 + $0x250] sm:$0xff]
    %v2622 = vld [vmem:[#allocation5 + $0x258] sm:$0xff]
    %v2623 = vld [vmem:[#allocation5 + $0x260] sm:$0xff]
    %v2624 = vld [vmem:[#allocation5 + $0x268] sm:$0xff]
    %v2625 = vld [vmem:[#allocation5 + $0x270] sm:$0xff]
    %v2626 = vld [vmem:[#allocation5 + $0x278] sm:$0xff]
    %v2627 = vld [vmem:[#allocation5 + $0x280] sm:$0xff]
    %v2628 = vld [vmem:[#allocation5 + $0x288] sm:$0xff]
    %v2629 = vld [vmem:[#allocation5 + $0x290] sm:$0xff]
    %v2630 = vld [vmem:[#allocation5 + $0x298] sm:$0xff]
    %v2631 = vld [vmem:[#allocation5 + $0x2a0] sm:$0xff]
    %v2632 = vld [vmem:[#allocation5 + $0x2a8] sm:$0xff]
    %v2633 = vld [vmem:[#allocation5 + $0x2b0] sm:$0xff]
    %v2634 = vld [vmem:[#allocation5 + $0x2b8] sm:$0xff]
    %v2635 = vld [vmem:[#allocation5 + $0x2c0] sm:$0xff]
    %v2636 = vld [vmem:[#allocation5 + $0x2c8] sm:$0xff]
    %v2637 = vld [vmem:[#allocation5 + $0x2d0] sm:$0xff]
    %v2638 = vld [vmem:[#allocation5 + $0x2d8] sm:$0xff]
    %v2639 = vld [vmem:[#allocation5 + $0x2e0] sm:$0xff]
    %v2640 = vld [vmem:[#allocation5 + $0x2e8] sm:$0xff]
    %v2641 = vld [vmem:[#allocation5 + $0x2f0] sm:$0xff]
    %v2642 = vld [vmem:[#allocation5 + $0x2f8] sm:$0xff]
    %v2643 = vld [vmem:[#allocation5 + $0x300] sm:$0xff]
    %v2644 = vld [vmem:[#allocation5 + $0x308] sm:$0xff]
    %v2645 = vld [vmem:[#allocation5 + $0x310] sm:$0xff]
    %v2646 = vld [vmem:[#allocation5 + $0x318] sm:$0xff]
    %v2647 = vld [vmem:[#allocation5 + $0x320] sm:$0xff]
    %v2648 = vld [vmem:[#allocation5 + $0x328] sm:$0xff]
    %v2649 = vld [vmem:[#allocation5 + $0x330] sm:$0xff]
    %v2650 = vld [vmem:[#allocation5 + $0x338] sm:$0xff]
    %v2651 = vld [vmem:[#allocation5 + $0x340] sm:$0xff]
    %v2652 = vld [vmem:[#allocation5 + $0x348] sm:$0xff]
    %v2653 = vld [vmem:[#allocation5 + $0x350] sm:$0xff]
    %v2654 = vld [vmem:[#allocation5 + $0x358] sm:$0xff]
    %v2655 = vld [vmem:[#allocation5 + $0x360] sm:$0xff]
    %v2656 = vld [vmem:[#allocation5 + $0x368] sm:$0xff]
    %v2657 = vld [vmem:[#allocation5 + $0x370] sm:$0xff]
    %v2658 = vld [vmem:[#allocation5 + $0x378] sm:$0xff]
    %v2659 = vld [vmem:[#allocation5 + $0x380] sm:$0xff]
    %v2660 = vld [vmem:[#allocation5 + $0x388] sm:$0xff]
    %v2661 = vld [vmem:[#allocation5 + $0x390] sm:$0xff]
    %v2662 = vld [vmem:[#allocation5 + $0x398] sm:$0xff]
    %v2663 = vld [vmem:[#allocation5 + $0x3a0] sm:$0xff]
    %v2664 = vld [vmem:[#allocation5 + $0x3a8] sm:$0xff]
    %v2665 = vld [vmem:[#allocation5 + $0x3b0] sm:$0xff]
    %v2666 = vld [vmem:[#allocation5 + $0x3b8] sm:$0xff]
    %v2667 = vld [vmem:[#allocation5 + $0x3c0] sm:$0xff]
    %v2668 = vld [vmem:[#allocation5 + $0x3c8] sm:$0xff]
    %v2669 = vld [vmem:[#allocation5 + $0x3d0] sm:$0xff]
    %v2670 = vld [vmem:[#allocation5 + $0x3d8] sm:$0xff]
    %v2671 = vld [vmem:[#allocation5 + $0x3e0] sm:$0xff]
    %v2672 = vld [vmem:[#allocation5 + $0x3e8] sm:$0xff]
    %v2673 = vld [vmem:[#allocation5 + $0x3f0] sm:$0xff]
    %v2674 = vld [vmem:[#allocation5 + $0x3f8] sm:$0xff]
    %v2675 = vld [vmem:[#allocation5 + $0x400] sm:$0xff]
    %v2676 = vld [vmem:[#allocation5 + $0x408] sm:$0xff]
    %v2677 = vld [vmem:[#allocation5 + $0x410] sm:$0xff]
    %v2678 = vld [vmem:[#allocation5 + $0x418] sm:$0xff]
    %v2679 = vld [vmem:[#allocation5 + $0x420] sm:$0xff]
    %v2680 = vld [vmem:[#allocation5 + $0x428] sm:$0xff]
    %v2681 = vld [vmem:[#allocation5 + $0x430] sm:$0xff]
    %v2682 = vld [vmem:[#allocation5 + $0x438] sm:$0xff]
    %v2683 = vld [vmem:[#allocation5 + $0x440] sm:$0xff]
    %v2684 = vld [vmem:[#allocation5 + $0x448] sm:$0xff]
    %v2685 = vld [vmem:[#allocation5 + $0x450] sm:$0xff]
    %v2686 = vld [vmem:[#allocation5 + $0x458] sm:$0xff]
    %v2687 = vld [vmem:[#allocation5 + $0x460] sm:$0xff]
    %v2688 = vld [vmem:[#allocation5 + $0x468] sm:$0xff]
    %v2689 = vld [vmem:[#allocation5 + $0x470] sm:$0xff]
    %v2690 = vld [vmem:[#allocation5 + $0x478] sm:$0xff]
    %v2691 = vld [vmem:[#allocation5 + $0x480] sm:$0xff]
    %v2692 = vld [vmem:[#allocation5 + $0x488] sm:$0xff]
    %v2693 = vld [vmem:[#allocation5 + $0x490] sm:$0xff]
    %v2694 = vld [vmem:[#allocation5 + $0x498] sm:$0xff]
    %v2695 = vld [vmem:[#allocation5 + $0x4a0] sm:$0xff]
    %v2696 = vld [vmem:[#allocation5 + $0x4a8] sm:$0xff]
    %v2697 = vld [vmem:[#allocation5 + $0x4b0] sm:$0xff]
    %v2698 = vld [vmem:[#allocation5 + $0x4b8] sm:$0xff]
    %v2699 = vld [vmem:[#allocation5 + $0x4c0] sm:$0xff]
    %v2700 = vld [vmem:[#allocation5 + $0x4c8] sm:$0xff]
    %v2701 = vld [vmem:[#allocation5 + $0x4d0] sm:$0xff]
    %v2702 = vld [vmem:[#allocation5 + $0x4d8] sm:$0xff]
    %v2703 = vld [vmem:[#allocation5 + $0x4e0] sm:$0xff]
    %v2704 = vld [vmem:[#allocation5 + $0x4e8] sm:$0xff]
    %v2705 = vld [vmem:[#allocation5 + $0x4f0] sm:$0xff]
    %v2706 = vld [vmem:[#allocation5 + $0x4f8] sm:$0xff]
    %2707 = vmatprep.subr.mxu0 %v2548
    %2708 = vmatpush1.msra.mxu0 %v2547
    %2709 = vmatprep.subr.mxu0 %v2553
    %2710 = vmatpush1.msra.mxu0 %v2552
    %2711 = vmatprep.subr.mxu0 %v2558
    %2712 = vmatpush1.msra.mxu0 %v2557
    %2713 = vmatprep.subr.mxu0 %v2563
    %2714 = vmatpush1.msra.mxu0 %v2562
    %2715 = vmatprep.subr.mxu0 %v2568
    %2716 = vmatpush1.msra.mxu0 %v2567
    %2717 = vmatprep.subr.mxu0 %v2573
    %2718 = vmatpush1.msra.mxu0 %v2572
    %2719 = vmatprep.subr.mxu0 %v2578
    %2720 = vmatpush1.msra.mxu0 %v2577
    %2721 = vmatprep.subr.mxu0 %v2583
    %2722 = vmatpush1.msra.mxu0 %v2582
    %2723 = vmatprep.subr.mxu0 %v2588
    %2724 = vmatpush1.msra.mxu0 %v2587
    %2725 = vmatprep.subr.mxu0 %v2593
    %2726 = vmatpush1.msra.mxu0 %v2592
    %2727 = vmatprep.subr.mxu0 %v2598
    %2728 = vmatpush1.msra.mxu0 %v2597
    %2729 = vmatprep.subr.mxu0 %v2603
    %2730 = vmatpush1.msra.mxu0 %v2602
    %2731 = vmatprep.subr.mxu0 %v2608
    %2732 = vmatpush1.msra.mxu0 %v2607
    %2733 = vmatprep.subr.mxu0 %v2613
    %2734 = vmatpush1.msra.mxu0 %v2612
    %2735 = vmatprep.subr.mxu0 %v2618
    %2736 = vmatpush1.msra.mxu0 %v2617
    %2737 = vmatprep.subr.mxu0 %v2623
    %2738 = vmatpush1.msra.mxu0 %v2622
    %2739 = vmatprep.subr.mxu0 %v2628
    %2740 = vmatpush1.msra.mxu0 %v2627
    %2741 = vmatprep.subr.mxu0 %v2633
    %2742 = vmatpush1.msra.mxu0 %v2632
    %2743 = vmatprep.subr.mxu0 %v2638
    %2744 = vmatpush1.msra.mxu0 %v2637
    %2745 = vmatprep.subr.mxu0 %v2643
    %2746 = vmatpush1.msra.mxu0 %v2642
    %2747 = vmatprep.subr.mxu0 %v2648
    %2748 = vmatpush1.msra.mxu0 %v2647
    %2749 = vmatprep.subr.mxu0 %v2653
    %2750 = vmatpush1.msra.mxu0 %v2652
    %2751 = vmatprep.subr.mxu0 %v2658
    %2752 = vmatpush1.msra.mxu0 %v2657
    %2753 = vmatprep.subr.mxu0 %v2663
    %2754 = vmatpush1.msra.mxu0 %v2662
    %2755 = vmatprep.subr.mxu0 %v2668
    %2756 = vmatpush1.msra.mxu0 %v2667
    %2757 = vmatprep.subr.mxu0 %v2673
    %2758 = vmatpush1.msra.mxu0 %v2672
    %2759 = vmatprep.subr.mxu0 %v2678
    %2760 = vmatpush1.msra.mxu0 %v2677
    %2761 = vmatprep.subr.mxu0 %v2683
    %2762 = vmatpush1.msra.mxu0 %v2682
    %2763 = vmatprep.subr.mxu0 %v2688
    %2764 = vmatpush1.msra.mxu0 %v2687
    %2765 = vmatprep.subr.mxu0 %v2693
    %2766 = vmatpush1.msra.mxu0 %v2692
    %2767 = vmatprep.subr.mxu0 %v2698
    %2768 = vmatpush1.msra.mxu0 %v2697
    %2769 = vmatprep.subr.mxu0 %v2703
    %2770 = vmatpush1.msra.mxu0 %v2702
    %2771 = vmatprep.mubr.f32.mxu0 %v2541
    %2772 = vmatmul.mubr.f32.gmra.mrb[0].mxu0 %v2543
    %v2773 = vpop.f32.mrb[0].mxu0
    %v2774 = vadd.f32 0.0, %v2773
    %v2775 = vpop.f32.mrb[0].mxu0
    %v2776 = vadd.f32 0.0, %v2775
    %2777 = vdwg.mxu0
    %2778 = vmatprep.subr.mxu0 %v2550
    %2779 = vmatpush1.msra.mxu0 %v2549
    %2780 = vmatprep.subr.mxu0 %v2555
    %2781 = vmatpush1.msra.mxu0 %v2554
    %2782 = vmatprep.subr.mxu0 %v2560
    %2783 = vmatpush1.msra.mxu0 %v2559
    %2784 = vmatprep.subr.mxu0 %v2565
    %2785 = vmatpush1.msra.mxu0 %v2564
    %2786 = vmatprep.subr.mxu0 %v2570
    %2787 = vmatpush1.msra.mxu0 %v2569
    %2788 = vmatprep.subr.mxu0 %v2575
    %2789 = vmatpush1.msra.mxu0 %v2574
    %2790 = vmatprep.subr.mxu0 %v2580
    %2791 = vmatpush1.msra.mxu0 %v2579
    %2792 = vmatprep.subr.mxu0 %v2585
    %2793 = vmatpush1.msra.mxu0 %v2584
    %2794 = vmatprep.subr.mxu0 %v2590
    %2795 = vmatpush1.msra.mxu0 %v2589
    %2796 = vmatprep.subr.mxu0 %v2595
    %2797 = vmatpush1.msra.mxu0 %v2594
    %2798 = vmatprep.subr.mxu0 %v2600
    %2799 = vmatpush1.msra.mxu0 %v2599
    %2800 = vmatprep.subr.mxu0 %v2605
    %2801 = vmatpush1.msra.mxu0 %v2604
    %2802 = vmatprep.subr.mxu0 %v2610
    %2803 = vmatpush1.msra.mxu0 %v2609
    %2804 = vmatprep.subr.mxu0 %v2615
    %2805 = vmatpush1.msra.mxu0 %v2614
    %2806 = vmatprep.subr.mxu0 %v2620
    %2807 = vmatpush1.msra.mxu0 %v2619
    %2808 = vmatprep.subr.mxu0 %v2625
    %2809 = vmatpush1.msra.mxu0 %v2624
    %2810 = vmatprep.subr.mxu0 %v2630
    %2811 = vmatpush1.msra.mxu0 %v2629
    %2812 = vmatprep.subr.mxu0 %v2635
    %2813 = vmatpush1.msra.mxu0 %v2634
    %2814 = vmatprep.subr.mxu0 %v2640
    %2815 = vmatpush1.msra.mxu0 %v2639
    %2816 = vmatprep.subr.mxu0 %v2645
    %2817 = vmatpush1.msra.mxu0 %v2644
    %2818 = vmatprep.subr.mxu0 %v2650
    %2819 = vmatpush1.msra.mxu0 %v2649
    %2820 = vmatprep.subr.mxu0 %v2655
    %2821 = vmatpush1.msra.mxu0 %v2654
    %2822 = vmatprep.subr.mxu0 %v2660
    %2823 = vmatpush1.msra.mxu0 %v2659
    %2824 = vmatprep.subr.mxu0 %v2665
    %2825 = vmatpush1.msra.mxu0 %v2664
    %2826 = vmatprep.subr.mxu0 %v2670
    %2827 = vmatpush1.msra.mxu0 %v2669
    %2828 = vmatprep.subr.mxu0 %v2675
    %2829 = vmatpush1.msra.mxu0 %v2674
    %2830 = vmatprep.subr.mxu0 %v2680
    %2831 = vmatpush1.msra.mxu0 %v2679
    %2832 = vmatprep.subr.mxu0 %v2685
    %2833 = vmatpush1.msra.mxu0 %v2684
    %2834 = vmatprep.subr.mxu0 %v2690
    %2835 = vmatpush1.msra.mxu0 %v2689
    %2836 = vmatprep.subr.mxu0 %v2695
    %2837 = vmatpush1.msra.mxu0 %v2694
    %2838 = vmatprep.subr.mxu0 %v2700
    %2839 = vmatpush1.msra.mxu0 %v2699
    %2840 = vmatprep.subr.mxu0 %v2705
    %2841 = vmatpush1.msra.mxu0 %v2704
    %2842 = vmatprep.mubr.f32.mxu0 %v2541
    %2843 = vmatmul.mubr.f32.gmra.mrb[0].mxu0 %v2543
    %v2844 = vpop.f32.mrb[0].mxu0
    %v2845 = vadd.f32 0.0, %v2844
    %v2846 = vpop.f32.mrb[0].mxu0
    %v2847 = vadd.f32 0.0, %v2846
    %2848 = vdwg.mxu0
    %2849 = vmatprep.subr.mxu0 0.0
    %2850 = vmatpush1.msra.mxu0 %v2551
    %2851 = vmatprep.subr.mxu0 0.0
    %2852 = vmatpush1.msra.mxu0 %v2556
    %2853 = vmatprep.subr.mxu0 0.0
    %2854 = vmatpush1.msra.mxu0 %v2561
    %2855 = vmatprep.subr.mxu0 0.0
    %2856 = vmatpush1.msra.mxu0 %v2566
    %2857 = vmatprep.subr.mxu0 0.0
    %2858 = vmatpush1.msra.mxu0 %v2571
    %2859 = vmatprep.subr.mxu0 0.0
    %2860 = vmatpush1.msra.mxu0 %v2576
    %2861 = vmatprep.subr.mxu0 0.0
    %2862 = vmatpush1.msra.mxu0 %v2581
    %2863 = vmatprep.subr.mxu0 0.0
    %2864 = vmatpush1.msra.mxu0 %v2586
    %2865 = vmatprep.subr.mxu0 0.0
    %2866 = vmatpush1.msra.mxu0 %v2591
    %2867 = vmatprep.subr.mxu0 0.0
    %2868 = vmatpush1.msra.mxu0 %v2596
    %2869 = vmatprep.subr.mxu0 0.0
    %2870 = vmatpush1.msra.mxu0 %v2601
    %2871 = vmatprep.subr.mxu0 0.0
    %2872 = vmatpush1.msra.mxu0 %v2606
    %2873 = vmatprep.subr.mxu0 0.0
    %2874 = vmatpush1.msra.mxu0 %v2611
    %2875 = vmatprep.subr.mxu0 0.0
    %2876 = vmatpush1.msra.mxu0 %v2616
    %2877 = vmatprep.subr.mxu0 0.0
    %2878 = vmatpush1.msra.mxu0 %v2621
    %2879 = vmatprep.subr.mxu0 0.0
    %2880 = vmatpush1.msra.mxu0 %v2626
    %2881 = vmatprep.subr.mxu0 0.0
    %2882 = vmatpush1.msra.mxu0 %v2631
    %2883 = vmatprep.subr.mxu0 0.0
    %2884 = vmatpush1.msra.mxu0 %v2636
    %2885 = vmatprep.subr.mxu0 0.0
    %2886 = vmatpush1.msra.mxu0 %v2641
    %2887 = vmatprep.subr.mxu0 0.0
    %2888 = vmatpush1.msra.mxu0 %v2646
    %2889 = vmatprep.subr.mxu0 0.0
    %2890 = vmatpush1.msra.mxu0 %v2651
    %2891 = vmatprep.subr.mxu0 0.0
    %2892 = vmatpush1.msra.mxu0 %v2656
    %2893 = vmatprep.subr.mxu0 0.0
    %2894 = vmatpush1.msra.mxu0 %v2661
    %2895 = vmatprep.subr.mxu0 0.0
    %2896 = vmatpush1.msra.mxu0 %v2666
    %2897 = vmatprep.subr.mxu0 0.0
    %2898 = vmatpush1.msra.mxu0 %v2671
    %2899 = vmatprep.subr.mxu0 0.0
    %2900 = vmatpush1.msra.mxu0 %v2676
    %2901 = vmatprep.subr.mxu0 0.0
    %2902 = vmatpush1.msra.mxu0 %v2681
    %2903 = vmatprep.subr.mxu0 0.0
    %2904 = vmatpush1.msra.mxu0 %v2686
    %2905 = vmatprep.subr.mxu0 0.0
    %2906 = vmatpush1.msra.mxu0 %v2691
    %2907 = vmatprep.subr.mxu0 0.0
    %2908 = vmatpush1.msra.mxu0 %v2696
    %2909 = vmatprep.subr.mxu0 0.0
    %2910 = vmatpush1.msra.mxu0 %v2701
    %2911 = vmatprep.subr.mxu0 0.0
    %2912 = vmatpush1.msra.mxu0 %v2706
    %2913 = vmatprep.mubr.f32.mxu0 %v2541
    %2914 = vmatmul.mubr.f32.gmra.mrb[0].mxu0 %v2543
    %v2915 = vpop.f32.mrb[0].mxu0
    %v2916 = vadd.f32 0.0, %v2915
    %v2917 = vpop.f32.mrb[0].mxu0
    %2918 = vdwg.mxu0
    %v2919 = vadd.f32 %v2916, %v809
    %v2920 = vtanh.pop %v2919
    %2922 = vset.pattern.permute.xlu0 0
    %2923 = vperm.xlu0 %2922, %v427
    %v2924 = vpop.permute.xlu0 %2923
    %v2926 = vmul.f32 %v2920, %v2924
    %v2927 = vadd.f32 %v2541, %v2926
    %s2928 = scalar_lea.vmem [#allocation2], 160
    %v2929 = vld [vmem:[%s2928] sm:$0xff]
    %v2930 = vld [vmem:[%s2928 + $0x8] sm:$0xff]
    %v2931 = vld [vmem:[%s2928 + $0x10] sm:$0xff]
    %v2932 = vld [vmem:[%s2928 + $0x18] sm:$0xff]
    %v2933 = vadd.f32 %v2774, %v2929
    %v2934 = vadd.f32 %v2776, %v2930
    %v2935 = vadd.f32 %v2845, %v2931
    %v2936 = vadd.f32 %v2847, %v2932
    %v2937 = vxor.u32 %v2933, 2147483648
    %v2938 = vxor.u32 %v2934, 2147483648
    %v2939 = vxor.u32 %v2935, 2147483648
    %v2940 = vxor.u32 %v2936, 2147483648
    %v2941 = vmul.f32 %v2937, 1.442695
    %v2942 = vpow.pop %v2941
    %v2943 = vmul.f32 %v2938, 1.442695
    %v2944 = vpow.pop %v2943
    %v2945 = vmul.f32 %v2939, 1.442695
    %v2946 = vpow.pop %v2945
    %v2947 = vmul.f32 %v2940, 1.442695
    %v2948 = vpow.pop %v2947
    %v2949 = vadd.f32 %v2942, 1.0
    %v2950 = vadd.f32 %v2944, 1.0
    %v2951 = vadd.f32 %v2946, 1.0
    %v2952 = vadd.f32 %v2948, 1.0
    %v2953 = vrcp.pop %v2949
    %v2954 = vmul.f32 1.0, %v2953
    %v2955 = vrcp.pop %v2950
    %v2956 = vmul.f32 1.0, %v2955
    %v2957 = vrcp.pop %v2951
    %v2958 = vmul.f32 1.0, %v2957
    %v2959 = vrcp.pop %v2952
    %v2960 = vmul.f32 1.0, %v2959
    %v2961 = vmul.f32 %v2954, %v2927
    %v2962 = vmul.f32 %v2956, %v2960
    %v2963 = vadd.f32 %v2961, %v2962
    %v2964 = vtanh.pop %v2963
    %v2965 = vmul.f32 %v2958, %v2964
    %s2966 = scalar_lea.vmem [#allocation10], 40
    %2967 = vst [vmem:[%s2966] sm:$0xff] %v2965
    %v2968 = vadd.f32 %v2546, %v2965
    %v2969 = vld [vmem:[#allocation5] sm:$0xff]
    %v2970 = vld [vmem:[#allocation5 + $0x8] sm:$0xff]
    %v2971 = vld [vmem:[#allocation5 + $0x10] sm:$0xff]
    %v2972 = vld [vmem:[#allocation5 + $0x18] sm:$0xff]
    %v2973 = vld [vmem:[#allocation5 + $0x20] sm:$0xff]
    %v2974 = vld [vmem:[#allocation5 + $0x28] sm:$0xff]
    %v2975 = vld [vmem:[#allocation5 + $0x30] sm:$0xff]
    %v2976 = vld [vmem:[#allocation5 + $0x38] sm:$0xff]
    %v2977 = vld [vmem:[#allocation5 + $0x40] sm:$0xff]
    %v2978 = vld [vmem:[#allocation5 + $0x48] sm:$0xff]
    %v2979 = vld [vmem:[#allocation5 + $0x50] sm:$0xff]
    %v2980 = vld [vmem:[#allocation5 + $0x58] sm:$0xff]
    %v2981 = vld [vmem:[#allocation5 + $0x60] sm:$0xff]
    %v2982 = vld [vmem:[#allocation5 + $0x68] sm:$0xff]
    %v2983 = vld [vmem:[#allocation5 + $0x70] sm:$0xff]
    %v2984 = vld [vmem:[#allocation5 + $0x78] sm:$0xff]
    %v2985 = vld [vmem:[#allocation5 + $0x80] sm:$0xff]
    %v2986 = vld [vmem:[#allocation5 + $0x88] sm:$0xff]
    %v2987 = vld [vmem:[#allocation5 + $0x90] sm:$0xff]
    %v2988 = vld [vmem:[#allocation5 + $0x98] sm:$0xff]
    %v2989 = vld [vmem:[#allocation5 + $0xa0] sm:$0xff]
    %v2990 = vld [vmem:[#allocation5 + $0xa8] sm:$0xff]
    %v2991 = vld [vmem:[#allocation5 + $0xb0] sm:$0xff]
    %v2992 = vld [vmem:[#allocation5 + $0xb8] sm:$0xff]
    %v2993 = vld [vmem:[#allocation5 + $0xc0] sm:$0xff]
    %v2994 = vld [vmem:[#allocation5 + $0xc8] sm:$0xff]
    %v2995 = vld [vmem:[#allocation5 + $0xd0] sm:$0xff]
    %v2996 = vld [vmem:[#allocation5 + $0xd8] sm:$0xff]
    %v2997 = vld [vmem:[#allocation5 + $0xe0] sm:$0xff]
    %v2998 = vld [vmem:[#allocation5 + $0xe8] sm:$0xff]
    %v2999 = vld [vmem:[#allocation5 + $0xf0] sm:$0xff]
    %v3000 = vld [vmem:[#allocation5 + $0xf8] sm:$0xff]
    %v3001 = vld [vmem:[#allocation5 + $0x100] sm:$0xff]
    %v3002 = vld [vmem:[#allocation5 + $0x108] sm:$0xff]
    %v3003 = vld [vmem:[#allocation5 + $0x110] sm:$0xff]
    %v3004 = vld [vmem:[#allocation5 + $0x118] sm:$0xff]
    %v3005 = vld [vmem:[#allocation5 + $0x120] sm:$0xff]
    %v3006 = vld [vmem:[#allocation5 + $0x128] sm:$0xff]
    %v3007 = vld [vmem:[#allocation5 + $0x130] sm:$0xff]
    %v3008 = vld [vmem:[#allocation5 + $0x138] sm:$0xff]
    %v3009 = vld [vmem:[#allocation5 + $0x140] sm:$0xff]
    %v3010 = vld [vmem:[#allocation5 + $0x148] sm:$0xff]
    %v3011 = vld [vmem:[#allocation5 + $0x150] sm:$0xff]
    %v3012 = vld [vmem:[#allocation5 + $0x158] sm:$0xff]
    %v3013 = vld [vmem:[#allocation5 + $0x160] sm:$0xff]
    %v3014 = vld [vmem:[#allocation5 + $0x168] sm:$0xff]
    %v3015 = vld [vmem:[#allocation5 + $0x170] sm:$0xff]
    %v3016 = vld [vmem:[#allocation5 + $0x178] sm:$0xff]
    %v3017 = vld [vmem:[#allocation5 + $0x180] sm:$0xff]
    %v3018 = vld [vmem:[#allocation5 + $0x188] sm:$0xff]
    %v3019 = vld [vmem:[#allocation5 + $0x190] sm:$0xff]
    %v3020 = vld [vmem:[#allocation5 + $0x198] sm:$0xff]
    %v3021 = vld [vmem:[#allocation5 + $0x1a0] sm:$0xff]
    %v3022 = vld [vmem:[#allocation5 + $0x1a8] sm:$0xff]
    %v3023 = vld [vmem:[#allocation5 + $0x1b0] sm:$0xff]
    %v3024 = vld [vmem:[#allocation5 + $0x1b8] sm:$0xff]
    %v3025 = vld [vmem:[#allocation5 + $0x1c0] sm:$0xff]
    %v3026 = vld [vmem:[#allocation5 + $0x1c8] sm:$0xff]
    %v3027 = vld [vmem:[#allocation5 + $0x1d0] sm:$0xff]
    %v3028 = vld [vmem:[#allocation5 + $0x1d8] sm:$0xff]
    %v3029 = vld [vmem:[#allocation5 + $0x1e0] sm:$0xff]
    %v3030 = vld [vmem:[#allocation5 + $0x1e8] sm:$0xff]
    %v3031 = vld [vmem:[#allocation5 + $0x1f0] sm:$0xff]
    %v3032 = vld [vmem:[#allocation5 + $0x1f8] sm:$0xff]
    %v3033 = vld [vmem:[#allocation5 + $0x200] sm:$0xff]
    %v3034 = vld [vmem:[#allocation5 + $0x208] sm:$0xff]
    %v3035 = vld [vmem:[#allocation5 + $0x210] sm:$0xff]
    %v3036 = vld [vmem:[#allocation5 + $0x218] sm:$0xff]
    %v3037 = vld [vmem:[#allocation5 + $0x220] sm:$0xff]
    %v3038 = vld [vmem:[#allocation5 + $0x228] sm:$0xff]
    %v3039 = vld [vmem:[#allocation5 + $0x230] sm:$0xff]
    %v3040 = vld [vmem:[#allocation5 + $0x238] sm:$0xff]
    %v3041 = vld [vmem:[#allocation5 + $0x240] sm:$0xff]
    %v3042 = vld [vmem:[#allocation5 + $0x248] sm:$0xff]
    %v3043 = vld [vmem:[#allocation5 + $0x250] sm:$0xff]
    %v3044 = vld [vmem:[#allocation5 + $0x258] sm:$0xff]
    %v3045 = vld [vmem:[#allocation5 + $0x260] sm:$0xff]
    %v3046 = vld [vmem:[#allocation5 + $0x268] sm:$0xff]
    %v3047 = vld [vmem:[#allocation5 + $0x270] sm:$0xff]
    %v3048 = vld [vmem:[#allocation5 + $0x278] sm:$0xff]
    %v3049 = vld [vmem:[#allocation5 + $0x280] sm:$0xff]
    %v3050 = vld [vmem:[#allocation5 + $0x288] sm:$0xff]
    %v3051 = vld [vmem:[#allocation5 + $0x290] sm:$0xff]
    %v3052 = vld [vmem:[#allocation5 + $0x298] sm:$0xff]
    %v3053 = vld [vmem:[#allocation5 + $0x2a0] sm:$0xff]
    %v3054 = vld [vmem:[#allocation5 + $0x2a8] sm:$0xff]
    %v3055 = vld [vmem:[#allocation5 + $0x2b0] sm:$0xff]
    %v3056 = vld [vmem:[#allocation5 + $0x2b8] sm:$0xff]
    %v3057 = vld [vmem:[#allocation5 + $0x2c0] sm:$0xff]
    %v3058 = vld [vmem:[#allocation5 + $0x2c8] sm:$0xff]
    %v3059 = vld [vmem:[#allocation5 + $0x2d0] sm:$0xff]
    %v3060 = vld [vmem:[#allocation5 + $0x2d8] sm:$0xff]
    %v3061 = vld [vmem:[#allocation5 + $0x2e0] sm:$0xff]
    %v3062 = vld [vmem:[#allocation5 + $0x2e8] sm:$0xff]
    %v3063 = vld [vmem:[#allocation5 + $0x2f0] sm:$0xff]
    %v3064 = vld [vmem:[#allocation5 + $0x2f8] sm:$0xff]
    %v3065 = vld [vmem:[#allocation5 + $0x300] sm:$0xff]
    %v3066 = vld [vmem:[#allocation5 + $0x308] sm:$0xff]
    %v3067 = vld [vmem:[#allocation5 + $0x310] sm:$0xff]
    %v3068 = vld [vmem:[#allocation5 + $0x318] sm:$0xff]
    %v3069 = vld [vmem:[#allocation5 + $0x320] sm:$0xff]
    %v3070 = vld [vmem:[#allocation5 + $0x328] sm:$0xff]
    %v3071 = vld [vmem:[#allocation5 + $0x330] sm:$0xff]
    %v3072 = vld [vmem:[#allocation5 + $0x338] sm:$0xff]
    %v3073 = vld [vmem:[#allocation5 + $0x340] sm:$0xff]
    %v3074 = vld [vmem:[#allocation5 + $0x348] sm:$0xff]
    %v3075 = vld [vmem:[#allocation5 + $0x350] sm:$0xff]
    %v3076 = vld [vmem:[#allocation5 + $0x358] sm:$0xff]
    %v3077 = vld [vmem:[#allocation5 + $0x360] sm:$0xff]
    %v3078 = vld [vmem:[#allocation5 + $0x368] sm:$0xff]
    %v3079 = vld [vmem:[#allocation5 + $0x370] sm:$0xff]
    %v3080 = vld [vmem:[#allocation5 + $0x378] sm:$0xff]
    %v3081 = vld [vmem:[#allocation5 + $0x380] sm:$0xff]
    %v3082 = vld [vmem:[#allocation5 + $0x388] sm:$0xff]
    %v3083 = vld [vmem:[#allocation5 + $0x390] sm:$0xff]
    %v3084 = vld [vmem:[#allocation5 + $0x398] sm:$0xff]
    %v3085 = vld [vmem:[#allocation5 + $0x3a0] sm:$0xff]
    %v3086 = vld [vmem:[#allocation5 + $0x3a8] sm:$0xff]
    %v3087 = vld [vmem:[#allocation5 + $0x3b0] sm:$0xff]
    %v3088 = vld [vmem:[#allocation5 + $0x3b8] sm:$0xff]
    %v3089 = vld [vmem:[#allocation5 + $0x3c0] sm:$0xff]
    %v3090 = vld [vmem:[#allocation5 + $0x3c8] sm:$0xff]
    %v3091 = vld [vmem:[#allocation5 + $0x3d0] sm:$0xff]
    %v3092 = vld [vmem:[#allocation5 + $0x3d8] sm:$0xff]
    %v3093 = vld [vmem:[#allocation5 + $0x3e0] sm:$0xff]
    %v3094 = vld [vmem:[#allocation5 + $0x3e8] sm:$0xff]
    %v3095 = vld [vmem:[#allocation5 + $0x3f0] sm:$0xff]
    %v3096 = vld [vmem:[#allocation5 + $0x3f8] sm:$0xff]
    %v3097 = vld [vmem:[#allocation5 + $0x400] sm:$0xff]
    %v3098 = vld [vmem:[#allocation5 + $0x408] sm:$0xff]
    %v3099 = vld [vmem:[#allocation5 + $0x410] sm:$0xff]
    %v3100 = vld [vmem:[#allocation5 + $0x418] sm:$0xff]
    %v3101 = vld [vmem:[#allocation5 + $0x420] sm:$0xff]
    %v3102 = vld [vmem:[#allocation5 + $0x428] sm:$0xff]
    %v3103 = vld [vmem:[#allocation5 + $0x430] sm:$0xff]
    %v3104 = vld [vmem:[#allocation5 + $0x438] sm:$0xff]
    %v3105 = vld [vmem:[#allocation5 + $0x440] sm:$0xff]
    %v3106 = vld [vmem:[#allocation5 + $0x448] sm:$0xff]
    %v3107 = vld [vmem:[#allocation5 + $0x450] sm:$0xff]
    %v3108 = vld [vmem:[#allocation5 + $0x458] sm:$0xff]
    %v3109 = vld [vmem:[#allocation5 + $0x460] sm:$0xff]
    %v3110 = vld [vmem:[#allocation5 + $0x468] sm:$0xff]
    %v3111 = vld [vmem:[#allocation5 + $0x470] sm:$0xff]
    %v3112 = vld [vmem:[#allocation5 + $0x478] sm:$0xff]
    %v3113 = vld [vmem:[#allocation5 + $0x480] sm:$0xff]
    %v3114 = vld [vmem:[#allocation5 + $0x488] sm:$0xff]
    %v3115 = vld [vmem:[#allocation5 + $0x490] sm:$0xff]
    %v3116 = vld [vmem:[#allocation5 + $0x498] sm:$0xff]
    %v3117 = vld [vmem:[#allocation5 + $0x4a0] sm:$0xff]
    %v3118 = vld [vmem:[#allocation5 + $0x4a8] sm:$0xff]
    %v3119 = vld [vmem:[#allocation5 + $0x4b0] sm:$0xff]
    %v3120 = vld [vmem:[#allocation5 + $0x4b8] sm:$0xff]
    %v3121 = vld [vmem:[#allocation5 + $0x4c0] sm:$0xff]
    %v3122 = vld [vmem:[#allocation5 + $0x4c8] sm:$0xff]
    %v3123 = vld [vmem:[#allocation5 + $0x4d0] sm:$0xff]
    %v3124 = vld [vmem:[#allocation5 + $0x4d8] sm:$0xff]
    %v3125 = vld [vmem:[#allocation5 + $0x4e0] sm:$0xff]
    %v3126 = vld [vmem:[#allocation5 + $0x4e8] sm:$0xff]
    %v3127 = vld [vmem:[#allocation5 + $0x4f0] sm:$0xff]
    %v3128 = vld [vmem:[#allocation5 + $0x4f8] sm:$0xff]
    %3129 = vmatprep.subr.mxu0 %v2970
    %3130 = vmatpush1.msra.mxu0 %v2969
    %3131 = vmatprep.subr.mxu0 %v2975
    %3132 = vmatpush1.msra.mxu0 %v2974
    %3133 = vmatprep.subr.mxu0 %v2980
    %3134 = vmatpush1.msra.mxu0 %v2979
    %3135 = vmatprep.subr.mxu0 %v2985
    %3136 = vmatpush1.msra.mxu0 %v2984
    %3137 = vmatprep.subr.mxu0 %v2990
    %3138 = vmatpush1.msra.mxu0 %v2989
    %3139 = vmatprep.subr.mxu0 %v2995
    %3140 = vmatpush1.msra.mxu0 %v2994
    %3141 = vmatprep.subr.mxu0 %v3000
    %3142 = vmatpush1.msra.mxu0 %v2999
    %3143 = vmatprep.subr.mxu0 %v3005
    %3144 = vmatpush1.msra.mxu0 %v3004
    %3145 = vmatprep.subr.mxu0 %v3010
    %3146 = vmatpush1.msra.mxu0 %v3009
    %3147 = vmatprep.subr.mxu0 %v3015
    %3148 = vmatpush1.msra.mxu0 %v3014
    %3149 = vmatprep.subr.mxu0 %v3020
    %3150 = vmatpush1.msra.mxu0 %v3019
    %3151 = vmatprep.subr.mxu0 %v3025
    %3152 = vmatpush1.msra.mxu0 %v3024
    %3153 = vmatprep.subr.mxu0 %v3030
    %3154 = vmatpush1.msra.mxu0 %v3029
    %3155 = vmatprep.subr.mxu0 %v3035
    %3156 = vmatpush1.msra.mxu0 %v3034
    %3157 = vmatprep.subr.mxu0 %v3040
    %3158 = vmatpush1.msra.mxu0 %v3039
    %3159 = vmatprep.subr.mxu0 %v3045
    %3160 = vmatpush1.msra.mxu0 %v3044
    %3161 = vmatprep.subr.mxu0 %v3050
    %3162 = vmatpush1.msra.mxu0 %v3049
    %3163 = vmatprep.subr.mxu0 %v3055
    %3164 = vmatpush1.msra.mxu0 %v3054
    %3165 = vmatprep.subr.mxu0 %v3060
    %3166 = vmatpush1.msra.mxu0 %v3059
    %3167 = vmatprep.subr.mxu0 %v3065
    %3168 = vmatpush1.msra.mxu0 %v3064
    %3169 = vmatprep.subr.mxu0 %v3070
    %3170 = vmatpush1.msra.mxu0 %v3069
    %3171 = vmatprep.subr.mxu0 %v3075
    %3172 = vmatpush1.msra.mxu0 %v3074
    %3173 = vmatprep.subr.mxu0 %v3080
    %3174 = vmatpush1.msra.mxu0 %v3079
    %3175 = vmatprep.subr.mxu0 %v3085
    %3176 = vmatpush1.msra.mxu0 %v3084
    %3177 = vmatprep.subr.mxu0 %v3090
    %3178 = vmatpush1.msra.mxu0 %v3089
    %3179 = vmatprep.subr.mxu0 %v3095
    %3180 = vmatpush1.msra.mxu0 %v3094
    %3181 = vmatprep.subr.mxu0 %v3100
    %3182 = vmatpush1.msra.mxu0 %v3099
    %3183 = vmatprep.subr.mxu0 %v3105
    %3184 = vmatpush1.msra.mxu0 %v3104
    %3185 = vmatprep.subr.mxu0 %v3110
    %3186 = vmatpush1.msra.mxu0 %v3109
    %3187 = vmatprep.subr.mxu0 %v3115
    %3188 = vmatpush1.msra.mxu0 %v3114
    %3189 = vmatprep.subr.mxu0 %v3120
    %3190 = vmatpush1.msra.mxu0 %v3119
    %3191 = vmatprep.subr.mxu0 %v3125
    %3192 = vmatpush1.msra.mxu0 %v3124
    %3193 = vmatprep.mubr.f32.mxu0 %v2963
    %3194 = vmatmul.mubr.f32.gmra.mrb[0].mxu0 %v2965
    %v3195 = vpop.f32.mrb[0].mxu0
    %v3196 = vadd.f32 0.0, %v3195
    %v3197 = vpop.f32.mrb[0].mxu0
    %v3198 = vadd.f32 0.0, %v3197
    %3199 = vdwg.mxu0
    %3200 = vmatprep.subr.mxu0 %v2972
    %3201 = vmatpush1.msra.mxu0 %v2971
    %3202 = vmatprep.subr.mxu0 %v2977
    %3203 = vmatpush1.msra.mxu0 %v2976
    %3204 = vmatprep.subr.mxu0 %v2982
    %3205 = vmatpush1.msra.mxu0 %v2981
    %3206 = vmatprep.subr.mxu0 %v2987
    %3207 = vmatpush1.msra.mxu0 %v2986
    %3208 = vmatprep.subr.mxu0 %v2992
    %3209 = vmatpush1.msra.mxu0 %v2991
    %3210 = vmatprep.subr.mxu0 %v2997
    %3211 = vmatpush1.msra.mxu0 %v2996
    %3212 = vmatprep.subr.mxu0 %v3002
    %3213 = vmatpush1.msra.mxu0 %v3001
    %3214 = vmatprep.subr.mxu0 %v3007
    %3215 = vmatpush1.msra.mxu0 %v3006
    %3216 = vmatprep.subr.mxu0 %v3012
    %3217 = vmatpush1.msra.mxu0 %v3011
    %3218 = vmatprep.subr.mxu0 %v3017
    %3219 = vmatpush1.msra.mxu0 %v3016
    %3220 = vmatprep.subr.mxu0 %v3022
    %3221 = vmatpush1.msra.mxu0 %v3021
    %3222 = vmatprep.subr.mxu0 %v3027
    %3223 = vmatpush1.msra.mxu0 %v3026
    %3224 = vmatprep.subr.mxu0 %v3032
    %3225 = vmatpush1.msra.mxu0 %v3031
    %3226 = vmatprep.subr.mxu0 %v3037
    %3227 = vmatpush1.msra.mxu0 %v3036
    %3228 = vmatprep.subr.mxu0 %v3042
    %3229 = vmatpush1.msra.mxu0 %v3041
    %3230 = vmatprep.subr.mxu0 %v3047
    %3231 = vmatpush1.msra.mxu0 %v3046
    %3232 = vmatprep.subr.mxu0 %v3052
    %3233 = vmatpush1.msra.mxu0 %v3051
    %3234 = vmatprep.subr.mxu0 %v3057
    %3235 = vmatpush1.msra.mxu0 %v3056
    %3236 = vmatprep.subr.mxu0 %v3062
    %3237 = vmatpush1.msra.mxu0 %v3061
    %3238 = vmatprep.subr.mxu0 %v3067
    %3239 = vmatpush1.msra.mxu0 %v3066
    %3240 = vmatprep.subr.mxu0 %v3072
    %3241 = vmatpush1.msra.mxu0 %v3071
    %3242 = vmatprep.subr.mxu0 %v3077
    %3243 = vmatpush1.msra.mxu0 %v3076
    %3244 = vmatprep.subr.mxu0 %v3082
    %3245 = vmatpush1.msra.mxu0 %v3081
    %3246 = vmatprep.subr.mxu0 %v3087
    %3247 = vmatpush1.msra.mxu0 %v3086
    %3248 = vmatprep.subr.mxu0 %v3092
    %3249 = vmatpush1.msra.mxu0 %v3091
    %3250 = vmatprep.subr.mxu0 %v3097
    %3251 = vmatpush1.msra.mxu0 %v3096
    %3252 = vmatprep.subr.mxu0 %v3102
    %3253 = vmatpush1.msra.mxu0 %v3101
    %3254 = vmatprep.subr.mxu0 %v3107
    %3255 = vmatpush1.msra.mxu0 %v3106
    %3256 = vmatprep.subr.mxu0 %v3112
    %3257 = vmatpush1.msra.mxu0 %v3111
    %3258 = vmatprep.subr.mxu0 %v3117
    %3259 = vmatpush1.msra.mxu0 %v3116
    %3260 = vmatprep.subr.mxu0 %v3122
    %3261 = vmatpush1.msra.mxu0 %v3121
    %3262 = vmatprep.subr.mxu0 %v3127
    %3263 = vmatpush1.msra.mxu0 %v3126
    %3264 = vmatprep.mubr.f32.mxu0 %v2963
    %3265 = vmatmul.mubr.f32.gmra.mrb[0].mxu0 %v2965
    %v3266 = vpop.f32.mrb[0].mxu0
    %v3267 = vadd.f32 0.0, %v3266
    %v3268 = vpop.f32.mrb[0].mxu0
    %v3269 = vadd.f32 0.0, %v3268
    %3270 = vdwg.mxu0
    %3271 = vmatprep.subr.mxu0 0.0
    %3272 = vmatpush1.msra.mxu0 %v2973
    %3273 = vmatprep.subr.mxu0 0.0
    %3274 = vmatpush1.msra.mxu0 %v2978
    %3275 = vmatprep.subr.mxu0 0.0
    %3276 = vmatpush1.msra.mxu0 %v2983
    %3277 = vmatprep.subr.mxu0 0.0
    %3278 = vmatpush1.msra.mxu0 %v2988
    %3279 = vmatprep.subr.mxu0 0.0
    %3280 = vmatpush1.msra.mxu0 %v2993
    %3281 = vmatprep.subr.mxu0 0.0
    %3282 = vmatpush1.msra.mxu0 %v2998
    %3283 = vmatprep.subr.mxu0 0.0
    %3284 = vmatpush1.msra.mxu0 %v3003
    %3285 = vmatprep.subr.mxu0 0.0
    %3286 = vmatpush1.msra.mxu0 %v3008
    %3287 = vmatprep.subr.mxu0 0.0
    %3288 = vmatpush1.msra.mxu0 %v3013
    %3289 = vmatprep.subr.mxu0 0.0
    %3290 = vmatpush1.msra.mxu0 %v3018
    %3291 = vmatprep.subr.mxu0 0.0
    %3292 = vmatpush1.msra.mxu0 %v3023
    %3293 = vmatprep.subr.mxu0 0.0
    %3294 = vmatpush1.msra.mxu0 %v3028
    %3295 = vmatprep.subr.mxu0 0.0
    %3296 = vmatpush1.msra.mxu0 %v3033
    %3297 = vmatprep.subr.mxu0 0.0
    %3298 = vmatpush1.msra.mxu0 %v3038
    %3299 = vmatprep.subr.mxu0 0.0
    %3300 = vmatpush1.msra.mxu0 %v3043
    %3301 = vmatprep.subr.mxu0 0.0
    %3302 = vmatpush1.msra.mxu0 %v3048
    %3303 = vmatprep.subr.mxu0 0.0
    %3304 = vmatpush1.msra.mxu0 %v3053
    %3305 = vmatprep.subr.mxu0 0.0
    %3306 = vmatpush1.msra.mxu0 %v3058
    %3307 = vmatprep.subr.mxu0 0.0
    %3308 = vmatpush1.msra.mxu0 %v3063
    %3309 = vmatprep.subr.mxu0 0.0
    %3310 = vmatpush1.msra.mxu0 %v3068
    %3311 = vmatprep.subr.mxu0 0.0
    %3312 = vmatpush1.msra.mxu0 %v3073
    %3313 = vmatprep.subr.mxu0 0.0
    %3314 = vmatpush1.msra.mxu0 %v3078
    %3315 = vmatprep.subr.mxu0 0.0
    %3316 = vmatpush1.msra.mxu0 %v3083
    %3317 = vmatprep.subr.mxu0 0.0
    %3318 = vmatpush1.msra.mxu0 %v3088
    %3319 = vmatprep.subr.mxu0 0.0
    %3320 = vmatpush1.msra.mxu0 %v3093
    %3321 = vmatprep.subr.mxu0 0.0
    %3322 = vmatpush1.msra.mxu0 %v3098
    %3323 = vmatprep.subr.mxu0 0.0
    %3324 = vmatpush1.msra.mxu0 %v3103
    %3325 = vmatprep.subr.mxu0 0.0
    %3326 = vmatpush1.msra.mxu0 %v3108
    %3327 = vmatprep.subr.mxu0 0.0
    %3328 = vmatpush1.msra.mxu0 %v3113
    %3329 = vmatprep.subr.mxu0 0.0
    %3330 = vmatpush1.msra.mxu0 %v3118
    %3331 = vmatprep.subr.mxu0 0.0
    %3332 = vmatpush1.msra.mxu0 %v3123
    %3333 = vmatprep.subr.mxu0 0.0
    %3334 = vmatpush1.msra.mxu0 %v3128
    %3335 = vmatprep.mubr.f32.mxu0 %v2963
    %3336 = vmatmul.mubr.f32.gmra.mrb[0].mxu0 %v2965
    %v3337 = vpop.f32.mrb[0].mxu0
    %v3338 = vadd.f32 0.0, %v3337
    %v3339 = vpop.f32.mrb[0].mxu0
    %3340 = vdwg.mxu0
    %v3341 = vadd.f32 %v3338, %v809
    %v3342 = vtanh.pop %v3341
    %3344 = vset.pattern.permute.xlu0 0
    %3345 = vperm.xlu0 %3344, %v428
    %v3346 = vpop.permute.xlu0 %3345
    %v3348 = vmul.f32 %v3342, %v3346
    %v3349 = vadd.f32 %v2963, %v3348
    %s3350 = scalar_lea.vmem [#allocation2], 192
    %v3351 = vld [vmem:[%s3350] sm:$0xff]
    %v3352 = vld [vmem:[%s3350 + $0x8] sm:$0xff]
    %v3353 = vld [vmem:[%s3350 + $0x10] sm:$0xff]
    %v3354 = vld [vmem:[%s3350 + $0x18] sm:$0xff]
    %v3355 = vadd.f32 %v3196, %v3351
    %v3356 = vadd.f32 %v3198, %v3352
    %v3357 = vadd.f32 %v3267, %v3353
    %v3358 = vadd.f32 %v3269, %v3354
    %v3359 = vxor.u32 %v3355, 2147483648
    %v3360 = vxor.u32 %v3356, 2147483648
    %v3361 = vxor.u32 %v3357, 2147483648
    %v3362 = vxor.u32 %v3358, 2147483648
    %v3363 = vmul.f32 %v3359, 1.442695
    %v3364 = vpow.pop %v3363
    %v3365 = vmul.f32 %v3360, 1.442695
    %v3366 = vpow.pop %v3365
    %v3367 = vmul.f32 %v3361, 1.442695
    %v3368 = vpow.pop %v3367
    %v3369 = vmul.f32 %v3362, 1.442695
    %v3370 = vpow.pop %v3369
    %v3371 = vadd.f32 %v3364, 1.0
    %v3372 = vadd.f32 %v3366, 1.0
    %v3373 = vadd.f32 %v3368, 1.0
    %v3374 = vadd.f32 %v3370, 1.0
    %v3375 = vrcp.pop %v3371
    %v3376 = vmul.f32 1.0, %v3375
    %v3377 = vrcp.pop %v3372
    %v3378 = vmul.f32 1.0, %v3377
    %v3379 = vrcp.pop %v3373
    %v3380 = vmul.f32 1.0, %v3379
    %v3381 = vrcp.pop %v3374
    %v3382 = vmul.f32 1.0, %v3381
    %v3383 = vmul.f32 %v3376, %v3349
    %v3384 = vmul.f32 %v3378, %v3382
    %v3385 = vadd.f32 %v3383, %v3384
    %v3386 = vtanh.pop %v3385
    %v3387 = vmul.f32 %v3380, %v3386
    %s3388 = scalar_lea.vmem [#allocation10], 48
    %3389 = vst [vmem:[%s3388] sm:$0xff] %v3387
    %v3390 = vadd.f32 %v2968, %v3387
    %v3391 = vld [vmem:[#allocation5] sm:$0xff]
    %v3392 = vld [vmem:[#allocation5 + $0x8] sm:$0xff]
    %v3393 = vld [vmem:[#allocation5 + $0x10] sm:$0xff]
    %v3394 = vld [vmem:[#allocation5 + $0x18] sm:$0xff]
    %v3395 = vld [vmem:[#allocation5 + $0x20] sm:$0xff]
    %v3396 = vld [vmem:[#allocation5 + $0x28] sm:$0xff]
    %v3397 = vld [vmem:[#allocation5 + $0x30] sm:$0xff]
    %v3398 = vld [vmem:[#allocation5 + $0x38] sm:$0xff]
    %v3399 = vld [vmem:[#allocation5 + $0x40] sm:$0xff]
    %v3400 = vld [vmem:[#allocation5 + $0x48] sm:$0xff]
    %v3401 = vld [vmem:[#allocation5 + $0x50] sm:$0xff]
    %v3402 = vld [vmem:[#allocation5 + $0x58] sm:$0xff]
    %v3403 = vld [vmem:[#allocation5 + $0x60] sm:$0xff]
    %v3404 = vld [vmem:[#allocation5 + $0x68] sm:$0xff]
    %v3405 = vld [vmem:[#allocation5 + $0x70] sm:$0xff]
    %v3406 = vld [vmem:[#allocation5 + $0x78] sm:$0xff]
    %v3407 = vld [vmem:[#allocation5 + $0x80] sm:$0xff]
    %v3408 = vld [vmem:[#allocation5 + $0x88] sm:$0xff]
    %v3409 = vld [vmem:[#allocation5 + $0x90] sm:$0xff]
    %v3410 = vld [vmem:[#allocation5 + $0x98] sm:$0xff]
    %v3411 = vld [vmem:[#allocation5 + $0xa0] sm:$0xff]
    %v3412 = vld [vmem:[#allocation5 + $0xa8] sm:$0xff]
    %v3413 = vld [vmem:[#allocation5 + $0xb0] sm:$0xff]
    %v3414 = vld [vmem:[#allocation5 + $0xb8] sm:$0xff]
    %v3415 = vld [vmem:[#allocation5 + $0xc0] sm:$0xff]
    %v3416 = vld [vmem:[#allocation5 + $0xc8] sm:$0xff]
    %v3417 = vld [vmem:[#allocation5 + $0xd0] sm:$0xff]
    %v3418 = vld [vmem:[#allocation5 + $0xd8] sm:$0xff]
    %v3419 = vld [vmem:[#allocation5 + $0xe0] sm:$0xff]
    %v3420 = vld [vmem:[#allocation5 + $0xe8] sm:$0xff]
    %v3421 = vld [vmem:[#allocation5 + $0xf0] sm:$0xff]
    %v3422 = vld [vmem:[#allocation5 + $0xf8] sm:$0xff]
    %v3423 = vld [vmem:[#allocation5 + $0x100] sm:$0xff]
    %v3424 = vld [vmem:[#allocation5 + $0x108] sm:$0xff]
    %v3425 = vld [vmem:[#allocation5 + $0x110] sm:$0xff]
    %v3426 = vld [vmem:[#allocation5 + $0x118] sm:$0xff]
    %v3427 = vld [vmem:[#allocation5 + $0x120] sm:$0xff]
    %v3428 = vld [vmem:[#allocation5 + $0x128] sm:$0xff]
    %v3429 = vld [vmem:[#allocation5 + $0x130] sm:$0xff]
    %v3430 = vld [vmem:[#allocation5 + $0x138] sm:$0xff]
    %v3431 = vld [vmem:[#allocation5 + $0x140] sm:$0xff]
    %v3432 = vld [vmem:[#allocation5 + $0x148] sm:$0xff]
    %v3433 = vld [vmem:[#allocation5 + $0x150] sm:$0xff]
    %v3434 = vld [vmem:[#allocation5 + $0x158] sm:$0xff]
    %v3435 = vld [vmem:[#allocation5 + $0x160] sm:$0xff]
    %v3436 = vld [vmem:[#allocation5 + $0x168] sm:$0xff]
    %v3437 = vld [vmem:[#allocation5 + $0x170] sm:$0xff]
    %v3438 = vld [vmem:[#allocation5 + $0x178] sm:$0xff]
    %v3439 = vld [vmem:[#allocation5 + $0x180] sm:$0xff]
    %v3440 = vld [vmem:[#allocation5 + $0x188] sm:$0xff]
    %v3441 = vld [vmem:[#allocation5 + $0x190] sm:$0xff]
    %v3442 = vld [vmem:[#allocation5 + $0x198] sm:$0xff]
    %v3443 = vld [vmem:[#allocation5 + $0x1a0] sm:$0xff]
    %v3444 = vld [vmem:[#allocation5 + $0x1a8] sm:$0xff]
    %v3445 = vld [vmem:[#allocation5 + $0x1b0] sm:$0xff]
    %v3446 = vld [vmem:[#allocation5 + $0x1b8] sm:$0xff]
    %v3447 = vld [vmem:[#allocation5 + $0x1c0] sm:$0xff]
    %v3448 = vld [vmem:[#allocation5 + $0x1c8] sm:$0xff]
    %v3449 = vld [vmem:[#allocation5 + $0x1d0] sm:$0xff]
    %v3450 = vld [vmem:[#allocation5 + $0x1d8] sm:$0xff]
    %v3451 = vld [vmem:[#allocation5 + $0x1e0] sm:$0xff]
    %v3452 = vld [vmem:[#allocation5 + $0x1e8] sm:$0xff]
    %v3453 = vld [vmem:[#allocation5 + $0x1f0] sm:$0xff]
    %v3454 = vld [vmem:[#allocation5 + $0x1f8] sm:$0xff]
    %v3455 = vld [vmem:[#allocation5 + $0x200] sm:$0xff]
    %v3456 = vld [vmem:[#allocation5 + $0x208] sm:$0xff]
    %v3457 = vld [vmem:[#allocation5 + $0x210] sm:$0xff]
    %v3458 = vld [vmem:[#allocation5 + $0x218] sm:$0xff]
    %v3459 = vld [vmem:[#allocation5 + $0x220] sm:$0xff]
    %v3460 = vld [vmem:[#allocation5 + $0x228] sm:$0xff]
    %v3461 = vld [vmem:[#allocation5 + $0x230] sm:$0xff]
    %v3462 = vld [vmem:[#allocation5 + $0x238] sm:$0xff]
    %v3463 = vld [vmem:[#allocation5 + $0x240] sm:$0xff]
    %v3464 = vld [vmem:[#allocation5 + $0x248] sm:$0xff]
    %v3465 = vld [vmem:[#allocation5 + $0x250] sm:$0xff]
    %v3466 = vld [vmem:[#allocation5 + $0x258] sm:$0xff]
    %v3467 = vld [vmem:[#allocation5 + $0x260] sm:$0xff]
    %v3468 = vld [vmem:[#allocation5 + $0x268] sm:$0xff]
    %v3469 = vld [vmem:[#allocation5 + $0x270] sm:$0xff]
    %v3470 = vld [vmem:[#allocation5 + $0x278] sm:$0xff]
    %v3471 = vld [vmem:[#allocation5 + $0x280] sm:$0xff]
    %v3472 = vld [vmem:[#allocation5 + $0x288] sm:$0xff]
    %v3473 = vld [vmem:[#allocation5 + $0x290] sm:$0xff]
    %v3474 = vld [vmem:[#allocation5 + $0x298] sm:$0xff]
    %v3475 = vld [vmem:[#allocation5 + $0x2a0] sm:$0xff]
    %v3476 = vld [vmem:[#allocation5 + $0x2a8] sm:$0xff]
    %v3477 = vld [vmem:[#allocation5 + $0x2b0] sm:$0xff]
    %v3478 = vld [vmem:[#allocation5 + $0x2b8] sm:$0xff]
    %v3479 = vld [vmem:[#allocation5 + $0x2c0] sm:$0xff]
    %v3480 = vld [vmem:[#allocation5 + $0x2c8] sm:$0xff]
    %v3481 = vld [vmem:[#allocation5 + $0x2d0] sm:$0xff]
    %v3482 = vld [vmem:[#allocation5 + $0x2d8] sm:$0xff]
    %v3483 = vld [vmem:[#allocation5 + $0x2e0] sm:$0xff]
    %v3484 = vld [vmem:[#allocation5 + $0x2e8] sm:$0xff]
    %v3485 = vld [vmem:[#allocation5 + $0x2f0] sm:$0xff]
    %v3486 = vld [vmem:[#allocation5 + $0x2f8] sm:$0xff]
    %v3487 = vld [vmem:[#allocation5 + $0x300] sm:$0xff]
    %v3488 = vld [vmem:[#allocation5 + $0x308] sm:$0xff]
    %v3489 = vld [vmem:[#allocation5 + $0x310] sm:$0xff]
    %v3490 = vld [vmem:[#allocation5 + $0x318] sm:$0xff]
    %v3491 = vld [vmem:[#allocation5 + $0x320] sm:$0xff]
    %v3492 = vld [vmem:[#allocation5 + $0x328] sm:$0xff]
    %v3493 = vld [vmem:[#allocation5 + $0x330] sm:$0xff]
    %v3494 = vld [vmem:[#allocation5 + $0x338] sm:$0xff]
    %v3495 = vld [vmem:[#allocation5 + $0x340] sm:$0xff]
    %v3496 = vld [vmem:[#allocation5 + $0x348] sm:$0xff]
    %v3497 = vld [vmem:[#allocation5 + $0x350] sm:$0xff]
    %v3498 = vld [vmem:[#allocation5 + $0x358] sm:$0xff]
    %v3499 = vld [vmem:[#allocation5 + $0x360] sm:$0xff]
    %v3500 = vld [vmem:[#allocation5 + $0x368] sm:$0xff]
    %v3501 = vld [vmem:[#allocation5 + $0x370] sm:$0xff]
    %v3502 = vld [vmem:[#allocation5 + $0x378] sm:$0xff]
    %v3503 = vld [vmem:[#allocation5 + $0x380] sm:$0xff]
    %v3504 = vld [vmem:[#allocation5 + $0x388] sm:$0xff]
    %v3505 = vld [vmem:[#allocation5 + $0x390] sm:$0xff]
    %v3506 = vld [vmem:[#allocation5 + $0x398] sm:$0xff]
    %v3507 = vld [vmem:[#allocation5 + $0x3a0] sm:$0xff]
    %v3508 = vld [vmem:[#allocation5 + $0x3a8] sm:$0xff]
    %v3509 = vld [vmem:[#allocation5 + $0x3b0] sm:$0xff]
    %v3510 = vld [vmem:[#allocation5 + $0x3b8] sm:$0xff]
    %v3511 = vld [vmem:[#allocation5 + $0x3c0] sm:$0xff]
    %v3512 = vld [vmem:[#allocation5 + $0x3c8] sm:$0xff]
    %v3513 = vld [vmem:[#allocation5 + $0x3d0] sm:$0xff]
    %v3514 = vld [vmem:[#allocation5 + $0x3d8] sm:$0xff]
    %v3515 = vld [vmem:[#allocation5 + $0x3e0] sm:$0xff]
    %v3516 = vld [vmem:[#allocation5 + $0x3e8] sm:$0xff]
    %v3517 = vld [vmem:[#allocation5 + $0x3f0] sm:$0xff]
    %v3518 = vld [vmem:[#allocation5 + $0x3f8] sm:$0xff]
    %v3519 = vld [vmem:[#allocation5 + $0x400] sm:$0xff]
    %v3520 = vld [vmem:[#allocation5 + $0x408] sm:$0xff]
    %v3521 = vld [vmem:[#allocation5 + $0x410] sm:$0xff]
    %v3522 = vld [vmem:[#allocation5 + $0x418] sm:$0xff]
    %v3523 = vld [vmem:[#allocation5 + $0x420] sm:$0xff]
    %v3524 = vld [vmem:[#allocation5 + $0x428] sm:$0xff]
    %v3525 = vld [vmem:[#allocation5 + $0x430] sm:$0xff]
    %v3526 = vld [vmem:[#allocation5 + $0x438] sm:$0xff]
    %v3527 = vld [vmem:[#allocation5 + $0x440] sm:$0xff]
    %v3528 = vld [vmem:[#allocation5 + $0x448] sm:$0xff]
    %v3529 = vld [vmem:[#allocation5 + $0x450] sm:$0xff]
    %v3530 = vld [vmem:[#allocation5 + $0x458] sm:$0xff]
    %v3531 = vld [vmem:[#allocation5 + $0x460] sm:$0xff]
    %v3532 = vld [vmem:[#allocation5 + $0x468] sm:$0xff]
    %v3533 = vld [vmem:[#allocation5 + $0x470] sm:$0xff]
    %v3534 = vld [vmem:[#allocation5 + $0x478] sm:$0xff]
    %v3535 = vld [vmem:[#allocation5 + $0x480] sm:$0xff]
    %v3536 = vld [vmem:[#allocation5 + $0x488] sm:$0xff]
    %v3537 = vld [vmem:[#allocation5 + $0x490] sm:$0xff]
    %v3538 = vld [vmem:[#allocation5 + $0x498] sm:$0xff]
    %v3539 = vld [vmem:[#allocation5 + $0x4a0] sm:$0xff]
    %v3540 = vld [vmem:[#allocation5 + $0x4a8] sm:$0xff]
    %v3541 = vld [vmem:[#allocation5 + $0x4b0] sm:$0xff]
    %v3542 = vld [vmem:[#allocation5 + $0x4b8] sm:$0xff]
    %v3543 = vld [vmem:[#allocation5 + $0x4c0] sm:$0xff]
    %v3544 = vld [vmem:[#allocation5 + $0x4c8] sm:$0xff]
    %v3545 = vld [vmem:[#allocation5 + $0x4d0] sm:$0xff]
    %v3546 = vld [vmem:[#allocation5 + $0x4d8] sm:$0xff]
    %v3547 = vld [vmem:[#allocation5 + $0x4e0] sm:$0xff]
    %v3548 = vld [vmem:[#allocation5 + $0x4e8] sm:$0xff]
    %v3549 = vld [vmem:[#allocation5 + $0x4f0] sm:$0xff]
    %v3550 = vld [vmem:[#allocation5 + $0x4f8] sm:$0xff]
    %3551 = vmatprep.subr.mxu0 %v3392
    %3552 = vmatpush1.msra.mxu0 %v3391
    %3553 = vmatprep.subr.mxu0 %v3397
    %3554 = vmatpush1.msra.mxu0 %v3396
    %3555 = vmatprep.subr.mxu0 %v3402
    %3556 = vmatpush1.msra.mxu0 %v3401
    %3557 = vmatprep.subr.mxu0 %v3407
    %3558 = vmatpush1.msra.mxu0 %v3406
    %3559 = vmatprep.subr.mxu0 %v3412
    %3560 = vmatpush1.msra.mxu0 %v3411
    %3561 = vmatprep.subr.mxu0 %v3417
    %3562 = vmatpush1.msra.mxu0 %v3416
    %3563 = vmatprep.subr.mxu0 %v3422
    %3564 = vmatpush1.msra.mxu0 %v3421
    %3565 = vmatprep.subr.mxu0 %v3427
    %3566 = vmatpush1.msra.mxu0 %v3426
    %3567 = vmatprep.subr.mxu0 %v3432
    %3568 = vmatpush1.msra.mxu0 %v3431
    %3569 = vmatprep.subr.mxu0 %v3437
    %3570 = vmatpush1.msra.mxu0 %v3436
    %3571 = vmatprep.subr.mxu0 %v3442
    %3572 = vmatpush1.msra.mxu0 %v3441
    %3573 = vmatprep.subr.mxu0 %v3447
    %3574 = vmatpush1.msra.mxu0 %v3446
    %3575 = vmatprep.subr.mxu0 %v3452
    %3576 = vmatpush1.msra.mxu0 %v3451
    %3577 = vmatprep.subr.mxu0 %v3457
    %3578 = vmatpush1.msra.mxu0 %v3456
    %3579 = vmatprep.subr.mxu0 %v3462
    %3580 = vmatpush1.msra.mxu0 %v3461
    %3581 = vmatprep.subr.mxu0 %v3467
    %3582 = vmatpush1.msra.mxu0 %v3466
    %3583 = vmatprep.subr.mxu0 %v3472
    %3584 = vmatpush1.msra.mxu0 %v3471
    %3585 = vmatprep.subr.mxu0 %v3477
    %3586 = vmatpush1.msra.mxu0 %v3476
    %3587 = vmatprep.subr.mxu0 %v3482
    %3588 = vmatpush1.msra.mxu0 %v3481
    %3589 = vmatprep.subr.mxu0 %v3487
    %3590 = vmatpush1.msra.mxu0 %v3486
    %3591 = vmatprep.subr.mxu0 %v3492
    %3592 = vmatpush1.msra.mxu0 %v3491
    %3593 = vmatprep.subr.mxu0 %v3497
    %3594 = vmatpush1.msra.mxu0 %v3496
    %3595 = vmatprep.subr.mxu0 %v3502
    %3596 = vmatpush1.msra.mxu0 %v3501
    %3597 = vmatprep.subr.mxu0 %v3507
    %3598 = vmatpush1.msra.mxu0 %v3506
    %3599 = vmatprep.subr.mxu0 %v3512
    %3600 = vmatpush1.msra.mxu0 %v3511
    %3601 = vmatprep.subr.mxu0 %v3517
    %3602 = vmatpush1.msra.mxu0 %v3516
    %3603 = vmatprep.subr.mxu0 %v3522
    %3604 = vmatpush1.msra.mxu0 %v3521
    %3605 = vmatprep.subr.mxu0 %v3527
    %3606 = vmatpush1.msra.mxu0 %v3526
    %3607 = vmatprep.subr.mxu0 %v3532
    %3608 = vmatpush1.msra.mxu0 %v3531
    %3609 = vmatprep.subr.mxu0 %v3537
    %3610 = vmatpush1.msra.mxu0 %v3536
    %3611 = vmatprep.subr.mxu0 %v3542
    %3612 = vmatpush1.msra.mxu0 %v3541
    %3613 = vmatprep.subr.mxu0 %v3547
    %3614 = vmatpush1.msra.mxu0 %v3546
    %3615 = vmatprep.mubr.f32.mxu0 %v3385
    %3616 = vmatmul.mubr.f32.gmra.mrb[0].mxu0 %v3387
    %v3617 = vpop.f32.mrb[0].mxu0
    %v3618 = vadd.f32 0.0, %v3617
    %v3619 = vpop.f32.mrb[0].mxu0
    %v3620 = vadd.f32 0.0, %v3619
    %3621 = vdwg.mxu0
    %3622 = vmatprep.subr.mxu0 %v3394
    %3623 = vmatpush1.msra.mxu0 %v3393
    %3624 = vmatprep.subr.mxu0 %v3399
    %3625 = vmatpush1.msra.mxu0 %v3398
    %3626 = vmatprep.subr.mxu0 %v3404
    %3627 = vmatpush1.msra.mxu0 %v3403
    %3628 = vmatprep.subr.mxu0 %v3409
    %3629 = vmatpush1.msra.mxu0 %v3408
    %3630 = vmatprep.subr.mxu0 %v3414
    %3631 = vmatpush1.msra.mxu0 %v3413
    %3632 = vmatprep.subr.mxu0 %v3419
    %3633 = vmatpush1.msra.mxu0 %v3418
    %3634 = vmatprep.subr.mxu0 %v3424
    %3635 = vmatpush1.msra.mxu0 %v3423
    %3636 = vmatprep.subr.mxu0 %v3429
    %3637 = vmatpush1.msra.mxu0 %v3428
    %3638 = vmatprep.subr.mxu0 %v3434
    %3639 = vmatpush1.msra.mxu0 %v3433
    %3640 = vmatprep.subr.mxu0 %v3439
    %3641 = vmatpush1.msra.mxu0 %v3438
    %3642 = vmatprep.subr.mxu0 %v3444
    %3643 = vmatpush1.msra.mxu0 %v3443
    %3644 = vmatprep.subr.mxu0 %v3449
    %3645 = vmatpush1.msra.mxu0 %v3448
    %3646 = vmatprep.subr.mxu0 %v3454
    %3647 = vmatpush1.msra.mxu0 %v3453
    %3648 = vmatprep.subr.mxu0 %v3459
    %3649 = vmatpush1.msra.mxu0 %v3458
    %3650 = vmatprep.subr.mxu0 %v3464
    %3651 = vmatpush1.msra.mxu0 %v3463
    %3652 = vmatprep.subr.mxu0 %v3469
    %3653 = vmatpush1.msra.mxu0 %v3468
    %3654 = vmatprep.subr.mxu0 %v3474
    %3655 = vmatpush1.msra.mxu0 %v3473
    %3656 = vmatprep.subr.mxu0 %v3479
    %3657 = vmatpush1.msra.mxu0 %v3478
    %3658 = vmatprep.subr.mxu0 %v3484
    %3659 = vmatpush1.msra.mxu0 %v3483
    %3660 = vmatprep.subr.mxu0 %v3489
    %3661 = vmatpush1.msra.mxu0 %v3488
    %3662 = vmatprep.subr.mxu0 %v3494
    %3663 = vmatpush1.msra.mxu0 %v3493
    %3664 = vmatprep.subr.mxu0 %v3499
    %3665 = vmatpush1.msra.mxu0 %v3498
    %3666 = vmatprep.subr.mxu0 %v3504
    %3667 = vmatpush1.msra.mxu0 %v3503
    %3668 = vmatprep.subr.mxu0 %v3509
    %3669 = vmatpush1.msra.mxu0 %v3508
    %3670 = vmatprep.subr.mxu0 %v3514
    %3671 = vmatpush1.msra.mxu0 %v3513
    %3672 = vmatprep.subr.mxu0 %v3519
    %3673 = vmatpush1.msra.mxu0 %v3518
    %3674 = vmatprep.subr.mxu0 %v3524
    %3675 = vmatpush1.msra.mxu0 %v3523
    %3676 = vmatprep.subr.mxu0 %v3529
    %3677 = vmatpush1.msra.mxu0 %v3528
    %3678 = vmatprep.subr.mxu0 %v3534
    %3679 = vmatpush1.msra.mxu0 %v3533
    %3680 = vmatprep.subr.mxu0 %v3539
    %3681 = vmatpush1.msra.mxu0 %v3538
    %3682 = vmatprep.subr.mxu0 %v3544
    %3683 = vmatpush1.msra.mxu0 %v3543
    %3684 = vmatprep.subr.mxu0 %v3549
    %3685 = vmatpush1.msra.mxu0 %v3548
    %3686 = vmatprep.mubr.f32.mxu0 %v3385
    %3687 = vmatmul.mubr.f32.gmra.mrb[0].mxu0 %v3387
    %v3688 = vpop.f32.mrb[0].mxu0
    %v3689 = vadd.f32 0.0, %v3688
    %v3690 = vpop.f32.mrb[0].mxu0
    %v3691 = vadd.f32 0.0, %v3690
    %3692 = vdwg.mxu0
    %3693 = vmatprep.subr.mxu0 0.0
    %3694 = vmatpush1.msra.mxu0 %v3395
    %3695 = vmatprep.subr.mxu0 0.0
    %3696 = vmatpush1.msra.mxu0 %v3400
    %3697 = vmatprep.subr.mxu0 0.0
    %3698 = vmatpush1.msra.mxu0 %v3405
    %3699 = vmatprep.subr.mxu0 0.0
    %3700 = vmatpush1.msra.mxu0 %v3410
    %3701 = vmatprep.subr.mxu0 0.0
    %3702 = vmatpush1.msra.mxu0 %v3415
    %3703 = vmatprep.subr.mxu0 0.0
    %3704 = vmatpush1.msra.mxu0 %v3420
    %3705 = vmatprep.subr.mxu0 0.0
    %3706 = vmatpush1.msra.mxu0 %v3425
    %3707 = vmatprep.subr.mxu0 0.0
    %3708 = vmatpush1.msra.mxu0 %v3430
    %3709 = vmatprep.subr.mxu0 0.0
    %3710 = vmatpush1.msra.mxu0 %v3435
    %3711 = vmatprep.subr.mxu0 0.0
    %3712 = vmatpush1.msra.mxu0 %v3440
    %3713 = vmatprep.subr.mxu0 0.0
    %3714 = vmatpush1.msra.mxu0 %v3445
    %3715 = vmatprep.subr.mxu0 0.0
    %3716 = vmatpush1.msra.mxu0 %v3450
    %3717 = vmatprep.subr.mxu0 0.0
    %3718 = vmatpush1.msra.mxu0 %v3455
    %3719 = vmatprep.subr.mxu0 0.0
    %3720 = vmatpush1.msra.mxu0 %v3460
    %3721 = vmatprep.subr.mxu0 0.0
    %3722 = vmatpush1.msra.mxu0 %v3465
    %3723 = vmatprep.subr.mxu0 0.0
    %3724 = vmatpush1.msra.mxu0 %v3470
    %3725 = vmatprep.subr.mxu0 0.0
    %3726 = vmatpush1.msra.mxu0 %v3475
    %3727 = vmatprep.subr.mxu0 0.0
    %3728 = vmatpush1.msra.mxu0 %v3480
    %3729 = vmatprep.subr.mxu0 0.0
    %3730 = vmatpush1.msra.mxu0 %v3485
    %3731 = vmatprep.subr.mxu0 0.0
    %3732 = vmatpush1.msra.mxu0 %v3490
    %3733 = vmatprep.subr.mxu0 0.0
    %3734 = vmatpush1.msra.mxu0 %v3495
    %3735 = vmatprep.subr.mxu0 0.0
    %3736 = vmatpush1.msra.mxu0 %v3500
    %3737 = vmatprep.subr.mxu0 0.0
    %3738 = vmatpush1.msra.mxu0 %v3505
    %3739 = vmatprep.subr.mxu0 0.0
    %3740 = vmatpush1.msra.mxu0 %v3510
    %3741 = vmatprep.subr.mxu0 0.0
    %3742 = vmatpush1.msra.mxu0 %v3515
    %3743 = vmatprep.subr.mxu0 0.0
    %3744 = vmatpush1.msra.mxu0 %v3520
    %3745 = vmatprep.subr.mxu0 0.0
    %3746 = vmatpush1.msra.mxu0 %v3525
    %3747 = vmatprep.subr.mxu0 0.0
    %3748 = vmatpush1.msra.mxu0 %v3530
    %3749 = vmatprep.subr.mxu0 0.0
    %3750 = vmatpush1.msra.mxu0 %v3535
    %3751 = vmatprep.subr.mxu0 0.0
    %3752 = vmatpush1.msra.mxu0 %v3540
    %3753 = vmatprep.subr.mxu0 0.0
    %3754 = vmatpush1.msra.mxu0 %v3545
    %3755 = vmatprep.subr.mxu0 0.0
    %3756 = vmatpush1.msra.mxu0 %v3550
    %3757 = vmatprep.mubr.f32.mxu0 %v3385
    %3758 = vmatmul.mubr.f32.gmra.mrb[0].mxu0 %v3387
    %v3759 = vpop.f32.mrb[0].mxu0
    %v3760 = vadd.f32 0.0, %v3759
    %v3761 = vpop.f32.mrb[0].mxu0
    %3762 = vdwg.mxu0
    %v3763 = vadd.f32 %v3760, %v809
    %v3764 = vtanh.pop %v3763
    %3766 = vset.pattern.permute.xlu0 0
    %3767 = vperm.xlu0 %3766, %v429
    %v3768 = vpop.permute.xlu0 %3767
    %v3770 = vmul.f32 %v3764, %v3768
    %v3771 = vadd.f32 %v3385, %v3770
    %s3772 = scalar_lea.vmem [#allocation2], 224
    %v3773 = vld [vmem:[%s3772] sm:$0xff]
    %v3774 = vld [vmem:[%s3772 + $0x8] sm:$0xff]
    %v3775 = vld [vmem:[%s3772 + $0x10] sm:$0xff]
    %v3776 = vld [vmem:[%s3772 + $0x18] sm:$0xff]
    %v3777 = vadd.f32 %v3618, %v3773
    %v3778 = vadd.f32 %v3620, %v3774
    %v3779 = vadd.f32 %v3689, %v3775
    %v3780 = vadd.f32 %v3691, %v3776
    %v3781 = vxor.u32 %v3777, 2147483648
    %v3782 = vxor.u32 %v3778, 2147483648
    %v3783 = vxor.u32 %v3779, 2147483648
    %v3784 = vxor.u32 %v3780, 2147483648
    %v3785 = vmul.f32 %v3781, 1.442695
    %v3786 = vpow.pop %v3785
    %v3787 = vmul.f32 %v3782, 1.442695
    %v3788 = vpow.pop %v3787
    %v3789 = vmul.f32 %v3783, 1.442695
    %v3790 = vpow.pop %v3789
    %v3791 = vmul.f32 %v3784, 1.442695
    %v3792 = vpow.pop %v3791
    %v3793 = vadd.f32 %v3786, 1.0
    %v3794 = vadd.f32 %v3788, 1.0
    %v3795 = vadd.f32 %v3790, 1.0
    %v3796 = vadd.f32 %v3792, 1.0
    %v3797 = vrcp.pop %v3793
    %v3798 = vmul.f32 1.0, %v3797
    %v3799 = vrcp.pop %v3794
    %v3800 = vmul.f32 1.0, %v3799
    %v3801 = vrcp.pop %v3795
    %v3802 = vmul.f32 1.0, %v3801
    %v3803 = vrcp.pop %v3796
    %v3804 = vmul.f32 1.0, %v3803
    %v3805 = vmul.f32 %v3798, %v3771
    %v3806 = vmul.f32 %v3800, %v3804
    %v3807 = vadd.f32 %v3805, %v3806
    %v3808 = vtanh.pop %v3807
    %v3809 = vmul.f32 %v3802, %v3808
    %s3810 = scalar_lea.vmem [#allocation10], 56
    %3811 = vst [vmem:[%s3810] sm:$0xff] %v3809
    %v3812 = vadd.f32 %v3390, %v3809
    %3813 = vst [vmem:[#allocation3] sm:$0xff] %v3809
    %3814 = vst [vmem:[#allocation4] sm:$0xff] %v3807
    %v3815 = vld [vmem:[#allocation11] sm:$0xff]
    %v3816 = vmul.f32 %v3812, 0.125
    %v3817 = vadd.f32 %v3815, %v3816
    %3818 = vst [vmem:[#allocation11] sm:$0xff] %v3817
    // Predicated region
    $region38: #{tpu_custom_call.1} parent=1 // pred_check
      _
    $region39: #{tpu_custom_call.1} parent=1 // pred_check_branch
      %3820 = sbr.rel (0) target = $region41
    $region40: #{tpu_custom_call.1} parent=1 // pred_region
      %s3822 = ssub.s32 1024, 1024
      %3823 = vsyncadd [#allocation7], %s3822
      %s3824 = sshll.u32 [#allocation10], 4
      %s3825 = int_to_ptr.vmem [resolvable:$true] %s3824
      %3830 = dma.vmem_to_hbm [thread:$0]  %s3825, 1024, %s6, [#allocation7], 128, 128, 8
    $region41: #{tpu_custom_call.1} parent=1 // pred_fallthru
      _
    // Predicated region
    $region42: #{tpu_custom_call.1} parent=1 // pred_check
      _
    $region43: #{tpu_custom_call.1} parent=1 // pred_check_branch
      %3832 = sbr.rel (0) target = $region45
    $region44: #{tpu_custom_call.1} parent=1 // pred_region
      %s3834 = ssub.s32 128, 128
      %3835 = vsyncadd [#allocation12], %s3834
      %s3837 = sshll.u32 [#allocation11], 4
      %s3838 = int_to_ptr.vmem [resolvable:$true] %s3837
      %3840 = dma.vmem_to_hbm [thread:$0]  %s3838, 128, %s7, [#allocation12]
    $region45: #{tpu_custom_call.1} parent=1 // pred_fallthru
      _
    // Predicated region
    $region46: #{tpu_custom_call.1} parent=1 // pred_check
      _
    $region47: #{tpu_custom_call.1} parent=1 // pred_check_branch
      %3842 = sbr.rel (0) target = $region49
    $region48: #{tpu_custom_call.1} parent=1 // pred_region
      %3843 = dma.done [#allocation7], 1024
    $region49: #{tpu_custom_call.1} parent=1 // pred_fallthru
      _
    // Predicated region
    $region50: #{tpu_custom_call.1} parent=1 // pred_check
      _
    $region51: #{tpu_custom_call.1} parent=1 // pred_check_branch
      %3845 = sbr.rel (0) target = $region53
    $region52: #{tpu_custom_call.1} parent=1 // pred_region
      %3846 = dma.done [#allocation12], 128
    $region53: #{tpu_custom_call.1} parent=1 // pred_fallthru
      _
    %3847 = vsyncpa [#allocation6], 1
    %3848 = vsyncpa [#allocation9], 1
    %3849 = vsyncpa [#allocation7], 1
    %3850 = vsyncpa [#allocation12], 1

</llo_original>
